<compile_context>
chip_gen: v5e
topology: v5e:2x2
jax: 0.10.0
libtpu: 0.0.40
codegen_flags: <defaults>
</compile_context>

<pallas_src>
import functools

import jax
import jax.numpy as jnp
import numpy as np
from jax import lax
from jax.experimental import pallas as pl
from jax.experimental.pallas import tpu as pltpu

LANES = 128
HALO = 8                      # halo block rows (only kernel_size-1 of them are read)


def _round_up(x, m):
    return ((x + m - 1) // m) * m


def _vmem_limit_bytes():
    """~75% of physical VMEM, capped at 96 MiB (v5e/v6e: 96 MiB, v7x/unknown: 48 MiB)."""
    try:
        cap = int(pltpu.get_tpu_info().vmem_capacity_bytes)
    except Exception:  # conservative fallback if the query is unavailable
        cap = 64 * 1024 * 1024
    return min(cap * 3 // 4, 96 * 1024 * 1024)


def _working_set_bytes(th, wp, w_out, cip, cop, ksize):
    """Per-grid-step VMEM footprint of the conv kernel (double buffers included)."""
    return (2 * th * wp * cip * 2                  # th-row input block (bf16, x2 buffers)
            + 2 * HALO * wp * cip * 2              # 8-row halo block (x2 buffers)
            + 2 * ksize * (ksize * cip) * cop * 2  # kw-folded weights (x2 buffers)
            + 2 * th * w_out * cop * 2             # conv-output tile (x2 buffers)
            + (th + HALO) * wp * cip * 2           # stitched-input scratch
            + th * w_out * cop * 4                 # f32 accumulator (live value)
            + th * w_out * ksize * cip * 2)        # kw-folded patch temporary


def _pick_row_tile(N, H_pad, wp, w_out, cip, cop, ksize, budget):
    """Largest th (multiple of 8, dividing H_pad) whose working set fits `budget`."""
    best = HALO
    for th in range(HALO, H_pad + 1, HALO):
        if H_pad % th == 0 and _working_set_bytes(th, wp, w_out, cip, cop, ksize) <= budget:
            best = th
    # v7x has 2 TensorCores per chip: keep >= 2 parallel grid cells when batch == 1.
    if N < 2 and best == H_pad:
        for th in range(best - HALO, HALO - 1, -HALO):
            if H_pad % th == 0:
                return th
    return best


def _conv_stats_kernel(xa_ref, xh_ref, w_ref, ps_ref, pb_ref, y_ref, stats_ref, xw_ref,
                       *, th, w_out, ksize, H, W, pad, pre_bn, mask_stats):
    """One (th x w_out) row tile of a KxK 'same' conv + per-tile BN statistics.

    xa_ref : (1, th, Wp, Cip)   padded-input rows [j*th, (j+1)*th)            (bf16)
    xh_ref : (1, 8,  Wp, Cip)   halo rows [(j+1)*th, (j+1)*th + 8)            (bf16)
    w_ref  : (K, K*Cip, Cop)    kw-folded bf16 weights
    ps/pb  : (1, Cip)           previous stage's BN scale/shift (used iff pre_bn)
    y_ref  : (1, th, w_out, Cop) raw conv output tile (bf16, lane-dense)
    stats  : (1, 1, 2, Cop)      per-tile channel [sum, sum-of-squares] (f32)
    xw_ref : (th+8, Wp, Cip)     stitched-input VMEM scratch (bf16)
    """
    j = pl.program_id(1)
    wp = xa_ref.shape[2]
    cip = xa_ref.shape[3]

    def prep(tile, row0, nrows):
        """Fuse the previous stage's BN+ReLU into the load; re-zero the padding."""
        if not pre_bn:
            return tile
        v = jnp.maximum(tile.astype(jnp.float32) * ps_ref[...] + pb_ref[...], 0.0)
        gr = row0 + lax.broadcasted_iota(jnp.int32, (nrows, wp, 1), 0)
        gc = lax.broadcasted_iota(jnp.int32, (nrows, wp, 1), 1)
        interior = ((gr >= pad) & (gr < H + pad)) & ((gc >= pad) & (gc < W + pad))
        return jnp.where(interior, v, 0.0).astype(jnp.bfloat16)

    # Stitch th rows + 8 halo rows once into VMEM scratch (single, budgeted copy).
    xw_ref[pl.ds(0, th), :, :] = prep(xa_ref[0], j * th, th)
    xw_ref[pl.ds(th, HALO), :, :] = prep(xh_ref[0], (j + 1) * th, HALO)

    # Conv as `ksize` MXU matmuls with the kw taps folded into the contraction
    # (K = ksize*Cip); f32 accumulation in values (no zero-init / scratch RMW).
    acc = None
    for kh in range(ksize):
        rows = xw_ref[pl.ds(kh, th), :, :]                              # (th, Wp, Cip)
        patch = jnp.concatenate([rows[:, kw:kw + w_out, :] for kw in range(ksize)],
                                axis=-1)                                # (th, w_out, K*Cip)
        d = jnp.dot(patch.reshape(th * w_out, ksize * cip), w_ref[kh],
                    preferred_element_type=jnp.float32)
        acc = d if acc is None else acc + d

    # Raw conv tile, emitted once -- never recomputed downstream.
    y_ref[...] = acc.reshape(1, th, w_out, acc.shape[-1]).astype(y_ref.dtype)

    # Per-tile channel sums for train-mode BatchNorm (mask the rows/cols that only
    # exist because of the 8-sublane spatial padding).
    a = acc
    if mask_stats:
        gr = j * th + lax.broadcasted_iota(jnp.int32, (th, w_out, 1), 0)
        gc = lax.broadcasted_iota(jnp.int32, (th, w_out, 1), 1)
        valid = (gr < H) & (gc < W)
        a = jnp.where(valid, acc.reshape(th, w_out, -1), 0.0).reshape(th * w_out, -1)
    s = jnp.sum(a, axis=0, keepdims=True)
    ss = jnp.sum(a * a, axis=0, keepdims=True)
    # TODO(synk): a Welford-style combine would avoid E[x^2]-E[x]^2 cancellation for
    #             very large-magnitude activations; plain f32 sums are fine here.
    stats_ref[...] = jnp.concatenate([s, ss], axis=0)[None, None]


def _bn_relu_kernel(y_ref, scale_ref, shift_ref, o_ref):
    """Pure elementwise pass: relu(y * scale + shift), lane-dense bf16 store."""
    y = y_ref[...].astype(jnp.float32)
    o_ref[...] = jnp.maximum(y * scale_ref[...] + shift_ref[...], 0.0).astype(o_ref.dtype)


def _conv_stage(xp, wq, pre_scale, pre_shift, *, th, H_pad, H, W, w_out, pad,
                pre_bn, mask_stats, vmem_limit):
    """Run the conv(+optional fused pre-BN) kernel over one stage."""
    N, _, Wp, Cip = xp.shape
    K = wq.shape[0]
    Cop = wq.shape[2]
    n_tiles = H_pad // th

    kern = functools.partial(_conv_stats_kernel, th=th, w_out=w_out, ksize=K,
                             H=H, W=W, pad=pad, pre_bn=pre_bn, mask_stats=mask_stats)
    return pl.pallas_call(
        kern,
        out_shape=(jax.ShapeDtypeStruct((N, H_pad, w_out, Cop), jnp.bfloat16),
                   jax.ShapeDtypeStruct((N, n_tiles, 2, Cop), jnp.float32)),
        grid=(N, n_tiles),
        in_specs=[
            pl.BlockSpec((1, th, Wp, Cip), lambda n, j: (n, j, 0, 0)),
            pl.BlockSpec((1, HALO, Wp, Cip),
                         lambda n, j, _b=th // HALO: (n, (j + 1) * _b, 0, 0)),
            pl.BlockSpec((K, K * Cip, Cop), lambda n, j: (0, 0, 0)),
            pl.BlockSpec((1, Cip), lambda n, j: (0, 0)),
            pl.BlockSpec((1, Cip), lambda n, j: (0, 0)),
        ],
        out_specs=(pl.BlockSpec((1, th, w_out, Cop), lambda n, j: (n, j, 0, 0)),
                   pl.BlockSpec((1, 1, 2, Cop), lambda n, j: (n, j, 0, 0))),
        scratch_shapes=[pltpu.VMEM((th + HALO, Wp, Cip), jnp.bfloat16)],
        compiler_params=pltpu.CompilerParams(
            dimension_semantics=("parallel", "parallel"),
            vmem_limit_bytes=vmem_limit),
    )(xp, xp, wq, pre_scale, pre_shift)


def _bn_relu(y, scale, shift, *, th, vmem_limit):
    N, H_pad, w_out, Cop = y.shape
    n_tiles = H_pad // th
    return pl.pallas_call(
        _bn_relu_kernel,
        out_shape=jax.ShapeDtypeStruct(y.shape, jnp.bfloat16),
        grid=(N, n_tiles),
        in_specs=[pl.BlockSpec((1, th, w_out, Cop), lambda n, j: (n, j, 0, 0)),
                  pl.BlockSpec((1, Cop), lambda n, j: (0, 0)),
                  pl.BlockSpec((1, Cop), lambda n, j: (0, 0))],
        out_specs=pl.BlockSpec((1, th, w_out, Cop), lambda n, j: (n, j, 0, 0)),
        compiler_params=pltpu.CompilerParams(
            dimension_semantics=("parallel", "parallel"),
            vmem_limit_bytes=vmem_limit),
    )(y, scale, shift)


def _fold_weights(w_hwio, cip, cop):
    """(K, K, Cin, Cout) -> (K, K*Cip, Cop) bf16; row index kw*Cip+ci matches the
    lane-concatenated patch layout built inside the kernel."""
    K, _, cin, cout = w_hwio.shape
    wq = jnp.pad(w_hwio, ((0, 0), (0, 0), (0, cip - cin), (0, cop - cout)))
    return wq.reshape(K, K * cip, cop).astype(jnp.bfloat16)


def _fold_bn(stats, gamma, beta, count, cop, eps):
    """Per-tile (sum, sum-of-squares) -> folded train-mode BN scale/shift."""
    s = jnp.sum(stats.astype(jnp.float32), axis=(0, 1))        # (2, Cop)
    mean = s[0] / count
    var = jnp.maximum(s[1] / count - mean * mean, 0.0)
    g = jnp.pad(gamma.astype(jnp.float32), (0, cop - gamma.shape[0]))
    b = jnp.pad(beta.astype(jnp.float32), (0, cop - beta.shape[0]))
    scale = g * lax.rsqrt(var + eps)
    shift = b - mean * scale
    return scale.reshape(1, cop), shift.reshape(1, cop)


def unet_block_forward(x_nchw, params, eps=1e-5, row_tile=None):
    """UnetBlock.forward: relu(bn2(conv2(relu(bn1(conv1(x)))))), train-mode BN. NCHW in/out."""
    N, Cin, H, W = x_nchw.shape
    K = params["w1"].shape[0]
    pad = K // 2
    assert K % 2 == 1 and (K - 1) <= HALO and 2 * pad <= HALO
    mid = params["w1"].shape[3]
    cout = params["w2"].shape[3]

    Cip1 = _round_up(Cin, LANES)
    Cop1 = _round_up(mid, LANES)
    Cop2 = _round_up(cout, LANES)
    # TODO(synk): a VPU path (or folding kh into the contraction) would avoid the
    #             ~(128/Cin)x lane-padding waste for very small channel counts.

    w_out = _round_up(W, 8)                 # lane-dense, 8-sublane-aligned output width
    Wp = w_out + HALO                       # padded input width (multiple of 8)
    H_pad = _round_up(H, 8)
    mask_stats = (w_out != W) or (H_pad != H)

    vmem_limit = _vmem_limit_bytes()
    cip_max, cop_max = max(Cip1, Cop1), max(Cop1, Cop2)
    if row_tile is None:
        th = _pick_row_tile(N, H_pad, Wp, w_out, cip_max, cop_max, K,
                            budget=int(vmem_limit * 0.8))
    else:
        th = row_tile
    assert th % HALO == 0 and H_pad % th == 0, (H_pad, th)
    vmem_limit = min(max(vmem_limit,
                         _working_set_bytes(th, Wp, w_out, cip_max, cop_max, K) + (8 << 20)),
                     120 * 1024 * 1024)

    # Padded-input height: >= H_pad + HALO (halo of the last tile), and a multiple of
    # th so every BlockSpec divides its array exactly.
    H_total = H_pad + HALO
    H_total += (-H_total) % th

    count = jnp.float32(N * H * W)
    ones1 = jnp.ones((1, Cip1), jnp.float32)
    zeros1 = jnp.zeros((1, Cip1), jnp.float32)

    x = jnp.transpose(x_nchw, (0, 2, 3, 1))                     # NCHW -> NHWC
    xp1 = jnp.pad(x.astype(jnp.bfloat16),
                  ((0, 0), (pad, H_total - H - pad), (pad, Wp - W - pad),
                   (0, Cip1 - Cin)))
    wq1 = _fold_weights(params["w1"], Cip1, Cop1)
    wq2 = _fold_weights(params["w2"], Cop1, Cop2)

    # Stage 1: conv1 + batch stats.  BN1/ReLU are fused into stage 2's input load,
    # so there is no separate elementwise pass for the inner stage.
    y1, st1 = _conv_stage(xp1, wq1, ones1, zeros1, th=th, H_pad=H_pad, H=H, W=W,
                          w_out=w_out, pad=pad, pre_bn=False, mask_stats=mask_stats,
                          vmem_limit=vmem_limit)
    sc1, sh1 = _fold_bn(st1, params["g1"], params["bt1"], count, Cop1, eps)

    # Stage 2: input is the *raw* conv1 output padded with zeros; the kernel applies
    # relu(y*scale1 + shift1) and re-zeroes the 'same' padding while stitching tiles.
    xp2 = jnp.pad(y1, ((0, 0), (pad, H_total - H_pad - pad),
                       (pad, Wp - w_out - pad), (0, 0)))
    y2, st2 = _conv_stage(xp2, wq2, sc1, sh1, th=th, H_pad=H_pad, H=H, W=W,
                          w_out=w_out, pad=pad, pre_bn=True, mask_stats=mask_stats,
                          vmem_limit=vmem_limit)
    sc2, sh2 = _fold_bn(st2, params["g2"], params["bt2"], count, Cop2, eps)

    # Final elementwise BN2 + ReLU (bf16 lane-dense store); cast/slice in the wrapper.
    z2 = _bn_relu(y2, sc2, sh2, th=th, vmem_limit=vmem_limit)
    out = z2[:, :H, :W, :cout].astype(jnp.float32)
    return jnp.transpose(out, (0, 3, 1, 2))                     # NHWC -> NCHW


def init_unet_block_params(key, in_channels, out_channels, mid_channels=None, kernel_size=3):
    """Deterministic init matching the PyTorch module's parameter shapes (HWIO conv
    weights, PyTorch default U(-1/sqrt(fan_in), +) init, BN gamma=1/beta=0).  Conv
    biases are kept for interface parity but are cancelled by train-mode BN."""
    if mid_channels is None:
        mid_channels = out_channels
    k1, k2, k3, k4 = jax.random.split(key, 4)

    def conv_init(kw, kb, cin, cout):
        fan_in = cin * kernel_size * kernel_size
        bound = 1.0 / np.sqrt(fan_in)
        w = jax.random.uniform(kw, (kernel_size, kernel_size, cin, cout),
                               jnp.float32, -bound, bound)
        b = jax.random.uniform(kb, (cout,), jnp.float32, -bound, bound)
        return w, b

    w1, b1 = conv_init(k1, k2, in_channels, mid_channels)
    w2, b2 = conv_init(k3, k4, mid_channels, out_channels)
    return dict(
        w1=w1, b1=b1, g1=jnp.ones((mid_channels,), jnp.float32),
        bt1=jnp.zeros((mid_channels,), jnp.float32),
        w2=w2, b2=b2, g2=jnp.ones((out_channels,), jnp.float32),
        bt2=jnp.zeros((out_channels,), jnp.float32),
    )


def _reference_forward(x_nchw, params, eps=1e-5):
    """Pure-JAX f32 reference (includes conv bias; train-mode BN cancels it)."""
    x = jnp.transpose(x_nchw, (0, 2, 3, 1))

    def stage(x, w, b, g, bt):
        y = lax.conv_general_dilated(
            x, w, window_strides=(1, 1), padding="SAME",
            dimension_numbers=("NHWC", "HWIO", "NHWC"),
            precision=lax.Precision.HIGHEST) + b
        mean = jnp.mean(y, axis=(0, 1, 2), keepdims=True)
        var = jnp.mean((y - mean) ** 2, axis=(0, 1, 2), keepdims=True)
        y = (y - mean) * lax.rsqrt(var + eps) * g + bt
        return jnp.maximum(y, 0.0)

    y = stage(x, params["w1"], params["b1"], params["g1"], params["bt1"])
    y = stage(y, params["w2"], params["b2"], params["g2"], params["bt2"])
    return jnp.transpose(y, (0, 3, 1, 2))


if __name__ == "__main__":
    key = jax.random.PRNGKey(0)
    kx, kp = jax.random.split(key)

    # Small shapes: batch=2, in_channels=4, out_channels=8, spatial=16x16 (NCHW).
    N, Cin, H, W = 2, 4, 16, 16
    Cout = 8
    x = jax.random.normal(kx, (N, Cin, H, W), jnp.float32)
    params = init_unet_block_params(kp, in_channels=Cin, out_channels=Cout)

    fwd = jax.jit(unet_block_forward, static_argnames=("row_tile",))

    out = jax.block_until_ready(fwd(x, params))                  # auto row tile
    assert out.shape == (N, Cout, H, W)
    ref = _reference_forward(x, params)
    np.testing.assert_allclose(np.asarray(out), np.asarray(ref), atol=6e-2, rtol=6e-2)

    # Also exercise the multi-row-tile 8-row-halo path (grid = (2, 2)).
    out_tiled = jax.block_until_ready(fwd(x, params, row_tile=8))
    np.testing.assert_allclose(np.asarray(out_tiled), np.asarray(ref),
                               atol=6e-2, rtol=6e-2)

    print("KERNEL_OK")
</pallas_src>

<mosaic_0001>
module attributes {stable_mosaic.version = 11 : i64} {
  func.func @_conv_stats_kernel(%arg0: i32, %arg1: i32, %arg2: memref<1x16x24x128xbf16, #tpu.memory_space<vmem>>, %arg3: memref<1x8x24x128xbf16, #tpu.memory_space<vmem>>, %arg4: memref<3x384x128xbf16, #tpu.memory_space<vmem>>, %arg5: memref<1x128xf32, #tpu.memory_space<vmem>>, %arg6: memref<1x128xf32, #tpu.memory_space<vmem>>, %arg7: memref<1x16x16x128xbf16, #tpu.memory_space<vmem>>, %arg8: memref<1x1x2x128xf32, #tpu.memory_space<vmem>>, %arg9: memref<24x24x128xbf16, #tpu.memory_space<vmem>>) attributes {dimension_semantics = [#tpu.dimension_semantics<parallel>, #tpu.dimension_semantics<parallel>], iteration_bounds = array<i64: 2, 1>, scalar_prefetch = 0 : i64, scratch_operands = 1 : i64, tpu.core_type = #tpu.core_type<tc>, window_params = [{transform_indices = @transform_0, window_bounds = array<i64: 1, 16, 24, 128>}, {transform_indices = @transform_1, window_bounds = array<i64: 1, 8, 24, 128>}, {pipeline_mode = #tpu.pipeline_mode<synchronous>, transform_indices = @transform_2, window_bounds = array<i64: 3, 384, 128>}, {pipeline_mode = #tpu.pipeline_mode<synchronous>, transform_indices = @transform_3, window_bounds = array<i64: 1, 128>}, {pipeline_mode = #tpu.pipeline_mode<synchronous>, transform_indices = @transform_4, window_bounds = array<i64: 1, 128>}, {transform_indices = @transform_5, window_bounds = array<i64: 1, 16, 16, 128>}, {transform_indices = @transform_6, window_bounds = array<i64: 1, 1, 2, 128>}]} {
    %c0 = arith.constant 0 : index
    %c0_0 = arith.constant 0 : index
    %c0_1 = arith.constant 0 : index
    %c0_2 = arith.constant 0 : index
    %0 = vector.load %arg2[%c0, %c0_0, %c0_1, %c0_2] : memref<1x16x24x128xbf16, #tpu.memory_space<vmem>>, vector<1x16x24x128xbf16>
    %1 = vector.shape_cast %0 : vector<1x16x24x128xbf16> to vector<16x24x128xbf16>
    %c0_3 = arith.constant 0 : index
    %c0_4 = arith.constant 0 : index
    %c0_5 = arith.constant 0 : index
    %2 = vector.load %arg9[%c0_3, %c0_4, %c0_5] : memref<24x24x128xbf16, #tpu.memory_space<vmem>>, vector<16x24x128xbf16>
    tpu.vector_store %arg9[%c0_3, %c0_4, %c0_5], %1 {strides = array<i32>} : memref<24x24x128xbf16, #tpu.memory_space<vmem>>, vector<16x24x128xbf16>,
    %c0_6 = arith.constant 0 : index
    %c0_7 = arith.constant 0 : index
    %c0_8 = arith.constant 0 : index
    %c0_9 = arith.constant 0 : index
    %3 = vector.load %arg3[%c0_6, %c0_7, %c0_8, %c0_9] : memref<1x8x24x128xbf16, #tpu.memory_space<vmem>>, vector<1x8x24x128xbf16>
    %4 = vector.shape_cast %3 : vector<1x8x24x128xbf16> to vector<8x24x128xbf16>
    %c16 = arith.constant 16 : index
    %c0_10 = arith.constant 0 : index
    %c0_11 = arith.constant 0 : index
    %5 = vector.load %arg9[%c16, %c0_10, %c0_11] : memref<24x24x128xbf16, #tpu.memory_space<vmem>>, vector<8x24x128xbf16>
    tpu.vector_store %arg9[%c16, %c0_10, %c0_11], %4 {strides = array<i32>} : memref<24x24x128xbf16, #tpu.memory_space<vmem>>, vector<8x24x128xbf16>,
    %c0_12 = arith.constant 0 : index
    %c0_13 = arith.constant 0 : index
    %c0_14 = arith.constant 0 : index
    %6 = vector.load %arg9[%c0_12, %c0_13, %c0_14] : memref<24x24x128xbf16, #tpu.memory_space<vmem>>, vector<16x24x128xbf16>
    %7 = vector.extract_strided_slice %6 {offsets = [0, 0, 0], sizes = [16, 16, 128], strides = [1, 1, 1]} : vector<16x24x128xbf16> to vector<16x16x128xbf16>
    %8 = vector.extract_strided_slice %6 {offsets = [0, 1, 0], sizes = [16, 16, 128], strides = [1, 1, 1]} : vector<16x24x128xbf16> to vector<16x16x128xbf16>
    %9 = vector.extract_strided_slice %6 {offsets = [0, 2, 0], sizes = [16, 16, 128], strides = [1, 1, 1]} : vector<16x24x128xbf16> to vector<16x16x128xbf16>
    %10 = tpu.concatenate %7, %8, %9 in 2 : vector<16x16x128xbf16>, vector<16x16x128xbf16>, vector<16x16x128xbf16> -> vector<16x16x384xbf16>
    %11 = vector.shape_cast %10 : vector<16x16x384xbf16> to vector<256x384xbf16>
    %c0_15 = arith.constant 0 : index
    %c0_16 = arith.constant 0 : index
    %c0_17 = arith.constant 0 : index
    %12 = vector.load %arg4[%c0_15, %c0_16, %c0_17] : memref<3x384x128xbf16, #tpu.memory_space<vmem>>, vector<1x384x128xbf16>
    %13 = vector.shape_cast %12 : vector<1x384x128xbf16> to vector<384x128xbf16>
    %cst = arith.constant dense<0.000000e+00> : vector<256x128xf32>
    %14 = tpu.matmul %11, %13, %cst {dimension_numbers = #tpu.dot_dimension_numbers<[1], [0], [0], [1], [0, 0, 1, 1], [], []>} : vector<256x384xbf16>, vector<384x128xbf16>, vector<256x128xf32> -> vector<256x128xf32>
    %c1 = arith.constant 1 : index
    %c0_18 = arith.constant 0 : index
    %c0_19 = arith.constant 0 : index
    %15 = vector.load %arg9[%c1, %c0_18, %c0_19] : memref<24x24x128xbf16, #tpu.memory_space<vmem>>, vector<16x24x128xbf16>
    %16 = vector.extract_strided_slice %15 {offsets = [0, 0, 0], sizes = [16, 16, 128], strides = [1, 1, 1]} : vector<16x24x128xbf16> to vector<16x16x128xbf16>
    %17 = vector.extract_strided_slice %15 {offsets = [0, 1, 0], sizes = [16, 16, 128], strides = [1, 1, 1]} : vector<16x24x128xbf16> to vector<16x16x128xbf16>
    %18 = vector.extract_strided_slice %15 {offsets = [0, 2, 0], sizes = [16, 16, 128], strides = [1, 1, 1]} : vector<16x24x128xbf16> to vector<16x16x128xbf16>
    %19 = tpu.concatenate %16, %17, %18 in 2 : vector<16x16x128xbf16>, vector<16x16x128xbf16>, vector<16x16x128xbf16> -> vector<16x16x384xbf16>
    %20 = vector.shape_cast %19 : vector<16x16x384xbf16> to vector<256x384xbf16>
    %c1_20 = arith.constant 1 : index
    %c0_21 = arith.constant 0 : index
    %c0_22 = arith.constant 0 : index
    %21 = vector.load %arg4[%c1_20, %c0_21, %c0_22] : memref<3x384x128xbf16, #tpu.memory_space<vmem>>, vector<1x384x128xbf16>
    %22 = vector.shape_cast %21 : vector<1x384x128xbf16> to vector<384x128xbf16>
    %cst_23 = arith.constant dense<0.000000e+00> : vector<256x128xf32>
    %23 = tpu.matmul %20, %22, %cst_23 {dimension_numbers = #tpu.dot_dimension_numbers<[1], [0], [0], [1], [0, 0, 1, 1], [], []>} : vector<256x384xbf16>, vector<384x128xbf16>, vector<256x128xf32> -> vector<256x128xf32>
    %24 = arith.addf %14, %23 : vector<256x128xf32>
    %c2 = arith.constant 2 : index
    %c0_24 = arith.constant 0 : index
    %c0_25 = arith.constant 0 : index
    %25 = vector.load %arg9[%c2, %c0_24, %c0_25] : memref<24x24x128xbf16, #tpu.memory_space<vmem>>, vector<16x24x128xbf16>
    %26 = vector.extract_strided_slice %25 {offsets = [0, 0, 0], sizes = [16, 16, 128], strides = [1, 1, 1]} : vector<16x24x128xbf16> to vector<16x16x128xbf16>
    %27 = vector.extract_strided_slice %25 {offsets = [0, 1, 0], sizes = [16, 16, 128], strides = [1, 1, 1]} : vector<16x24x128xbf16> to vector<16x16x128xbf16>
    %28 = vector.extract_strided_slice %25 {offsets = [0, 2, 0], sizes = [16, 16, 128], strides = [1, 1, 1]} : vector<16x24x128xbf16> to vector<16x16x128xbf16>
    %29 = tpu.concatenate %26, %27, %28 in 2 : vector<16x16x128xbf16>, vector<16x16x128xbf16>, vector<16x16x128xbf16> -> vector<16x16x384xbf16>
    %30 = vector.shape_cast %29 : vector<16x16x384xbf16> to vector<256x384xbf16>
    %c2_26 = arith.constant 2 : index
    %c0_27 = arith.constant 0 : index
    %c0_28 = arith.constant 0 : index
    %31 = vector.load %arg4[%c2_26, %c0_27, %c0_28] : memref<3x384x128xbf16, #tpu.memory_space<vmem>>, vector<1x384x128xbf16>
    %32 = vector.shape_cast %31 : vector<1x384x128xbf16> to vector<384x128xbf16>
    %cst_29 = arith.constant dense<0.000000e+00> : vector<256x128xf32>
    %33 = tpu.matmul %30, %32, %cst_29 {dimension_numbers = #tpu.dot_dimension_numbers<[1], [0], [0], [1], [0, 0, 1, 1], [], []>} : vector<256x384xbf16>, vector<384x128xbf16>, vector<256x128xf32> -> vector<256x128xf32>
    %34 = arith.addf %24, %33 : vector<256x128xf32>
    %35 = vector.shape_cast %34 : vector<256x128xf32> to vector<1x16x16x128xf32>
    %36 = arith.truncf %35 : vector<1x16x16x128xf32> to vector<1x16x16x128xbf16>
    %c0_30 = arith.constant 0 : index
    %c0_31 = arith.constant 0 : index
    %c0_32 = arith.constant 0 : index
    %c0_33 = arith.constant 0 : index
    %37 = vector.load %arg7[%c0_30, %c0_31, %c0_32, %c0_33] : memref<1x16x16x128xbf16, #tpu.memory_space<vmem>>, vector<1x16x16x128xbf16>
    tpu.vector_store %arg7[%c0_30, %c0_31, %c0_32, %c0_33], %36 {strides = array<i32>} : memref<1x16x16x128xbf16, #tpu.memory_space<vmem>>, vector<1x16x16x128xbf16>,
    %cst_34 = arith.constant dense<0.000000e+00> : vector<128xf32>
    %38 = vector.multi_reduction <add>, %34, %cst_34 [0] : vector<256x128xf32> to vector<128xf32>
    %39 = vector.shape_cast %38 : vector<128xf32> to vector<1x128xf32>
    %40 = arith.mulf %34, %34 : vector<256x128xf32>
    %cst_35 = arith.constant dense<0.000000e+00> : vector<128xf32>
    %41 = vector.multi_reduction <add>, %40, %cst_35 [0] : vector<256x128xf32> to vector<128xf32>
    %42 = vector.shape_cast %41 : vector<128xf32> to vector<1x128xf32>
    %43 = tpu.concatenate %39, %42 in 0 : vector<1x128xf32>, vector<1x128xf32> -> vector<2x128xf32>
    %44 = vector.shape_cast %43 : vector<2x128xf32> to vector<1x1x2x128xf32>
    %c0_36 = arith.constant 0 : index
    %c0_37 = arith.constant 0 : index
    %c0_38 = arith.constant 0 : index
    %c0_39 = arith.constant 0 : index
    %45 = vector.load %arg8[%c0_36, %c0_37, %c0_38, %c0_39] : memref<1x1x2x128xf32, #tpu.memory_space<vmem>>, vector<1x1x2x128xf32>
    tpu.vector_store %arg8[%c0_36, %c0_37, %c0_38, %c0_39], %44 {strides = array<i32>} : memref<1x1x2x128xf32, #tpu.memory_space<vmem>>, vector<1x1x2x128xf32>,
    return
  }
  func.func @transform_0(%arg0: i32, %arg1: i32) -> (i32, i32, i32, i32) {
    %c0_i32 = arith.constant 0 : i32
    %c0_i32_0 = arith.constant 0 : i32
    %c0_i32_1 = arith.constant 0 : i32
    return %arg0, %arg1, %c0_i32, %c0_i32_0 : i32, i32, i32, i32
  }
  func.func @transform_1(%arg0: i32, %arg1: i32) -> (i32, i32, i32, i32) {
    %c1_i32 = arith.constant 1 : i32
    %0 = arith.addi %arg1, %c1_i32 : i32
    %c2_i32 = arith.constant 2 : i32
    %1 = arith.muli %0, %c2_i32 : i32
    %c0_i32 = arith.constant 0 : i32
    %c0_i32_0 = arith.constant 0 : i32
    %c0_i32_1 = arith.constant 0 : i32
    return %arg0, %1, %c0_i32, %c0_i32_0 : i32, i32, i32, i32
  }
  func.func @transform_2(%arg0: i32, %arg1: i32) -> (i32, i32, i32) {
    %c0_i32 = arith.constant 0 : i32
    %c0_i32_0 = arith.constant 0 : i32
    %c0_i32_1 = arith.constant 0 : i32
    %c0_i32_2 = arith.constant 0 : i32
    return %c0_i32, %c0_i32_0, %c0_i32_1 : i32, i32, i32
  }
  func.func @transform_3(%arg0: i32, %arg1: i32) -> (i32, i32) {
    %c0_i32 = arith.constant 0 : i32
    %c0_i32_0 = arith.constant 0 : i32
    %c0_i32_1 = arith.constant 0 : i32
    return %c0_i32, %c0_i32_0 : i32, i32
  }
  func.func @transform_4(%arg0: i32, %arg1: i32) -> (i32, i32) {
    %c0_i32 = arith.constant 0 : i32
    %c0_i32_0 = arith.constant 0 : i32
    %c0_i32_1 = arith.constant 0 : i32
    return %c0_i32, %c0_i32_0 : i32, i32
  }
  func.func @transform_5(%arg0: i32, %arg1: i32) -> (i32, i32, i32, i32) {
    %c0_i32 = arith.constant 0 : i32
    %c0_i32_0 = arith.constant 0 : i32
    %c0_i32_1 = arith.constant 0 : i32
    return %arg0, %arg1, %c0_i32, %c0_i32_0 : i32, i32, i32, i32
  }
  func.func @transform_6(%arg0: i32, %arg1: i32) -> (i32, i32, i32, i32) {
    %c0_i32 = arith.constant 0 : i32
    %c0_i32_0 = arith.constant 0 : i32
    %c0_i32_1 = arith.constant 0 : i32
    return %arg0, %arg1, %c0_i32, %c0_i32_0 : i32, i32, i32, i32
  }
}

module attributes {stable_mosaic.version = 11 : i64} {
  func.func @_bn_relu_kernel(%arg0: i32, %arg1: i32, %arg2: memref<1x16x16x128xbf16, #tpu.memory_space<vmem>>, %arg3: memref<1x128xf32, #tpu.memory_space<vmem>>, %arg4: memref<1x128xf32, #tpu.memory_space<vmem>>, %arg5: memref<1x16x16x128xbf16, #tpu.memory_space<vmem>>) attributes {dimension_semantics = [#tpu.dimension_semantics<parallel>, #tpu.dimension_semantics<parallel>], iteration_bounds = array<i64: 2, 1>, scalar_prefetch = 0 : i64, scratch_operands = 0 : i64, tpu.core_type = #tpu.core_type<tc>, window_params = [{transform_indices = @transform_0, window_bounds = array<i64: 1, 16, 16, 128>}, {pipeline_mode = #tpu.pipeline_mode<synchronous>, transform_indices = @transform_1, window_bounds = array<i64: 1, 128>}, {pipeline_mode = #tpu.pipeline_mode<synchronous>, transform_indices = @transform_2, window_bounds = array<i64: 1, 128>}, {transform_indices = @transform_3, window_bounds = array<i64: 1, 16, 16, 128>}]} {
    %c0 = arith.constant 0 : index
    %c0_0 = arith.constant 0 : index
    %c0_1 = arith.constant 0 : index
    %c0_2 = arith.constant 0 : index
    %0 = vector.load %arg2[%c0, %c0_0, %c0_1, %c0_2] : memref<1x16x16x128xbf16, #tpu.memory_space<vmem>>, vector<1x16x16x128xbf16>
    %1 = arith.extf %0 : vector<1x16x16x128xbf16> to vector<1x16x16x128xf32>
    %c0_3 = arith.constant 0 : index
    %c0_4 = arith.constant 0 : index
    %2 = vector.load %arg3[%c0_3, %c0_4] : memref<1x128xf32, #tpu.memory_space<vmem>>, vector<1x128xf32>
    %3 = vector.shape_cast %2 : vector<1x128xf32> to vector<1x1x1x128xf32>
    %4 = vector.broadcast %3 : vector<1x1x1x128xf32> to vector<1x16x16x128xf32>
    %5 = arith.mulf %1, %4 : vector<1x16x16x128xf32>
    %c0_5 = arith.constant 0 : index
    %c0_6 = arith.constant 0 : index
    %6 = vector.load %arg4[%c0_5, %c0_6] : memref<1x128xf32, #tpu.memory_space<vmem>>, vector<1x128xf32>
    %7 = vector.shape_cast %6 : vector<1x128xf32> to vector<1x1x1x128xf32>
    %8 = vector.broadcast %7 : vector<1x1x1x128xf32> to vector<1x16x16x128xf32>
    %9 = arith.addf %5, %8 : vector<1x16x16x128xf32>
    %cst = arith.constant 0.000000e+00 : f32
    %10 = vector.broadcast %cst : f32 to vector<1x16x16x128xf32>
    %11 = arith.maximumf %9, %10 : vector<1x16x16x128xf32>
    %12 = arith.truncf %11 : vector<1x16x16x128xf32> to vector<1x16x16x128xbf16>
    %c0_7 = arith.constant 0 : index
    %c0_8 = arith.constant 0 : index
    %c0_9 = arith.constant 0 : index
    %c0_10 = arith.constant 0 : index
    %13 = vector.load %arg5[%c0_7, %c0_8, %c0_9, %c0_10] : memref<1x16x16x128xbf16, #tpu.memory_space<vmem>>, vector<1x16x16x128xbf16>
    tpu.vector_store %arg5[%c0_7, %c0_8, %c0_9, %c0_10], %12 {strides = array<i32>} : memref<1x16x16x128xbf16, #tpu.memory_space<vmem>>, vector<1x16x16x128xbf16>,
    return
  }
  func.func @transform_0(%arg0: i32, %arg1: i32) -> (i32, i32, i32, i32) {
    %c0_i32 = arith.constant 0 : i32
    %c0_i32_0 = arith.constant 0 : i32
    %c0_i32_1 = arith.constant 0 : i32
    return %arg0, %arg1, %c0_i32, %c0_i32_0 : i32, i32, i32, i32
  }
  func.func @transform_1(%arg0: i32, %arg1: i32) -> (i32, i32) {
    %c0_i32 = arith.constant 0 : i32
    %c0_i32_0 = arith.constant 0 : i32
    %c0_i32_1 = arith.constant 0 : i32
    return %c0_i32, %c0_i32_0 : i32, i32
  }
  func.func @transform_2(%arg0: i32, %arg1: i32) -> (i32, i32) {
    %c0_i32 = arith.constant 0 : i32
    %c0_i32_0 = arith.constant 0 : i32
    %c0_i32_1 = arith.constant 0 : i32
    return %c0_i32, %c0_i32_0 : i32, i32
  }
  func.func @transform_3(%arg0: i32, %arg1: i32) -> (i32, i32, i32, i32) {
    %c0_i32 = arith.constant 0 : i32
    %c0_i32_0 = arith.constant 0 : i32
    %c0_i32_1 = arith.constant 0 : i32
    return %arg0, %arg1, %c0_i32, %c0_i32_0 : i32, i32, i32, i32
  }
}

module attributes {stable_mosaic.version = 11 : i64} {
  func.func @_conv_stats_kernel(%arg0: i32, %arg1: i32, %arg2: memref<1x16x24x128xbf16, #tpu.memory_space<vmem>>, %arg3: memref<1x8x24x128xbf16, #tpu.memory_space<vmem>>, %arg4: memref<3x384x128xbf16, #tpu.memory_space<vmem>>, %arg5: memref<1x128xf32, #tpu.memory_space<vmem>>, %arg6: memref<1x128xf32, #tpu.memory_space<vmem>>, %arg7: memref<1x16x16x128xbf16, #tpu.memory_space<vmem>>, %arg8: memref<1x1x2x128xf32, #tpu.memory_space<vmem>>, %arg9: memref<24x24x128xbf16, #tpu.memory_space<vmem>>) attributes {dimension_semantics = [#tpu.dimension_semantics<parallel>, #tpu.dimension_semantics<parallel>], iteration_bounds = array<i64: 2, 1>, scalar_prefetch = 0 : i64, scratch_operands = 1 : i64, tpu.core_type = #tpu.core_type<tc>, window_params = [{transform_indices = @transform_0, window_bounds = array<i64: 1, 16, 24, 128>}, {transform_indices = @transform_1, window_bounds = array<i64: 1, 8, 24, 128>}, {pipeline_mode = #tpu.pipeline_mode<synchronous>, transform_indices = @transform_2, window_bounds = array<i64: 3, 384, 128>}, {pipeline_mode = #tpu.pipeline_mode<synchronous>, transform_indices = @transform_3, window_bounds = array<i64: 1, 128>}, {pipeline_mode = #tpu.pipeline_mode<synchronous>, transform_indices = @transform_4, window_bounds = array<i64: 1, 128>}, {transform_indices = @transform_5, window_bounds = array<i64: 1, 16, 16, 128>}, {transform_indices = @transform_6, window_bounds = array<i64: 1, 1, 2, 128>}]} {
    %c0 = arith.constant 0 : index
    %c0_0 = arith.constant 0 : index
    %c0_1 = arith.constant 0 : index
    %c0_2 = arith.constant 0 : index
    %0 = vector.load %arg2[%c0, %c0_0, %c0_1, %c0_2] : memref<1x16x24x128xbf16, #tpu.memory_space<vmem>>, vector<1x16x24x128xbf16>
    %1 = vector.shape_cast %0 : vector<1x16x24x128xbf16> to vector<16x24x128xbf16>
    %c16_i32 = arith.constant 16 : i32
    %2 = arith.muli %arg1, %c16_i32 : i32
    %3 = arith.extf %1 : vector<16x24x128xbf16> to vector<16x24x128xf32>
    %c0_3 = arith.constant 0 : index
    %c0_4 = arith.constant 0 : index
    %4 = vector.load %arg5[%c0_3, %c0_4] : memref<1x128xf32, #tpu.memory_space<vmem>>, vector<1x128xf32>
    %5 = vector.shape_cast %4 : vector<1x128xf32> to vector<1x1x128xf32>
    %6 = vector.broadcast %5 : vector<1x1x128xf32> to vector<16x24x128xf32>
    %7 = arith.mulf %3, %6 : vector<16x24x128xf32>
    %c0_5 = arith.constant 0 : index
    %c0_6 = arith.constant 0 : index
    %8 = vector.load %arg6[%c0_5, %c0_6] : memref<1x128xf32, #tpu.memory_space<vmem>>, vector<1x128xf32>
    %9 = vector.shape_cast %8 : vector<1x128xf32> to vector<1x1x128xf32>
    %10 = vector.broadcast %9 : vector<1x1x128xf32> to vector<16x24x128xf32>
    %11 = arith.addf %7, %10 : vector<16x24x128xf32>
    %cst = arith.constant 0.000000e+00 : f32
    %12 = vector.broadcast %cst : f32 to vector<16x24x128xf32>
    %13 = arith.maximumf %11, %12 : vector<16x24x128xf32>
    %14 = tpu.iota {dimensions = array<i32: 0>} : vector<16x24x1xi32>
    %15 = vector.broadcast %2 : i32 to vector<16x24x1xi32>
    %16 = arith.addi %15, %14 : vector<16x24x1xi32>
    %17 = tpu.iota {dimensions = array<i32: 1>} : vector<16x24x1xi32>
    %c1_i32 = arith.constant 1 : i32
    %18 = vector.broadcast %c1_i32 : i32 to vector<16x24x1xi32>
    %19 = arith.cmpi sge, %16, %18 : vector<16x24x1xi32>
    %c17_i32 = arith.constant 17 : i32
    %20 = vector.broadcast %c17_i32 : i32 to vector<16x24x1xi32>
    %21 = arith.cmpi slt, %16, %20 : vector<16x24x1xi32>
    %22 = arith.andi %19, %21 : vector<16x24x1xi1>
    %c1_i32_7 = arith.constant 1 : i32
    %23 = vector.broadcast %c1_i32_7 : i32 to vector<16x24x1xi32>
    %24 = arith.cmpi sge, %17, %23 : vector<16x24x1xi32>
    %c17_i32_8 = arith.constant 17 : i32
    %25 = vector.broadcast %c17_i32_8 : i32 to vector<16x24x1xi32>
    %26 = arith.cmpi slt, %17, %25 : vector<16x24x1xi32>
    %27 = arith.andi %24, %26 : vector<16x24x1xi1>
    %28 = arith.andi %22, %27 : vector<16x24x1xi1>
    %cst_9 = arith.constant 0.000000e+00 : f32
    %29 = vector.shape_cast %28 : vector<16x24x1xi1> to vector<16x24x1xi1>
    %30 = vector.broadcast %29 : vector<16x24x1xi1> to vector<16x24x128xi1>
    %31 = vector.broadcast %cst_9 : f32 to vector<16x24x128xf32>
    %32 = arith.select %30, %13, %31 : vector<16x24x128xi1>, vector<16x24x128xf32>
    %33 = arith.truncf %32 : vector<16x24x128xf32> to vector<16x24x128xbf16>
    %c0_10 = arith.constant 0 : index
    %c0_11 = arith.constant 0 : index
    %c0_12 = arith.constant 0 : index
    %34 = vector.load %arg9[%c0_10, %c0_11, %c0_12] : memref<24x24x128xbf16, #tpu.memory_space<vmem>>, vector<16x24x128xbf16>
    tpu.vector_store %arg9[%c0_10, %c0_11, %c0_12], %33 {strides = array<i32>} : memref<24x24x128xbf16, #tpu.memory_space<vmem>>, vector<16x24x128xbf16>,
    %c0_13 = arith.constant 0 : index
    %c0_14 = arith.constant 0 : index
    %c0_15 = arith.constant 0 : index
    %c0_16 = arith.constant 0 : index
    %35 = vector.load %arg3[%c0_13, %c0_14, %c0_15, %c0_16] : memref<1x8x24x128xbf16, #tpu.memory_space<vmem>>, vector<1x8x24x128xbf16>
    %36 = vector.shape_cast %35 : vector<1x8x24x128xbf16> to vector<8x24x128xbf16>
    %c1_i32_17 = arith.constant 1 : i32
    %37 = arith.addi %arg1, %c1_i32_17 : i32
    %c16_i32_18 = arith.constant 16 : i32
    %38 = arith.muli %37, %c16_i32_18 : i32
    %39 = arith.extf %36 : vector<8x24x128xbf16> to vector<8x24x128xf32>
    %c0_19 = arith.constant 0 : index
    %c0_20 = arith.constant 0 : index
    %40 = vector.load %arg5[%c0_19, %c0_20] : memref<1x128xf32, #tpu.memory_space<vmem>>, vector<1x128xf32>
    %41 = vector.shape_cast %40 : vector<1x128xf32> to vector<1x1x128xf32>
    %42 = vector.broadcast %41 : vector<1x1x128xf32> to vector<8x24x128xf32>
    %43 = arith.mulf %39, %42 : vector<8x24x128xf32>
    %c0_21 = arith.constant 0 : index
    %c0_22 = arith.constant 0 : index
    %44 = vector.load %arg6[%c0_21, %c0_22] : memref<1x128xf32, #tpu.memory_space<vmem>>, vector<1x128xf32>
    %45 = vector.shape_cast %44 : vector<1x128xf32> to vector<1x1x128xf32>
    %46 = vector.broadcast %45 : vector<1x1x128xf32> to vector<8x24x128xf32>
    %47 = arith.addf %43, %46 : vector<8x24x128xf32>
    %cst_23 = arith.constant 0.000000e+00 : f32
    %48 = vector.broadcast %cst_23 : f32 to vector<8x24x128xf32>
    %49 = arith.maximumf %47, %48 : vector<8x24x128xf32>
    %50 = tpu.iota {dimensions = array<i32: 0>} : vector<8x24x1xi32>
    %51 = vector.broadcast %38 : i32 to vector<8x24x1xi32>
    %52 = arith.addi %51, %50 : vector<8x24x1xi32>
    %53 = tpu.iota {dimensions = array<i32: 1>} : vector<8x24x1xi32>
    %c1_i32_24 = arith.constant 1 : i32
    %54 = vector.broadcast %c1_i32_24 : i32 to vector<8x24x1xi32>
    %55 = arith.cmpi sge, %52, %54 : vector<8x24x1xi32>
    %c17_i32_25 = arith.constant 17 : i32
    %56 = vector.broadcast %c17_i32_25 : i32 to vector<8x24x1xi32>
    %57 = arith.cmpi slt, %52, %56 : vector<8x24x1xi32>
    %58 = arith.andi %55, %57 : vector<8x24x1xi1>
    %c1_i32_26 = arith.constant 1 : i32
    %59 = vector.broadcast %c1_i32_26 : i32 to vector<8x24x1xi32>
    %60 = arith.cmpi sge, %53, %59 : vector<8x24x1xi32>
    %c17_i32_27 = arith.constant 17 : i32
    %61 = vector.broadcast %c17_i32_27 : i32 to vector<8x24x1xi32>
    %62 = arith.cmpi slt, %53, %61 : vector<8x24x1xi32>
    %63 = arith.andi %60, %62 : vector<8x24x1xi1>
    %64 = arith.andi %58, %63 : vector<8x24x1xi1>
    %cst_28 = arith.constant 0.000000e+00 : f32
    %65 = vector.shape_cast %64 : vector<8x24x1xi1> to vector<8x24x1xi1>
    %66 = vector.broadcast %65 : vector<8x24x1xi1> to vector<8x24x128xi1>
    %67 = vector.broadcast %cst_28 : f32 to vector<8x24x128xf32>
    %68 = arith.select %66, %49, %67 : vector<8x24x128xi1>, vector<8x24x128xf32>
    %69 = arith.truncf %68 : vector<8x24x128xf32> to vector<8x24x128xbf16>
    %c16 = arith.constant 16 : index
    %c0_29 = arith.constant 0 : index
    %c0_30 = arith.constant 0 : index
    %70 = vector.load %arg9[%c16, %c0_29, %c0_30] : memref<24x24x128xbf16, #tpu.memory_space<vmem>>, vector<8x24x128xbf16>
    tpu.vector_store %arg9[%c16, %c0_29, %c0_30], %69 {strides = array<i32>} : memref<24x24x128xbf16, #tpu.memory_space<vmem>>, vector<8x24x128xbf16>,
    %c0_31 = arith.constant 0 : index
    %c0_32 = arith.constant 0 : index
    %c0_33 = arith.constant 0 : index
    %71 = vector.load %arg9[%c0_31, %c0_32, %c0_33] : memref<24x24x128xbf16, #tpu.memory_space<vmem>>, vector<16x24x128xbf16>
    %72 = vector.extract_strided_slice %71 {offsets = [0, 0, 0], sizes = [16, 16, 128], strides = [1, 1, 1]} : vector<16x24x128xbf16> to vector<16x16x128xbf16>
    %73 = vector.extract_strided_slice %71 {offsets = [0, 1, 0], sizes = [16, 16, 128], strides = [1, 1, 1]} : vector<16x24x128xbf16> to vector<16x16x128xbf16>
    %74 = vector.extract_strided_slice %71 {offsets = [0, 2, 0], sizes = [16, 16, 128], strides = [1, 1, 1]} : vector<16x24x128xbf16> to vector<16x16x128xbf16>
    %75 = tpu.concatenate %72, %73, %74 in 2 : vector<16x16x128xbf16>, vector<16x16x128xbf16>, vector<16x16x128xbf16> -> vector<16x16x384xbf16>
    %76 = vector.shape_cast %75 : vector<16x16x384xbf16> to vector<256x384xbf16>
    %c0_34 = arith.constant 0 : index
    %c0_35 = arith.constant 0 : index
    %c0_36 = arith.constant 0 : index
    %77 = vector.load %arg4[%c0_34, %c0_35, %c0_36] : memref<3x384x128xbf16, #tpu.memory_space<vmem>>, vector<1x384x128xbf16>
    %78 = vector.shape_cast %77 : vector<1x384x128xbf16> to vector<384x128xbf16>
    %cst_37 = arith.constant dense<0.000000e+00> : vector<256x128xf32>
    %79 = tpu.matmul %76, %78, %cst_37 {dimension_numbers = #tpu.dot_dimension_numbers<[1], [0], [0], [1], [0, 0, 1, 1], [], []>} : vector<256x384xbf16>, vector<384x128xbf16>, vector<256x128xf32> -> vector<256x128xf32>
    %c1 = arith.constant 1 : index
    %c0_38 = arith.constant 0 : index
    %c0_39 = arith.constant 0 : index
    %80 = vector.load %arg9[%c1, %c0_38, %c0_39] : memref<24x24x128xbf16, #tpu.memory_space<vmem>>, vector<16x24x128xbf16>
    %81 = vector.extract_strided_slice %80 {offsets = [0, 0, 0], sizes = [16, 16, 128], strides = [1, 1, 1]} : vector<16x24x128xbf16> to vector<16x16x128xbf16>
    %82 = vector.extract_strided_slice %80 {offsets = [0, 1, 0], sizes = [16, 16, 128], strides = [1, 1, 1]} : vector<16x24x128xbf16> to vector<16x16x128xbf16>
    %83 = vector.extract_strided_slice %80 {offsets = [0, 2, 0], sizes = [16, 16, 128], strides = [1, 1, 1]} : vector<16x24x128xbf16> to vector<16x16x128xbf16>
    %84 = tpu.concatenate %81, %82, %83 in 2 : vector<16x16x128xbf16>, vector<16x16x128xbf16>, vector<16x16x128xbf16> -> vector<16x16x384xbf16>
    %85 = vector.shape_cast %84 : vector<16x16x384xbf16> to vector<256x384xbf16>
    %c1_40 = arith.constant 1 : index
    %c0_41 = arith.constant 0 : index
    %c0_42 = arith.constant 0 : index
    %86 = vector.load %arg4[%c1_40, %c0_41, %c0_42] : memref<3x384x128xbf16, #tpu.memory_space<vmem>>, vector<1x384x128xbf16>
    %87 = vector.shape_cast %86 : vector<1x384x128xbf16> to vector<384x128xbf16>
    %cst_43 = arith.constant dense<0.000000e+00> : vector<256x128xf32>
    %88 = tpu.matmul %85, %87, %cst_43 {dimension_numbers = #tpu.dot_dimension_numbers<[1], [0], [0], [1], [0, 0, 1, 1], [], []>} : vector<256x384xbf16>, vector<384x128xbf16>, vector<256x128xf32> -> vector<256x128xf32>
    %89 = arith.addf %79, %88 : vector<256x128xf32>
    %c2 = arith.constant 2 : index
    %c0_44 = arith.constant 0 : index
    %c0_45 = arith.constant 0 : index
    %90 = vector.load %arg9[%c2, %c0_44, %c0_45] : memref<24x24x128xbf16, #tpu.memory_space<vmem>>, vector<16x24x128xbf16>
    %91 = vector.extract_strided_slice %90 {offsets = [0, 0, 0], sizes = [16, 16, 128], strides = [1, 1, 1]} : vector<16x24x128xbf16> to vector<16x16x128xbf16>
    %92 = vector.extract_strided_slice %90 {offsets = [0, 1, 0], sizes = [16, 16, 128], strides = [1, 1, 1]} : vector<16x24x128xbf16> to vector<16x16x128xbf16>
    %93 = vector.extract_strided_slice %90 {offsets = [0, 2, 0], sizes = [16, 16, 128], strides = [1, 1, 1]} : vector<16x24x128xbf16> to vector<16x16x128xbf16>
    %94 = tpu.concatenate %91, %92, %93 in 2 : vector<16x16x128xbf16>, vector<16x16x128xbf16>, vector<16x16x128xbf16> -> vector<16x16x384xbf16>
    %95 = vector.shape_cast %94 : vector<16x16x384xbf16> to vector<256x384xbf16>
    %c2_46 = arith.constant 2 : index
    %c0_47 = arith.constant 0 : index
    %c0_48 = arith.constant 0 : index
    %96 = vector.load %arg4[%c2_46, %c0_47, %c0_48] : memref<3x384x128xbf16, #tpu.memory_space<vmem>>, vector<1x384x128xbf16>
    %97 = vector.shape_cast %96 : vector<1x384x128xbf16> to vector<384x128xbf16>
    %cst_49 = arith.constant dense<0.000000e+00> : vector<256x128xf32>
    %98 = tpu.matmul %95, %97, %cst_49 {dimension_numbers = #tpu.dot_dimension_numbers<[1], [0], [0], [1], [0, 0, 1, 1], [], []>} : vector<256x384xbf16>, vector<384x128xbf16>, vector<256x128xf32> -> vector<256x128xf32>
    %99 = arith.addf %89, %98 : vector<256x128xf32>
    %100 = vector.shape_cast %99 : vector<256x128xf32> to vector<1x16x16x128xf32>
    %101 = arith.truncf %100 : vector<1x16x16x128xf32> to vector<1x16x16x128xbf16>
    %c0_50 = arith.constant 0 : index
    %c0_51 = arith.constant 0 : index
    %c0_52 = arith.constant 0 : index
    %c0_53 = arith.constant 0 : index
    %102 = vector.load %arg7[%c0_50, %c0_51, %c0_52, %c0_53] : memref<1x16x16x128xbf16, #tpu.memory_space<vmem>>, vector<1x16x16x128xbf16>
    tpu.vector_store %arg7[%c0_50, %c0_51, %c0_52, %c0_53], %101 {strides = array<i32>} : memref<1x16x16x128xbf16, #tpu.memory_space<vmem>>, vector<1x16x16x128xbf16>,
    %cst_54 = arith.constant dense<0.000000e+00> : vector<128xf32>
    %103 = vector.multi_reduction <add>, %99, %cst_54 [0] : vector<256x128xf32> to vector<128xf32>
    %104 = vector.shape_cast %103 : vector<128xf32> to vector<1x128xf32>
    %105 = arith.mulf %99, %99 : vector<256x128xf32>
    %cst_55 = arith.constant dense<0.000000e+00> : vector<128xf32>
    %106 = vector.multi_reduction <add>, %105, %cst_55 [0] : vector<256x128xf32> to vector<128xf32>
    %107 = vector.shape_cast %106 : vector<128xf32> to vector<1x128xf32>
    %108 = tpu.concatenate %104, %107 in 0 : vector<1x128xf32>, vector<1x128xf32> -> vector<2x128xf32>
    %109 = vector.shape_cast %108 : vector<2x128xf32> to vector<1x1x2x128xf32>
    %c0_56 = arith.constant 0 : index
    %c0_57 = arith.constant 0 : index
    %c0_58 = arith.constant 0 : index
    %c0_59 = arith.constant 0 : index
    %110 = vector.load %arg8[%c0_56, %c0_57, %c0_58, %c0_59] : memref<1x1x2x128xf32, #tpu.memory_space<vmem>>, vector<1x1x2x128xf32>
    tpu.vector_store %arg8[%c0_56, %c0_57, %c0_58, %c0_59], %109 {strides = array<i32>} : memref<1x1x2x128xf32, #tpu.memory_space<vmem>>, vector<1x1x2x128xf32>,
    return
  }
  func.func @transform_0(%arg0: i32, %arg1: i32) -> (i32, i32, i32, i32) {
    %c0_i32 = arith.constant 0 : i32
    %c0_i32_0 = arith.constant 0 : i32
    %c0_i32_1 = arith.constant 0 : i32
    return %arg0, %arg1, %c0_i32, %c0_i32_0 : i32, i32, i32, i32
  }
  func.func @transform_1(%arg0: i32, %arg1: i32) -> (i32, i32, i32, i32) {
    %c1_i32 = arith.constant 1 : i32
    %0 = arith.addi %arg1, %c1_i32 : i32
    %c2_i32 = arith.constant 2 : i32
    %1 = arith.muli %0, %c2_i32 : i32
    %c0_i32 = arith.constant 0 : i32
    %c0_i32_0 = arith.constant 0 : i32
    %c0_i32_1 = arith.constant 0 : i32
    return %arg0, %1, %c0_i32, %c0_i32_0 : i32, i32, i32, i32
  }
  func.func @transform_2(%arg0: i32, %arg1: i32) -> (i32, i32, i32) {
    %c0_i32 = arith.constant 0 : i32
    %c0_i32_0 = arith.constant 0 : i32
    %c0_i32_1 = arith.constant 0 : i32
    %c0_i32_2 = arith.constant 0 : i32
    return %c0_i32, %c0_i32_0, %c0_i32_1 : i32, i32, i32
  }
  func.func @transform_3(%arg0: i32, %arg1: i32) -> (i32, i32) {
    %c0_i32 = arith.constant 0 : i32
    %c0_i32_0 = arith.constant 0 : i32
    %c0_i32_1 = arith.constant 0 : i32
    return %c0_i32, %c0_i32_0 : i32, i32
  }
  func.func @transform_4(%arg0: i32, %arg1: i32) -> (i32, i32) {
    %c0_i32 = arith.constant 0 : i32
    %c0_i32_0 = arith.constant 0 : i32
    %c0_i32_1 = arith.constant 0 : i32
    return %c0_i32, %c0_i32_0 : i32, i32
  }
  func.func @transform_5(%arg0: i32, %arg1: i32) -> (i32, i32, i32, i32) {
    %c0_i32 = arith.constant 0 : i32
    %c0_i32_0 = arith.constant 0 : i32
    %c0_i32_1 = arith.constant 0 : i32
    return %arg0, %arg1, %c0_i32, %c0_i32_0 : i32, i32, i32, i32
  }
  func.func @transform_6(%arg0: i32, %arg1: i32) -> (i32, i32, i32, i32) {
    %c0_i32 = arith.constant 0 : i32
    %c0_i32_0 = arith.constant 0 : i32
    %c0_i32_1 = arith.constant 0 : i32
    return %arg0, %arg1, %c0_i32, %c0_i32_0 : i32, i32, i32, i32
  }
}

</mosaic_0001>

<llo_original>
// kernel: unet_block_forward.5
$region0: #{unet_block_forward.5}
  #allocation0 [shape = 'u32[]', space=smem, size = 0x4, offset = 0x4, fixed_abs, tag = 'smem constant byte address 0x4 - core index']
  #allocation1 [shape = 'u32[72,128]{1,0:T(1,128)}', space=vmem, size = 0x9000, scoped, tag = 'internal scratch']
  %s0 = inlined_call_operand.vmem [shape: bf16[2,16,16,128], index: 0, kind: input, shape index: {}]
  %s1 = inlined_call_operand.vmem [shape: f32[1,128], index: 1, kind: input, shape index: {}]
  %s2 = inlined_call_operand.vmem [shape: f32[1,128], index: 2, kind: input, shape index: {}]
  %s3 = inlined_call_operand.vmem [shape: bf16[2,16,16,128], index: 3, kind: output, shape index: {}]
  %s4 = sld [smem:[#allocation0]]
  $region45: #{unet_block_forward.5} parent=0
    _
  %s6 = ssub.s32 1, %s4
  %s7 = scalar_select 0, %s6, %s4
  loop: start=0, step=1, limit=4
  $region2: #{unet_block_forward.5} parent=0 // loop_pre_header
    _
  $region3: #{unet_block_forward.5} parent=0 // loop_header
    %s9 = sphi 0, %s13
    %p10 = scmp.ge.s32.totalorder %s9, 4
    %s16 = sphi 0, %s28
    %s17 = sphi 0, %s24
    %s18 = sphi 0, %s16
    %s19 = sphi 0, %s17
    %s20 = sphi 0, %s18
    %s21 = sphi 0, %s19
    %s33 = sphi 0, %s35
    %s36 = sphi 0, %s33
    %s37 = sphi 0, %s36
    %s53 = sphi 0, %s37
    %s57 = sphi 0, %s57
    %s59 = sphi 0, %s57
    %s60 = sphi 0, %s59
    %s74 = sphi 0, %s60
    %s78 = sphi 0, %s78
    %s80 = sphi 0, %s78
    %s81 = sphi 0, %s80
    %s95 = sphi 0, %s81
    %s103 = sphi 0, %s105
    %s106 = sphi 0, %s103
    %s107 = sphi 0, %s106
    %s123 = sphi 0, %s107
  $region4: #{unet_block_forward.5} parent=0 // loop_header_branch
    %12 = sbr.rel (%p10) target = $region8
  $region5: #{unet_block_forward.5} parent=0 // loop_body
    %s14 = ssub.s32 %s9, 1
    %s15 = ssub.s32 %s9, 2
    %s22 = sadd.s32 1, %s17
    %p23 = scmp.ge.s32.totalorder %s22, 1
    %s24 = scalar_select %p23, 0, %s22
    %s25 = sadd.s32 1, %s16
    %s26 = scalar_select %p23, %s25, %s16
    %p27 = scmp.ge.s32.totalorder %s26, 2
    %s28 = scalar_select %p27, 0, %s26
    %s29 = ssub.s32 %s16, %s28
    %s30 = ssub.s32 %s17, %s24
    %s31 = sor.u32 %s29, %s30
    %p32 = scmp.eq.s32.totalorder %s31, 0
    %s34 = sadd.s32 %s33, 1
    %s35 = scalar_select %p32, %s33, %s34
    %p38 = pneg %p32
    %p39 = scmp.eq.s32.totalorder %s9, 1
    %p40 = por %p38, %p39
    %p41 = scmp.ne.s32.totalorder %s33, %s36
    %p42 = scmp.eq.s32.totalorder %s9, 0
    %p43 = por %p41, %p42
    %p44 = scmp.ne.s32.totalorder %s33, %s36
    %p45 = scmp.eq.s32.totalorder %s14, 1
    %p46 = por %p44, %p45
    %p47 = scmp.ne.s32.totalorder %s36, %s37
    %p48 = scmp.eq.s32.totalorder %s14, 0
    %p49 = por %p47, %p48
    %p50 = scmp.ne.s32.totalorder %s36, %s37
    %p51 = scmp.eq.s32.totalorder %s15, 1
    %p52 = por %p50, %p51
    %p54 = scmp.ne.s32.totalorder %s37, %s53
    %p55 = scmp.eq.s32.totalorder %s15, 0
    %p56 = por %p54, %p55
    %s58 = sadd.s32 %s57, 1
    %p61 = scmp.eq.s32.totalorder %s9, 1
    %p62 = scmp.ne.s32.totalorder %s57, %s59
    %p63 = scmp.eq.s32.totalorder %s9, 0
    %p64 = por %p62, %p63
    %p65 = scmp.ne.s32.totalorder %s57, %s59
    %p66 = scmp.eq.s32.totalorder %s14, 1
    %p67 = por %p65, %p66
    %p68 = scmp.ne.s32.totalorder %s59, %s60
    %p69 = scmp.eq.s32.totalorder %s14, 0
    %p70 = por %p68, %p69
    %p71 = scmp.ne.s32.totalorder %s59, %s60
    %p72 = scmp.eq.s32.totalorder %s15, 1
    %p73 = por %p71, %p72
    %p75 = scmp.ne.s32.totalorder %s60, %s74
    %p76 = scmp.eq.s32.totalorder %s15, 0
    %p77 = por %p75, %p76
    %s79 = sadd.s32 %s78, 1
    %p82 = scmp.eq.s32.totalorder %s9, 1
    %p83 = scmp.ne.s32.totalorder %s78, %s80
    %p84 = scmp.eq.s32.totalorder %s9, 0
    %p85 = por %p83, %p84
    %p86 = scmp.ne.s32.totalorder %s78, %s80
    %p87 = scmp.eq.s32.totalorder %s14, 1
    %p88 = por %p86, %p87
    %p89 = scmp.ne.s32.totalorder %s80, %s81
    %p90 = scmp.eq.s32.totalorder %s14, 0
    %p91 = por %p89, %p90
    %p92 = scmp.ne.s32.totalorder %s80, %s81
    %p93 = scmp.eq.s32.totalorder %s15, 1
    %p94 = por %p92, %p93
    %p96 = scmp.ne.s32.totalorder %s81, %s95
    %p97 = scmp.eq.s32.totalorder %s15, 0
    %p98 = por %p96, %p97
    %s99 = ssub.s32 %s16, %s28
    %s100 = ssub.s32 %s17, %s24
    %s101 = sor.u32 %s99, %s100
    %p102 = scmp.eq.s32.totalorder %s101, 0
    %s104 = sadd.s32 %s103, 1
    %s105 = scalar_select %p102, %s103, %s104
    %p108 = pneg %p102
    %p109 = scmp.eq.s32.totalorder %s9, 1
    %p110 = por %p108, %p109
    %p111 = scmp.ne.s32.totalorder %s103, %s106
    %p112 = scmp.eq.s32.totalorder %s9, 0
    %p113 = por %p111, %p112
    %p114 = scmp.ne.s32.totalorder %s103, %s106
    %p115 = scmp.eq.s32.totalorder %s14, 1
    %p116 = por %p114, %p115
    %p117 = scmp.ne.s32.totalorder %s106, %s107
    %p118 = scmp.eq.s32.totalorder %s14, 0
    %p119 = por %p117, %p118
    %p120 = scmp.ne.s32.totalorder %s106, %s107
    %p121 = scmp.eq.s32.totalorder %s15, 1
    %p122 = por %p120, %p121
    %p124 = scmp.ne.s32.totalorder %s107, %s123
    %p125 = scmp.eq.s32.totalorder %s15, 0
    %p126 = por %p124, %p125
    %p127 = scmp.le.s32.totalorder 1, %s9
    %p128 = scmp.lt.s32.totalorder %s9, 3
    %p129 = pnand %p127, %p128
    %p130 = pneg %p129
    // Predicated region
    $region9: #{unet_block_forward.5} parent=5 // pred_check
      _
    $region10: #{unet_block_forward.5} parent=5 // pred_check_branch
      %132 = sbr.rel (%p129) target = $region12
    $region11: #{unet_block_forward.5} parent=5 // pred_region
      %s133 = ssub.s32 %s9, 1
      // Predicated region
      $region13: #{unet_block_forward.5} parent=11 // pred_check
        %p134 = pneg %p70
      $region14: #{unet_block_forward.5} parent=11 // pred_check_branch
        %136 = sbr.rel (%p134) target = $region16
      $region15: #{unet_block_forward.5} parent=11 // pred_region
        _
      $region16: #{unet_block_forward.5} parent=11 // pred_fallthru
        _
      // Predicated region
      $region17: #{unet_block_forward.5} parent=11 // pred_check
        %p137 = pneg %p91
      $region18: #{unet_block_forward.5} parent=11 // pred_check_branch
        %139 = sbr.rel (%p137) target = $region20
      $region19: #{unet_block_forward.5} parent=11 // pred_region
        _
      $region20: #{unet_block_forward.5} parent=11 // pred_fallthru
        _
    $region12: #{unet_block_forward.5} parent=5 // pred_fallthru
      _
    %p140 = scmp.lt.s32.totalorder %s9, 2
    // Predicated region
    $region21: #{unet_block_forward.5} parent=5 // pred_check
      %p141 = pneg %p140
    $region22: #{unet_block_forward.5} parent=5 // pred_check_branch
      %143 = sbr.rel (%p141) target = $region24
    $region23: #{unet_block_forward.5} parent=5 // pred_region
      // Predicated region
      $region25: #{unet_block_forward.5} parent=23 // pred_check
        %p144 = pneg %p43
      $region26: #{unet_block_forward.5} parent=23 // pred_check_branch
        %146 = sbr.rel (%p144) target = $region28
      $region27: #{unet_block_forward.5} parent=23 // pred_region
        %s147 = smul.u32 16, %s17
        %p148 = scmp.lt.s32.totalorder %s16, 1
        %s149 = scalar_select %p148, %s16, 1
        %p150 = scmp.lt.s32.totalorder %s147, 15
        %s151 = scalar_select %p150, %s147, 15
        %s152 = smul.addr %s151, 2
        %s153 = smul.addr %s149, 32
        %s154 = sadd.s32 %s152, %s153
        %s155 = smul.addr %s154, 4
        %s156 = scalar_lea.vmem %s0, %s155
        %s157 = smul.u32 16, %s17
      $region28: #{unet_block_forward.5} parent=23 // pred_fallthru
        _
    $region24: #{unet_block_forward.5} parent=5 // pred_fallthru
      _
    %p158 = scmp.le.s32.totalorder 1, %s9
    %p159 = scmp.lt.s32.totalorder %s9, 3
    %p160 = pnand %p158, %p159
    %p161 = pneg %p160
    // Predicated region
    $region29: #{unet_block_forward.5} parent=5 // pred_check
      _
    $region30: #{unet_block_forward.5} parent=5 // pred_check_branch
      %163 = sbr.rel (%p160) target = $region32
    $region31: #{unet_block_forward.5} parent=5 // pred_region
      %s164 = ssub.s32 %s9, 1
      %s165 = smul.u32 16, %s19
      %p166 = scmp.lt.s32.totalorder %s18, 1
      %s167 = scalar_select %p166, %s18, 1
      %p168 = scmp.lt.s32.totalorder %s165, 15
      %s169 = scalar_select %p168, %s165, 15
      %s170 = smul.addr %s169, 2
      %s171 = smul.addr %s167, 32
      %s172 = sadd.s32 %s170, %s171
      %s173 = smul.addr %s172, 4
      %s174 = scalar_lea.vmem %s0, %s173
      %p175 = pneg %p49
      %p176 = pneg %p46
      %p177 = pneg %p70
      %p178 = pneg %p67
      %p179 = pneg %p91
      %p180 = pneg %p88
      %p181 = pneg %p119
      %p182 = pneg %p116
      %s183 = smul.u32 16, %s19
      %p184 = scmp.lt.s32.totalorder %s18, 1
      %s185 = scalar_select %p184, %s18, 1
      %p186 = scmp.lt.s32.totalorder %s183, 15
      %s187 = scalar_select %p186, %s183, 15
      %s188 = smul.addr %s187, 2
      %s189 = smul.addr %s185, 32
      %s190 = sadd.s32 %s188, %s189
      %s191 = smul.addr %s190, 4
      %s192 = scalar_lea.vmem %s3, %s191
      %s193 = smul.u32 16, %s19
      %p194 = scmp.lt.s32.totalorder %s18, 1
      %s195 = scalar_select %p194, %s18, 1
      %p196 = scmp.lt.s32.totalorder %s193, 15
      %s197 = scalar_select %p196, %s193, 15
      %s198 = smul.addr %s197, 2
      %s199 = smul.addr %s195, 32
      %s200 = sadd.s32 %s198, %s199
      %s201 = smul.addr %s200, 4
      %s202 = scalar_lea.vmem %s0, %s201
      %s203 = smul.u32 16, %s19
      %s204 = smul.u32 16, %s19
      %p205 = scmp.lt.s32.totalorder %s18, 1
      %s206 = scalar_select %p205, %s18, 1
      %p207 = scmp.lt.s32.totalorder %s204, 15
      %s208 = scalar_select %p207, %s204, 15
      %s209 = smul.addr %s208, 2
      %s210 = smul.addr %s206, 32
      %s211 = sadd.s32 %s209, %s210
      %s212 = smul.addr %s211, 4
      %s213 = scalar_lea.vmem %s3, %s212
      %s214 = smul.u32 16, %s19
      %v215 = vld [vmem:[%s202] sm:$0xf]
      %v216 = vld [vmem:[%s202 + $0x4] sm:$0xf]
      %v217 = vld [vmem:[%s202 + $0x8] sm:$0xf]
      %v218 = vld [vmem:[%s202 + $0xc] sm:$0xf]
      %v219 = vld [vmem:[%s202 + $0x10] sm:$0xf]
      %v220 = vld [vmem:[%s202 + $0x14] sm:$0xf]
      %v221 = vld [vmem:[%s202 + $0x18] sm:$0xf]
      %v222 = vld [vmem:[%s202 + $0x1c] sm:$0xf]
      %v223 = vld [vmem:[%s202 + $0x20] sm:$0xf]
      %v224 = vld [vmem:[%s202 + $0x24] sm:$0xf]
      %v225 = vld [vmem:[%s202 + $0x28] sm:$0xf]
      %v226 = vld [vmem:[%s202 + $0x2c] sm:$0xf]
      %v227 = vld [vmem:[%s202 + $0x30] sm:$0xf]
      %v228 = vld [vmem:[%s202 + $0x34] sm:$0xf]
      %v229 = vld [vmem:[%s202 + $0x38] sm:$0xf]
      %v230 = vld [vmem:[%s202 + $0x3c] sm:$0xf]
      %v231 = vld [vmem:[%s202 + $0x40] sm:$0xf]
      %v232 = vld [vmem:[%s202 + $0x44] sm:$0xf]
      %v233 = vld [vmem:[%s202 + $0x48] sm:$0xf]
      %v234 = vld [vmem:[%s202 + $0x4c] sm:$0xf]
      %v235 = vld [vmem:[%s202 + $0x50] sm:$0xf]
      %v236 = vld [vmem:[%s202 + $0x54] sm:$0xf]
      %v237 = vld [vmem:[%s202 + $0x58] sm:$0xf]
      %v238 = vld [vmem:[%s202 + $0x5c] sm:$0xf]
      %v239 = vld [vmem:[%s202 + $0x60] sm:$0xf]
      %v240 = vld [vmem:[%s202 + $0x64] sm:$0xf]
      %v241 = vld [vmem:[%s202 + $0x68] sm:$0xf]
      %v242 = vld [vmem:[%s202 + $0x6c] sm:$0xf]
      %v243 = vld [vmem:[%s202 + $0x70] sm:$0xf]
      %v244 = vld [vmem:[%s202 + $0x74] sm:$0xf]
      %v245 = vld [vmem:[%s202 + $0x78] sm:$0xf]
      %v246 = vld [vmem:[%s202 + $0x7c] sm:$0xf]
      %v247 = vunpack.c.l.bf16 %v215
      %v248 = vunpack.c.l.bf16 %v216
      %v249 = vunpack.c.l.bf16 %v217
      %v250 = vunpack.c.l.bf16 %v218
      %v251 = vunpack.c.l.bf16 %v219
      %v252 = vunpack.c.l.bf16 %v220
      %v253 = vunpack.c.l.bf16 %v221
      %v254 = vunpack.c.l.bf16 %v222
      %v255 = vunpack.c.l.bf16 %v223
      %v256 = vunpack.c.l.bf16 %v224
      %v257 = vunpack.c.l.bf16 %v225
      %v258 = vunpack.c.l.bf16 %v226
      %v259 = vunpack.c.l.bf16 %v227
      %v260 = vunpack.c.l.bf16 %v228
      %v261 = vunpack.c.l.bf16 %v229
      %v262 = vunpack.c.l.bf16 %v230
      %v263 = vunpack.c.l.bf16 %v231
      %v264 = vunpack.c.l.bf16 %v232
      %v265 = vunpack.c.l.bf16 %v233
      %v266 = vunpack.c.l.bf16 %v234
      %v267 = vunpack.c.l.bf16 %v235
      %v268 = vunpack.c.l.bf16 %v236
      %v269 = vunpack.c.l.bf16 %v237
      %v270 = vunpack.c.l.bf16 %v238
      %v271 = vunpack.c.l.bf16 %v239
      %v272 = vunpack.c.l.bf16 %v240
      %v273 = vunpack.c.l.bf16 %v241
      %v274 = vunpack.c.l.bf16 %v242
      %v275 = vunpack.c.l.bf16 %v243
      %v276 = vunpack.c.l.bf16 %v244
      %v277 = vunpack.c.l.bf16 %v245
      %v278 = vunpack.c.l.bf16 %v246
      %v279 = vld [vmem:[%s1] sm:$0x1]
      %v281 = vperm.slane %v279, 0
      %v283 = vmul.f32 %v247, %v281
      %v284 = vmul.f32 %v248, %v281
      %v285 = vmul.f32 %v249, %v281
      %v286 = vmul.f32 %v250, %v281
      %v287 = vmul.f32 %v251, %v281
      %v288 = vmul.f32 %v252, %v281
      %v289 = vmul.f32 %v253, %v281
      %v290 = vmul.f32 %v254, %v281
      %v291 = vmul.f32 %v255, %v281
      %v292 = vmul.f32 %v256, %v281
      %v293 = vmul.f32 %v257, %v281
      %v294 = vmul.f32 %v258, %v281
      %v295 = vmul.f32 %v259, %v281
      %v296 = vmul.f32 %v260, %v281
      %v297 = vmul.f32 %v261, %v281
      %v298 = vmul.f32 %v262, %v281
      %v299 = vmul.f32 %v263, %v281
      %v300 = vmul.f32 %v264, %v281
      %v301 = vmul.f32 %v265, %v281
      %v302 = vmul.f32 %v266, %v281
      %v303 = vmul.f32 %v267, %v281
      %v304 = vmul.f32 %v268, %v281
      %v305 = vmul.f32 %v269, %v281
      %v306 = vmul.f32 %v270, %v281
      %v307 = vmul.f32 %v271, %v281
      %v308 = vmul.f32 %v272, %v281
      %v309 = vmul.f32 %v273, %v281
      %v310 = vmul.f32 %v274, %v281
      %v311 = vmul.f32 %v275, %v281
      %v312 = vmul.f32 %v276, %v281
      %v313 = vmul.f32 %v277, %v281
      %v314 = vmul.f32 %v278, %v281
      %v315 = vld [vmem:[%s2] sm:$0x1]
      %v317 = vperm.slane %v315, 0
      %v319 = vadd.f32 %v283, %v317
      %v320 = vadd.f32 %v284, %v317
      %v321 = vadd.f32 %v285, %v317
      %v322 = vadd.f32 %v286, %v317
      %v323 = vadd.f32 %v287, %v317
      %v324 = vadd.f32 %v288, %v317
      %v325 = vadd.f32 %v289, %v317
      %v326 = vadd.f32 %v290, %v317
      %v327 = vadd.f32 %v291, %v317
      %v328 = vadd.f32 %v292, %v317
      %v329 = vadd.f32 %v293, %v317
      %v330 = vadd.f32 %v294, %v317
      %v331 = vadd.f32 %v295, %v317
      %v332 = vadd.f32 %v296, %v317
      %v333 = vadd.f32 %v297, %v317
      %v334 = vadd.f32 %v298, %v317
      %v335 = vadd.f32 %v299, %v317
      %v336 = vadd.f32 %v300, %v317
      %v337 = vadd.f32 %v301, %v317
      %v338 = vadd.f32 %v302, %v317
      %v339 = vadd.f32 %v303, %v317
      %v340 = vadd.f32 %v304, %v317
      %v341 = vadd.f32 %v305, %v317
      %v342 = vadd.f32 %v306, %v317
      %v343 = vadd.f32 %v307, %v317
      %v344 = vadd.f32 %v308, %v317
      %v345 = vadd.f32 %v309, %v317
      %v346 = vadd.f32 %v310, %v317
      %v347 = vadd.f32 %v311, %v317
      %v348 = vadd.f32 %v312, %v317
      %v349 = vadd.f32 %v313, %v317
      %v350 = vadd.f32 %v314, %v317
      %v351 = vmax.f32 %v319, 0.0
      %v352 = vmax.f32 %v320, 0.0
      %v353 = vmax.f32 %v321, 0.0
      %v354 = vmax.f32 %v322, 0.0
      %v355 = vmax.f32 %v323, 0.0
      %v356 = vmax.f32 %v324, 0.0
      %v357 = vmax.f32 %v325, 0.0
      %v358 = vmax.f32 %v326, 0.0
      %v359 = vmax.f32 %v327, 0.0
      %v360 = vmax.f32 %v328, 0.0
      %v361 = vmax.f32 %v329, 0.0
      %v362 = vmax.f32 %v330, 0.0
      %v363 = vmax.f32 %v331, 0.0
      %v364 = vmax.f32 %v332, 0.0
      %v365 = vmax.f32 %v333, 0.0
      %v366 = vmax.f32 %v334, 0.0
      %v367 = vmax.f32 %v335, 0.0
      %v368 = vmax.f32 %v336, 0.0
      %v369 = vmax.f32 %v337, 0.0
      %v370 = vmax.f32 %v338, 0.0
      %v371 = vmax.f32 %v339, 0.0
      %v372 = vmax.f32 %v340, 0.0
      %v373 = vmax.f32 %v341, 0.0
      %v374 = vmax.f32 %v342, 0.0
      %v375 = vmax.f32 %v343, 0.0
      %v376 = vmax.f32 %v344, 0.0
      %v377 = vmax.f32 %v345, 0.0
      %v378 = vmax.f32 %v346, 0.0
      %v379 = vmax.f32 %v347, 0.0
      %v380 = vmax.f32 %v348, 0.0
      %v381 = vmax.f32 %v349, 0.0
      %v382 = vmax.f32 %v350, 0.0
      %v383 = vpack.c.bf16 %v351, %v351
      %v384 = vpack.c.bf16 %v352, %v352
      %v385 = vpack.c.bf16 %v353, %v353
      %v386 = vpack.c.bf16 %v354, %v354
      %v387 = vpack.c.bf16 %v355, %v355
      %v388 = vpack.c.bf16 %v356, %v356
      %v389 = vpack.c.bf16 %v357, %v357
      %v390 = vpack.c.bf16 %v358, %v358
      %v391 = vpack.c.bf16 %v359, %v359
      %v392 = vpack.c.bf16 %v360, %v360
      %v393 = vpack.c.bf16 %v361, %v361
      %v394 = vpack.c.bf16 %v362, %v362
      %v395 = vpack.c.bf16 %v363, %v363
      %v396 = vpack.c.bf16 %v364, %v364
      %v397 = vpack.c.bf16 %v365, %v365
      %v398 = vpack.c.bf16 %v366, %v366
      %v399 = vpack.c.bf16 %v367, %v367
      %v400 = vpack.c.bf16 %v368, %v368
      %v401 = vpack.c.bf16 %v369, %v369
      %v402 = vpack.c.bf16 %v370, %v370
      %v403 = vpack.c.bf16 %v371, %v371
      %v404 = vpack.c.bf16 %v372, %v372
      %v405 = vpack.c.bf16 %v373, %v373
      %v406 = vpack.c.bf16 %v374, %v374
      %v407 = vpack.c.bf16 %v375, %v375
      %v408 = vpack.c.bf16 %v376, %v376
      %v409 = vpack.c.bf16 %v377, %v377
      %v410 = vpack.c.bf16 %v378, %v378
      %v411 = vpack.c.bf16 %v379, %v379
      %v412 = vpack.c.bf16 %v380, %v380
      %v413 = vpack.c.bf16 %v381, %v381
      %v414 = vpack.c.bf16 %v382, %v382
      %415 = vst [vmem:[%s213] sm:$0xf] %v383
      %416 = vst [vmem:[%s213 + $0x4] sm:$0xf] %v384
      %417 = vst [vmem:[%s213 + $0x8] sm:$0xf] %v385
      %418 = vst [vmem:[%s213 + $0xc] sm:$0xf] %v386
      %419 = vst [vmem:[%s213 + $0x10] sm:$0xf] %v387
      %420 = vst [vmem:[%s213 + $0x14] sm:$0xf] %v388
      %421 = vst [vmem:[%s213 + $0x18] sm:$0xf] %v389
      %422 = vst [vmem:[%s213 + $0x1c] sm:$0xf] %v390
      %423 = vst [vmem:[%s213 + $0x20] sm:$0xf] %v391
      %424 = vst [vmem:[%s213 + $0x24] sm:$0xf] %v392
      %425 = vst [vmem:[%s213 + $0x28] sm:$0xf] %v393
      %426 = vst [vmem:[%s213 + $0x2c] sm:$0xf] %v394
      %427 = vst [vmem:[%s213 + $0x30] sm:$0xf] %v395
      %428 = vst [vmem:[%s213 + $0x34] sm:$0xf] %v396
      %429 = vst [vmem:[%s213 + $0x38] sm:$0xf] %v397
      %430 = vst [vmem:[%s213 + $0x3c] sm:$0xf] %v398
      %431 = vst [vmem:[%s213 + $0x40] sm:$0xf] %v399
      %432 = vst [vmem:[%s213 + $0x44] sm:$0xf] %v400
      %433 = vst [vmem:[%s213 + $0x48] sm:$0xf] %v401
      %434 = vst [vmem:[%s213 + $0x4c] sm:$0xf] %v402
      %435 = vst [vmem:[%s213 + $0x50] sm:$0xf] %v403
      %436 = vst [vmem:[%s213 + $0x54] sm:$0xf] %v404
      %437 = vst [vmem:[%s213 + $0x58] sm:$0xf] %v405
      %438 = vst [vmem:[%s213 + $0x5c] sm:$0xf] %v406
      %439 = vst [vmem:[%s213 + $0x60] sm:$0xf] %v407
      %440 = vst [vmem:[%s213 + $0x64] sm:$0xf] %v408
      %441 = vst [vmem:[%s213 + $0x68] sm:$0xf] %v409
      %442 = vst [vmem:[%s213 + $0x6c] sm:$0xf] %v410
      %443 = vst [vmem:[%s213 + $0x70] sm:$0xf] %v411
      %444 = vst [vmem:[%s213 + $0x74] sm:$0xf] %v412
      %445 = vst [vmem:[%s213 + $0x78] sm:$0xf] %v413
      %446 = vst [vmem:[%s213 + $0x7c] sm:$0xf] %v414
      %s447 = smul.u32 16, %s19
      %p448 = scmp.lt.s32.totalorder %s18, 1
      %s449 = scalar_select %p448, %s18, 1
      %p450 = scmp.lt.s32.totalorder %s447, 15
      %s451 = scalar_select %p450, %s447, 15
      %s452 = smul.addr %s451, 2
      %s453 = smul.addr %s449, 32
      %s454 = sadd.s32 %s452, %s453
      %s455 = smul.addr %s454, 4
      %s456 = scalar_lea.vmem %s3, %s455
      // Predicated region
      $region33: #{unet_block_forward.5} parent=31 // pred_check
        %p457 = pneg %p116
      $region34: #{unet_block_forward.5} parent=31 // pred_check_branch
        %459 = sbr.rel (%p457) target = $region36
      $region35: #{unet_block_forward.5} parent=31 // pred_region
        %s460 = smul.u32 16, %s19
      $region36: #{unet_block_forward.5} parent=31 // pred_fallthru
        _
    $region32: #{unet_block_forward.5} parent=5 // pred_fallthru
      _
    %p461 = scmp.le.s32.totalorder 2, %s9
    // Predicated region
    $region37: #{unet_block_forward.5} parent=5 // pred_check
      %p462 = pneg %p461
    $region38: #{unet_block_forward.5} parent=5 // pred_check_branch
      %464 = sbr.rel (%p462) target = $region40
    $region39: #{unet_block_forward.5} parent=5 // pred_region
      %s465 = ssub.s32 %s9, 2
      // Predicated region
      $region41: #{unet_block_forward.5} parent=39 // pred_check
        %p466 = pneg %p122
      $region42: #{unet_block_forward.5} parent=39 // pred_check_branch
        %468 = sbr.rel (%p466) target = $region44
      $region43: #{unet_block_forward.5} parent=39 // pred_region
        %s469 = smul.u32 16, %s21
        %p470 = scmp.lt.s32.totalorder %s20, 1
        %s471 = scalar_select %p470, %s20, 1
        %p472 = scmp.lt.s32.totalorder %s469, 15
        %s473 = scalar_select %p472, %s469, 15
        %s474 = smul.addr %s473, 2
        %s475 = smul.addr %s471, 32
        %s476 = sadd.s32 %s474, %s475
        %s477 = smul.addr %s476, 4
        %s478 = scalar_lea.vmem %s3, %s477
      $region44: #{unet_block_forward.5} parent=39 // pred_fallthru
        _
    $region40: #{unet_block_forward.5} parent=5 // pred_fallthru
      _
  $region6: #{unet_block_forward.5} parent=0 // loop_footer
    %s13 = sadd.s32 1, %s9
  $region7: #{unet_block_forward.5} parent=0 // loop_footer_branch
    %8 = sbr.rel target = $region3
  $region8: #{unet_block_forward.5} parent=0 // loop_exit
    _

// kernel: unet_block_forward.3
$region0: #{unet_block_forward.3}
  #allocation0 [shape = 'u32[]', space=smem, size = 0x4, offset = 0x4, fixed_abs, tag = 'smem constant byte address 0x4 - core index']
  #allocation1 [shape = 'u32[72,128]{1,0:T(1,128)}', space=vmem, size = 0x9000, scoped, tag = 'internal scratch']
  #allocation2 [shape = 'bf16[24,24,128]{2,1,0:T(8,128)(2,1)}', space=vmem, size = 0x24000, scoped, tag = 'scratch operand']
  %s0 = inlined_call_operand.vmem [shape: bf16[2,32,24,128], index: 0, kind: input, shape index: {}, may-alias: {0,1}]
  %s1 = inlined_call_operand.vmem [shape: bf16[2,32,24,128], index: 1, kind: input, shape index: {}, may-alias: {0,1}]
  %s2 = inlined_call_operand.vmem [shape: bf16[3,384,128], index: 2, kind: input, shape index: {}]
  %s3 = inlined_call_operand.vmem [shape: f32[1,128], index: 3, kind: input, shape index: {}]
  %s4 = inlined_call_operand.vmem [shape: f32[1,128], index: 4, kind: input, shape index: {}]
  %s5 = inlined_call_operand.vmem [shape: bf16[2,16,16,128], index: 5, kind: output, shape index: {0}]
  %s6 = inlined_call_operand.vmem [shape: f32[2,1,2,128], index: 6, kind: output, shape index: {1}]
  %7 = xla_tuple %s5, %s6
  %s8 = sld [smem:[#allocation0]]
  $region61: #{unet_block_forward.3} parent=0
    _
  %s10 = ssub.s32 1, %s8
  %s11 = scalar_select 0, %s10, %s8
  loop: start=0, step=1, limit=4
  $region2: #{unet_block_forward.3} parent=0 // loop_pre_header
    _
  $region3: #{unet_block_forward.3} parent=0 // loop_header
    %s13 = sphi 0, %s17
    %p14 = scmp.ge.s32.totalorder %s13, 4
    %s20 = sphi 0, %s32
    %s21 = sphi 0, %s28
    %s22 = sphi 0, %s20
    %s23 = sphi 0, %s21
    %s24 = sphi 0, %s22
    %s25 = sphi 0, %s23
    %s37 = sphi 0, %s39
    %s40 = sphi 0, %s37
    %s41 = sphi 0, %s40
    %s57 = sphi 0, %s41
    %s69 = sphi 0, %s71
    %s72 = sphi 0, %s69
    %s73 = sphi 0, %s72
    %s89 = sphi 0, %s73
    %s93 = sphi 0, %s93
    %s95 = sphi 0, %s93
    %s96 = sphi 0, %s95
    %s110 = sphi 0, %s96
    %s114 = sphi 0, %s114
    %s116 = sphi 0, %s114
    %s117 = sphi 0, %s116
    %s131 = sphi 0, %s117
    %s135 = sphi 0, %s135
    %s137 = sphi 0, %s135
    %s138 = sphi 0, %s137
    %s152 = sphi 0, %s138
    %s160 = sphi 0, %s162
    %s163 = sphi 0, %s160
    %s164 = sphi 0, %s163
    %s180 = sphi 0, %s164
    %s188 = sphi 0, %s190
    %s191 = sphi 0, %s188
    %s192 = sphi 0, %s191
    %s208 = sphi 0, %s192
  $region4: #{unet_block_forward.3} parent=0 // loop_header_branch
    %16 = sbr.rel (%p14) target = $region8
  $region5: #{unet_block_forward.3} parent=0 // loop_body
    %s18 = ssub.s32 %s13, 1
    %s19 = ssub.s32 %s13, 2
    %s26 = sadd.s32 1, %s21
    %p27 = scmp.ge.s32.totalorder %s26, 1
    %s28 = scalar_select %p27, 0, %s26
    %s29 = sadd.s32 1, %s20
    %s30 = scalar_select %p27, %s29, %s20
    %p31 = scmp.ge.s32.totalorder %s30, 2
    %s32 = scalar_select %p31, 0, %s30
    %s33 = ssub.s32 %s20, %s32
    %s34 = ssub.s32 %s21, %s28
    %s35 = sor.u32 %s33, %s34
    %p36 = scmp.eq.s32.totalorder %s35, 0
    %s38 = sadd.s32 %s37, 1
    %s39 = scalar_select %p36, %s37, %s38
    %p42 = pneg %p36
    %p43 = scmp.eq.s32.totalorder %s13, 1
    %p44 = por %p42, %p43
    %p45 = scmp.ne.s32.totalorder %s37, %s40
    %p46 = scmp.eq.s32.totalorder %s13, 0
    %p47 = por %p45, %p46
    %p48 = scmp.ne.s32.totalorder %s37, %s40
    %p49 = scmp.eq.s32.totalorder %s18, 1
    %p50 = por %p48, %p49
    %p51 = scmp.ne.s32.totalorder %s40, %s41
    %p52 = scmp.eq.s32.totalorder %s18, 0
    %p53 = por %p51, %p52
    %p54 = scmp.ne.s32.totalorder %s40, %s41
    %p55 = scmp.eq.s32.totalorder %s19, 1
    %p56 = por %p54, %p55
    %p58 = scmp.ne.s32.totalorder %s41, %s57
    %p59 = scmp.eq.s32.totalorder %s19, 0
    %p60 = por %p58, %p59
    %s61 = sadd.s32 %s21, 1
    %s62 = smul.u32 %s61, 2
    %s63 = sadd.s32 %s28, 1
    %s64 = smul.u32 %s63, 2
    %s65 = ssub.s32 %s20, %s32
    %s66 = ssub.s32 %s62, %s64
    %s67 = sor.u32 %s65, %s66
    %p68 = scmp.eq.s32.totalorder %s67, 0
    %s70 = sadd.s32 %s69, 1
    %s71 = scalar_select %p68, %s69, %s70
    %p74 = pneg %p68
    %p75 = scmp.eq.s32.totalorder %s13, 1
    %p76 = por %p74, %p75
    %p77 = scmp.ne.s32.totalorder %s69, %s72
    %p78 = scmp.eq.s32.totalorder %s13, 0
    %p79 = por %p77, %p78
    %p80 = scmp.ne.s32.totalorder %s69, %s72
    %p81 = scmp.eq.s32.totalorder %s18, 1
    %p82 = por %p80, %p81
    %p83 = scmp.ne.s32.totalorder %s72, %s73
    %p84 = scmp.eq.s32.totalorder %s18, 0
    %p85 = por %p83, %p84
    %p86 = scmp.ne.s32.totalorder %s72, %s73
    %p87 = scmp.eq.s32.totalorder %s19, 1
    %p88 = por %p86, %p87
    %p90 = scmp.ne.s32.totalorder %s73, %s89
    %p91 = scmp.eq.s32.totalorder %s19, 0
    %p92 = por %p90, %p91
    %s94 = sadd.s32 %s93, 1
    %p97 = scmp.eq.s32.totalorder %s13, 1
    %p98 = scmp.ne.s32.totalorder %s93, %s95
    %p99 = scmp.eq.s32.totalorder %s13, 0
    %p100 = por %p98, %p99
    %p101 = scmp.ne.s32.totalorder %s93, %s95
    %p102 = scmp.eq.s32.totalorder %s18, 1
    %p103 = por %p101, %p102
    %p104 = scmp.ne.s32.totalorder %s95, %s96
    %p105 = scmp.eq.s32.totalorder %s18, 0
    %p106 = por %p104, %p105
    %p107 = scmp.ne.s32.totalorder %s95, %s96
    %p108 = scmp.eq.s32.totalorder %s19, 1
    %p109 = por %p107, %p108
    %p111 = scmp.ne.s32.totalorder %s96, %s110
    %p112 = scmp.eq.s32.totalorder %s19, 0
    %p113 = por %p111, %p112
    %s115 = sadd.s32 %s114, 1
    %p118 = scmp.eq.s32.totalorder %s13, 1
    %p119 = scmp.ne.s32.totalorder %s114, %s116
    %p120 = scmp.eq.s32.totalorder %s13, 0
    %p121 = por %p119, %p120
    %p122 = scmp.ne.s32.totalorder %s114, %s116
    %p123 = scmp.eq.s32.totalorder %s18, 1
    %p124 = por %p122, %p123
    %p125 = scmp.ne.s32.totalorder %s116, %s117
    %p126 = scmp.eq.s32.totalorder %s18, 0
    %p127 = por %p125, %p126
    %p128 = scmp.ne.s32.totalorder %s116, %s117
    %p129 = scmp.eq.s32.totalorder %s19, 1
    %p130 = por %p128, %p129
    %p132 = scmp.ne.s32.totalorder %s117, %s131
    %p133 = scmp.eq.s32.totalorder %s19, 0
    %p134 = por %p132, %p133
    %s136 = sadd.s32 %s135, 1
    %p139 = scmp.eq.s32.totalorder %s13, 1
    %p140 = scmp.ne.s32.totalorder %s135, %s137
    %p141 = scmp.eq.s32.totalorder %s13, 0
    %p142 = por %p140, %p141
    %p143 = scmp.ne.s32.totalorder %s135, %s137
    %p144 = scmp.eq.s32.totalorder %s18, 1
    %p145 = por %p143, %p144
    %p146 = scmp.ne.s32.totalorder %s137, %s138
    %p147 = scmp.eq.s32.totalorder %s18, 0
    %p148 = por %p146, %p147
    %p149 = scmp.ne.s32.totalorder %s137, %s138
    %p150 = scmp.eq.s32.totalorder %s19, 1
    %p151 = por %p149, %p150
    %p153 = scmp.ne.s32.totalorder %s138, %s152
    %p154 = scmp.eq.s32.totalorder %s19, 0
    %p155 = por %p153, %p154
    %s156 = ssub.s32 %s20, %s32
    %s157 = ssub.s32 %s21, %s28
    %s158 = sor.u32 %s156, %s157
    %p159 = scmp.eq.s32.totalorder %s158, 0
    %s161 = sadd.s32 %s160, 1
    %s162 = scalar_select %p159, %s160, %s161
    %p165 = pneg %p159
    %p166 = scmp.eq.s32.totalorder %s13, 1
    %p167 = por %p165, %p166
    %p168 = scmp.ne.s32.totalorder %s160, %s163
    %p169 = scmp.eq.s32.totalorder %s13, 0
    %p170 = por %p168, %p169
    %p171 = scmp.ne.s32.totalorder %s160, %s163
    %p172 = scmp.eq.s32.totalorder %s18, 1
    %p173 = por %p171, %p172
    %p174 = scmp.ne.s32.totalorder %s163, %s164
    %p175 = scmp.eq.s32.totalorder %s18, 0
    %p176 = por %p174, %p175
    %p177 = scmp.ne.s32.totalorder %s163, %s164
    %p178 = scmp.eq.s32.totalorder %s19, 1
    %p179 = por %p177, %p178
    %p181 = scmp.ne.s32.totalorder %s164, %s180
    %p182 = scmp.eq.s32.totalorder %s19, 0
    %p183 = por %p181, %p182
    %s184 = ssub.s32 %s20, %s32
    %s185 = ssub.s32 %s21, %s28
    %s186 = sor.u32 %s184, %s185
    %p187 = scmp.eq.s32.totalorder %s186, 0
    %s189 = sadd.s32 %s188, 1
    %s190 = scalar_select %p187, %s188, %s189
    %p193 = pneg %p187
    %p194 = scmp.eq.s32.totalorder %s13, 1
    %p195 = por %p193, %p194
    %p196 = scmp.ne.s32.totalorder %s188, %s191
    %p197 = scmp.eq.s32.totalorder %s13, 0
    %p198 = por %p196, %p197
    %p199 = scmp.ne.s32.totalorder %s188, %s191
    %p200 = scmp.eq.s32.totalorder %s18, 1
    %p201 = por %p199, %p200
    %p202 = scmp.ne.s32.totalorder %s191, %s192
    %p203 = scmp.eq.s32.totalorder %s18, 0
    %p204 = por %p202, %p203
    %p205 = scmp.ne.s32.totalorder %s191, %s192
    %p206 = scmp.eq.s32.totalorder %s19, 1
    %p207 = por %p205, %p206
    %p209 = scmp.ne.s32.totalorder %s192, %s208
    %p210 = scmp.eq.s32.totalorder %s19, 0
    %p211 = por %p209, %p210
    %p212 = scmp.le.s32.totalorder 1, %s13
    %p213 = scmp.lt.s32.totalorder %s13, 3
    %p214 = pnand %p212, %p213
    %p215 = pneg %p214
    // Predicated region
    $region9: #{unet_block_forward.3} parent=5 // pred_check
      _
    $region10: #{unet_block_forward.3} parent=5 // pred_check_branch
      %217 = sbr.rel (%p214) target = $region12
    $region11: #{unet_block_forward.3} parent=5 // pred_region
      %s218 = ssub.s32 %s13, 1
      // Predicated region
      $region13: #{unet_block_forward.3} parent=11 // pred_check
        %p219 = pneg %p106
      $region14: #{unet_block_forward.3} parent=11 // pred_check_branch
        %221 = sbr.rel (%p219) target = $region16
      $region15: #{unet_block_forward.3} parent=11 // pred_region
        _
      $region16: #{unet_block_forward.3} parent=11 // pred_fallthru
        _
      // Predicated region
      $region17: #{unet_block_forward.3} parent=11 // pred_check
        %p222 = pneg %p127
      $region18: #{unet_block_forward.3} parent=11 // pred_check_branch
        %224 = sbr.rel (%p222) target = $region20
      $region19: #{unet_block_forward.3} parent=11 // pred_region
        _
      $region20: #{unet_block_forward.3} parent=11 // pred_fallthru
        _
      // Predicated region
      $region21: #{unet_block_forward.3} parent=11 // pred_check
        %p225 = pneg %p148
      $region22: #{unet_block_forward.3} parent=11 // pred_check_branch
        %227 = sbr.rel (%p225) target = $region24
      $region23: #{unet_block_forward.3} parent=11 // pred_region
        _
      $region24: #{unet_block_forward.3} parent=11 // pred_fallthru
        _
    $region12: #{unet_block_forward.3} parent=5 // pred_fallthru
      _
    %p228 = scmp.lt.s32.totalorder %s13, 2
    // Predicated region
    $region25: #{unet_block_forward.3} parent=5 // pred_check
      %p229 = pneg %p228
    $region26: #{unet_block_forward.3} parent=5 // pred_check_branch
      %231 = sbr.rel (%p229) target = $region28
    $region27: #{unet_block_forward.3} parent=5 // pred_region
      // Predicated region
      $region29: #{unet_block_forward.3} parent=27 // pred_check
        %p232 = pneg %p47
      $region30: #{unet_block_forward.3} parent=27 // pred_check_branch
        %234 = sbr.rel (%p232) target = $region32
      $region31: #{unet_block_forward.3} parent=27 // pred_region
        %s235 = smul.u32 16, %s21
        %p236 = scmp.lt.s32.totalorder %s20, 1
        %s237 = scalar_select %p236, %s20, 1
        %p238 = scmp.lt.s32.totalorder %s235, 31
        %s239 = scalar_select %p238, %s235, 31
        %s240 = smul.addr %s239, 3
        %s241 = smul.addr %s237, 96
        %s242 = sadd.s32 %s240, %s241
        %s243 = smul.addr %s242, 4
        %s244 = scalar_lea.vmem %s0, %s243
        %s245 = smul.u32 16, %s21
      $region32: #{unet_block_forward.3} parent=27 // pred_fallthru
        _
      // Predicated region
      $region33: #{unet_block_forward.3} parent=27 // pred_check
        %p246 = pneg %p79
      $region34: #{unet_block_forward.3} parent=27 // pred_check_branch
        %248 = sbr.rel (%p246) target = $region36
      $region35: #{unet_block_forward.3} parent=27 // pred_region
        %s249 = sadd.s32 %s21, 1
        %s250 = smul.u32 %s249, 2
        %s251 = smul.u32 8, %s250
        %p252 = scmp.lt.s32.totalorder %s20, 1
        %s253 = scalar_select %p252, %s20, 1
        %p254 = scmp.lt.s32.totalorder %s251, 31
        %s255 = scalar_select %p254, %s251, 31
        %s256 = smul.addr %s255, 3
        %s257 = smul.addr %s253, 96
        %s258 = sadd.s32 %s256, %s257
        %s259 = smul.addr %s258, 4
        %s260 = scalar_lea.vmem %s1, %s259
        %s261 = sadd.s32 %s21, 1
        %s262 = smul.u32 %s261, 2
        %s263 = smul.u32 8, %s262
      $region36: #{unet_block_forward.3} parent=27 // pred_fallthru
        _
    $region28: #{unet_block_forward.3} parent=5 // pred_fallthru
      _
    %p264 = scmp.le.s32.totalorder 1, %s13
    %p265 = scmp.lt.s32.totalorder %s13, 3
    %p266 = pnand %p264, %p265
    %p267 = pneg %p266
    // Predicated region
    $region37: #{unet_block_forward.3} parent=5 // pred_check
      _
    $region38: #{unet_block_forward.3} parent=5 // pred_check_branch
      %269 = sbr.rel (%p266) target = $region40
    $region39: #{unet_block_forward.3} parent=5 // pred_region
      %s270 = ssub.s32 %s13, 1
      %s271 = smul.u32 16, %s23
      %p272 = scmp.lt.s32.totalorder %s22, 1
      %s273 = scalar_select %p272, %s22, 1
      %p274 = scmp.lt.s32.totalorder %s271, 31
      %s275 = scalar_select %p274, %s271, 31
      %s276 = smul.addr %s275, 3
      %s277 = smul.addr %s273, 96
      %s278 = sadd.s32 %s276, %s277
      %s279 = smul.addr %s278, 4
      %s280 = scalar_lea.vmem %s0, %s279
      %p281 = pneg %p53
      %p282 = pneg %p50
      %s283 = sadd.s32 %s23, 1
      %s284 = smul.u32 %s283, 2
      %s285 = smul.u32 8, %s284
      %p286 = scmp.lt.s32.totalorder %s22, 1
      %s287 = scalar_select %p286, %s22, 1
      %p288 = scmp.lt.s32.totalorder %s285, 31
      %s289 = scalar_select %p288, %s285, 31
      %s290 = smul.addr %s289, 3
      %s291 = smul.addr %s287, 96
      %s292 = sadd.s32 %s290, %s291
      %s293 = smul.addr %s292, 4
      %s294 = scalar_lea.vmem %s1, %s293
      %p295 = pneg %p85
      %p296 = pneg %p82
      %p297 = pneg %p106
      %p298 = pneg %p103
      %p299 = pneg %p127
      %p300 = pneg %p124
      %p301 = pneg %p148
      %p302 = pneg %p145
      %p303 = pneg %p176
      %p304 = pneg %p173
      %s305 = smul.u32 16, %s23
      %p306 = scmp.lt.s32.totalorder %s22, 1
      %s307 = scalar_select %p306, %s22, 1
      %p308 = scmp.lt.s32.totalorder %s305, 15
      %s309 = scalar_select %p308, %s305, 15
      %s310 = smul.addr %s309, 2
      %s311 = smul.addr %s307, 32
      %s312 = sadd.s32 %s310, %s311
      %s313 = smul.addr %s312, 4
      %s314 = scalar_lea.vmem %s5, %s313
      %p315 = pneg %p204
      %p316 = pneg %p201
      %p317 = scmp.lt.s32.totalorder %s22, 1
      %s318 = scalar_select %p317, %s22, 1
      %p319 = scmp.lt.s32.totalorder %s23, 0
      %s320 = scalar_select %p319, %s23, 0
      %s321 = sadd.s32 %s320, %s318
      %s322 = smul.addr %s321, 2
      %s323 = scalar_lea.vmem %s6, %s322
      %s324 = smul.u32 16, %s23
      %p325 = scmp.lt.s32.totalorder %s22, 1
      %s326 = scalar_select %p325, %s22, 1
      %p327 = scmp.lt.s32.totalorder %s324, 31
      %s328 = scalar_select %p327, %s324, 31
      %s329 = smul.addr %s328, 3
      %s330 = smul.addr %s326, 96
      %s331 = sadd.s32 %s329, %s330
      %s332 = smul.addr %s331, 4
      %s333 = scalar_lea.vmem %s0, %s332
      %s334 = smul.u32 16, %s23
      %s335 = sadd.s32 %s23, 1
      %s336 = smul.u32 %s335, 2
      %s337 = smul.u32 8, %s336
      %p338 = scmp.lt.s32.totalorder %s22, 1
      %s339 = scalar_select %p338, %s22, 1
      %p340 = scmp.lt.s32.totalorder %s337, 31
      %s341 = scalar_select %p340, %s337, 31
      %s342 = smul.addr %s341, 3
      %s343 = smul.addr %s339, 96
      %s344 = sadd.s32 %s342, %s343
      %s345 = smul.addr %s344, 4
      %s346 = scalar_lea.vmem %s1, %s345
      %s347 = sadd.s32 %s23, 1
      %s348 = smul.u32 %s347, 2
      %s349 = smul.u32 8, %s348
      %s350 = smul.u32 16, %s23
      %p351 = scmp.lt.s32.totalorder %s22, 1
      %s352 = scalar_select %p351, %s22, 1
      %p353 = scmp.lt.s32.totalorder %s350, 15
      %s354 = scalar_select %p353, %s350, 15
      %s355 = smul.addr %s354, 2
      %s356 = smul.addr %s352, 32
      %s357 = sadd.s32 %s355, %s356
      %s358 = smul.addr %s357, 4
      %s359 = scalar_lea.vmem %s5, %s358
      %s360 = smul.u32 16, %s23
      %p361 = scmp.lt.s32.totalorder %s22, 1
      %s362 = scalar_select %p361, %s22, 1
      %p363 = scmp.lt.s32.totalorder %s23, 0
      %s364 = scalar_select %p363, %s23, 0
      %s365 = sadd.s32 %s364, %s362
      %s366 = smul.addr %s365, 2
      %s367 = scalar_lea.vmem %s6, %s366
      %v368 = vld [vmem:[%s333] sm:$0xf]
      %v369 = vld [vmem:[%s333 + $0x4] sm:$0xf]
      %v370 = vld [vmem:[%s333 + $0x8] sm:$0xf]
      %v371 = vld [vmem:[%s333 + $0xc] sm:$0xf]
      %v372 = vld [vmem:[%s333 + $0x10] sm:$0xf]
      %v373 = vld [vmem:[%s333 + $0x14] sm:$0xf]
      %v374 = vld [vmem:[%s333 + $0x18] sm:$0xf]
      %v375 = vld [vmem:[%s333 + $0x1c] sm:$0xf]
      %v376 = vld [vmem:[%s333 + $0x20] sm:$0xf]
      %v377 = vld [vmem:[%s333 + $0x24] sm:$0xf]
      %v378 = vld [vmem:[%s333 + $0x28] sm:$0xf]
      %v379 = vld [vmem:[%s333 + $0x2c] sm:$0xf]
      %v380 = vld [vmem:[%s333 + $0x30] sm:$0xf]
      %v381 = vld [vmem:[%s333 + $0x34] sm:$0xf]
      %v382 = vld [vmem:[%s333 + $0x38] sm:$0xf]
      %v383 = vld [vmem:[%s333 + $0x3c] sm:$0xf]
      %v384 = vld [vmem:[%s333 + $0x40] sm:$0xf]
      %v385 = vld [vmem:[%s333 + $0x44] sm:$0xf]
      %v386 = vld [vmem:[%s333 + $0x48] sm:$0xf]
      %v387 = vld [vmem:[%s333 + $0x4c] sm:$0xf]
      %v388 = vld [vmem:[%s333 + $0x50] sm:$0xf]
      %v389 = vld [vmem:[%s333 + $0x54] sm:$0xf]
      %v390 = vld [vmem:[%s333 + $0x58] sm:$0xf]
      %v391 = vld [vmem:[%s333 + $0x5c] sm:$0xf]
      %v392 = vld [vmem:[%s333 + $0x60] sm:$0xf]
      %v393 = vld [vmem:[%s333 + $0x64] sm:$0xf]
      %v394 = vld [vmem:[%s333 + $0x68] sm:$0xf]
      %v395 = vld [vmem:[%s333 + $0x6c] sm:$0xf]
      %v396 = vld [vmem:[%s333 + $0x70] sm:$0xf]
      %v397 = vld [vmem:[%s333 + $0x74] sm:$0xf]
      %v398 = vld [vmem:[%s333 + $0x78] sm:$0xf]
      %v399 = vld [vmem:[%s333 + $0x7c] sm:$0xf]
      %v400 = vld [vmem:[%s333 + $0x80] sm:$0xf]
      %v401 = vld [vmem:[%s333 + $0x84] sm:$0xf]
      %v402 = vld [vmem:[%s333 + $0x88] sm:$0xf]
      %v403 = vld [vmem:[%s333 + $0x8c] sm:$0xf]
      %v404 = vld [vmem:[%s333 + $0x90] sm:$0xf]
      %v405 = vld [vmem:[%s333 + $0x94] sm:$0xf]
      %v406 = vld [vmem:[%s333 + $0x98] sm:$0xf]
      %v407 = vld [vmem:[%s333 + $0x9c] sm:$0xf]
      %v408 = vld [vmem:[%s333 + $0xa0] sm:$0xf]
      %v409 = vld [vmem:[%s333 + $0xa4] sm:$0xf]
      %v410 = vld [vmem:[%s333 + $0xa8] sm:$0xf]
      %v411 = vld [vmem:[%s333 + $0xac] sm:$0xf]
      %v412 = vld [vmem:[%s333 + $0xb0] sm:$0xf]
      %v413 = vld [vmem:[%s333 + $0xb4] sm:$0xf]
      %v414 = vld [vmem:[%s333 + $0xb8] sm:$0xf]
      %v415 = vld [vmem:[%s333 + $0xbc] sm:$0xf]
      %416 = vst [vmem:[#allocation2] sm:$0xf] %v368
      %417 = vst [vmem:[#allocation2 + $0x4] sm:$0xf] %v369
      %418 = vst [vmem:[#allocation2 + $0x8] sm:$0xf] %v370
      %419 = vst [vmem:[#allocation2 + $0xc] sm:$0xf] %v371
      %420 = vst [vmem:[#allocation2 + $0x10] sm:$0xf] %v372
      %421 = vst [vmem:[#allocation2 + $0x14] sm:$0xf] %v373
      %422 = vst [vmem:[#allocation2 + $0x18] sm:$0xf] %v374
      %423 = vst [vmem:[#allocation2 + $0x1c] sm:$0xf] %v375
      %424 = vst [vmem:[#allocation2 + $0x20] sm:$0xf] %v376
      %425 = vst [vmem:[#allocation2 + $0x24] sm:$0xf] %v377
      %426 = vst [vmem:[#allocation2 + $0x28] sm:$0xf] %v378
      %427 = vst [vmem:[#allocation2 + $0x2c] sm:$0xf] %v379
      %428 = vst [vmem:[#allocation2 + $0x30] sm:$0xf] %v380
      %429 = vst [vmem:[#allocation2 + $0x34] sm:$0xf] %v381
      %430 = vst [vmem:[#allocation2 + $0x38] sm:$0xf] %v382
      %431 = vst [vmem:[#allocation2 + $0x3c] sm:$0xf] %v383
      %432 = vst [vmem:[#allocation2 + $0x40] sm:$0xf] %v384
      %433 = vst [vmem:[#allocation2 + $0x44] sm:$0xf] %v385
      %434 = vst [vmem:[#allocation2 + $0x48] sm:$0xf] %v386
      %435 = vst [vmem:[#allocation2 + $0x4c] sm:$0xf] %v387
      %436 = vst [vmem:[#allocation2 + $0x50] sm:$0xf] %v388
      %437 = vst [vmem:[#allocation2 + $0x54] sm:$0xf] %v389
      %438 = vst [vmem:[#allocation2 + $0x58] sm:$0xf] %v390
      %439 = vst [vmem:[#allocation2 + $0x5c] sm:$0xf] %v391
      %440 = vst [vmem:[#allocation2 + $0x60] sm:$0xf] %v392
      %441 = vst [vmem:[#allocation2 + $0x64] sm:$0xf] %v393
      %442 = vst [vmem:[#allocation2 + $0x68] sm:$0xf] %v394
      %443 = vst [vmem:[#allocation2 + $0x6c] sm:$0xf] %v395
      %444 = vst [vmem:[#allocation2 + $0x70] sm:$0xf] %v396
      %445 = vst [vmem:[#allocation2 + $0x74] sm:$0xf] %v397
      %446 = vst [vmem:[#allocation2 + $0x78] sm:$0xf] %v398
      %447 = vst [vmem:[#allocation2 + $0x7c] sm:$0xf] %v399
      %448 = vst [vmem:[#allocation2 + $0x80] sm:$0xf] %v400
      %449 = vst [vmem:[#allocation2 + $0x84] sm:$0xf] %v401
      %450 = vst [vmem:[#allocation2 + $0x88] sm:$0xf] %v402
      %451 = vst [vmem:[#allocation2 + $0x8c] sm:$0xf] %v403
      %452 = vst [vmem:[#allocation2 + $0x90] sm:$0xf] %v404
      %453 = vst [vmem:[#allocation2 + $0x94] sm:$0xf] %v405
      %454 = vst [vmem:[#allocation2 + $0x98] sm:$0xf] %v406
      %455 = vst [vmem:[#allocation2 + $0x9c] sm:$0xf] %v407
      %456 = vst [vmem:[#allocation2 + $0xa0] sm:$0xf] %v408
      %457 = vst [vmem:[#allocation2 + $0xa4] sm:$0xf] %v409
      %458 = vst [vmem:[#allocation2 + $0xa8] sm:$0xf] %v410
      %459 = vst [vmem:[#allocation2 + $0xac] sm:$0xf] %v411
      %460 = vst [vmem:[#allocation2 + $0xb0] sm:$0xf] %v412
      %461 = vst [vmem:[#allocation2 + $0xb4] sm:$0xf] %v413
      %462 = vst [vmem:[#allocation2 + $0xb8] sm:$0xf] %v414
      %463 = vst [vmem:[#allocation2 + $0xbc] sm:$0xf] %v415
      %v464 = vld [vmem:[%s346] sm:$0xf]
      %v465 = vld [vmem:[%s346 + $0x4] sm:$0xf]
      %v466 = vld [vmem:[%s346 + $0x8] sm:$0xf]
      %v467 = vld [vmem:[%s346 + $0xc] sm:$0xf]
      %v468 = vld [vmem:[%s346 + $0x10] sm:$0xf]
      %v469 = vld [vmem:[%s346 + $0x14] sm:$0xf]
      %v470 = vld [vmem:[%s346 + $0x18] sm:$0xf]
      %v471 = vld [vmem:[%s346 + $0x1c] sm:$0xf]
      %v472 = vld [vmem:[%s346 + $0x20] sm:$0xf]
      %v473 = vld [vmem:[%s346 + $0x24] sm:$0xf]
      %v474 = vld [vmem:[%s346 + $0x28] sm:$0xf]
      %v475 = vld [vmem:[%s346 + $0x2c] sm:$0xf]
      %v476 = vld [vmem:[%s346 + $0x30] sm:$0xf]
      %v477 = vld [vmem:[%s346 + $0x34] sm:$0xf]
      %v478 = vld [vmem:[%s346 + $0x38] sm:$0xf]
      %v479 = vld [vmem:[%s346 + $0x3c] sm:$0xf]
      %v480 = vld [vmem:[%s346 + $0x40] sm:$0xf]
      %v481 = vld [vmem:[%s346 + $0x44] sm:$0xf]
      %v482 = vld [vmem:[%s346 + $0x48] sm:$0xf]
      %v483 = vld [vmem:[%s346 + $0x4c] sm:$0xf]
      %v484 = vld [vmem:[%s346 + $0x50] sm:$0xf]
      %v485 = vld [vmem:[%s346 + $0x54] sm:$0xf]
      %v486 = vld [vmem:[%s346 + $0x58] sm:$0xf]
      %v487 = vld [vmem:[%s346 + $0x5c] sm:$0xf]
      %s488 = scalar_lea.vmem [#allocation2], 192
      %489 = vst [vmem:[%s488] sm:$0xf] %v464
      %490 = vst [vmem:[%s488 + $0x4] sm:$0xf] %v465
      %491 = vst [vmem:[%s488 + $0x8] sm:$0xf] %v466
      %492 = vst [vmem:[%s488 + $0xc] sm:$0xf] %v467
      %493 = vst [vmem:[%s488 + $0x10] sm:$0xf] %v468
      %494 = vst [vmem:[%s488 + $0x14] sm:$0xf] %v469
      %495 = vst [vmem:[%s488 + $0x18] sm:$0xf] %v470
      %496 = vst [vmem:[%s488 + $0x1c] sm:$0xf] %v471
      %497 = vst [vmem:[%s488 + $0x20] sm:$0xf] %v472
      %498 = vst [vmem:[%s488 + $0x24] sm:$0xf] %v473
      %499 = vst [vmem:[%s488 + $0x28] sm:$0xf] %v474
      %500 = vst [vmem:[%s488 + $0x2c] sm:$0xf] %v475
      %501 = vst [vmem:[%s488 + $0x30] sm:$0xf] %v476
      %502 = vst [vmem:[%s488 + $0x34] sm:$0xf] %v477
      %503 = vst [vmem:[%s488 + $0x38] sm:$0xf] %v478
      %504 = vst [vmem:[%s488 + $0x3c] sm:$0xf] %v479
      %505 = vst [vmem:[%s488 + $0x40] sm:$0xf] %v480
      %506 = vst [vmem:[%s488 + $0x44] sm:$0xf] %v481
      %507 = vst [vmem:[%s488 + $0x48] sm:$0xf] %v482
      %508 = vst [vmem:[%s488 + $0x4c] sm:$0xf] %v483
      %509 = vst [vmem:[%s488 + $0x50] sm:$0xf] %v484
      %510 = vst [vmem:[%s488 + $0x54] sm:$0xf] %v485
      %511 = vst [vmem:[%s488 + $0x58] sm:$0xf] %v486
      %512 = vst [vmem:[%s488 + $0x5c] sm:$0xf] %v487
      %v513 = vld [vmem:[#allocation2] sm:$0xf]
      %v514 = vld [vmem:[#allocation2 + $0x4] sm:$0xf]
      %v515 = vld [vmem:[#allocation2 + $0x8] sm:$0xf]
      %v516 = vld [vmem:[#allocation2 + $0xc] sm:$0xf]
      %v517 = vld [vmem:[#allocation2 + $0x10] sm:$0xf]
      %v518 = vld [vmem:[#allocation2 + $0x14] sm:$0xf]
      %v519 = vld [vmem:[#allocation2 + $0x18] sm:$0xf]
      %v520 = vld [vmem:[#allocation2 + $0x1c] sm:$0xf]
      %v521 = vld [vmem:[#allocation2 + $0x20] sm:$0xf]
      %v522 = vld [vmem:[#allocation2 + $0x24] sm:$0xf]
      %v523 = vld [vmem:[#allocation2 + $0x28] sm:$0xf]
      %v524 = vld [vmem:[#allocation2 + $0x2c] sm:$0xf]
      %v525 = vld [vmem:[#allocation2 + $0x30] sm:$0xf]
      %v526 = vld [vmem:[#allocation2 + $0x34] sm:$0xf]
      %v527 = vld [vmem:[#allocation2 + $0x38] sm:$0xf]
      %v528 = vld [vmem:[#allocation2 + $0x3c] sm:$0xf]
      %v529 = vld [vmem:[#allocation2 + $0x40] sm:$0xf]
      %v530 = vld [vmem:[#allocation2 + $0x44] sm:$0xf]
      %v531 = vld [vmem:[#allocation2 + $0x48] sm:$0xf]
      %v532 = vld [vmem:[#allocation2 + $0x4c] sm:$0xf]
      %v533 = vld [vmem:[#allocation2 + $0x50] sm:$0xf]
      %v534 = vld [vmem:[#allocation2 + $0x54] sm:$0xf]
      %v535 = vld [vmem:[#allocation2 + $0x58] sm:$0xf]
      %v536 = vld [vmem:[#allocation2 + $0x5c] sm:$0xf]
      %v537 = vld [vmem:[#allocation2 + $0x60] sm:$0xf]
      %v538 = vld [vmem:[#allocation2 + $0x64] sm:$0xf]
      %v539 = vld [vmem:[#allocation2 + $0x68] sm:$0xf]
      %v540 = vld [vmem:[#allocation2 + $0x6c] sm:$0xf]
      %v541 = vld [vmem:[#allocation2 + $0x70] sm:$0xf]
      %v542 = vld [vmem:[#allocation2 + $0x74] sm:$0xf]
      %v543 = vld [vmem:[#allocation2 + $0x78] sm:$0xf]
      %v544 = vld [vmem:[#allocation2 + $0x7c] sm:$0xf]
      %v545 = vld [vmem:[#allocation2 + $0x80] sm:$0xf]
      %v546 = vld [vmem:[#allocation2 + $0x84] sm:$0xf]
      %v547 = vld [vmem:[#allocation2 + $0x88] sm:$0xf]
      %v548 = vld [vmem:[#allocation2 + $0x8c] sm:$0xf]
      %v549 = vld [vmem:[#allocation2 + $0x90] sm:$0xf]
      %v550 = vld [vmem:[#allocation2 + $0x94] sm:$0xf]
      %v551 = vld [vmem:[#allocation2 + $0x98] sm:$0xf]
      %v552 = vld [vmem:[#allocation2 + $0x9c] sm:$0xf]
      %v553 = vld [vmem:[#allocation2 + $0xa0] sm:$0xf]
      %v554 = vld [vmem:[#allocation2 + $0xa4] sm:$0xf]
      %v555 = vld [vmem:[#allocation2 + $0xa8] sm:$0xf]
      %v556 = vld [vmem:[#allocation2 + $0xac] sm:$0xf]
      %v557 = vld [vmem:[#allocation2 + $0xb0] sm:$0xf]
      %v558 = vld [vmem:[#allocation2 + $0xb4] sm:$0xf]
      %v559 = vld [vmem:[#allocation2 + $0xb8] sm:$0xf]
      %v560 = vld [vmem:[#allocation2 + $0xbc] sm:$0xf]
      %v593 = vunpack.c.l.b16 %v513
      %v594 = vunpack.c.l.b16 %v514
      %v595 = vunpack.c.l.b16 %v516
      %v596 = vunpack.c.l.b16 %v517
      %v597 = vunpack.c.l.b16 %v519
      %v598 = vunpack.c.l.b16 %v520
      %v599 = vunpack.c.l.b16 %v522
      %v600 = vunpack.c.l.b16 %v523
      %v601 = vunpack.c.l.b16 %v525
      %v602 = vunpack.c.l.b16 %v526
      %v603 = vunpack.c.l.b16 %v528
      %v604 = vunpack.c.l.b16 %v529
      %v605 = vunpack.c.l.b16 %v531
      %v606 = vunpack.c.l.b16 %v532
      %v607 = vunpack.c.l.b16 %v534
      %v608 = vunpack.c.l.b16 %v535
      %v609 = vunpack.c.l.b16 %v537
      %v610 = vunpack.c.l.b16 %v538
      %v611 = vunpack.c.l.b16 %v540
      %v612 = vunpack.c.l.b16 %v541
      %v613 = vunpack.c.l.b16 %v543
      %v614 = vunpack.c.l.b16 %v544
      %v615 = vunpack.c.l.b16 %v546
      %v616 = vunpack.c.l.b16 %v547
      %v617 = vunpack.c.l.b16 %v549
      %v618 = vunpack.c.l.b16 %v550
      %v619 = vunpack.c.l.b16 %v552
      %v620 = vunpack.c.l.b16 %v553
      %v621 = vunpack.c.l.b16 %v555
      %v622 = vunpack.c.l.b16 %v556
      %v623 = vunpack.c.l.b16 %v558
      %v624 = vunpack.c.l.b16 %v559
      %v625 = vpack.c.b16 %v594, %v593
      %v626 = vpack.c.b16 %v596, %v595
      %v627 = vpack.c.b16 %v598, %v597
      %v628 = vpack.c.b16 %v600, %v599
      %v629 = vpack.c.b16 %v602, %v601
      %v630 = vpack.c.b16 %v604, %v603
      %v631 = vpack.c.b16 %v606, %v605
      %v632 = vpack.c.b16 %v608, %v607
      %v633 = vpack.c.b16 %v610, %v609
      %v634 = vpack.c.b16 %v612, %v611
      %v635 = vpack.c.b16 %v614, %v613
      %v636 = vpack.c.b16 %v616, %v615
      %v637 = vpack.c.b16 %v618, %v617
      %v638 = vpack.c.b16 %v620, %v619
      %v639 = vpack.c.b16 %v622, %v621
      %v640 = vpack.c.b16 %v624, %v623
      %v673 = vunpack.c.l.b16 %v515
      %v674 = vunpack.c.l.b16 %v518
      %v675 = vunpack.c.l.b16 %v521
      %v676 = vunpack.c.l.b16 %v524
      %v677 = vunpack.c.l.b16 %v527
      %v678 = vunpack.c.l.b16 %v530
      %v679 = vunpack.c.l.b16 %v533
      %v680 = vunpack.c.l.b16 %v536
      %v681 = vunpack.c.l.b16 %v539
      %v682 = vunpack.c.l.b16 %v542
      %v683 = vunpack.c.l.b16 %v545
      %v684 = vunpack.c.l.b16 %v548
      %v685 = vunpack.c.l.b16 %v551
      %v686 = vunpack.c.l.b16 %v554
      %v687 = vunpack.c.l.b16 %v557
      %v688 = vunpack.c.l.b16 %v560
      %v689 = vpack.c.b16 %v673, %v673
      %v690 = vpack.c.b16 %v674, %v674
      %v691 = vpack.c.b16 %v675, %v675
      %v692 = vpack.c.b16 %v676, %v676
      %v693 = vpack.c.b16 %v677, %v677
      %v694 = vpack.c.b16 %v678, %v678
      %v695 = vpack.c.b16 %v679, %v679
      %v696 = vpack.c.b16 %v680, %v680
      %v697 = vpack.c.b16 %v681, %v681
      %v698 = vpack.c.b16 %v682, %v682
      %v699 = vpack.c.b16 %v683, %v683
      %v700 = vpack.c.b16 %v684, %v684
      %v701 = vpack.c.b16 %v685, %v685
      %v702 = vpack.c.b16 %v686, %v686
      %v703 = vpack.c.b16 %v687, %v687
      %v704 = vpack.c.b16 %v688, %v688
      %vm705 = vsmask.f32 7424
      %v707 = vshrl.u32 %v625, 16
      %v709 = vshll.u32 %v625, 16
      %v711 = vrot.slane %v709, 1
      %v712 = vor.u32 %v707, %v711
      %v714 = vshll.u32 %v689, 16
      %v716 = vrot.slane %v714, 1
      %v717 = vsel %vm705, %v712, %v716
      %v719 = vshrl.u32 %v626, 16
      %v721 = vshll.u32 %v626, 16
      %v723 = vrot.slane %v721, 1
      %v724 = vor.u32 %v719, %v723
      %v726 = vshll.u32 %v690, 16
      %v728 = vrot.slane %v726, 1
      %v729 = vsel %vm705, %v724, %v728
      %v731 = vshrl.u32 %v627, 16
      %v733 = vshll.u32 %v627, 16
      %v735 = vrot.slane %v733, 1
      %v736 = vor.u32 %v731, %v735
      %v738 = vshll.u32 %v691, 16
      %v740 = vrot.slane %v738, 1
      %v741 = vsel %vm705, %v736, %v740
      %v743 = vshrl.u32 %v628, 16
      %v745 = vshll.u32 %v628, 16
      %v747 = vrot.slane %v745, 1
      %v748 = vor.u32 %v743, %v747
      %v750 = vshll.u32 %v692, 16
      %v752 = vrot.slane %v750, 1
      %v753 = vsel %vm705, %v748, %v752
      %v755 = vshrl.u32 %v629, 16
      %v757 = vshll.u32 %v629, 16
      %v759 = vrot.slane %v757, 1
      %v760 = vor.u32 %v755, %v759
      %v762 = vshll.u32 %v693, 16
      %v764 = vrot.slane %v762, 1
      %v765 = vsel %vm705, %v760, %v764
      %v767 = vshrl.u32 %v630, 16
      %v769 = vshll.u32 %v630, 16
      %v771 = vrot.slane %v769, 1
      %v772 = vor.u32 %v767, %v771
      %v774 = vshll.u32 %v694, 16
      %v776 = vrot.slane %v774, 1
      %v777 = vsel %vm705, %v772, %v776
      %v779 = vshrl.u32 %v631, 16
      %v781 = vshll.u32 %v631, 16
      %v783 = vrot.slane %v781, 1
      %v784 = vor.u32 %v779, %v783
      %v786 = vshll.u32 %v695, 16
      %v788 = vrot.slane %v786, 1
      %v789 = vsel %vm705, %v784, %v788
      %v791 = vshrl.u32 %v632, 16
      %v793 = vshll.u32 %v632, 16
      %v795 = vrot.slane %v793, 1
      %v796 = vor.u32 %v791, %v795
      %v798 = vshll.u32 %v696, 16
      %v800 = vrot.slane %v798, 1
      %v801 = vsel %vm705, %v796, %v800
      %v803 = vshrl.u32 %v633, 16
      %v805 = vshll.u32 %v633, 16
      %v807 = vrot.slane %v805, 1
      %v808 = vor.u32 %v803, %v807
      %v810 = vshll.u32 %v697, 16
      %v812 = vrot.slane %v810, 1
      %v813 = vsel %vm705, %v808, %v812
      %v815 = vshrl.u32 %v634, 16
      %v817 = vshll.u32 %v634, 16
      %v819 = vrot.slane %v817, 1
      %v820 = vor.u32 %v815, %v819
      %v822 = vshll.u32 %v698, 16
      %v824 = vrot.slane %v822, 1
      %v825 = vsel %vm705, %v820, %v824
      %v827 = vshrl.u32 %v635, 16
      %v829 = vshll.u32 %v635, 16
      %v831 = vrot.slane %v829, 1
      %v832 = vor.u32 %v827, %v831
      %v834 = vshll.u32 %v699, 16
      %v836 = vrot.slane %v834, 1
      %v837 = vsel %vm705, %v832, %v836
      %v839 = vshrl.u32 %v636, 16
      %v841 = vshll.u32 %v636, 16
      %v843 = vrot.slane %v841, 1
      %v844 = vor.u32 %v839, %v843
      %v846 = vshll.u32 %v700, 16
      %v848 = vrot.slane %v846, 1
      %v849 = vsel %vm705, %v844, %v848
      %v851 = vshrl.u32 %v637, 16
      %v853 = vshll.u32 %v637, 16
      %v855 = vrot.slane %v853, 1
      %v856 = vor.u32 %v851, %v855
      %v858 = vshll.u32 %v701, 16
      %v860 = vrot.slane %v858, 1
      %v861 = vsel %vm705, %v856, %v860
      %v863 = vshrl.u32 %v638, 16
      %v865 = vshll.u32 %v638, 16
      %v867 = vrot.slane %v865, 1
      %v868 = vor.u32 %v863, %v867
      %v870 = vshll.u32 %v702, 16
      %v872 = vrot.slane %v870, 1
      %v873 = vsel %vm705, %v868, %v872
      %v875 = vshrl.u32 %v639, 16
      %v877 = vshll.u32 %v639, 16
      %v879 = vrot.slane %v877, 1
      %v880 = vor.u32 %v875, %v879
      %v882 = vshll.u32 %v703, 16
      %v884 = vrot.slane %v882, 1
      %v885 = vsel %vm705, %v880, %v884
      %v887 = vshrl.u32 %v640, 16
      %v889 = vshll.u32 %v640, 16
      %v891 = vrot.slane %v889, 1
      %v892 = vor.u32 %v887, %v891
      %v894 = vshll.u32 %v704, 16
      %v896 = vrot.slane %v894, 1
      %v897 = vsel %vm705, %v892, %v896
      %vm914 = vcmask 1046528
      %v915 = vrot.slane %v625, 1
      %v916 = vrot.slane %v689, 1
      %v917 = vsel %vm914, %v915, %v916
      %v918 = vrot.slane %v626, 1
      %v919 = vrot.slane %v690, 1
      %v920 = vsel %vm914, %v918, %v919
      %v921 = vrot.slane %v627, 1
      %v922 = vrot.slane %v691, 1
      %v923 = vsel %vm914, %v921, %v922
      %v924 = vrot.slane %v628, 1
      %v925 = vrot.slane %v692, 1
      %v926 = vsel %vm914, %v924, %v925
      %v927 = vrot.slane %v629, 1
      %v928 = vrot.slane %v693, 1
      %v929 = vsel %vm914, %v927, %v928
      %v930 = vrot.slane %v630, 1
      %v931 = vrot.slane %v694, 1
      %v932 = vsel %vm914, %v930, %v931
      %v933 = vrot.slane %v631, 1
      %v934 = vrot.slane %v695, 1
      %v935 = vsel %vm914, %v933, %v934
      %v936 = vrot.slane %v632, 1
      %v937 = vrot.slane %v696, 1
      %v938 = vsel %vm914, %v936, %v937
      %v939 = vrot.slane %v633, 1
      %v940 = vrot.slane %v697, 1
      %v941 = vsel %vm914, %v939, %v940
      %v942 = vrot.slane %v634, 1
      %v943 = vrot.slane %v698, 1
      %v944 = vsel %vm914, %v942, %v943
      %v945 = vrot.slane %v635, 1
      %v946 = vrot.slane %v699, 1
      %v947 = vsel %vm914, %v945, %v946
      %v948 = vrot.slane %v636, 1
      %v949 = vrot.slane %v700, 1
      %v950 = vsel %vm914, %v948, %v949
      %v951 = vrot.slane %v637, 1
      %v952 = vrot.slane %v701, 1
      %v953 = vsel %vm914, %v951, %v952
      %v954 = vrot.slane %v638, 1
      %v955 = vrot.slane %v702, 1
      %v956 = vsel %vm914, %v954, %v955
      %v957 = vrot.slane %v639, 1
      %v958 = vrot.slane %v703, 1
      %v959 = vsel %vm914, %v957, %v958
      %v960 = vrot.slane %v640, 1
      %v961 = vrot.slane %v704, 1
      %v962 = vsel %vm914, %v960, %v961
      %v979 = vld [vmem:[%s2] sm:$0xf]
      %v980 = vld [vmem:[%s2 + $0x4] sm:$0xf]
      %v981 = vld [vmem:[%s2 + $0x8] sm:$0xf]
      %v982 = vld [vmem:[%s2 + $0xc] sm:$0xf]
      %v983 = vld [vmem:[%s2 + $0x10] sm:$0xf]
      %v984 = vld [vmem:[%s2 + $0x14] sm:$0xf]
      %v985 = vld [vmem:[%s2 + $0x18] sm:$0xf]
      %v986 = vld [vmem:[%s2 + $0x1c] sm:$0xf]
      %v987 = vld [vmem:[%s2 + $0x20] sm:$0xf]
      %v988 = vld [vmem:[%s2 + $0x24] sm:$0xf]
      %v989 = vld [vmem:[%s2 + $0x28] sm:$0xf]
      %v990 = vld [vmem:[%s2 + $0x2c] sm:$0xf]
      %v991 = vld [vmem:[%s2 + $0x30] sm:$0xf]
      %v992 = vld [vmem:[%s2 + $0x34] sm:$0xf]
      %v993 = vld [vmem:[%s2 + $0x38] sm:$0xf]
      %v994 = vld [vmem:[%s2 + $0x3c] sm:$0xf]
      %v995 = vld [vmem:[%s2 + $0x40] sm:$0xf]
      %v996 = vld [vmem:[%s2 + $0x44] sm:$0xf]
      %v997 = vld [vmem:[%s2 + $0x48] sm:$0xf]
      %v998 = vld [vmem:[%s2 + $0x4c] sm:$0xf]
      %v999 = vld [vmem:[%s2 + $0x50] sm:$0xf]
      %v1000 = vld [vmem:[%s2 + $0x54] sm:$0xf]
      %v1001 = vld [vmem:[%s2 + $0x58] sm:$0xf]
      %v1002 = vld [vmem:[%s2 + $0x5c] sm:$0xf]
      %v1003 = vld [vmem:[%s2 + $0x60] sm:$0xf]
      %v1004 = vld [vmem:[%s2 + $0x64] sm:$0xf]
      %v1005 = vld [vmem:[%s2 + $0x68] sm:$0xf]
      %v1006 = vld [vmem:[%s2 + $0x6c] sm:$0xf]
      %v1007 = vld [vmem:[%s2 + $0x70] sm:$0xf]
      %v1008 = vld [vmem:[%s2 + $0x74] sm:$0xf]
      %v1009 = vld [vmem:[%s2 + $0x78] sm:$0xf]
      %v1010 = vld [vmem:[%s2 + $0x7c] sm:$0xf]
      %v1011 = vld [vmem:[%s2 + $0x80] sm:$0xf]
      %v1012 = vld [vmem:[%s2 + $0x84] sm:$0xf]
      %v1013 = vld [vmem:[%s2 + $0x88] sm:$0xf]
      %v1014 = vld [vmem:[%s2 + $0x8c] sm:$0xf]
      %v1015 = vld [vmem:[%s2 + $0x90] sm:$0xf]
      %v1016 = vld [vmem:[%s2 + $0x94] sm:$0xf]
      %v1017 = vld [vmem:[%s2 + $0x98] sm:$0xf]
      %v1018 = vld [vmem:[%s2 + $0x9c] sm:$0xf]
      %v1019 = vld [vmem:[%s2 + $0xa0] sm:$0xf]
      %v1020 = vld [vmem:[%s2 + $0xa4] sm:$0xf]
      %v1021 = vld [vmem:[%s2 + $0xa8] sm:$0xf]
      %v1022 = vld [vmem:[%s2 + $0xac] sm:$0xf]
      %v1023 = vld [vmem:[%s2 + $0xb0] sm:$0xf]
      %v1024 = vld [vmem:[%s2 + $0xb4] sm:$0xf]
      %v1025 = vld [vmem:[%s2 + $0xb8] sm:$0xf]
      %v1026 = vld [vmem:[%s2 + $0xbc] sm:$0xf]
      %s1027 = scalar_lea.vmem [#allocation2], 12
      %v1028 = vld [vmem:[%s1027] sm:$0xf]
      %v1029 = vld [vmem:[%s1027 + $0x4] sm:$0xf]
      %v1030 = vld [vmem:[%s1027 + $0x8] sm:$0xf]
      %v1031 = vld [vmem:[%s1027 + $0xc] sm:$0xf]
      %v1032 = vld [vmem:[%s1027 + $0x10] sm:$0xf]
      %v1033 = vld [vmem:[%s1027 + $0x14] sm:$0xf]
      %v1034 = vld [vmem:[%s1027 + $0x18] sm:$0xf]
      %v1035 = vld [vmem:[%s1027 + $0x1c] sm:$0xf]
      %v1036 = vld [vmem:[%s1027 + $0x20] sm:$0xf]
      %v1037 = vld [vmem:[%s1027 + $0x24] sm:$0xf]
      %v1038 = vld [vmem:[%s1027 + $0x28] sm:$0xf]
      %v1039 = vld [vmem:[%s1027 + $0x2c] sm:$0xf]
      %v1040 = vld [vmem:[%s1027 + $0x30] sm:$0xf]
      %v1041 = vld [vmem:[%s1027 + $0x34] sm:$0xf]
      %v1042 = vld [vmem:[%s1027 + $0x38] sm:$0xf]
      %v1043 = vld [vmem:[%s1027 + $0x3c] sm:$0xf]
      %v1044 = vld [vmem:[%s1027 + $0x40] sm:$0xf]
      %v1045 = vld [vmem:[%s1027 + $0x44] sm:$0xf]
      %v1046 = vld [vmem:[%s1027 + $0x48] sm:$0xf]
      %v1047 = vld [vmem:[%s1027 + $0x4c] sm:$0xf]
      %v1048 = vld [vmem:[%s1027 + $0x50] sm:$0xf]
      %v1049 = vld [vmem:[%s1027 + $0x54] sm:$0xf]
      %v1050 = vld [vmem:[%s1027 + $0x58] sm:$0xf]
      %v1051 = vld [vmem:[%s1027 + $0x5c] sm:$0xf]
      %v1052 = vld [vmem:[%s1027 + $0x60] sm:$0xf]
      %v1053 = vld [vmem:[%s1027 + $0x64] sm:$0xf]
      %v1054 = vld [vmem:[%s1027 + $0x68] sm:$0xf]
      %v1055 = vld [vmem:[%s1027 + $0x6c] sm:$0xf]
      %v1056 = vld [vmem:[%s1027 + $0x70] sm:$0xf]
      %v1057 = vld [vmem:[%s1027 + $0x74] sm:$0xf]
      %v1058 = vld [vmem:[%s1027 + $0x78] sm:$0xf]
      %v1059 = vld [vmem:[%s1027 + $0x7c] sm:$0xf]
      %v1060 = vld [vmem:[%s1027 + $0x80] sm:$0xf]
      %v1061 = vld [vmem:[%s1027 + $0x84] sm:$0xf]
      %v1062 = vld [vmem:[%s1027 + $0x88] sm:$0xf]
      %v1063 = vld [vmem:[%s1027 + $0x8c] sm:$0xf]
      %v1064 = vld [vmem:[%s1027 + $0x90] sm:$0xf]
      %v1065 = vld [vmem:[%s1027 + $0x94] sm:$0xf]
      %v1066 = vld [vmem:[%s1027 + $0x98] sm:$0xf]
      %v1067 = vld [vmem:[%s1027 + $0x9c] sm:$0xf]
      %v1068 = vld [vmem:[%s1027 + $0xa0] sm:$0xf]
      %v1069 = vld [vmem:[%s1027 + $0xa4] sm:$0xf]
      %v1070 = vld [vmem:[%s1027 + $0xa8] sm:$0xf]
      %v1071 = vld [vmem:[%s1027 + $0xac] sm:$0xf]
      %v1072 = vld [vmem:[%s1027 + $0xb0] sm:$0xf]
      %v1073 = vld [vmem:[%s1027 + $0xb4] sm:$0xf]
      %v1074 = vld [vmem:[%s1027 + $0xb8] sm:$0xf]
      %v1075 = vld [vmem:[%s1027 + $0xbc] sm:$0xf]
      %v1108 = vunpack.c.l.b16 %v1028
      %v1109 = vunpack.c.l.b16 %v1029
      %v1110 = vunpack.c.l.b16 %v1031
      %v1111 = vunpack.c.l.b16 %v1032
      %v1112 = vunpack.c.l.b16 %v1034
      %v1113 = vunpack.c.l.b16 %v1035
      %v1114 = vunpack.c.l.b16 %v1037
      %v1115 = vunpack.c.l.b16 %v1038
      %v1116 = vunpack.c.l.b16 %v1040
      %v1117 = vunpack.c.l.b16 %v1041
      %v1118 = vunpack.c.l.b16 %v1043
      %v1119 = vunpack.c.l.b16 %v1044
      %v1120 = vunpack.c.l.b16 %v1046
      %v1121 = vunpack.c.l.b16 %v1047
      %v1122 = vunpack.c.l.b16 %v1049
      %v1123 = vunpack.c.l.b16 %v1050
      %v1124 = vunpack.c.l.b16 %v1052
      %v1125 = vunpack.c.l.b16 %v1053
      %v1126 = vunpack.c.l.b16 %v1055
      %v1127 = vunpack.c.l.b16 %v1056
      %v1128 = vunpack.c.l.b16 %v1058
      %v1129 = vunpack.c.l.b16 %v1059
      %v1130 = vunpack.c.l.b16 %v1061
      %v1131 = vunpack.c.l.b16 %v1062
      %v1132 = vunpack.c.l.b16 %v1064
      %v1133 = vunpack.c.l.b16 %v1065
      %v1134 = vunpack.c.l.b16 %v1067
      %v1135 = vunpack.c.l.b16 %v1068
      %v1136 = vunpack.c.l.b16 %v1070
      %v1137 = vunpack.c.l.b16 %v1071
      %v1138 = vunpack.c.l.b16 %v1073
      %v1139 = vunpack.c.l.b16 %v1074
      %v1140 = vpack.c.b16 %v1109, %v1108
      %v1141 = vpack.c.b16 %v1111, %v1110
      %v1142 = vpack.c.b16 %v1113, %v1112
      %v1143 = vpack.c.b16 %v1115, %v1114
      %v1144 = vpack.c.b16 %v1117, %v1116
      %v1145 = vpack.c.b16 %v1119, %v1118
      %v1146 = vpack.c.b16 %v1121, %v1120
      %v1147 = vpack.c.b16 %v1123, %v1122
      %v1148 = vpack.c.b16 %v1125, %v1124
      %v1149 = vpack.c.b16 %v1127, %v1126
      %v1150 = vpack.c.b16 %v1129, %v1128
      %v1151 = vpack.c.b16 %v1131, %v1130
      %v1152 = vpack.c.b16 %v1133, %v1132
      %v1153 = vpack.c.b16 %v1135, %v1134
      %v1154 = vpack.c.b16 %v1137, %v1136
      %v1155 = vpack.c.b16 %v1139, %v1138
      %v1188 = vunpack.c.l.b16 %v1030
      %v1189 = vunpack.c.l.b16 %v1033
      %v1190 = vunpack.c.l.b16 %v1036
      %v1191 = vunpack.c.l.b16 %v1039
      %v1192 = vunpack.c.l.b16 %v1042
      %v1193 = vunpack.c.l.b16 %v1045
      %v1194 = vunpack.c.l.b16 %v1048
      %v1195 = vunpack.c.l.b16 %v1051
      %v1196 = vunpack.c.l.b16 %v1054
      %v1197 = vunpack.c.l.b16 %v1057
      %v1198 = vunpack.c.l.b16 %v1060
      %v1199 = vunpack.c.l.b16 %v1063
      %v1200 = vunpack.c.l.b16 %v1066
      %v1201 = vunpack.c.l.b16 %v1069
      %v1202 = vunpack.c.l.b16 %v1072
      %v1203 = vunpack.c.l.b16 %v1075
      %v1204 = vpack.c.b16 %v1188, %v1188
      %v1205 = vpack.c.b16 %v1189, %v1189
      %v1206 = vpack.c.b16 %v1190, %v1190
      %v1207 = vpack.c.b16 %v1191, %v1191
      %v1208 = vpack.c.b16 %v1192, %v1192
      %v1209 = vpack.c.b16 %v1193, %v1193
      %v1210 = vpack.c.b16 %v1194, %v1194
      %v1211 = vpack.c.b16 %v1195, %v1195
      %v1212 = vpack.c.b16 %v1196, %v1196
      %v1213 = vpack.c.b16 %v1197, %v1197
      %v1214 = vpack.c.b16 %v1198, %v1198
      %v1215 = vpack.c.b16 %v1199, %v1199
      %v1216 = vpack.c.b16 %v1200, %v1200
      %v1217 = vpack.c.b16 %v1201, %v1201
      %v1218 = vpack.c.b16 %v1202, %v1202
      %v1219 = vpack.c.b16 %v1203, %v1203
      %v1221 = vshrl.u32 %v1140, 16
      %v1223 = vshll.u32 %v1140, 16
      %v1225 = vrot.slane %v1223, 1
      %v1226 = vor.u32 %v1221, %v1225
      %v1228 = vshll.u32 %v1204, 16
      %v1230 = vrot.slane %v1228, 1
      %v1231 = vsel %vm705, %v1226, %v1230
      %v1233 = vshrl.u32 %v1141, 16
      %v1235 = vshll.u32 %v1141, 16
      %v1237 = vrot.slane %v1235, 1
      %v1238 = vor.u32 %v1233, %v1237
      %v1240 = vshll.u32 %v1205, 16
      %v1242 = vrot.slane %v1240, 1
      %v1243 = vsel %vm705, %v1238, %v1242
      %v1245 = vshrl.u32 %v1142, 16
      %v1247 = vshll.u32 %v1142, 16
      %v1249 = vrot.slane %v1247, 1
      %v1250 = vor.u32 %v1245, %v1249
      %v1252 = vshll.u32 %v1206, 16
      %v1254 = vrot.slane %v1252, 1
      %v1255 = vsel %vm705, %v1250, %v1254
      %v1257 = vshrl.u32 %v1143, 16
      %v1259 = vshll.u32 %v1143, 16
      %v1261 = vrot.slane %v1259, 1
      %v1262 = vor.u32 %v1257, %v1261
      %v1264 = vshll.u32 %v1207, 16
      %v1266 = vrot.slane %v1264, 1
      %v1267 = vsel %vm705, %v1262, %v1266
      %v1269 = vshrl.u32 %v1144, 16
      %v1271 = vshll.u32 %v1144, 16
      %v1273 = vrot.slane %v1271, 1
      %v1274 = vor.u32 %v1269, %v1273
      %v1276 = vshll.u32 %v1208, 16
      %v1278 = vrot.slane %v1276, 1
      %v1279 = vsel %vm705, %v1274, %v1278
      %v1281 = vshrl.u32 %v1145, 16
      %v1283 = vshll.u32 %v1145, 16
      %v1285 = vrot.slane %v1283, 1
      %v1286 = vor.u32 %v1281, %v1285
      %v1288 = vshll.u32 %v1209, 16
      %v1290 = vrot.slane %v1288, 1
      %v1291 = vsel %vm705, %v1286, %v1290
      %v1293 = vshrl.u32 %v1146, 16
      %v1295 = vshll.u32 %v1146, 16
      %v1297 = vrot.slane %v1295, 1
      %v1298 = vor.u32 %v1293, %v1297
      %v1300 = vshll.u32 %v1210, 16
      %v1302 = vrot.slane %v1300, 1
      %v1303 = vsel %vm705, %v1298, %v1302
      %v1305 = vshrl.u32 %v1147, 16
      %v1307 = vshll.u32 %v1147, 16
      %v1309 = vrot.slane %v1307, 1
      %v1310 = vor.u32 %v1305, %v1309
      %v1312 = vshll.u32 %v1211, 16
      %v1314 = vrot.slane %v1312, 1
      %v1315 = vsel %vm705, %v1310, %v1314
      %v1317 = vshrl.u32 %v1148, 16
      %v1319 = vshll.u32 %v1148, 16
      %v1321 = vrot.slane %v1319, 1
      %v1322 = vor.u32 %v1317, %v1321
      %v1324 = vshll.u32 %v1212, 16
      %v1326 = vrot.slane %v1324, 1
      %v1327 = vsel %vm705, %v1322, %v1326
      %v1329 = vshrl.u32 %v1149, 16
      %v1331 = vshll.u32 %v1149, 16
      %v1333 = vrot.slane %v1331, 1
      %v1334 = vor.u32 %v1329, %v1333
      %v1336 = vshll.u32 %v1213, 16
      %v1338 = vrot.slane %v1336, 1
      %v1339 = vsel %vm705, %v1334, %v1338
      %v1341 = vshrl.u32 %v1150, 16
      %v1343 = vshll.u32 %v1150, 16
      %v1345 = vrot.slane %v1343, 1
      %v1346 = vor.u32 %v1341, %v1345
      %v1348 = vshll.u32 %v1214, 16
      %v1350 = vrot.slane %v1348, 1
      %v1351 = vsel %vm705, %v1346, %v1350
      %v1353 = vshrl.u32 %v1151, 16
      %v1355 = vshll.u32 %v1151, 16
      %v1357 = vrot.slane %v1355, 1
      %v1358 = vor.u32 %v1353, %v1357
      %v1360 = vshll.u32 %v1215, 16
      %v1362 = vrot.slane %v1360, 1
      %v1363 = vsel %vm705, %v1358, %v1362
      %v1365 = vshrl.u32 %v1152, 16
      %v1367 = vshll.u32 %v1152, 16
      %v1369 = vrot.slane %v1367, 1
      %v1370 = vor.u32 %v1365, %v1369
      %v1372 = vshll.u32 %v1216, 16
      %v1374 = vrot.slane %v1372, 1
      %v1375 = vsel %vm705, %v1370, %v1374
      %v1377 = vshrl.u32 %v1153, 16
      %v1379 = vshll.u32 %v1153, 16
      %v1381 = vrot.slane %v1379, 1
      %v1382 = vor.u32 %v1377, %v1381
      %v1384 = vshll.u32 %v1217, 16
      %v1386 = vrot.slane %v1384, 1
      %v1387 = vsel %vm705, %v1382, %v1386
      %v1389 = vshrl.u32 %v1154, 16
      %v1391 = vshll.u32 %v1154, 16
      %v1393 = vrot.slane %v1391, 1
      %v1394 = vor.u32 %v1389, %v1393
      %v1396 = vshll.u32 %v1218, 16
      %v1398 = vrot.slane %v1396, 1
      %v1399 = vsel %vm705, %v1394, %v1398
      %v1401 = vshrl.u32 %v1155, 16
      %v1403 = vshll.u32 %v1155, 16
      %v1405 = vrot.slane %v1403, 1
      %v1406 = vor.u32 %v1401, %v1405
      %v1408 = vshll.u32 %v1219, 16
      %v1410 = vrot.slane %v1408, 1
      %v1411 = vsel %vm705, %v1406, %v1410
      %v1428 = vrot.slane %v1140, 1
      %v1429 = vrot.slane %v1204, 1
      %v1430 = vsel %vm914, %v1428, %v1429
      %v1431 = vrot.slane %v1141, 1
      %v1432 = vrot.slane %v1205, 1
      %v1433 = vsel %vm914, %v1431, %v1432
      %v1434 = vrot.slane %v1142, 1
      %v1435 = vrot.slane %v1206, 1
      %v1436 = vsel %vm914, %v1434, %v1435
      %v1437 = vrot.slane %v1143, 1
      %v1438 = vrot.slane %v1207, 1
      %v1439 = vsel %vm914, %v1437, %v1438
      %v1440 = vrot.slane %v1144, 1
      %v1441 = vrot.slane %v1208, 1
      %v1442 = vsel %vm914, %v1440, %v1441
      %v1443 = vrot.slane %v1145, 1
      %v1444 = vrot.slane %v1209, 1
      %v1445 = vsel %vm914, %v1443, %v1444
      %v1446 = vrot.slane %v1146, 1
      %v1447 = vrot.slane %v1210, 1
      %v1448 = vsel %vm914, %v1446, %v1447
      %v1449 = vrot.slane %v1147, 1
      %v1450 = vrot.slane %v1211, 1
      %v1451 = vsel %vm914, %v1449, %v1450
      %v1452 = vrot.slane %v1148, 1
      %v1453 = vrot.slane %v1212, 1
      %v1454 = vsel %vm914, %v1452, %v1453
      %v1455 = vrot.slane %v1149, 1
      %v1456 = vrot.slane %v1213, 1
      %v1457 = vsel %vm914, %v1455, %v1456
      %v1458 = vrot.slane %v1150, 1
      %v1459 = vrot.slane %v1214, 1
      %v1460 = vsel %vm914, %v1458, %v1459
      %v1461 = vrot.slane %v1151, 1
      %v1462 = vrot.slane %v1215, 1
      %v1463 = vsel %vm914, %v1461, %v1462
      %v1464 = vrot.slane %v1152, 1
      %v1465 = vrot.slane %v1216, 1
      %v1466 = vsel %vm914, %v1464, %v1465
      %v1467 = vrot.slane %v1153, 1
      %v1468 = vrot.slane %v1217, 1
      %v1469 = vsel %vm914, %v1467, %v1468
      %v1470 = vrot.slane %v1154, 1
      %v1471 = vrot.slane %v1218, 1
      %v1472 = vsel %vm914, %v1470, %v1471
      %v1473 = vrot.slane %v1155, 1
      %v1474 = vrot.slane %v1219, 1
      %v1475 = vsel %vm914, %v1473, %v1474
      %s1492 = scalar_lea.vmem %s2, 192
      %v1493 = vld [vmem:[%s1492] sm:$0xf]
      %v1494 = vld [vmem:[%s1492 + $0x4] sm:$0xf]
      %v1495 = vld [vmem:[%s1492 + $0x8] sm:$0xf]
      %v1496 = vld [vmem:[%s1492 + $0xc] sm:$0xf]
      %v1497 = vld [vmem:[%s1492 + $0x10] sm:$0xf]
      %v1498 = vld [vmem:[%s1492 + $0x14] sm:$0xf]
      %v1499 = vld [vmem:[%s1492 + $0x18] sm:$0xf]
      %v1500 = vld [vmem:[%s1492 + $0x1c] sm:$0xf]
      %v1501 = vld [vmem:[%s1492 + $0x20] sm:$0xf]
      %v1502 = vld [vmem:[%s1492 + $0x24] sm:$0xf]
      %v1503 = vld [vmem:[%s1492 + $0x28] sm:$0xf]
      %v1504 = vld [vmem:[%s1492 + $0x2c] sm:$0xf]
      %v1505 = vld [vmem:[%s1492 + $0x30] sm:$0xf]
      %v1506 = vld [vmem:[%s1492 + $0x34] sm:$0xf]
      %v1507 = vld [vmem:[%s1492 + $0x38] sm:$0xf]
      %v1508 = vld [vmem:[%s1492 + $0x3c] sm:$0xf]
      %v1509 = vld [vmem:[%s1492 + $0x40] sm:$0xf]
      %v1510 = vld [vmem:[%s1492 + $0x44] sm:$0xf]
      %v1511 = vld [vmem:[%s1492 + $0x48] sm:$0xf]
      %v1512 = vld [vmem:[%s1492 + $0x4c] sm:$0xf]
      %v1513 = vld [vmem:[%s1492 + $0x50] sm:$0xf]
      %v1514 = vld [vmem:[%s1492 + $0x54] sm:$0xf]
      %v1515 = vld [vmem:[%s1492 + $0x58] sm:$0xf]
      %v1516 = vld [vmem:[%s1492 + $0x5c] sm:$0xf]
      %v1517 = vld [vmem:[%s1492 + $0x60] sm:$0xf]
      %v1518 = vld [vmem:[%s1492 + $0x64] sm:$0xf]
      %v1519 = vld [vmem:[%s1492 + $0x68] sm:$0xf]
      %v1520 = vld [vmem:[%s1492 + $0x6c] sm:$0xf]
      %v1521 = vld [vmem:[%s1492 + $0x70] sm:$0xf]
      %v1522 = vld [vmem:[%s1492 + $0x74] sm:$0xf]
      %v1523 = vld [vmem:[%s1492 + $0x78] sm:$0xf]
      %v1524 = vld [vmem:[%s1492 + $0x7c] sm:$0xf]
      %v1525 = vld [vmem:[%s1492 + $0x80] sm:$0xf]
      %v1526 = vld [vmem:[%s1492 + $0x84] sm:$0xf]
      %v1527 = vld [vmem:[%s1492 + $0x88] sm:$0xf]
      %v1528 = vld [vmem:[%s1492 + $0x8c] sm:$0xf]
      %v1529 = vld [vmem:[%s1492 + $0x90] sm:$0xf]
      %v1530 = vld [vmem:[%s1492 + $0x94] sm:$0xf]
      %v1531 = vld [vmem:[%s1492 + $0x98] sm:$0xf]
      %v1532 = vld [vmem:[%s1492 + $0x9c] sm:$0xf]
      %v1533 = vld [vmem:[%s1492 + $0xa0] sm:$0xf]
      %v1534 = vld [vmem:[%s1492 + $0xa4] sm:$0xf]
      %v1535 = vld [vmem:[%s1492 + $0xa8] sm:$0xf]
      %v1536 = vld [vmem:[%s1492 + $0xac] sm:$0xf]
      %v1537 = vld [vmem:[%s1492 + $0xb0] sm:$0xf]
      %v1538 = vld [vmem:[%s1492 + $0xb4] sm:$0xf]
      %v1539 = vld [vmem:[%s1492 + $0xb8] sm:$0xf]
      %v1540 = vld [vmem:[%s1492 + $0xbc] sm:$0xf]
      %v1589 = vunpack.c.l.b16 %v1493
      %v1590 = vunpack.c.l.b16 %v1494
      %v1591 = vunpack.c.l.b16 %v1495
      %v1592 = vunpack.c.l.b16 %v1496
      %v1593 = vunpack.c.l.b16 %v1497
      %v1594 = vunpack.c.l.b16 %v1498
      %v1595 = vunpack.c.l.b16 %v1499
      %v1596 = vunpack.c.l.b16 %v1500
      %v1597 = vunpack.c.l.b16 %v1501
      %v1598 = vunpack.c.l.b16 %v1502
      %v1599 = vunpack.c.l.b16 %v1503
      %v1600 = vunpack.c.l.b16 %v1504
      %v1601 = vunpack.c.l.b16 %v1505
      %v1602 = vunpack.c.l.b16 %v1506
      %v1603 = vunpack.c.l.b16 %v1507
      %v1604 = vunpack.c.l.b16 %v1508
      %v1605 = vunpack.c.l.b16 %v1509
      %v1606 = vunpack.c.l.b16 %v1510
      %v1607 = vunpack.c.l.b16 %v1511
      %v1608 = vunpack.c.l.b16 %v1512
      %v1609 = vunpack.c.l.b16 %v1513
      %v1610 = vunpack.c.l.b16 %v1514
      %v1611 = vunpack.c.l.b16 %v1515
      %v1612 = vunpack.c.l.b16 %v1516
      %v1613 = vunpack.c.l.b16 %v1517
      %v1614 = vunpack.c.l.b16 %v1518
      %v1615 = vunpack.c.l.b16 %v1519
      %v1616 = vunpack.c.l.b16 %v1520
      %v1617 = vunpack.c.l.b16 %v1521
      %v1618 = vunpack.c.l.b16 %v1522
      %v1619 = vunpack.c.l.b16 %v1523
      %v1620 = vunpack.c.l.b16 %v1524
      %v1621 = vunpack.c.l.b16 %v1525
      %v1622 = vunpack.c.l.b16 %v1526
      %v1623 = vunpack.c.l.b16 %v1527
      %v1624 = vunpack.c.l.b16 %v1528
      %v1625 = vunpack.c.l.b16 %v1529
      %v1626 = vunpack.c.l.b16 %v1530
      %v1627 = vunpack.c.l.b16 %v1531
      %v1628 = vunpack.c.l.b16 %v1532
      %v1629 = vunpack.c.l.b16 %v1533
      %v1630 = vunpack.c.l.b16 %v1534
      %v1631 = vunpack.c.l.b16 %v1535
      %v1632 = vunpack.c.l.b16 %v1536
      %v1633 = vunpack.c.l.b16 %v1537
      %v1634 = vunpack.c.l.b16 %v1538
      %v1635 = vunpack.c.l.b16 %v1539
      %v1636 = vunpack.c.l.b16 %v1540
      %v1637 = vpack.c.b16 %v1590, %v1589
      %v1638 = vpack.c.b16 %v1592, %v1591
      %v1639 = vpack.c.b16 %v1594, %v1593
      %v1640 = vpack.c.b16 %v1596, %v1595
      %v1641 = vpack.c.b16 %v1598, %v1597
      %v1642 = vpack.c.b16 %v1600, %v1599
      %v1643 = vpack.c.b16 %v1602, %v1601
      %v1644 = vpack.c.b16 %v1604, %v1603
      %v1645 = vpack.c.b16 %v1606, %v1605
      %v1646 = vpack.c.b16 %v1608, %v1607
      %v1647 = vpack.c.b16 %v1610, %v1609
      %v1648 = vpack.c.b16 %v1612, %v1611
      %v1649 = vpack.c.b16 %v1614, %v1613
      %v1650 = vpack.c.b16 %v1616, %v1615
      %v1651 = vpack.c.b16 %v1618, %v1617
      %v1652 = vpack.c.b16 %v1620, %v1619
      %v1653 = vpack.c.b16 %v1622, %v1621
      %v1654 = vpack.c.b16 %v1624, %v1623
      %v1655 = vpack.c.b16 %v1626, %v1625
      %v1656 = vpack.c.b16 %v1628, %v1627
      %v1657 = vpack.c.b16 %v1630, %v1629
      %v1658 = vpack.c.b16 %v1632, %v1631
      %v1659 = vpack.c.b16 %v1634, %v1633
      %v1660 = vpack.c.b16 %v1636, %v1635
      %1685 = vmatpush.bf16.msra.mxu0 %v1644
      %1686 = vmatpush.bf16.msra.mxu0 %v1643
      %1687 = vmatpush.bf16.msra.mxu0 %v1642
      %1688 = vmatpush.bf16.msra.mxu0 %v1641
      %1689 = vmatpush.bf16.msra.mxu0 %v1640
      %1690 = vmatpush.bf16.msra.mxu0 %v1639
      %1691 = vmatpush.bf16.msra.mxu0 %v1638
      %1692 = vmatpush.bf16.msra.mxu0 %v1637
      %1693 = vmatmul.bf16.gmra.mxu0 %v1140
      %v1694 = vpop.f32.mrf.mxu0
      %v1695 = vadd.f32 0.0, %v1694
      %v1696 = vpop.f32.mrf.mxu0
      %v1697 = vadd.f32 0.0, %v1696
      %1698 = vmatmul.bf16.gmra.mxu0 %v1141
      %v1699 = vpop.f32.mrf.mxu0
      %v1700 = vadd.f32 0.0, %v1699
      %v1701 = vpop.f32.mrf.mxu0
      %v1702 = vadd.f32 0.0, %v1701
      %1703 = vmatmul.bf16.gmra.mxu0 %v1142
      %v1704 = vpop.f32.mrf.mxu0
      %v1705 = vadd.f32 0.0, %v1704
      %v1706 = vpop.f32.mrf.mxu0
      %v1707 = vadd.f32 0.0, %v1706
      %1708 = vmatmul.bf16.gmra.mxu0 %v1143
      %v1709 = vpop.f32.mrf.mxu0
      %v1710 = vadd.f32 0.0, %v1709
      %v1711 = vpop.f32.mrf.mxu0
      %v1712 = vadd.f32 0.0, %v1711
      %1713 = vmatmul.bf16.gmra.mxu0 %v1144
      %v1714 = vpop.f32.mrf.mxu0
      %v1715 = vadd.f32 0.0, %v1714
      %v1716 = vpop.f32.mrf.mxu0
      %v1717 = vadd.f32 0.0, %v1716
      %1718 = vmatmul.bf16.gmra.mxu0 %v1145
      %v1719 = vpop.f32.mrf.mxu0
      %v1720 = vadd.f32 0.0, %v1719
      %v1721 = vpop.f32.mrf.mxu0
      %v1722 = vadd.f32 0.0, %v1721
      %1723 = vmatmul.bf16.gmra.mxu0 %v1146
      %v1724 = vpop.f32.mrf.mxu0
      %v1725 = vadd.f32 0.0, %v1724
      %v1726 = vpop.f32.mrf.mxu0
      %v1727 = vadd.f32 0.0, %v1726
      %1728 = vmatmul.bf16.gmra.mxu0 %v1147
      %v1729 = vpop.f32.mrf.mxu0
      %v1730 = vadd.f32 0.0, %v1729
      %v1731 = vpop.f32.mrf.mxu0
      %v1732 = vadd.f32 0.0, %v1731
      %1733 = vmatmul.bf16.gmra.mxu0 %v1148
      %v1734 = vpop.f32.mrf.mxu0
      %v1735 = vadd.f32 0.0, %v1734
      %v1736 = vpop.f32.mrf.mxu0
      %v1737 = vadd.f32 0.0, %v1736
      %1738 = vmatmul.bf16.gmra.mxu0 %v1149
      %v1739 = vpop.f32.mrf.mxu0
      %v1740 = vadd.f32 0.0, %v1739
      %v1741 = vpop.f32.mrf.mxu0
      %v1742 = vadd.f32 0.0, %v1741
      %1743 = vmatmul.bf16.gmra.mxu0 %v1150
      %v1744 = vpop.f32.mrf.mxu0
      %v1745 = vadd.f32 0.0, %v1744
      %v1746 = vpop.f32.mrf.mxu0
      %v1747 = vadd.f32 0.0, %v1746
      %1748 = vmatmul.bf16.gmra.mxu0 %v1151
      %v1749 = vpop.f32.mrf.mxu0
      %v1750 = vadd.f32 0.0, %v1749
      %v1751 = vpop.f32.mrf.mxu0
      %v1752 = vadd.f32 0.0, %v1751
      %1753 = vmatmul.bf16.gmra.mxu0 %v1152
      %v1754 = vpop.f32.mrf.mxu0
      %v1755 = vadd.f32 0.0, %v1754
      %v1756 = vpop.f32.mrf.mxu0
      %v1757 = vadd.f32 0.0, %v1756
      %1758 = vmatmul.bf16.gmra.mxu0 %v1153
      %v1759 = vpop.f32.mrf.mxu0
      %v1760 = vadd.f32 0.0, %v1759
      %v1761 = vpop.f32.mrf.mxu0
      %v1762 = vadd.f32 0.0, %v1761
      %1763 = vmatmul.bf16.gmra.mxu0 %v1154
      %v1764 = vpop.f32.mrf.mxu0
      %v1765 = vadd.f32 0.0, %v1764
      %v1766 = vpop.f32.mrf.mxu0
      %v1767 = vadd.f32 0.0, %v1766
      %1768 = vmatmul.bf16.gmra.mxu0 %v1155
      %v1769 = vpop.f32.mrf.mxu0
      %v1770 = vadd.f32 0.0, %v1769
      %v1771 = vpop.f32.mrf.mxu0
      %v1772 = vadd.f32 0.0, %v1771
      %1773 = vdwg.mxu0
      %1774 = vmatpush.bf16.msra.mxu0 %v1652
      %1775 = vmatpush.bf16.msra.mxu0 %v1651
      %1776 = vmatpush.bf16.msra.mxu0 %v1650
      %1777 = vmatpush.bf16.msra.mxu0 %v1649
      %1778 = vmatpush.bf16.msra.mxu0 %v1648
      %1779 = vmatpush.bf16.msra.mxu0 %v1647
      %1780 = vmatpush.bf16.msra.mxu0 %v1646
      %1781 = vmatpush.bf16.msra.mxu0 %v1645
      %1782 = vmatmul.bf16.gmra.mxu0 %v1231
      %v1783 = vpop.f32.mrf.mxu0
      %v1784 = vadd.f32 %v1695, %v1783
      %v1785 = vpop.f32.mrf.mxu0
      %v1786 = vadd.f32 %v1697, %v1785
      %1787 = vmatmul.bf16.gmra.mxu0 %v1243
      %v1788 = vpop.f32.mrf.mxu0
      %v1789 = vadd.f32 %v1700, %v1788
      %v1790 = vpop.f32.mrf.mxu0
      %v1791 = vadd.f32 %v1702, %v1790
      %1792 = vmatmul.bf16.gmra.mxu0 %v1255
      %v1793 = vpop.f32.mrf.mxu0
      %v1794 = vadd.f32 %v1705, %v1793
      %v1795 = vpop.f32.mrf.mxu0
      %v1796 = vadd.f32 %v1707, %v1795
      %1797 = vmatmul.bf16.gmra.mxu0 %v1267
      %v1798 = vpop.f32.mrf.mxu0
      %v1799 = vadd.f32 %v1710, %v1798
      %v1800 = vpop.f32.mrf.mxu0
      %v1801 = vadd.f32 %v1712, %v1800
      %1802 = vmatmul.bf16.gmra.mxu0 %v1279
      %v1803 = vpop.f32.mrf.mxu0
      %v1804 = vadd.f32 %v1715, %v1803
      %v1805 = vpop.f32.mrf.mxu0
      %v1806 = vadd.f32 %v1717, %v1805
      %1807 = vmatmul.bf16.gmra.mxu0 %v1291
      %v1808 = vpop.f32.mrf.mxu0
      %v1809 = vadd.f32 %v1720, %v1808
      %v1810 = vpop.f32.mrf.mxu0
      %v1811 = vadd.f32 %v1722, %v1810
      %1812 = vmatmul.bf16.gmra.mxu0 %v1303
      %v1813 = vpop.f32.mrf.mxu0
      %v1814 = vadd.f32 %v1725, %v1813
      %v1815 = vpop.f32.mrf.mxu0
      %v1816 = vadd.f32 %v1727, %v1815
      %1817 = vmatmul.bf16.gmra.mxu0 %v1315
      %v1818 = vpop.f32.mrf.mxu0
      %v1819 = vadd.f32 %v1730, %v1818
      %v1820 = vpop.f32.mrf.mxu0
      %v1821 = vadd.f32 %v1732, %v1820
      %1822 = vmatmul.bf16.gmra.mxu0 %v1327
      %v1823 = vpop.f32.mrf.mxu0
      %v1824 = vadd.f32 %v1735, %v1823
      %v1825 = vpop.f32.mrf.mxu0
      %v1826 = vadd.f32 %v1737, %v1825
      %1827 = vmatmul.bf16.gmra.mxu0 %v1339
      %v1828 = vpop.f32.mrf.mxu0
      %v1829 = vadd.f32 %v1740, %v1828
      %v1830 = vpop.f32.mrf.mxu0
      %v1831 = vadd.f32 %v1742, %v1830
      %1832 = vmatmul.bf16.gmra.mxu0 %v1351
      %v1833 = vpop.f32.mrf.mxu0
      %v1834 = vadd.f32 %v1745, %v1833
      %v1835 = vpop.f32.mrf.mxu0
      %v1836 = vadd.f32 %v1747, %v1835
      %1837 = vmatmul.bf16.gmra.mxu0 %v1363
      %v1838 = vpop.f32.mrf.mxu0
      %v1839 = vadd.f32 %v1750, %v1838
      %v1840 = vpop.f32.mrf.mxu0
      %v1841 = vadd.f32 %v1752, %v1840
      %1842 = vmatmul.bf16.gmra.mxu0 %v1375
      %v1843 = vpop.f32.mrf.mxu0
      %v1844 = vadd.f32 %v1755, %v1843
      %v1845 = vpop.f32.mrf.mxu0
      %v1846 = vadd.f32 %v1757, %v1845
      %1847 = vmatmul.bf16.gmra.mxu0 %v1387
      %v1848 = vpop.f32.mrf.mxu0
      %v1849 = vadd.f32 %v1760, %v1848
      %v1850 = vpop.f32.mrf.mxu0
      %v1851 = vadd.f32 %v1762, %v1850
      %1852 = vmatmul.bf16.gmra.mxu0 %v1399
      %v1853 = vpop.f32.mrf.mxu0
      %v1854 = vadd.f32 %v1765, %v1853
      %v1855 = vpop.f32.mrf.mxu0
      %v1856 = vadd.f32 %v1767, %v1855
      %1857 = vmatmul.bf16.gmra.mxu0 %v1411
      %v1858 = vpop.f32.mrf.mxu0
      %v1859 = vadd.f32 %v1770, %v1858
      %v1860 = vpop.f32.mrf.mxu0
      %v1861 = vadd.f32 %v1772, %v1860
      %1862 = vdwg.mxu0
      %1863 = vmatpush.bf16.msra.mxu0 %v1660
      %1864 = vmatpush.bf16.msra.mxu0 %v1659
      %1865 = vmatpush.bf16.msra.mxu0 %v1658
      %1866 = vmatpush.bf16.msra.mxu0 %v1657
      %1867 = vmatpush.bf16.msra.mxu0 %v1656
      %1868 = vmatpush.bf16.msra.mxu0 %v1655
      %1869 = vmatpush.bf16.msra.mxu0 %v1654
      %1870 = vmatpush.bf16.msra.mxu0 %v1653
      %1871 = vmatmul.bf16.gmra.mxu0 %v1430
      %v1872 = vpop.f32.mrf.mxu0
      %v1873 = vadd.f32 %v1784, %v1872
      %v1874 = vpop.f32.mrf.mxu0
      %v1875 = vadd.f32 %v1786, %v1874
      %1876 = vmatmul.bf16.gmra.mxu0 %v1433
      %v1877 = vpop.f32.mrf.mxu0
      %v1878 = vadd.f32 %v1789, %v1877
      %v1879 = vpop.f32.mrf.mxu0
      %v1880 = vadd.f32 %v1791, %v1879
      %1881 = vmatmul.bf16.gmra.mxu0 %v1436
      %v1882 = vpop.f32.mrf.mxu0
      %v1883 = vadd.f32 %v1794, %v1882
      %v1884 = vpop.f32.mrf.mxu0
      %v1885 = vadd.f32 %v1796, %v1884
      %1886 = vmatmul.bf16.gmra.mxu0 %v1439
      %v1887 = vpop.f32.mrf.mxu0
      %v1888 = vadd.f32 %v1799, %v1887
      %v1889 = vpop.f32.mrf.mxu0
      %v1890 = vadd.f32 %v1801, %v1889
      %1891 = vmatmul.bf16.gmra.mxu0 %v1442
      %v1892 = vpop.f32.mrf.mxu0
      %v1893 = vadd.f32 %v1804, %v1892
      %v1894 = vpop.f32.mrf.mxu0
      %v1895 = vadd.f32 %v1806, %v1894
      %1896 = vmatmul.bf16.gmra.mxu0 %v1445
      %v1897 = vpop.f32.mrf.mxu0
      %v1898 = vadd.f32 %v1809, %v1897
      %v1899 = vpop.f32.mrf.mxu0
      %v1900 = vadd.f32 %v1811, %v1899
      %1901 = vmatmul.bf16.gmra.mxu0 %v1448
      %v1902 = vpop.f32.mrf.mxu0
      %v1903 = vadd.f32 %v1814, %v1902
      %v1904 = vpop.f32.mrf.mxu0
      %v1905 = vadd.f32 %v1816, %v1904
      %1906 = vmatmul.bf16.gmra.mxu0 %v1451
      %v1907 = vpop.f32.mrf.mxu0
      %v1908 = vadd.f32 %v1819, %v1907
      %v1909 = vpop.f32.mrf.mxu0
      %v1910 = vadd.f32 %v1821, %v1909
      %1911 = vmatmul.bf16.gmra.mxu0 %v1454
      %v1912 = vpop.f32.mrf.mxu0
      %v1913 = vadd.f32 %v1824, %v1912
      %v1914 = vpop.f32.mrf.mxu0
      %v1915 = vadd.f32 %v1826, %v1914
      %1916 = vmatmul.bf16.gmra.mxu0 %v1457
      %v1917 = vpop.f32.mrf.mxu0
      %v1918 = vadd.f32 %v1829, %v1917
      %v1919 = vpop.f32.mrf.mxu0
      %v1920 = vadd.f32 %v1831, %v1919
      %1921 = vmatmul.bf16.gmra.mxu0 %v1460
      %v1922 = vpop.f32.mrf.mxu0
      %v1923 = vadd.f32 %v1834, %v1922
      %v1924 = vpop.f32.mrf.mxu0
      %v1925 = vadd.f32 %v1836, %v1924
      %1926 = vmatmul.bf16.gmra.mxu0 %v1463
      %v1927 = vpop.f32.mrf.mxu0
      %v1928 = vadd.f32 %v1839, %v1927
      %v1929 = vpop.f32.mrf.mxu0
      %v1930 = vadd.f32 %v1841, %v1929
      %1931 = vmatmul.bf16.gmra.mxu0 %v1466
      %v1932 = vpop.f32.mrf.mxu0
      %v1933 = vadd.f32 %v1844, %v1932
      %v1934 = vpop.f32.mrf.mxu0
      %v1935 = vadd.f32 %v1846, %v1934
      %1936 = vmatmul.bf16.gmra.mxu0 %v1469
      %v1937 = vpop.f32.mrf.mxu0
      %v1938 = vadd.f32 %v1849, %v1937
      %v1939 = vpop.f32.mrf.mxu0
      %v1940 = vadd.f32 %v1851, %v1939
      %1941 = vmatmul.bf16.gmra.mxu0 %v1472
      %v1942 = vpop.f32.mrf.mxu0
      %v1943 = vadd.f32 %v1854, %v1942
      %v1944 = vpop.f32.mrf.mxu0
      %v1945 = vadd.f32 %v1856, %v1944
      %1946 = vmatmul.bf16.gmra.mxu0 %v1475
      %v1947 = vpop.f32.mrf.mxu0
      %v1948 = vadd.f32 %v1859, %v1947
      %v1949 = vpop.f32.mrf.mxu0
      %v1950 = vadd.f32 %v1861, %v1949
      %1951 = vdwg.mxu0
      %v2000 = vunpack.c.l.b16 %v979
      %v2001 = vunpack.c.l.b16 %v980
      %v2002 = vunpack.c.l.b16 %v981
      %v2003 = vunpack.c.l.b16 %v982
      %v2004 = vunpack.c.l.b16 %v983
      %v2005 = vunpack.c.l.b16 %v984
      %v2006 = vunpack.c.l.b16 %v985
      %v2007 = vunpack.c.l.b16 %v986
      %v2008 = vunpack.c.l.b16 %v987
      %v2009 = vunpack.c.l.b16 %v988
      %v2010 = vunpack.c.l.b16 %v989
      %v2011 = vunpack.c.l.b16 %v990
      %v2012 = vunpack.c.l.b16 %v991
      %v2013 = vunpack.c.l.b16 %v992
      %v2014 = vunpack.c.l.b16 %v993
      %v2015 = vunpack.c.l.b16 %v994
      %v2016 = vunpack.c.l.b16 %v995
      %v2017 = vunpack.c.l.b16 %v996
      %v2018 = vunpack.c.l.b16 %v997
      %v2019 = vunpack.c.l.b16 %v998
      %v2020 = vunpack.c.l.b16 %v999
      %v2021 = vunpack.c.l.b16 %v1000
      %v2022 = vunpack.c.l.b16 %v1001
      %v2023 = vunpack.c.l.b16 %v1002
      %v2024 = vunpack.c.l.b16 %v1003
      %v2025 = vunpack.c.l.b16 %v1004
      %v2026 = vunpack.c.l.b16 %v1005
      %v2027 = vunpack.c.l.b16 %v1006
      %v2028 = vunpack.c.l.b16 %v1007
      %v2029 = vunpack.c.l.b16 %v1008
      %v2030 = vunpack.c.l.b16 %v1009
      %v2031 = vunpack.c.l.b16 %v1010
      %v2032 = vunpack.c.l.b16 %v1011
      %v2033 = vunpack.c.l.b16 %v1012
      %v2034 = vunpack.c.l.b16 %v1013
      %v2035 = vunpack.c.l.b16 %v1014
      %v2036 = vunpack.c.l.b16 %v1015
      %v2037 = vunpack.c.l.b16 %v1016
      %v2038 = vunpack.c.l.b16 %v1017
      %v2039 = vunpack.c.l.b16 %v1018
      %v2040 = vunpack.c.l.b16 %v1019
      %v2041 = vunpack.c.l.b16 %v1020
      %v2042 = vunpack.c.l.b16 %v1021
      %v2043 = vunpack.c.l.b16 %v1022
      %v2044 = vunpack.c.l.b16 %v1023
      %v2045 = vunpack.c.l.b16 %v1024
      %v2046 = vunpack.c.l.b16 %v1025
      %v2047 = vunpack.c.l.b16 %v1026
      %v2048 = vpack.c.b16 %v2001, %v2000
      %v2049 = vpack.c.b16 %v2003, %v2002
      %v2050 = vpack.c.b16 %v2005, %v2004
      %v2051 = vpack.c.b16 %v2007, %v2006
      %v2052 = vpack.c.b16 %v2009, %v2008
      %v2053 = vpack.c.b16 %v2011, %v2010
      %v2054 = vpack.c.b16 %v2013, %v2012
      %v2055 = vpack.c.b16 %v2015, %v2014
      %v2056 = vpack.c.b16 %v2017, %v2016
      %v2057 = vpack.c.b16 %v2019, %v2018
      %v2058 = vpack.c.b16 %v2021, %v2020
      %v2059 = vpack.c.b16 %v2023, %v2022
      %v2060 = vpack.c.b16 %v2025, %v2024
      %v2061 = vpack.c.b16 %v2027, %v2026
      %v2062 = vpack.c.b16 %v2029, %v2028
      %v2063 = vpack.c.b16 %v2031, %v2030
      %v2064 = vpack.c.b16 %v2033, %v2032
      %v2065 = vpack.c.b16 %v2035, %v2034
      %v2066 = vpack.c.b16 %v2037, %v2036
      %v2067 = vpack.c.b16 %v2039, %v2038
      %v2068 = vpack.c.b16 %v2041, %v2040
      %v2069 = vpack.c.b16 %v2043, %v2042
      %v2070 = vpack.c.b16 %v2045, %v2044
      %v2071 = vpack.c.b16 %v2047, %v2046
      %2096 = vmatpush.bf16.msra.mxu0 %v2055
      %2097 = vmatpush.bf16.msra.mxu0 %v2054
      %2098 = vmatpush.bf16.msra.mxu0 %v2053
      %2099 = vmatpush.bf16.msra.mxu0 %v2052
      %2100 = vmatpush.bf16.msra.mxu0 %v2051
      %2101 = vmatpush.bf16.msra.mxu0 %v2050
      %2102 = vmatpush.bf16.msra.mxu0 %v2049
      %2103 = vmatpush.bf16.msra.mxu0 %v2048
      %2104 = vmatmul.bf16.gmra.mxu0 %v625
      %v2105 = vpop.f32.mrf.mxu0
      %v2106 = vadd.f32 %v1873, %v2105
      %v2107 = vpop.f32.mrf.mxu0
      %v2108 = vadd.f32 %v1875, %v2107
      %2109 = vmatmul.bf16.gmra.mxu0 %v626
      %v2110 = vpop.f32.mrf.mxu0
      %v2111 = vadd.f32 %v1878, %v2110
      %v2112 = vpop.f32.mrf.mxu0
      %v2113 = vadd.f32 %v1880, %v2112
      %2114 = vmatmul.bf16.gmra.mxu0 %v627
      %v2115 = vpop.f32.mrf.mxu0
      %v2116 = vadd.f32 %v1883, %v2115
      %v2117 = vpop.f32.mrf.mxu0
      %v2118 = vadd.f32 %v1885, %v2117
      %2119 = vmatmul.bf16.gmra.mxu0 %v628
      %v2120 = vpop.f32.mrf.mxu0
      %v2121 = vadd.f32 %v1888, %v2120
      %v2122 = vpop.f32.mrf.mxu0
      %v2123 = vadd.f32 %v1890, %v2122
      %2124 = vmatmul.bf16.gmra.mxu0 %v629
      %v2125 = vpop.f32.mrf.mxu0
      %v2126 = vadd.f32 %v1893, %v2125
      %v2127 = vpop.f32.mrf.mxu0
      %v2128 = vadd.f32 %v1895, %v2127
      %2129 = vmatmul.bf16.gmra.mxu0 %v630
      %v2130 = vpop.f32.mrf.mxu0
      %v2131 = vadd.f32 %v1898, %v2130
      %v2132 = vpop.f32.mrf.mxu0
      %v2133 = vadd.f32 %v1900, %v2132
      %2134 = vmatmul.bf16.gmra.mxu0 %v631
      %v2135 = vpop.f32.mrf.mxu0
      %v2136 = vadd.f32 %v1903, %v2135
      %v2137 = vpop.f32.mrf.mxu0
      %v2138 = vadd.f32 %v1905, %v2137
      %2139 = vmatmul.bf16.gmra.mxu0 %v632
      %v2140 = vpop.f32.mrf.mxu0
      %v2141 = vadd.f32 %v1908, %v2140
      %v2142 = vpop.f32.mrf.mxu0
      %v2143 = vadd.f32 %v1910, %v2142
      %2144 = vmatmul.bf16.gmra.mxu0 %v633
      %v2145 = vpop.f32.mrf.mxu0
      %v2146 = vadd.f32 %v1913, %v2145
      %v2147 = vpop.f32.mrf.mxu0
      %v2148 = vadd.f32 %v1915, %v2147
      %2149 = vmatmul.bf16.gmra.mxu0 %v634
      %v2150 = vpop.f32.mrf.mxu0
      %v2151 = vadd.f32 %v1918, %v2150
      %v2152 = vpop.f32.mrf.mxu0
      %v2153 = vadd.f32 %v1920, %v2152
      %2154 = vmatmul.bf16.gmra.mxu0 %v635
      %v2155 = vpop.f32.mrf.mxu0
      %v2156 = vadd.f32 %v1923, %v2155
      %v2157 = vpop.f32.mrf.mxu0
      %v2158 = vadd.f32 %v1925, %v2157
      %2159 = vmatmul.bf16.gmra.mxu0 %v636
      %v2160 = vpop.f32.mrf.mxu0
      %v2161 = vadd.f32 %v1928, %v2160
      %v2162 = vpop.f32.mrf.mxu0
      %v2163 = vadd.f32 %v1930, %v2162
      %2164 = vmatmul.bf16.gmra.mxu0 %v637
      %v2165 = vpop.f32.mrf.mxu0
      %v2166 = vadd.f32 %v1933, %v2165
      %v2167 = vpop.f32.mrf.mxu0
      %v2168 = vadd.f32 %v1935, %v2167
      %2169 = vmatmul.bf16.gmra.mxu0 %v638
      %v2170 = vpop.f32.mrf.mxu0
      %v2171 = vadd.f32 %v1938, %v2170
      %v2172 = vpop.f32.mrf.mxu0
      %v2173 = vadd.f32 %v1940, %v2172
      %2174 = vmatmul.bf16.gmra.mxu0 %v639
      %v2175 = vpop.f32.mrf.mxu0
      %v2176 = vadd.f32 %v1943, %v2175
      %v2177 = vpop.f32.mrf.mxu0
      %v2178 = vadd.f32 %v1945, %v2177
      %2179 = vmatmul.bf16.gmra.mxu0 %v640
      %v2180 = vpop.f32.mrf.mxu0
      %v2181 = vadd.f32 %v1948, %v2180
      %v2182 = vpop.f32.mrf.mxu0
      %v2183 = vadd.f32 %v1950, %v2182
      %2184 = vdwg.mxu0
      %2185 = vmatpush.bf16.msra.mxu0 %v2063
      %2186 = vmatpush.bf16.msra.mxu0 %v2062
      %2187 = vmatpush.bf16.msra.mxu0 %v2061
      %2188 = vmatpush.bf16.msra.mxu0 %v2060
      %2189 = vmatpush.bf16.msra.mxu0 %v2059
      %2190 = vmatpush.bf16.msra.mxu0 %v2058
      %2191 = vmatpush.bf16.msra.mxu0 %v2057
      %2192 = vmatpush.bf16.msra.mxu0 %v2056
      %2193 = vmatmul.bf16.gmra.mxu0 %v717
      %v2194 = vpop.f32.mrf.mxu0
      %v2195 = vadd.f32 %v2106, %v2194
      %v2196 = vpop.f32.mrf.mxu0
      %v2197 = vadd.f32 %v2108, %v2196
      %2198 = vmatmul.bf16.gmra.mxu0 %v729
      %v2199 = vpop.f32.mrf.mxu0
      %v2200 = vadd.f32 %v2111, %v2199
      %v2201 = vpop.f32.mrf.mxu0
      %v2202 = vadd.f32 %v2113, %v2201
      %2203 = vmatmul.bf16.gmra.mxu0 %v741
      %v2204 = vpop.f32.mrf.mxu0
      %v2205 = vadd.f32 %v2116, %v2204
      %v2206 = vpop.f32.mrf.mxu0
      %v2207 = vadd.f32 %v2118, %v2206
      %2208 = vmatmul.bf16.gmra.mxu0 %v753
      %v2209 = vpop.f32.mrf.mxu0
      %v2210 = vadd.f32 %v2121, %v2209
      %v2211 = vpop.f32.mrf.mxu0
      %v2212 = vadd.f32 %v2123, %v2211
      %2213 = vmatmul.bf16.gmra.mxu0 %v765
      %v2214 = vpop.f32.mrf.mxu0
      %v2215 = vadd.f32 %v2126, %v2214
      %v2216 = vpop.f32.mrf.mxu0
      %v2217 = vadd.f32 %v2128, %v2216
      %2218 = vmatmul.bf16.gmra.mxu0 %v777
      %v2219 = vpop.f32.mrf.mxu0
      %v2220 = vadd.f32 %v2131, %v2219
      %v2221 = vpop.f32.mrf.mxu0
      %v2222 = vadd.f32 %v2133, %v2221
      %2223 = vmatmul.bf16.gmra.mxu0 %v789
      %v2224 = vpop.f32.mrf.mxu0
      %v2225 = vadd.f32 %v2136, %v2224
      %v2226 = vpop.f32.mrf.mxu0
      %v2227 = vadd.f32 %v2138, %v2226
      %2228 = vmatmul.bf16.gmra.mxu0 %v801
      %v2229 = vpop.f32.mrf.mxu0
      %v2230 = vadd.f32 %v2141, %v2229
      %v2231 = vpop.f32.mrf.mxu0
      %v2232 = vadd.f32 %v2143, %v2231
      %2233 = vmatmul.bf16.gmra.mxu0 %v813
      %v2234 = vpop.f32.mrf.mxu0
      %v2235 = vadd.f32 %v2146, %v2234
      %v2236 = vpop.f32.mrf.mxu0
      %v2237 = vadd.f32 %v2148, %v2236
      %2238 = vmatmul.bf16.gmra.mxu0 %v825
      %v2239 = vpop.f32.mrf.mxu0
      %v2240 = vadd.f32 %v2151, %v2239
      %v2241 = vpop.f32.mrf.mxu0
      %v2242 = vadd.f32 %v2153, %v2241
      %2243 = vmatmul.bf16.gmra.mxu0 %v837
      %v2244 = vpop.f32.mrf.mxu0
      %v2245 = vadd.f32 %v2156, %v2244
      %v2246 = vpop.f32.mrf.mxu0
      %v2247 = vadd.f32 %v2158, %v2246
      %2248 = vmatmul.bf16.gmra.mxu0 %v849
      %v2249 = vpop.f32.mrf.mxu0
      %v2250 = vadd.f32 %v2161, %v2249
      %v2251 = vpop.f32.mrf.mxu0
      %v2252 = vadd.f32 %v2163, %v2251
      %2253 = vmatmul.bf16.gmra.mxu0 %v861
      %v2254 = vpop.f32.mrf.mxu0
      %v2255 = vadd.f32 %v2166, %v2254
      %v2256 = vpop.f32.mrf.mxu0
      %v2257 = vadd.f32 %v2168, %v2256
      %2258 = vmatmul.bf16.gmra.mxu0 %v873
      %v2259 = vpop.f32.mrf.mxu0
      %v2260 = vadd.f32 %v2171, %v2259
      %v2261 = vpop.f32.mrf.mxu0
      %v2262 = vadd.f32 %v2173, %v2261
      %2263 = vmatmul.bf16.gmra.mxu0 %v885
      %v2264 = vpop.f32.mrf.mxu0
      %v2265 = vadd.f32 %v2176, %v2264
      %v2266 = vpop.f32.mrf.mxu0
      %v2267 = vadd.f32 %v2178, %v2266
      %2268 = vmatmul.bf16.gmra.mxu0 %v897
      %v2269 = vpop.f32.mrf.mxu0
      %v2270 = vadd.f32 %v2181, %v2269
      %v2271 = vpop.f32.mrf.mxu0
      %v2272 = vadd.f32 %v2183, %v2271
      %2273 = vdwg.mxu0
      %2274 = vmatpush.bf16.msra.mxu0 %v2071
      %2275 = vmatpush.bf16.msra.mxu0 %v2070
      %2276 = vmatpush.bf16.msra.mxu0 %v2069
      %2277 = vmatpush.bf16.msra.mxu0 %v2068
      %2278 = vmatpush.bf16.msra.mxu0 %v2067
      %2279 = vmatpush.bf16.msra.mxu0 %v2066
      %2280 = vmatpush.bf16.msra.mxu0 %v2065
      %2281 = vmatpush.bf16.msra.mxu0 %v2064
      %2282 = vmatmul.bf16.gmra.mxu0 %v917
      %v2283 = vpop.f32.mrf.mxu0
      %v2284 = vadd.f32 %v2195, %v2283
      %v2285 = vpop.f32.mrf.mxu0
      %v2286 = vadd.f32 %v2197, %v2285
      %2287 = vmatmul.bf16.gmra.mxu0 %v920
      %v2288 = vpop.f32.mrf.mxu0
      %v2289 = vadd.f32 %v2200, %v2288
      %v2290 = vpop.f32.mrf.mxu0
      %v2291 = vadd.f32 %v2202, %v2290
      %2292 = vmatmul.bf16.gmra.mxu0 %v923
      %v2293 = vpop.f32.mrf.mxu0
      %v2294 = vadd.f32 %v2205, %v2293
      %v2295 = vpop.f32.mrf.mxu0
      %v2296 = vadd.f32 %v2207, %v2295
      %2297 = vmatmul.bf16.gmra.mxu0 %v926
      %v2298 = vpop.f32.mrf.mxu0
      %v2299 = vadd.f32 %v2210, %v2298
      %v2300 = vpop.f32.mrf.mxu0
      %v2301 = vadd.f32 %v2212, %v2300
      %2302 = vmatmul.bf16.gmra.mxu0 %v929
      %v2303 = vpop.f32.mrf.mxu0
      %v2304 = vadd.f32 %v2215, %v2303
      %v2305 = vpop.f32.mrf.mxu0
      %v2306 = vadd.f32 %v2217, %v2305
      %2307 = vmatmul.bf16.gmra.mxu0 %v932
      %v2308 = vpop.f32.mrf.mxu0
      %v2309 = vadd.f32 %v2220, %v2308
      %v2310 = vpop.f32.mrf.mxu0
      %v2311 = vadd.f32 %v2222, %v2310
      %2312 = vmatmul.bf16.gmra.mxu0 %v935
      %v2313 = vpop.f32.mrf.mxu0
      %v2314 = vadd.f32 %v2225, %v2313
      %v2315 = vpop.f32.mrf.mxu0
      %v2316 = vadd.f32 %v2227, %v2315
      %2317 = vmatmul.bf16.gmra.mxu0 %v938
      %v2318 = vpop.f32.mrf.mxu0
      %v2319 = vadd.f32 %v2230, %v2318
      %v2320 = vpop.f32.mrf.mxu0
      %v2321 = vadd.f32 %v2232, %v2320
      %2322 = vmatmul.bf16.gmra.mxu0 %v941
      %v2323 = vpop.f32.mrf.mxu0
      %v2324 = vadd.f32 %v2235, %v2323
      %v2325 = vpop.f32.mrf.mxu0
      %v2326 = vadd.f32 %v2237, %v2325
      %2327 = vmatmul.bf16.gmra.mxu0 %v944
      %v2328 = vpop.f32.mrf.mxu0
      %v2329 = vadd.f32 %v2240, %v2328
      %v2330 = vpop.f32.mrf.mxu0
      %v2331 = vadd.f32 %v2242, %v2330
      %2332 = vmatmul.bf16.gmra.mxu0 %v947
      %v2333 = vpop.f32.mrf.mxu0
      %v2334 = vadd.f32 %v2245, %v2333
      %v2335 = vpop.f32.mrf.mxu0
      %v2336 = vadd.f32 %v2247, %v2335
      %2337 = vmatmul.bf16.gmra.mxu0 %v950
      %v2338 = vpop.f32.mrf.mxu0
      %v2339 = vadd.f32 %v2250, %v2338
      %v2340 = vpop.f32.mrf.mxu0
      %v2341 = vadd.f32 %v2252, %v2340
      %2342 = vmatmul.bf16.gmra.mxu0 %v953
      %v2343 = vpop.f32.mrf.mxu0
      %v2344 = vadd.f32 %v2255, %v2343
      %v2345 = vpop.f32.mrf.mxu0
      %v2346 = vadd.f32 %v2257, %v2345
      %2347 = vmatmul.bf16.gmra.mxu0 %v956
      %v2348 = vpop.f32.mrf.mxu0
      %v2349 = vadd.f32 %v2260, %v2348
      %v2350 = vpop.f32.mrf.mxu0
      %v2351 = vadd.f32 %v2262, %v2350
      %2352 = vmatmul.bf16.gmra.mxu0 %v959
      %v2353 = vpop.f32.mrf.mxu0
      %v2354 = vadd.f32 %v2265, %v2353
      %v2355 = vpop.f32.mrf.mxu0
      %v2356 = vadd.f32 %v2267, %v2355
      %2357 = vmatmul.bf16.gmra.mxu0 %v962
      %v2358 = vpop.f32.mrf.mxu0
      %v2359 = vadd.f32 %v2270, %v2358
      %v2360 = vpop.f32.mrf.mxu0
      %v2361 = vadd.f32 %v2272, %v2360
      %2362 = vdwg.mxu0
      %s2363 = scalar_lea.vmem [#allocation2], 24
      %v2364 = vld [vmem:[%s2363] sm:$0xf]
      %v2365 = vld [vmem:[%s2363 + $0x4] sm:$0xf]
      %v2366 = vld [vmem:[%s2363 + $0x8] sm:$0xf]
      %v2367 = vld [vmem:[%s2363 + $0xc] sm:$0xf]
      %v2368 = vld [vmem:[%s2363 + $0x10] sm:$0xf]
      %v2369 = vld [vmem:[%s2363 + $0x14] sm:$0xf]
      %v2370 = vld [vmem:[%s2363 + $0x18] sm:$0xf]
      %v2371 = vld [vmem:[%s2363 + $0x1c] sm:$0xf]
      %v2372 = vld [vmem:[%s2363 + $0x20] sm:$0xf]
      %v2373 = vld [vmem:[%s2363 + $0x24] sm:$0xf]
      %v2374 = vld [vmem:[%s2363 + $0x28] sm:$0xf]
      %v2375 = vld [vmem:[%s2363 + $0x2c] sm:$0xf]
      %v2376 = vld [vmem:[%s2363 + $0x30] sm:$0xf]
      %v2377 = vld [vmem:[%s2363 + $0x34] sm:$0xf]
      %v2378 = vld [vmem:[%s2363 + $0x38] sm:$0xf]
      %v2379 = vld [vmem:[%s2363 + $0x3c] sm:$0xf]
      %v2380 = vld [vmem:[%s2363 + $0x40] sm:$0xf]
      %v2381 = vld [vmem:[%s2363 + $0x44] sm:$0xf]
      %v2382 = vld [vmem:[%s2363 + $0x48] sm:$0xf]
      %v2383 = vld [vmem:[%s2363 + $0x4c] sm:$0xf]
      %v2384 = vld [vmem:[%s2363 + $0x50] sm:$0xf]
      %v2385 = vld [vmem:[%s2363 + $0x54] sm:$0xf]
      %v2386 = vld [vmem:[%s2363 + $0x58] sm:$0xf]
      %v2387 = vld [vmem:[%s2363 + $0x5c] sm:$0xf]
      %v2388 = vld [vmem:[%s2363 + $0x60] sm:$0xf]
      %v2389 = vld [vmem:[%s2363 + $0x64] sm:$0xf]
      %v2390 = vld [vmem:[%s2363 + $0x68] sm:$0xf]
      %v2391 = vld [vmem:[%s2363 + $0x6c] sm:$0xf]
      %v2392 = vld [vmem:[%s2363 + $0x70] sm:$0xf]
      %v2393 = vld [vmem:[%s2363 + $0x74] sm:$0xf]
      %v2394 = vld [vmem:[%s2363 + $0x78] sm:$0xf]
      %v2395 = vld [vmem:[%s2363 + $0x7c] sm:$0xf]
      %v2396 = vld [vmem:[%s2363 + $0x80] sm:$0xf]
      %v2397 = vld [vmem:[%s2363 + $0x84] sm:$0xf]
      %v2398 = vld [vmem:[%s2363 + $0x88] sm:$0xf]
      %v2399 = vld [vmem:[%s2363 + $0x8c] sm:$0xf]
      %v2400 = vld [vmem:[%s2363 + $0x90] sm:$0xf]
      %v2401 = vld [vmem:[%s2363 + $0x94] sm:$0xf]
      %v2402 = vld [vmem:[%s2363 + $0x98] sm:$0xf]
      %v2403 = vld [vmem:[%s2363 + $0x9c] sm:$0xf]
      %v2404 = vld [vmem:[%s2363 + $0xa0] sm:$0xf]
      %v2405 = vld [vmem:[%s2363 + $0xa4] sm:$0xf]
      %v2406 = vld [vmem:[%s2363 + $0xa8] sm:$0xf]
      %v2407 = vld [vmem:[%s2363 + $0xac] sm:$0xf]
      %v2408 = vld [vmem:[%s2363 + $0xb0] sm:$0xf]
      %v2409 = vld [vmem:[%s2363 + $0xb4] sm:$0xf]
      %v2410 = vld [vmem:[%s2363 + $0xb8] sm:$0xf]
      %v2411 = vld [vmem:[%s2363 + $0xbc] sm:$0xf]
      %v2444 = vunpack.c.l.b16 %v2364
      %v2445 = vunpack.c.l.b16 %v2365
      %v2446 = vunpack.c.l.b16 %v2367
      %v2447 = vunpack.c.l.b16 %v2368
      %v2448 = vunpack.c.l.b16 %v2370
      %v2449 = vunpack.c.l.b16 %v2371
      %v2450 = vunpack.c.l.b16 %v2373
      %v2451 = vunpack.c.l.b16 %v2374
      %v2452 = vunpack.c.l.b16 %v2376
      %v2453 = vunpack.c.l.b16 %v2377
      %v2454 = vunpack.c.l.b16 %v2379
      %v2455 = vunpack.c.l.b16 %v2380
      %v2456 = vunpack.c.l.b16 %v2382
      %v2457 = vunpack.c.l.b16 %v2383
      %v2458 = vunpack.c.l.b16 %v2385
      %v2459 = vunpack.c.l.b16 %v2386
      %v2460 = vunpack.c.l.b16 %v2388
      %v2461 = vunpack.c.l.b16 %v2389
      %v2462 = vunpack.c.l.b16 %v2391
      %v2463 = vunpack.c.l.b16 %v2392
      %v2464 = vunpack.c.l.b16 %v2394
      %v2465 = vunpack.c.l.b16 %v2395
      %v2466 = vunpack.c.l.b16 %v2397
      %v2467 = vunpack.c.l.b16 %v2398
      %v2468 = vunpack.c.l.b16 %v2400
      %v2469 = vunpack.c.l.b16 %v2401
      %v2470 = vunpack.c.l.b16 %v2403
      %v2471 = vunpack.c.l.b16 %v2404
      %v2472 = vunpack.c.l.b16 %v2406
      %v2473 = vunpack.c.l.b16 %v2407
      %v2474 = vunpack.c.l.b16 %v2409
      %v2475 = vunpack.c.l.b16 %v2410
      %v2476 = vpack.c.b16 %v2445, %v2444
      %v2477 = vpack.c.b16 %v2447, %v2446
      %v2478 = vpack.c.b16 %v2449, %v2448
      %v2479 = vpack.c.b16 %v2451, %v2450
      %v2480 = vpack.c.b16 %v2453, %v2452
      %v2481 = vpack.c.b16 %v2455, %v2454
      %v2482 = vpack.c.b16 %v2457, %v2456
      %v2483 = vpack.c.b16 %v2459, %v2458
      %v2484 = vpack.c.b16 %v2461, %v2460
      %v2485 = vpack.c.b16 %v2463, %v2462
      %v2486 = vpack.c.b16 %v2465, %v2464
      %v2487 = vpack.c.b16 %v2467, %v2466
      %v2488 = vpack.c.b16 %v2469, %v2468
      %v2489 = vpack.c.b16 %v2471, %v2470
      %v2490 = vpack.c.b16 %v2473, %v2472
      %v2491 = vpack.c.b16 %v2475, %v2474
      %v2524 = vunpack.c.l.b16 %v2366
      %v2525 = vunpack.c.l.b16 %v2369
      %v2526 = vunpack.c.l.b16 %v2372
      %v2527 = vunpack.c.l.b16 %v2375
      %v2528 = vunpack.c.l.b16 %v2378
      %v2529 = vunpack.c.l.b16 %v2381
      %v2530 = vunpack.c.l.b16 %v2384
      %v2531 = vunpack.c.l.b16 %v2387
      %v2532 = vunpack.c.l.b16 %v2390
      %v2533 = vunpack.c.l.b16 %v2393
      %v2534 = vunpack.c.l.b16 %v2396
      %v2535 = vunpack.c.l.b16 %v2399
      %v2536 = vunpack.c.l.b16 %v2402
      %v2537 = vunpack.c.l.b16 %v2405
      %v2538 = vunpack.c.l.b16 %v2408
      %v2539 = vunpack.c.l.b16 %v2411
      %v2540 = vpack.c.b16 %v2524, %v2524
      %v2541 = vpack.c.b16 %v2525, %v2525
      %v2542 = vpack.c.b16 %v2526, %v2526
      %v2543 = vpack.c.b16 %v2527, %v2527
      %v2544 = vpack.c.b16 %v2528, %v2528
      %v2545 = vpack.c.b16 %v2529, %v2529
      %v2546 = vpack.c.b16 %v2530, %v2530
      %v2547 = vpack.c.b16 %v2531, %v2531
      %v2548 = vpack.c.b16 %v2532, %v2532
      %v2549 = vpack.c.b16 %v2533, %v2533
      %v2550 = vpack.c.b16 %v2534, %v2534
      %v2551 = vpack.c.b16 %v2535, %v2535
      %v2552 = vpack.c.b16 %v2536, %v2536
      %v2553 = vpack.c.b16 %v2537, %v2537
      %v2554 = vpack.c.b16 %v2538, %v2538
      %v2555 = vpack.c.b16 %v2539, %v2539
      %v2557 = vshrl.u32 %v2476, 16
      %v2559 = vshll.u32 %v2476, 16
      %v2561 = vrot.slane %v2559, 1
      %v2562 = vor.u32 %v2557, %v2561
      %v2564 = vshll.u32 %v2540, 16
      %v2566 = vrot.slane %v2564, 1
      %v2567 = vsel %vm705, %v2562, %v2566
      %v2569 = vshrl.u32 %v2477, 16
      %v2571 = vshll.u32 %v2477, 16
      %v2573 = vrot.slane %v2571, 1
      %v2574 = vor.u32 %v2569, %v2573
      %v2576 = vshll.u32 %v2541, 16
      %v2578 = vrot.slane %v2576, 1
      %v2579 = vsel %vm705, %v2574, %v2578
      %v2581 = vshrl.u32 %v2478, 16
      %v2583 = vshll.u32 %v2478, 16
      %v2585 = vrot.slane %v2583, 1
      %v2586 = vor.u32 %v2581, %v2585
      %v2588 = vshll.u32 %v2542, 16
      %v2590 = vrot.slane %v2588, 1
      %v2591 = vsel %vm705, %v2586, %v2590
      %v2593 = vshrl.u32 %v2479, 16
      %v2595 = vshll.u32 %v2479, 16
      %v2597 = vrot.slane %v2595, 1
      %v2598 = vor.u32 %v2593, %v2597
      %v2600 = vshll.u32 %v2543, 16
      %v2602 = vrot.slane %v2600, 1
      %v2603 = vsel %vm705, %v2598, %v2602
      %v2605 = vshrl.u32 %v2480, 16
      %v2607 = vshll.u32 %v2480, 16
      %v2609 = vrot.slane %v2607, 1
      %v2610 = vor.u32 %v2605, %v2609
      %v2612 = vshll.u32 %v2544, 16
      %v2614 = vrot.slane %v2612, 1
      %v2615 = vsel %vm705, %v2610, %v2614
      %v2617 = vshrl.u32 %v2481, 16
      %v2619 = vshll.u32 %v2481, 16
      %v2621 = vrot.slane %v2619, 1
      %v2622 = vor.u32 %v2617, %v2621
      %v2624 = vshll.u32 %v2545, 16
      %v2626 = vrot.slane %v2624, 1
      %v2627 = vsel %vm705, %v2622, %v2626
      %v2629 = vshrl.u32 %v2482, 16
      %v2631 = vshll.u32 %v2482, 16
      %v2633 = vrot.slane %v2631, 1
      %v2634 = vor.u32 %v2629, %v2633
      %v2636 = vshll.u32 %v2546, 16
      %v2638 = vrot.slane %v2636, 1
      %v2639 = vsel %vm705, %v2634, %v2638
      %v2641 = vshrl.u32 %v2483, 16
      %v2643 = vshll.u32 %v2483, 16
      %v2645 = vrot.slane %v2643, 1
      %v2646 = vor.u32 %v2641, %v2645
      %v2648 = vshll.u32 %v2547, 16
      %v2650 = vrot.slane %v2648, 1
      %v2651 = vsel %vm705, %v2646, %v2650
      %v2653 = vshrl.u32 %v2484, 16
      %v2655 = vshll.u32 %v2484, 16
      %v2657 = vrot.slane %v2655, 1
      %v2658 = vor.u32 %v2653, %v2657
      %v2660 = vshll.u32 %v2548, 16
      %v2662 = vrot.slane %v2660, 1
      %v2663 = vsel %vm705, %v2658, %v2662
      %v2665 = vshrl.u32 %v2485, 16
      %v2667 = vshll.u32 %v2485, 16
      %v2669 = vrot.slane %v2667, 1
      %v2670 = vor.u32 %v2665, %v2669
      %v2672 = vshll.u32 %v2549, 16
      %v2674 = vrot.slane %v2672, 1
      %v2675 = vsel %vm705, %v2670, %v2674
      %v2677 = vshrl.u32 %v2486, 16
      %v2679 = vshll.u32 %v2486, 16
      %v2681 = vrot.slane %v2679, 1
      %v2682 = vor.u32 %v2677, %v2681
      %v2684 = vshll.u32 %v2550, 16
      %v2686 = vrot.slane %v2684, 1
      %v2687 = vsel %vm705, %v2682, %v2686
      %v2689 = vshrl.u32 %v2487, 16
      %v2691 = vshll.u32 %v2487, 16
      %v2693 = vrot.slane %v2691, 1
      %v2694 = vor.u32 %v2689, %v2693
      %v2696 = vshll.u32 %v2551, 16
      %v2698 = vrot.slane %v2696, 1
      %v2699 = vsel %vm705, %v2694, %v2698
      %v2701 = vshrl.u32 %v2488, 16
      %v2703 = vshll.u32 %v2488, 16
      %v2705 = vrot.slane %v2703, 1
      %v2706 = vor.u32 %v2701, %v2705
      %v2708 = vshll.u32 %v2552, 16
      %v2710 = vrot.slane %v2708, 1
      %v2711 = vsel %vm705, %v2706, %v2710
      %v2713 = vshrl.u32 %v2489, 16
      %v2715 = vshll.u32 %v2489, 16
      %v2717 = vrot.slane %v2715, 1
      %v2718 = vor.u32 %v2713, %v2717
      %v2720 = vshll.u32 %v2553, 16
      %v2722 = vrot.slane %v2720, 1
      %v2723 = vsel %vm705, %v2718, %v2722
      %v2725 = vshrl.u32 %v2490, 16
      %v2727 = vshll.u32 %v2490, 16
      %v2729 = vrot.slane %v2727, 1
      %v2730 = vor.u32 %v2725, %v2729
      %v2732 = vshll.u32 %v2554, 16
      %v2734 = vrot.slane %v2732, 1
      %v2735 = vsel %vm705, %v2730, %v2734
      %v2737 = vshrl.u32 %v2491, 16
      %v2739 = vshll.u32 %v2491, 16
      %v2741 = vrot.slane %v2739, 1
      %v2742 = vor.u32 %v2737, %v2741
      %v2744 = vshll.u32 %v2555, 16
      %v2746 = vrot.slane %v2744, 1
      %v2747 = vsel %vm705, %v2742, %v2746
      %v2764 = vrot.slane %v2476, 1
      %v2765 = vrot.slane %v2540, 1
      %v2766 = vsel %vm914, %v2764, %v2765
      %v2767 = vrot.slane %v2477, 1
      %v2768 = vrot.slane %v2541, 1
      %v2769 = vsel %vm914, %v2767, %v2768
      %v2770 = vrot.slane %v2478, 1
      %v2771 = vrot.slane %v2542, 1
      %v2772 = vsel %vm914, %v2770, %v2771
      %v2773 = vrot.slane %v2479, 1
      %v2774 = vrot.slane %v2543, 1
      %v2775 = vsel %vm914, %v2773, %v2774
      %v2776 = vrot.slane %v2480, 1
      %v2777 = vrot.slane %v2544, 1
      %v2778 = vsel %vm914, %v2776, %v2777
      %v2779 = vrot.slane %v2481, 1
      %v2780 = vrot.slane %v2545, 1
      %v2781 = vsel %vm914, %v2779, %v2780
      %v2782 = vrot.slane %v2482, 1
      %v2783 = vrot.slane %v2546, 1
      %v2784 = vsel %vm914, %v2782, %v2783
      %v2785 = vrot.slane %v2483, 1
      %v2786 = vrot.slane %v2547, 1
      %v2787 = vsel %vm914, %v2785, %v2786
      %v2788 = vrot.slane %v2484, 1
      %v2789 = vrot.slane %v2548, 1
      %v2790 = vsel %vm914, %v2788, %v2789
      %v2791 = vrot.slane %v2485, 1
      %v2792 = vrot.slane %v2549, 1
      %v2793 = vsel %vm914, %v2791, %v2792
      %v2794 = vrot.slane %v2486, 1
      %v2795 = vrot.slane %v2550, 1
      %v2796 = vsel %vm914, %v2794, %v2795
      %v2797 = vrot.slane %v2487, 1
      %v2798 = vrot.slane %v2551, 1
      %v2799 = vsel %vm914, %v2797, %v2798
      %v2800 = vrot.slane %v2488, 1
      %v2801 = vrot.slane %v2552, 1
      %v2802 = vsel %vm914, %v2800, %v2801
      %v2803 = vrot.slane %v2489, 1
      %v2804 = vrot.slane %v2553, 1
      %v2805 = vsel %vm914, %v2803, %v2804
      %v2806 = vrot.slane %v2490, 1
      %v2807 = vrot.slane %v2554, 1
      %v2808 = vsel %vm914, %v2806, %v2807
      %v2809 = vrot.slane %v2491, 1
      %v2810 = vrot.slane %v2555, 1
      %v2811 = vsel %vm914, %v2809, %v2810
      %s2828 = scalar_lea.vmem %s2, 384
      %v2829 = vld [vmem:[%s2828] sm:$0xf]
      %v2830 = vld [vmem:[%s2828 + $0x4] sm:$0xf]
      %v2831 = vld [vmem:[%s2828 + $0x8] sm:$0xf]
      %v2832 = vld [vmem:[%s2828 + $0xc] sm:$0xf]
      %v2833 = vld [vmem:[%s2828 + $0x10] sm:$0xf]
      %v2834 = vld [vmem:[%s2828 + $0x14] sm:$0xf]
      %v2835 = vld [vmem:[%s2828 + $0x18] sm:$0xf]
      %v2836 = vld [vmem:[%s2828 + $0x1c] sm:$0xf]
      %v2837 = vld [vmem:[%s2828 + $0x20] sm:$0xf]
      %v2838 = vld [vmem:[%s2828 + $0x24] sm:$0xf]
      %v2839 = vld [vmem:[%s2828 + $0x28] sm:$0xf]
      %v2840 = vld [vmem:[%s2828 + $0x2c] sm:$0xf]
      %v2841 = vld [vmem:[%s2828 + $0x30] sm:$0xf]
      %v2842 = vld [vmem:[%s2828 + $0x34] sm:$0xf]
      %v2843 = vld [vmem:[%s2828 + $0x38] sm:$0xf]
      %v2844 = vld [vmem:[%s2828 + $0x3c] sm:$0xf]
      %v2845 = vld [vmem:[%s2828 + $0x40] sm:$0xf]
      %v2846 = vld [vmem:[%s2828 + $0x44] sm:$0xf]
      %v2847 = vld [vmem:[%s2828 + $0x48] sm:$0xf]
      %v2848 = vld [vmem:[%s2828 + $0x4c] sm:$0xf]
      %v2849 = vld [vmem:[%s2828 + $0x50] sm:$0xf]
      %v2850 = vld [vmem:[%s2828 + $0x54] sm:$0xf]
      %v2851 = vld [vmem:[%s2828 + $0x58] sm:$0xf]
      %v2852 = vld [vmem:[%s2828 + $0x5c] sm:$0xf]
      %v2853 = vld [vmem:[%s2828 + $0x60] sm:$0xf]
      %v2854 = vld [vmem:[%s2828 + $0x64] sm:$0xf]
      %v2855 = vld [vmem:[%s2828 + $0x68] sm:$0xf]
      %v2856 = vld [vmem:[%s2828 + $0x6c] sm:$0xf]
      %v2857 = vld [vmem:[%s2828 + $0x70] sm:$0xf]
      %v2858 = vld [vmem:[%s2828 + $0x74] sm:$0xf]
      %v2859 = vld [vmem:[%s2828 + $0x78] sm:$0xf]
      %v2860 = vld [vmem:[%s2828 + $0x7c] sm:$0xf]
      %v2861 = vld [vmem:[%s2828 + $0x80] sm:$0xf]
      %v2862 = vld [vmem:[%s2828 + $0x84] sm:$0xf]
      %v2863 = vld [vmem:[%s2828 + $0x88] sm:$0xf]
      %v2864 = vld [vmem:[%s2828 + $0x8c] sm:$0xf]
      %v2865 = vld [vmem:[%s2828 + $0x90] sm:$0xf]
      %v2866 = vld [vmem:[%s2828 + $0x94] sm:$0xf]
      %v2867 = vld [vmem:[%s2828 + $0x98] sm:$0xf]
      %v2868 = vld [vmem:[%s2828 + $0x9c] sm:$0xf]
      %v2869 = vld [vmem:[%s2828 + $0xa0] sm:$0xf]
      %v2870 = vld [vmem:[%s2828 + $0xa4] sm:$0xf]
      %v2871 = vld [vmem:[%s2828 + $0xa8] sm:$0xf]
      %v2872 = vld [vmem:[%s2828 + $0xac] sm:$0xf]
      %v2873 = vld [vmem:[%s2828 + $0xb0] sm:$0xf]
      %v2874 = vld [vmem:[%s2828 + $0xb4] sm:$0xf]
      %v2875 = vld [vmem:[%s2828 + $0xb8] sm:$0xf]
      %v2876 = vld [vmem:[%s2828 + $0xbc] sm:$0xf]
      %v2925 = vunpack.c.l.b16 %v2829
      %v2926 = vunpack.c.l.b16 %v2830
      %v2927 = vunpack.c.l.b16 %v2831
      %v2928 = vunpack.c.l.b16 %v2832
      %v2929 = vunpack.c.l.b16 %v2833
      %v2930 = vunpack.c.l.b16 %v2834
      %v2931 = vunpack.c.l.b16 %v2835
      %v2932 = vunpack.c.l.b16 %v2836
      %v2933 = vunpack.c.l.b16 %v2837
      %v2934 = vunpack.c.l.b16 %v2838
      %v2935 = vunpack.c.l.b16 %v2839
      %v2936 = vunpack.c.l.b16 %v2840
      %v2937 = vunpack.c.l.b16 %v2841
      %v2938 = vunpack.c.l.b16 %v2842
      %v2939 = vunpack.c.l.b16 %v2843
      %v2940 = vunpack.c.l.b16 %v2844
      %v2941 = vunpack.c.l.b16 %v2845
      %v2942 = vunpack.c.l.b16 %v2846
      %v2943 = vunpack.c.l.b16 %v2847
      %v2944 = vunpack.c.l.b16 %v2848
      %v2945 = vunpack.c.l.b16 %v2849
      %v2946 = vunpack.c.l.b16 %v2850
      %v2947 = vunpack.c.l.b16 %v2851
      %v2948 = vunpack.c.l.b16 %v2852
      %v2949 = vunpack.c.l.b16 %v2853
      %v2950 = vunpack.c.l.b16 %v2854
      %v2951 = vunpack.c.l.b16 %v2855
      %v2952 = vunpack.c.l.b16 %v2856
      %v2953 = vunpack.c.l.b16 %v2857
      %v2954 = vunpack.c.l.b16 %v2858
      %v2955 = vunpack.c.l.b16 %v2859
      %v2956 = vunpack.c.l.b16 %v2860
      %v2957 = vunpack.c.l.b16 %v2861
      %v2958 = vunpack.c.l.b16 %v2862
      %v2959 = vunpack.c.l.b16 %v2863
      %v2960 = vunpack.c.l.b16 %v2864
      %v2961 = vunpack.c.l.b16 %v2865
      %v2962 = vunpack.c.l.b16 %v2866
      %v2963 = vunpack.c.l.b16 %v2867
      %v2964 = vunpack.c.l.b16 %v2868
      %v2965 = vunpack.c.l.b16 %v2869
      %v2966 = vunpack.c.l.b16 %v2870
      %v2967 = vunpack.c.l.b16 %v2871
      %v2968 = vunpack.c.l.b16 %v2872
      %v2969 = vunpack.c.l.b16 %v2873
      %v2970 = vunpack.c.l.b16 %v2874
      %v2971 = vunpack.c.l.b16 %v2875
      %v2972 = vunpack.c.l.b16 %v2876
      %v2973 = vpack.c.b16 %v2926, %v2925
      %v2974 = vpack.c.b16 %v2928, %v2927
      %v2975 = vpack.c.b16 %v2930, %v2929
      %v2976 = vpack.c.b16 %v2932, %v2931
      %v2977 = vpack.c.b16 %v2934, %v2933
      %v2978 = vpack.c.b16 %v2936, %v2935
      %v2979 = vpack.c.b16 %v2938, %v2937
      %v2980 = vpack.c.b16 %v2940, %v2939
      %v2981 = vpack.c.b16 %v2942, %v2941
      %v2982 = vpack.c.b16 %v2944, %v2943
      %v2983 = vpack.c.b16 %v2946, %v2945
      %v2984 = vpack.c.b16 %v2948, %v2947
      %v2985 = vpack.c.b16 %v2950, %v2949
      %v2986 = vpack.c.b16 %v2952, %v2951
      %v2987 = vpack.c.b16 %v2954, %v2953
      %v2988 = vpack.c.b16 %v2956, %v2955
      %v2989 = vpack.c.b16 %v2958, %v2957
      %v2990 = vpack.c.b16 %v2960, %v2959
      %v2991 = vpack.c.b16 %v2962, %v2961
      %v2992 = vpack.c.b16 %v2964, %v2963
      %v2993 = vpack.c.b16 %v2966, %v2965
      %v2994 = vpack.c.b16 %v2968, %v2967
      %v2995 = vpack.c.b16 %v2970, %v2969
      %v2996 = vpack.c.b16 %v2972, %v2971
      %3021 = vmatpush.bf16.msra.mxu0 %v2980
      %3022 = vmatpush.bf16.msra.mxu0 %v2979
      %3023 = vmatpush.bf16.msra.mxu0 %v2978
      %3024 = vmatpush.bf16.msra.mxu0 %v2977
      %3025 = vmatpush.bf16.msra.mxu0 %v2976
      %3026 = vmatpush.bf16.msra.mxu0 %v2975
      %3027 = vmatpush.bf16.msra.mxu0 %v2974
      %3028 = vmatpush.bf16.msra.mxu0 %v2973
      %3029 = vmatmul.bf16.gmra.mxu0 %v2476
      %v3030 = vpop.f32.mrf.mxu0
      %v3031 = vadd.f32 0.0, %v3030
      %v3032 = vpop.f32.mrf.mxu0
      %v3033 = vadd.f32 0.0, %v3032
      %3034 = vmatmul.bf16.gmra.mxu0 %v2477
      %v3035 = vpop.f32.mrf.mxu0
      %v3036 = vadd.f32 0.0, %v3035
      %v3037 = vpop.f32.mrf.mxu0
      %v3038 = vadd.f32 0.0, %v3037
      %3039 = vmatmul.bf16.gmra.mxu0 %v2478
      %v3040 = vpop.f32.mrf.mxu0
      %v3041 = vadd.f32 0.0, %v3040
      %v3042 = vpop.f32.mrf.mxu0
      %v3043 = vadd.f32 0.0, %v3042
      %3044 = vmatmul.bf16.gmra.mxu0 %v2479
      %v3045 = vpop.f32.mrf.mxu0
      %v3046 = vadd.f32 0.0, %v3045
      %v3047 = vpop.f32.mrf.mxu0
      %v3048 = vadd.f32 0.0, %v3047
      %3049 = vmatmul.bf16.gmra.mxu0 %v2480
      %v3050 = vpop.f32.mrf.mxu0
      %v3051 = vadd.f32 0.0, %v3050
      %v3052 = vpop.f32.mrf.mxu0
      %v3053 = vadd.f32 0.0, %v3052
      %3054 = vmatmul.bf16.gmra.mxu0 %v2481
      %v3055 = vpop.f32.mrf.mxu0
      %v3056 = vadd.f32 0.0, %v3055
      %v3057 = vpop.f32.mrf.mxu0
      %v3058 = vadd.f32 0.0, %v3057
      %3059 = vmatmul.bf16.gmra.mxu0 %v2482
      %v3060 = vpop.f32.mrf.mxu0
      %v3061 = vadd.f32 0.0, %v3060
      %v3062 = vpop.f32.mrf.mxu0
      %v3063 = vadd.f32 0.0, %v3062
      %3064 = vmatmul.bf16.gmra.mxu0 %v2483
      %v3065 = vpop.f32.mrf.mxu0
      %v3066 = vadd.f32 0.0, %v3065
      %v3067 = vpop.f32.mrf.mxu0
      %v3068 = vadd.f32 0.0, %v3067
      %3069 = vmatmul.bf16.gmra.mxu0 %v2484
      %v3070 = vpop.f32.mrf.mxu0
      %v3071 = vadd.f32 0.0, %v3070
      %v3072 = vpop.f32.mrf.mxu0
      %v3073 = vadd.f32 0.0, %v3072
      %3074 = vmatmul.bf16.gmra.mxu0 %v2485
      %v3075 = vpop.f32.mrf.mxu0
      %v3076 = vadd.f32 0.0, %v3075
      %v3077 = vpop.f32.mrf.mxu0
      %v3078 = vadd.f32 0.0, %v3077
      %3079 = vmatmul.bf16.gmra.mxu0 %v2486
      %v3080 = vpop.f32.mrf.mxu0
      %v3081 = vadd.f32 0.0, %v3080
      %v3082 = vpop.f32.mrf.mxu0
      %v3083 = vadd.f32 0.0, %v3082
      %3084 = vmatmul.bf16.gmra.mxu0 %v2487
      %v3085 = vpop.f32.mrf.mxu0
      %v3086 = vadd.f32 0.0, %v3085
      %v3087 = vpop.f32.mrf.mxu0
      %v3088 = vadd.f32 0.0, %v3087
      %3089 = vmatmul.bf16.gmra.mxu0 %v2488
      %v3090 = vpop.f32.mrf.mxu0
      %v3091 = vadd.f32 0.0, %v3090
      %v3092 = vpop.f32.mrf.mxu0
      %v3093 = vadd.f32 0.0, %v3092
      %3094 = vmatmul.bf16.gmra.mxu0 %v2489
      %v3095 = vpop.f32.mrf.mxu0
      %v3096 = vadd.f32 0.0, %v3095
      %v3097 = vpop.f32.mrf.mxu0
      %v3098 = vadd.f32 0.0, %v3097
      %3099 = vmatmul.bf16.gmra.mxu0 %v2490
      %v3100 = vpop.f32.mrf.mxu0
      %v3101 = vadd.f32 0.0, %v3100
      %v3102 = vpop.f32.mrf.mxu0
      %v3103 = vadd.f32 0.0, %v3102
      %3104 = vmatmul.bf16.gmra.mxu0 %v2491
      %v3105 = vpop.f32.mrf.mxu0
      %v3106 = vadd.f32 0.0, %v3105
      %v3107 = vpop.f32.mrf.mxu0
      %v3108 = vadd.f32 0.0, %v3107
      %3109 = vdwg.mxu0
      %3110 = vmatpush.bf16.msra.mxu0 %v2988
      %3111 = vmatpush.bf16.msra.mxu0 %v2987
      %3112 = vmatpush.bf16.msra.mxu0 %v2986
      %3113 = vmatpush.bf16.msra.mxu0 %v2985
      %3114 = vmatpush.bf16.msra.mxu0 %v2984
      %3115 = vmatpush.bf16.msra.mxu0 %v2983
      %3116 = vmatpush.bf16.msra.mxu0 %v2982
      %3117 = vmatpush.bf16.msra.mxu0 %v2981
      %3118 = vmatmul.bf16.gmra.mxu0 %v2567
      %v3119 = vpop.f32.mrf.mxu0
      %v3120 = vadd.f32 %v3031, %v3119
      %v3121 = vpop.f32.mrf.mxu0
      %v3122 = vadd.f32 %v3033, %v3121
      %3123 = vmatmul.bf16.gmra.mxu0 %v2579
      %v3124 = vpop.f32.mrf.mxu0
      %v3125 = vadd.f32 %v3036, %v3124
      %v3126 = vpop.f32.mrf.mxu0
      %v3127 = vadd.f32 %v3038, %v3126
      %3128 = vmatmul.bf16.gmra.mxu0 %v2591
      %v3129 = vpop.f32.mrf.mxu0
      %v3130 = vadd.f32 %v3041, %v3129
      %v3131 = vpop.f32.mrf.mxu0
      %v3132 = vadd.f32 %v3043, %v3131
      %3133 = vmatmul.bf16.gmra.mxu0 %v2603
      %v3134 = vpop.f32.mrf.mxu0
      %v3135 = vadd.f32 %v3046, %v3134
      %v3136 = vpop.f32.mrf.mxu0
      %v3137 = vadd.f32 %v3048, %v3136
      %3138 = vmatmul.bf16.gmra.mxu0 %v2615
      %v3139 = vpop.f32.mrf.mxu0
      %v3140 = vadd.f32 %v3051, %v3139
      %v3141 = vpop.f32.mrf.mxu0
      %v3142 = vadd.f32 %v3053, %v3141
      %3143 = vmatmul.bf16.gmra.mxu0 %v2627
      %v3144 = vpop.f32.mrf.mxu0
      %v3145 = vadd.f32 %v3056, %v3144
      %v3146 = vpop.f32.mrf.mxu0
      %v3147 = vadd.f32 %v3058, %v3146
      %3148 = vmatmul.bf16.gmra.mxu0 %v2639
      %v3149 = vpop.f32.mrf.mxu0
      %v3150 = vadd.f32 %v3061, %v3149
      %v3151 = vpop.f32.mrf.mxu0
      %v3152 = vadd.f32 %v3063, %v3151
      %3153 = vmatmul.bf16.gmra.mxu0 %v2651
      %v3154 = vpop.f32.mrf.mxu0
      %v3155 = vadd.f32 %v3066, %v3154
      %v3156 = vpop.f32.mrf.mxu0
      %v3157 = vadd.f32 %v3068, %v3156
      %3158 = vmatmul.bf16.gmra.mxu0 %v2663
      %v3159 = vpop.f32.mrf.mxu0
      %v3160 = vadd.f32 %v3071, %v3159
      %v3161 = vpop.f32.mrf.mxu0
      %v3162 = vadd.f32 %v3073, %v3161
      %3163 = vmatmul.bf16.gmra.mxu0 %v2675
      %v3164 = vpop.f32.mrf.mxu0
      %v3165 = vadd.f32 %v3076, %v3164
      %v3166 = vpop.f32.mrf.mxu0
      %v3167 = vadd.f32 %v3078, %v3166
      %3168 = vmatmul.bf16.gmra.mxu0 %v2687
      %v3169 = vpop.f32.mrf.mxu0
      %v3170 = vadd.f32 %v3081, %v3169
      %v3171 = vpop.f32.mrf.mxu0
      %v3172 = vadd.f32 %v3083, %v3171
      %3173 = vmatmul.bf16.gmra.mxu0 %v2699
      %v3174 = vpop.f32.mrf.mxu0
      %v3175 = vadd.f32 %v3086, %v3174
      %v3176 = vpop.f32.mrf.mxu0
      %v3177 = vadd.f32 %v3088, %v3176
      %3178 = vmatmul.bf16.gmra.mxu0 %v2711
      %v3179 = vpop.f32.mrf.mxu0
      %v3180 = vadd.f32 %v3091, %v3179
      %v3181 = vpop.f32.mrf.mxu0
      %v3182 = vadd.f32 %v3093, %v3181
      %3183 = vmatmul.bf16.gmra.mxu0 %v2723
      %v3184 = vpop.f32.mrf.mxu0
      %v3185 = vadd.f32 %v3096, %v3184
      %v3186 = vpop.f32.mrf.mxu0
      %v3187 = vadd.f32 %v3098, %v3186
      %3188 = vmatmul.bf16.gmra.mxu0 %v2735
      %v3189 = vpop.f32.mrf.mxu0
      %v3190 = vadd.f32 %v3101, %v3189
      %v3191 = vpop.f32.mrf.mxu0
      %v3192 = vadd.f32 %v3103, %v3191
      %3193 = vmatmul.bf16.gmra.mxu0 %v2747
      %v3194 = vpop.f32.mrf.mxu0
      %v3195 = vadd.f32 %v3106, %v3194
      %v3196 = vpop.f32.mrf.mxu0
      %v3197 = vadd.f32 %v3108, %v3196
      %3198 = vdwg.mxu0
      %3199 = vmatpush.bf16.msra.mxu0 %v2996
      %3200 = vmatpush.bf16.msra.mxu0 %v2995
      %3201 = vmatpush.bf16.msra.mxu0 %v2994
      %3202 = vmatpush.bf16.msra.mxu0 %v2993
      %3203 = vmatpush.bf16.msra.mxu0 %v2992
      %3204 = vmatpush.bf16.msra.mxu0 %v2991
      %3205 = vmatpush.bf16.msra.mxu0 %v2990
      %3206 = vmatpush.bf16.msra.mxu0 %v2989
      %3207 = vmatmul.bf16.gmra.mxu0 %v2766
      %v3208 = vpop.f32.mrf.mxu0
      %v3209 = vadd.f32 %v3120, %v3208
      %v3210 = vpop.f32.mrf.mxu0
      %v3211 = vadd.f32 %v3122, %v3210
      %3212 = vmatmul.bf16.gmra.mxu0 %v2769
      %v3213 = vpop.f32.mrf.mxu0
      %v3214 = vadd.f32 %v3125, %v3213
      %v3215 = vpop.f32.mrf.mxu0
      %v3216 = vadd.f32 %v3127, %v3215
      %3217 = vmatmul.bf16.gmra.mxu0 %v2772
      %v3218 = vpop.f32.mrf.mxu0
      %v3219 = vadd.f32 %v3130, %v3218
      %v3220 = vpop.f32.mrf.mxu0
      %v3221 = vadd.f32 %v3132, %v3220
      %3222 = vmatmul.bf16.gmra.mxu0 %v2775
      %v3223 = vpop.f32.mrf.mxu0
      %v3224 = vadd.f32 %v3135, %v3223
      %v3225 = vpop.f32.mrf.mxu0
      %v3226 = vadd.f32 %v3137, %v3225
      %3227 = vmatmul.bf16.gmra.mxu0 %v2778
      %v3228 = vpop.f32.mrf.mxu0
      %v3229 = vadd.f32 %v3140, %v3228
      %v3230 = vpop.f32.mrf.mxu0
      %v3231 = vadd.f32 %v3142, %v3230
      %3232 = vmatmul.bf16.gmra.mxu0 %v2781
      %v3233 = vpop.f32.mrf.mxu0
      %v3234 = vadd.f32 %v3145, %v3233
      %v3235 = vpop.f32.mrf.mxu0
      %v3236 = vadd.f32 %v3147, %v3235
      %3237 = vmatmul.bf16.gmra.mxu0 %v2784
      %v3238 = vpop.f32.mrf.mxu0
      %v3239 = vadd.f32 %v3150, %v3238
      %v3240 = vpop.f32.mrf.mxu0
      %v3241 = vadd.f32 %v3152, %v3240
      %3242 = vmatmul.bf16.gmra.mxu0 %v2787
      %v3243 = vpop.f32.mrf.mxu0
      %v3244 = vadd.f32 %v3155, %v3243
      %v3245 = vpop.f32.mrf.mxu0
      %v3246 = vadd.f32 %v3157, %v3245
      %3247 = vmatmul.bf16.gmra.mxu0 %v2790
      %v3248 = vpop.f32.mrf.mxu0
      %v3249 = vadd.f32 %v3160, %v3248
      %v3250 = vpop.f32.mrf.mxu0
      %v3251 = vadd.f32 %v3162, %v3250
      %3252 = vmatmul.bf16.gmra.mxu0 %v2793
      %v3253 = vpop.f32.mrf.mxu0
      %v3254 = vadd.f32 %v3165, %v3253
      %v3255 = vpop.f32.mrf.mxu0
      %v3256 = vadd.f32 %v3167, %v3255
      %3257 = vmatmul.bf16.gmra.mxu0 %v2796
      %v3258 = vpop.f32.mrf.mxu0
      %v3259 = vadd.f32 %v3170, %v3258
      %v3260 = vpop.f32.mrf.mxu0
      %v3261 = vadd.f32 %v3172, %v3260
      %3262 = vmatmul.bf16.gmra.mxu0 %v2799
      %v3263 = vpop.f32.mrf.mxu0
      %v3264 = vadd.f32 %v3175, %v3263
      %v3265 = vpop.f32.mrf.mxu0
      %v3266 = vadd.f32 %v3177, %v3265
      %3267 = vmatmul.bf16.gmra.mxu0 %v2802
      %v3268 = vpop.f32.mrf.mxu0
      %v3269 = vadd.f32 %v3180, %v3268
      %v3270 = vpop.f32.mrf.mxu0
      %v3271 = vadd.f32 %v3182, %v3270
      %3272 = vmatmul.bf16.gmra.mxu0 %v2805
      %v3273 = vpop.f32.mrf.mxu0
      %v3274 = vadd.f32 %v3185, %v3273
      %v3275 = vpop.f32.mrf.mxu0
      %v3276 = vadd.f32 %v3187, %v3275
      %3277 = vmatmul.bf16.gmra.mxu0 %v2808
      %v3278 = vpop.f32.mrf.mxu0
      %v3279 = vadd.f32 %v3190, %v3278
      %v3280 = vpop.f32.mrf.mxu0
      %v3281 = vadd.f32 %v3192, %v3280
      %3282 = vmatmul.bf16.gmra.mxu0 %v2811
      %v3283 = vpop.f32.mrf.mxu0
      %v3284 = vadd.f32 %v3195, %v3283
      %v3285 = vpop.f32.mrf.mxu0
      %v3286 = vadd.f32 %v3197, %v3285
      %3287 = vdwg.mxu0
      %v3288 = vadd.f32 %v2284, %v3209
      %v3289 = vadd.f32 %v2286, %v3211
      %v3290 = vadd.f32 %v2289, %v3214
      %v3291 = vadd.f32 %v2291, %v3216
      %v3292 = vadd.f32 %v2294, %v3219
      %v3293 = vadd.f32 %v2296, %v3221
      %v3294 = vadd.f32 %v2299, %v3224
      %v3295 = vadd.f32 %v2301, %v3226
      %v3296 = vadd.f32 %v2304, %v3229
      %v3297 = vadd.f32 %v2306, %v3231
      %v3298 = vadd.f32 %v2309, %v3234
      %v3299 = vadd.f32 %v2311, %v3236
      %v3300 = vadd.f32 %v2314, %v3239
      %v3301 = vadd.f32 %v2316, %v3241
      %v3302 = vadd.f32 %v2319, %v3244
      %v3303 = vadd.f32 %v2321, %v3246
      %v3304 = vadd.f32 %v2324, %v3249
      %v3305 = vadd.f32 %v2326, %v3251
      %v3306 = vadd.f32 %v2329, %v3254
      %v3307 = vadd.f32 %v2331, %v3256
      %v3308 = vadd.f32 %v2334, %v3259
      %v3309 = vadd.f32 %v2336, %v3261
      %v3310 = vadd.f32 %v2339, %v3264
      %v3311 = vadd.f32 %v2341, %v3266
      %v3312 = vadd.f32 %v2344, %v3269
      %v3313 = vadd.f32 %v2346, %v3271
      %v3314 = vadd.f32 %v2349, %v3274
      %v3315 = vadd.f32 %v2351, %v3276
      %v3316 = vadd.f32 %v2354, %v3279
      %v3317 = vadd.f32 %v2356, %v3281
      %v3318 = vadd.f32 %v2359, %v3284
      %v3319 = vadd.f32 %v2361, %v3286
      %v3320 = vpack.c.bf16 %v3288, %v3288
      %v3321 = vpack.c.bf16 %v3289, %v3289
      %v3322 = vpack.c.bf16 %v3290, %v3290
      %v3323 = vpack.c.bf16 %v3291, %v3291
      %v3324 = vpack.c.bf16 %v3292, %v3292
      %v3325 = vpack.c.bf16 %v3293, %v3293
      %v3326 = vpack.c.bf16 %v3294, %v3294
      %v3327 = vpack.c.bf16 %v3295, %v3295
      %v3328 = vpack.c.bf16 %v3296, %v3296
      %v3329 = vpack.c.bf16 %v3297, %v3297
      %v3330 = vpack.c.bf16 %v3298, %v3298
      %v3331 = vpack.c.bf16 %v3299, %v3299
      %v3332 = vpack.c.bf16 %v3300, %v3300
      %v3333 = vpack.c.bf16 %v3301, %v3301
      %v3334 = vpack.c.bf16 %v3302, %v3302
      %v3335 = vpack.c.bf16 %v3303, %v3303
      %v3336 = vpack.c.bf16 %v3304, %v3304
      %v3337 = vpack.c.bf16 %v3305, %v3305
      %v3338 = vpack.c.bf16 %v3306, %v3306
      %v3339 = vpack.c.bf16 %v3307, %v3307
      %v3340 = vpack.c.bf16 %v3308, %v3308
      %v3341 = vpack.c.bf16 %v3309, %v3309
      %v3342 = vpack.c.bf16 %v3310, %v3310
      %v3343 = vpack.c.bf16 %v3311, %v3311
      %v3344 = vpack.c.bf16 %v3312, %v3312
      %v3345 = vpack.c.bf16 %v3313, %v3313
      %v3346 = vpack.c.bf16 %v3314, %v3314
      %v3347 = vpack.c.bf16 %v3315, %v3315
      %v3348 = vpack.c.bf16 %v3316, %v3316
      %v3349 = vpack.c.bf16 %v3317, %v3317
      %v3350 = vpack.c.bf16 %v3318, %v3318
      %v3351 = vpack.c.bf16 %v3319, %v3319
      %3352 = vst [vmem:[%s359] sm:$0xf] %v3320
      %3353 = vst [vmem:[%s359 + $0x4] sm:$0xf] %v3321
      %3354 = vst [vmem:[%s359 + $0x8] sm:$0xf] %v3322
      %3355 = vst [vmem:[%s359 + $0xc] sm:$0xf] %v3323
      %3356 = vst [vmem:[%s359 + $0x10] sm:$0xf] %v3324
      %3357 = vst [vmem:[%s359 + $0x14] sm:$0xf] %v3325
      %3358 = vst [vmem:[%s359 + $0x18] sm:$0xf] %v3326
      %3359 = vst [vmem:[%s359 + $0x1c] sm:$0xf] %v3327
      %3360 = vst [vmem:[%s359 + $0x20] sm:$0xf] %v3328
      %3361 = vst [vmem:[%s359 + $0x24] sm:$0xf] %v3329
      %3362 = vst [vmem:[%s359 + $0x28] sm:$0xf] %v3330
      %3363 = vst [vmem:[%s359 + $0x2c] sm:$0xf] %v3331
      %3364 = vst [vmem:[%s359 + $0x30] sm:$0xf] %v3332
      %3365 = vst [vmem:[%s359 + $0x34] sm:$0xf] %v3333
      %3366 = vst [vmem:[%s359 + $0x38] sm:$0xf] %v3334
      %3367 = vst [vmem:[%s359 + $0x3c] sm:$0xf] %v3335
      %3368 = vst [vmem:[%s359 + $0x40] sm:$0xf] %v3336
      %3369 = vst [vmem:[%s359 + $0x44] sm:$0xf] %v3337
      %3370 = vst [vmem:[%s359 + $0x48] sm:$0xf] %v3338
      %3371 = vst [vmem:[%s359 + $0x4c] sm:$0xf] %v3339
      %3372 = vst [vmem:[%s359 + $0x50] sm:$0xf] %v3340
      %3373 = vst [vmem:[%s359 + $0x54] sm:$0xf] %v3341
      %3374 = vst [vmem:[%s359 + $0x58] sm:$0xf] %v3342
      %3375 = vst [vmem:[%s359 + $0x5c] sm:$0xf] %v3343
      %3376 = vst [vmem:[%s359 + $0x60] sm:$0xf] %v3344
      %3377 = vst [vmem:[%s359 + $0x64] sm:$0xf] %v3345
      %3378 = vst [vmem:[%s359 + $0x68] sm:$0xf] %v3346
      %3379 = vst [vmem:[%s359 + $0x6c] sm:$0xf] %v3347
      %3380 = vst [vmem:[%s359 + $0x70] sm:$0xf] %v3348
      %3381 = vst [vmem:[%s359 + $0x74] sm:$0xf] %v3349
      %3382 = vst [vmem:[%s359 + $0x78] sm:$0xf] %v3350
      %3383 = vst [vmem:[%s359 + $0x7c] sm:$0xf] %v3351
      %v3384 = vadd.f32 %v3288, %v3289
      %v3385 = vadd.f32 %v3384, %v3290
      %v3386 = vadd.f32 %v3385, %v3291
      %v3387 = vadd.f32 %v3386, %v3292
      %v3388 = vadd.f32 %v3387, %v3293
      %v3389 = vadd.f32 %v3388, %v3294
      %v3390 = vadd.f32 %v3389, %v3295
      %v3391 = vadd.f32 %v3390, %v3296
      %v3392 = vadd.f32 %v3391, %v3297
      %v3393 = vadd.f32 %v3392, %v3298
      %v3394 = vadd.f32 %v3393, %v3299
      %v3395 = vadd.f32 %v3394, %v3300
      %v3396 = vadd.f32 %v3395, %v3301
      %v3397 = vadd.f32 %v3396, %v3302
      %v3398 = vadd.f32 %v3397, %v3303
      %v3399 = vadd.f32 %v3398, %v3304
      %v3400 = vadd.f32 %v3399, %v3305
      %v3401 = vadd.f32 %v3400, %v3306
      %v3402 = vadd.f32 %v3401, %v3307
      %v3403 = vadd.f32 %v3402, %v3308
      %v3404 = vadd.f32 %v3403, %v3309
      %v3405 = vadd.f32 %v3404, %v3310
      %v3406 = vadd.f32 %v3405, %v3311
      %v3407 = vadd.f32 %v3406, %v3312
      %v3408 = vadd.f32 %v3407, %v3313
      %v3409 = vadd.f32 %v3408, %v3314
      %v3410 = vadd.f32 %v3409, %v3315
      %v3411 = vadd.f32 %v3410, %v3316
      %v3412 = vadd.f32 %v3411, %v3317
      %v3413 = vadd.f32 %v3412, %v3318
      %v3414 = vadd.f32 %v3413, %v3319
      %v3415 = vrot.slane %v3414, 4
      %v3416 = vadd.f32 %v3414, %v3415
      %v3417 = vrot.slane %v3416, 2
      %v3418 = vadd.f32 %v3416, %v3417
      %v3419 = vrot.slane %v3418, 1
      %v3420 = vadd.f32 %v3418, %v3419
      %v3421 = vmul.f32 %v3288, %v3288
      %v3422 = vmul.f32 %v3289, %v3289
      %v3423 = vmul.f32 %v3290, %v3290
      %v3424 = vmul.f32 %v3291, %v3291
      %v3425 = vmul.f32 %v3292, %v3292
      %v3426 = vmul.f32 %v3293, %v3293
      %v3427 = vmul.f32 %v3294, %v3294
      %v3428 = vmul.f32 %v3295, %v3295
      %v3429 = vmul.f32 %v3296, %v3296
      %v3430 = vmul.f32 %v3297, %v3297
      %v3431 = vmul.f32 %v3298, %v3298
      %v3432 = vmul.f32 %v3299, %v3299
      %v3433 = vmul.f32 %v3300, %v3300
      %v3434 = vmul.f32 %v3301, %v3301
      %v3435 = vmul.f32 %v3302, %v3302
      %v3436 = vmul.f32 %v3303, %v3303
      %v3437 = vmul.f32 %v3304, %v3304
      %v3438 = vmul.f32 %v3305, %v3305
      %v3439 = vmul.f32 %v3306, %v3306
      %v3440 = vmul.f32 %v3307, %v3307
      %v3441 = vmul.f32 %v3308, %v3308
      %v3442 = vmul.f32 %v3309, %v3309
      %v3443 = vmul.f32 %v3310, %v3310
      %v3444 = vmul.f32 %v3311, %v3311
      %v3445 = vmul.f32 %v3312, %v3312
      %v3446 = vmul.f32 %v3313, %v3313
      %v3447 = vmul.f32 %v3314, %v3314
      %v3448 = vmul.f32 %v3315, %v3315
      %v3449 = vmul.f32 %v3316, %v3316
      %v3450 = vmul.f32 %v3317, %v3317
      %v3451 = vmul.f32 %v3318, %v3318
      %v3452 = vmul.f32 %v3319, %v3319
      %v3453 = vadd.f32 %v3421, %v3422
      %v3454 = vadd.f32 %v3453, %v3423
      %v3455 = vadd.f32 %v3454, %v3424
      %v3456 = vadd.f32 %v3455, %v3425
      %v3457 = vadd.f32 %v3456, %v3426
      %v3458 = vadd.f32 %v3457, %v3427
      %v3459 = vadd.f32 %v3458, %v3428
      %v3460 = vadd.f32 %v3459, %v3429
      %v3461 = vadd.f32 %v3460, %v3430
      %v3462 = vadd.f32 %v3461, %v3431
      %v3463 = vadd.f32 %v3462, %v3432
      %v3464 = vadd.f32 %v3463, %v3433
      %v3465 = vadd.f32 %v3464, %v3434
      %v3466 = vadd.f32 %v3465, %v3435
      %v3467 = vadd.f32 %v3466, %v3436
      %v3468 = vadd.f32 %v3467, %v3437
      %v3469 = vadd.f32 %v3468, %v3438
      %v3470 = vadd.f32 %v3469, %v3439
      %v3471 = vadd.f32 %v3470, %v3440
      %v3472 = vadd.f32 %v3471, %v3441
      %v3473 = vadd.f32 %v3472, %v3442
      %v3474 = vadd.f32 %v3473, %v3443
      %v3475 = vadd.f32 %v3474, %v3444
      %v3476 = vadd.f32 %v3475, %v3445
      %v3477 = vadd.f32 %v3476, %v3446
      %v3478 = vadd.f32 %v3477, %v3447
      %v3479 = vadd.f32 %v3478, %v3448
      %v3480 = vadd.f32 %v3479, %v3449
      %v3481 = vadd.f32 %v3480, %v3450
      %v3482 = vadd.f32 %v3481, %v3451
      %v3483 = vadd.f32 %v3482, %v3452
      %v3484 = vrot.slane %v3483, 4
      %v3485 = vadd.f32 %v3483, %v3484
      %v3486 = vrot.slane %v3485, 2
      %v3487 = vadd.f32 %v3485, %v3486
      %v3488 = vrot.slane %v3487, 1
      %v3489 = vadd.f32 %v3487, %v3488
      %vm3490 = vcmask 1040384
      %v3491 = vsel %vm3490, %v3420, %v3489
      %3492 = vst [vmem:[%s367] sm:$0x3] %v3491
      %s3493 = smul.u32 16, %s23
      %p3494 = scmp.lt.s32.totalorder %s22, 1
      %s3495 = scalar_select %p3494, %s22, 1
      %p3496 = scmp.lt.s32.totalorder %s3493, 15
      %s3497 = scalar_select %p3496, %s3493, 15
      %s3498 = smul.addr %s3497, 2
      %s3499 = smul.addr %s3495, 32
      %s3500 = sadd.s32 %s3498, %s3499
      %s3501 = smul.addr %s3500, 4
      %s3502 = scalar_lea.vmem %s5, %s3501
      %p3503 = scmp.lt.s32.totalorder %s22, 1
      %s3504 = scalar_select %p3503, %s22, 1
      %p3505 = scmp.lt.s32.totalorder %s23, 0
      %s3506 = scalar_select %p3505, %s23, 0
      %s3507 = sadd.s32 %s3506, %s3504
      %s3508 = smul.addr %s3507, 2
      %s3509 = scalar_lea.vmem %s6, %s3508
      // Predicated region
      $region41: #{unet_block_forward.3} parent=39 // pred_check
        %p3510 = pneg %p173
      $region42: #{unet_block_forward.3} parent=39 // pred_check_branch
        %3512 = sbr.rel (%p3510) target = $region44
      $region43: #{unet_block_forward.3} parent=39 // pred_region
        %s3513 = smul.u32 16, %s23
      $region44: #{unet_block_forward.3} parent=39 // pred_fallthru
        _
      // Predicated region
      $region45: #{unet_block_forward.3} parent=39 // pred_check
        %p3514 = pneg %p201
      $region46: #{unet_block_forward.3} parent=39 // pred_check_branch
        %3516 = sbr.rel (%p3514) target = $region48
      $region47: #{unet_block_forward.3} parent=39 // pred_region
        _
      $region48: #{unet_block_forward.3} parent=39 // pred_fallthru
        _
    $region40: #{unet_block_forward.3} parent=5 // pred_fallthru
      _
    %p3517 = scmp.le.s32.totalorder 2, %s13
    // Predicated region
    $region49: #{unet_block_forward.3} parent=5 // pred_check
      %p3518 = pneg %p3517
    $region50: #{unet_block_forward.3} parent=5 // pred_check_branch
      %3520 = sbr.rel (%p3518) target = $region52
    $region51: #{unet_block_forward.3} parent=5 // pred_region
      %s3521 = ssub.s32 %s13, 2
      // Predicated region
      $region53: #{unet_block_forward.3} parent=51 // pred_check
        %p3522 = pneg %p179
      $region54: #{unet_block_forward.3} parent=51 // pred_check_branch
        %3524 = sbr.rel (%p3522) target = $region56
      $region55: #{unet_block_forward.3} parent=51 // pred_region
        %s3525 = smul.u32 16, %s25
        %p3526 = scmp.lt.s32.totalorder %s24, 1
        %s3527 = scalar_select %p3526, %s24, 1
        %p3528 = scmp.lt.s32.totalorder %s3525, 15
        %s3529 = scalar_select %p3528, %s3525, 15
        %s3530 = smul.addr %s3529, 2
        %s3531 = smul.addr %s3527, 32
        %s3532 = sadd.s32 %s3530, %s3531
        %s3533 = smul.addr %s3532, 4
        %s3534 = scalar_lea.vmem %s5, %s3533
      $region56: #{unet_block_forward.3} parent=51 // pred_fallthru
        _
      // Predicated region
      $region57: #{unet_block_forward.3} parent=51 // pred_check
        %p3535 = pneg %p207
      $region58: #{unet_block_forward.3} parent=51 // pred_check_branch
        %3537 = sbr.rel (%p3535) target = $region60
      $region59: #{unet_block_forward.3} parent=51 // pred_region
        %p3538 = scmp.lt.s32.totalorder %s24, 1
        %s3539 = scalar_select %p3538, %s24, 1
        %p3540 = scmp.lt.s32.totalorder %s25, 0
        %s3541 = scalar_select %p3540, %s25, 0
        %s3542 = sadd.s32 %s3541, %s3539
        %s3543 = smul.addr %s3542, 2
        %s3544 = scalar_lea.vmem %s6, %s3543
      $region60: #{unet_block_forward.3} parent=51 // pred_fallthru
        _
    $region52: #{unet_block_forward.3} parent=5 // pred_fallthru
      _
  $region6: #{unet_block_forward.3} parent=0 // loop_footer
    %s17 = sadd.s32 1, %s13
  $region7: #{unet_block_forward.3} parent=0 // loop_footer_branch
    %12 = sbr.rel target = $region3
  $region8: #{unet_block_forward.3} parent=0 // loop_exit
    _

// kernel: unet_block_forward.4
$region0: #{unet_block_forward.4}
  #allocation0 [shape = 'u32[]', space=smem, size = 0x4, offset = 0x4, fixed_abs, tag = 'smem constant byte address 0x4 - core index']
  #allocation1 [shape = 'u32[72,128]{1,0:T(1,128)}', space=vmem, size = 0x9000, scoped, tag = 'internal scratch']
  #allocation2 [shape = 'bf16[24,24,128]{2,1,0:T(8,128)(2,1)}', space=vmem, size = 0x24000, scoped, tag = 'scratch operand']
  %s0 = inlined_call_operand.vmem [shape: bf16[2,32,24,128], index: 0, kind: input, shape index: {}, may-alias: {0,1}]
  %s1 = inlined_call_operand.vmem [shape: bf16[2,32,24,128], index: 1, kind: input, shape index: {}, may-alias: {0,1}]
  %s2 = inlined_call_operand.vmem [shape: bf16[3,384,128], index: 2, kind: input, shape index: {}]
  %s3 = inlined_call_operand.vmem [shape: f32[1,128], index: 3, kind: input, shape index: {}]
  %s4 = inlined_call_operand.vmem [shape: f32[1,128], index: 4, kind: input, shape index: {}]
  %s5 = inlined_call_operand.vmem [shape: bf16[2,16,16,128], index: 5, kind: output, shape index: {0}]
  %s6 = inlined_call_operand.vmem [shape: f32[2,1,2,128], index: 6, kind: output, shape index: {1}]
  %7 = xla_tuple %s5, %s6
  %s8 = sld [smem:[#allocation0]]
  $region61: #{unet_block_forward.4} parent=0
    _
  %s10 = ssub.s32 1, %s8
  %s11 = scalar_select 0, %s10, %s8
  loop: start=0, step=1, limit=4
  $region2: #{unet_block_forward.4} parent=0 // loop_pre_header
    _
  $region3: #{unet_block_forward.4} parent=0 // loop_header
    %s13 = sphi 0, %s17
    %p14 = scmp.ge.s32.totalorder %s13, 4
    %s20 = sphi 0, %s32
    %s21 = sphi 0, %s28
    %s22 = sphi 0, %s20
    %s23 = sphi 0, %s21
    %s24 = sphi 0, %s22
    %s25 = sphi 0, %s23
    %s37 = sphi 0, %s39
    %s40 = sphi 0, %s37
    %s41 = sphi 0, %s40
    %s57 = sphi 0, %s41
    %s69 = sphi 0, %s71
    %s72 = sphi 0, %s69
    %s73 = sphi 0, %s72
    %s89 = sphi 0, %s73
    %s93 = sphi 0, %s93
    %s95 = sphi 0, %s93
    %s96 = sphi 0, %s95
    %s110 = sphi 0, %s96
    %s114 = sphi 0, %s114
    %s116 = sphi 0, %s114
    %s117 = sphi 0, %s116
    %s131 = sphi 0, %s117
    %s135 = sphi 0, %s135
    %s137 = sphi 0, %s135
    %s138 = sphi 0, %s137
    %s152 = sphi 0, %s138
    %s160 = sphi 0, %s162
    %s163 = sphi 0, %s160
    %s164 = sphi 0, %s163
    %s180 = sphi 0, %s164
    %s188 = sphi 0, %s190
    %s191 = sphi 0, %s188
    %s192 = sphi 0, %s191
    %s208 = sphi 0, %s192
  $region4: #{unet_block_forward.4} parent=0 // loop_header_branch
    %16 = sbr.rel (%p14) target = $region8
  $region5: #{unet_block_forward.4} parent=0 // loop_body
    %s18 = ssub.s32 %s13, 1
    %s19 = ssub.s32 %s13, 2
    %s26 = sadd.s32 1, %s21
    %p27 = scmp.ge.s32.totalorder %s26, 1
    %s28 = scalar_select %p27, 0, %s26
    %s29 = sadd.s32 1, %s20
    %s30 = scalar_select %p27, %s29, %s20
    %p31 = scmp.ge.s32.totalorder %s30, 2
    %s32 = scalar_select %p31, 0, %s30
    %s33 = ssub.s32 %s20, %s32
    %s34 = ssub.s32 %s21, %s28
    %s35 = sor.u32 %s33, %s34
    %p36 = scmp.eq.s32.totalorder %s35, 0
    %s38 = sadd.s32 %s37, 1
    %s39 = scalar_select %p36, %s37, %s38
    %p42 = pneg %p36
    %p43 = scmp.eq.s32.totalorder %s13, 1
    %p44 = por %p42, %p43
    %p45 = scmp.ne.s32.totalorder %s37, %s40
    %p46 = scmp.eq.s32.totalorder %s13, 0
    %p47 = por %p45, %p46
    %p48 = scmp.ne.s32.totalorder %s37, %s40
    %p49 = scmp.eq.s32.totalorder %s18, 1
    %p50 = por %p48, %p49
    %p51 = scmp.ne.s32.totalorder %s40, %s41
    %p52 = scmp.eq.s32.totalorder %s18, 0
    %p53 = por %p51, %p52
    %p54 = scmp.ne.s32.totalorder %s40, %s41
    %p55 = scmp.eq.s32.totalorder %s19, 1
    %p56 = por %p54, %p55
    %p58 = scmp.ne.s32.totalorder %s41, %s57
    %p59 = scmp.eq.s32.totalorder %s19, 0
    %p60 = por %p58, %p59
    %s61 = sadd.s32 %s21, 1
    %s62 = smul.u32 %s61, 2
    %s63 = sadd.s32 %s28, 1
    %s64 = smul.u32 %s63, 2
    %s65 = ssub.s32 %s20, %s32
    %s66 = ssub.s32 %s62, %s64
    %s67 = sor.u32 %s65, %s66
    %p68 = scmp.eq.s32.totalorder %s67, 0
    %s70 = sadd.s32 %s69, 1
    %s71 = scalar_select %p68, %s69, %s70
    %p74 = pneg %p68
    %p75 = scmp.eq.s32.totalorder %s13, 1
    %p76 = por %p74, %p75
    %p77 = scmp.ne.s32.totalorder %s69, %s72
    %p78 = scmp.eq.s32.totalorder %s13, 0
    %p79 = por %p77, %p78
    %p80 = scmp.ne.s32.totalorder %s69, %s72
    %p81 = scmp.eq.s32.totalorder %s18, 1
    %p82 = por %p80, %p81
    %p83 = scmp.ne.s32.totalorder %s72, %s73
    %p84 = scmp.eq.s32.totalorder %s18, 0
    %p85 = por %p83, %p84
    %p86 = scmp.ne.s32.totalorder %s72, %s73
    %p87 = scmp.eq.s32.totalorder %s19, 1
    %p88 = por %p86, %p87
    %p90 = scmp.ne.s32.totalorder %s73, %s89
    %p91 = scmp.eq.s32.totalorder %s19, 0
    %p92 = por %p90, %p91
    %s94 = sadd.s32 %s93, 1
    %p97 = scmp.eq.s32.totalorder %s13, 1
    %p98 = scmp.ne.s32.totalorder %s93, %s95
    %p99 = scmp.eq.s32.totalorder %s13, 0
    %p100 = por %p98, %p99
    %p101 = scmp.ne.s32.totalorder %s93, %s95
    %p102 = scmp.eq.s32.totalorder %s18, 1
    %p103 = por %p101, %p102
    %p104 = scmp.ne.s32.totalorder %s95, %s96
    %p105 = scmp.eq.s32.totalorder %s18, 0
    %p106 = por %p104, %p105
    %p107 = scmp.ne.s32.totalorder %s95, %s96
    %p108 = scmp.eq.s32.totalorder %s19, 1
    %p109 = por %p107, %p108
    %p111 = scmp.ne.s32.totalorder %s96, %s110
    %p112 = scmp.eq.s32.totalorder %s19, 0
    %p113 = por %p111, %p112
    %s115 = sadd.s32 %s114, 1
    %p118 = scmp.eq.s32.totalorder %s13, 1
    %p119 = scmp.ne.s32.totalorder %s114, %s116
    %p120 = scmp.eq.s32.totalorder %s13, 0
    %p121 = por %p119, %p120
    %p122 = scmp.ne.s32.totalorder %s114, %s116
    %p123 = scmp.eq.s32.totalorder %s18, 1
    %p124 = por %p122, %p123
    %p125 = scmp.ne.s32.totalorder %s116, %s117
    %p126 = scmp.eq.s32.totalorder %s18, 0
    %p127 = por %p125, %p126
    %p128 = scmp.ne.s32.totalorder %s116, %s117
    %p129 = scmp.eq.s32.totalorder %s19, 1
    %p130 = por %p128, %p129
    %p132 = scmp.ne.s32.totalorder %s117, %s131
    %p133 = scmp.eq.s32.totalorder %s19, 0
    %p134 = por %p132, %p133
    %s136 = sadd.s32 %s135, 1
    %p139 = scmp.eq.s32.totalorder %s13, 1
    %p140 = scmp.ne.s32.totalorder %s135, %s137
    %p141 = scmp.eq.s32.totalorder %s13, 0
    %p142 = por %p140, %p141
    %p143 = scmp.ne.s32.totalorder %s135, %s137
    %p144 = scmp.eq.s32.totalorder %s18, 1
    %p145 = por %p143, %p144
    %p146 = scmp.ne.s32.totalorder %s137, %s138
    %p147 = scmp.eq.s32.totalorder %s18, 0
    %p148 = por %p146, %p147
    %p149 = scmp.ne.s32.totalorder %s137, %s138
    %p150 = scmp.eq.s32.totalorder %s19, 1
    %p151 = por %p149, %p150
    %p153 = scmp.ne.s32.totalorder %s138, %s152
    %p154 = scmp.eq.s32.totalorder %s19, 0
    %p155 = por %p153, %p154
    %s156 = ssub.s32 %s20, %s32
    %s157 = ssub.s32 %s21, %s28
    %s158 = sor.u32 %s156, %s157
    %p159 = scmp.eq.s32.totalorder %s158, 0
    %s161 = sadd.s32 %s160, 1
    %s162 = scalar_select %p159, %s160, %s161
    %p165 = pneg %p159
    %p166 = scmp.eq.s32.totalorder %s13, 1
    %p167 = por %p165, %p166
    %p168 = scmp.ne.s32.totalorder %s160, %s163
    %p169 = scmp.eq.s32.totalorder %s13, 0
    %p170 = por %p168, %p169
    %p171 = scmp.ne.s32.totalorder %s160, %s163
    %p172 = scmp.eq.s32.totalorder %s18, 1
    %p173 = por %p171, %p172
    %p174 = scmp.ne.s32.totalorder %s163, %s164
    %p175 = scmp.eq.s32.totalorder %s18, 0
    %p176 = por %p174, %p175
    %p177 = scmp.ne.s32.totalorder %s163, %s164
    %p178 = scmp.eq.s32.totalorder %s19, 1
    %p179 = por %p177, %p178
    %p181 = scmp.ne.s32.totalorder %s164, %s180
    %p182 = scmp.eq.s32.totalorder %s19, 0
    %p183 = por %p181, %p182
    %s184 = ssub.s32 %s20, %s32
    %s185 = ssub.s32 %s21, %s28
    %s186 = sor.u32 %s184, %s185
    %p187 = scmp.eq.s32.totalorder %s186, 0
    %s189 = sadd.s32 %s188, 1
    %s190 = scalar_select %p187, %s188, %s189
    %p193 = pneg %p187
    %p194 = scmp.eq.s32.totalorder %s13, 1
    %p195 = por %p193, %p194
    %p196 = scmp.ne.s32.totalorder %s188, %s191
    %p197 = scmp.eq.s32.totalorder %s13, 0
    %p198 = por %p196, %p197
    %p199 = scmp.ne.s32.totalorder %s188, %s191
    %p200 = scmp.eq.s32.totalorder %s18, 1
    %p201 = por %p199, %p200
    %p202 = scmp.ne.s32.totalorder %s191, %s192
    %p203 = scmp.eq.s32.totalorder %s18, 0
    %p204 = por %p202, %p203
    %p205 = scmp.ne.s32.totalorder %s191, %s192
    %p206 = scmp.eq.s32.totalorder %s19, 1
    %p207 = por %p205, %p206
    %p209 = scmp.ne.s32.totalorder %s192, %s208
    %p210 = scmp.eq.s32.totalorder %s19, 0
    %p211 = por %p209, %p210
    %p212 = scmp.le.s32.totalorder 1, %s13
    %p213 = scmp.lt.s32.totalorder %s13, 3
    %p214 = pnand %p212, %p213
    %p215 = pneg %p214
    // Predicated region
    $region9: #{unet_block_forward.4} parent=5 // pred_check
      _
    $region10: #{unet_block_forward.4} parent=5 // pred_check_branch
      %217 = sbr.rel (%p214) target = $region12
    $region11: #{unet_block_forward.4} parent=5 // pred_region
      %s218 = ssub.s32 %s13, 1
      // Predicated region
      $region13: #{unet_block_forward.4} parent=11 // pred_check
        %p219 = pneg %p106
      $region14: #{unet_block_forward.4} parent=11 // pred_check_branch
        %221 = sbr.rel (%p219) target = $region16
      $region15: #{unet_block_forward.4} parent=11 // pred_region
        _
      $region16: #{unet_block_forward.4} parent=11 // pred_fallthru
        _
      // Predicated region
      $region17: #{unet_block_forward.4} parent=11 // pred_check
        %p222 = pneg %p127
      $region18: #{unet_block_forward.4} parent=11 // pred_check_branch
        %224 = sbr.rel (%p222) target = $region20
      $region19: #{unet_block_forward.4} parent=11 // pred_region
        _
      $region20: #{unet_block_forward.4} parent=11 // pred_fallthru
        _
      // Predicated region
      $region21: #{unet_block_forward.4} parent=11 // pred_check
        %p225 = pneg %p148
      $region22: #{unet_block_forward.4} parent=11 // pred_check_branch
        %227 = sbr.rel (%p225) target = $region24
      $region23: #{unet_block_forward.4} parent=11 // pred_region
        _
      $region24: #{unet_block_forward.4} parent=11 // pred_fallthru
        _
    $region12: #{unet_block_forward.4} parent=5 // pred_fallthru
      _
    %p228 = scmp.lt.s32.totalorder %s13, 2
    // Predicated region
    $region25: #{unet_block_forward.4} parent=5 // pred_check
      %p229 = pneg %p228
    $region26: #{unet_block_forward.4} parent=5 // pred_check_branch
      %231 = sbr.rel (%p229) target = $region28
    $region27: #{unet_block_forward.4} parent=5 // pred_region
      // Predicated region
      $region29: #{unet_block_forward.4} parent=27 // pred_check
        %p232 = pneg %p47
      $region30: #{unet_block_forward.4} parent=27 // pred_check_branch
        %234 = sbr.rel (%p232) target = $region32
      $region31: #{unet_block_forward.4} parent=27 // pred_region
        %s235 = smul.u32 16, %s21
        %p236 = scmp.lt.s32.totalorder %s20, 1
        %s237 = scalar_select %p236, %s20, 1
        %p238 = scmp.lt.s32.totalorder %s235, 31
        %s239 = scalar_select %p238, %s235, 31
        %s240 = smul.addr %s239, 3
        %s241 = smul.addr %s237, 96
        %s242 = sadd.s32 %s240, %s241
        %s243 = smul.addr %s242, 4
        %s244 = scalar_lea.vmem %s0, %s243
        %s245 = smul.u32 16, %s21
      $region32: #{unet_block_forward.4} parent=27 // pred_fallthru
        _
      // Predicated region
      $region33: #{unet_block_forward.4} parent=27 // pred_check
        %p246 = pneg %p79
      $region34: #{unet_block_forward.4} parent=27 // pred_check_branch
        %248 = sbr.rel (%p246) target = $region36
      $region35: #{unet_block_forward.4} parent=27 // pred_region
        %s249 = sadd.s32 %s21, 1
        %s250 = smul.u32 %s249, 2
        %s251 = smul.u32 8, %s250
        %p252 = scmp.lt.s32.totalorder %s20, 1
        %s253 = scalar_select %p252, %s20, 1
        %p254 = scmp.lt.s32.totalorder %s251, 31
        %s255 = scalar_select %p254, %s251, 31
        %s256 = smul.addr %s255, 3
        %s257 = smul.addr %s253, 96
        %s258 = sadd.s32 %s256, %s257
        %s259 = smul.addr %s258, 4
        %s260 = scalar_lea.vmem %s1, %s259
        %s261 = sadd.s32 %s21, 1
        %s262 = smul.u32 %s261, 2
        %s263 = smul.u32 8, %s262
      $region36: #{unet_block_forward.4} parent=27 // pred_fallthru
        _
    $region28: #{unet_block_forward.4} parent=5 // pred_fallthru
      _
    %p264 = scmp.le.s32.totalorder 1, %s13
    %p265 = scmp.lt.s32.totalorder %s13, 3
    %p266 = pnand %p264, %p265
    %p267 = pneg %p266
    // Predicated region
    $region37: #{unet_block_forward.4} parent=5 // pred_check
      _
    $region38: #{unet_block_forward.4} parent=5 // pred_check_branch
      %269 = sbr.rel (%p266) target = $region40
    $region39: #{unet_block_forward.4} parent=5 // pred_region
      %s270 = ssub.s32 %s13, 1
      %s271 = smul.u32 16, %s23
      %p272 = scmp.lt.s32.totalorder %s22, 1
      %s273 = scalar_select %p272, %s22, 1
      %p274 = scmp.lt.s32.totalorder %s271, 31
      %s275 = scalar_select %p274, %s271, 31
      %s276 = smul.addr %s275, 3
      %s277 = smul.addr %s273, 96
      %s278 = sadd.s32 %s276, %s277
      %s279 = smul.addr %s278, 4
      %s280 = scalar_lea.vmem %s0, %s279
      %p281 = pneg %p53
      %p282 = pneg %p50
      %s283 = sadd.s32 %s23, 1
      %s284 = smul.u32 %s283, 2
      %s285 = smul.u32 8, %s284
      %p286 = scmp.lt.s32.totalorder %s22, 1
      %s287 = scalar_select %p286, %s22, 1
      %p288 = scmp.lt.s32.totalorder %s285, 31
      %s289 = scalar_select %p288, %s285, 31
      %s290 = smul.addr %s289, 3
      %s291 = smul.addr %s287, 96
      %s292 = sadd.s32 %s290, %s291
      %s293 = smul.addr %s292, 4
      %s294 = scalar_lea.vmem %s1, %s293
      %p295 = pneg %p85
      %p296 = pneg %p82
      %p297 = pneg %p106
      %p298 = pneg %p103
      %p299 = pneg %p127
      %p300 = pneg %p124
      %p301 = pneg %p148
      %p302 = pneg %p145
      %p303 = pneg %p176
      %p304 = pneg %p173
      %s305 = smul.u32 16, %s23
      %p306 = scmp.lt.s32.totalorder %s22, 1
      %s307 = scalar_select %p306, %s22, 1
      %p308 = scmp.lt.s32.totalorder %s305, 15
      %s309 = scalar_select %p308, %s305, 15
      %s310 = smul.addr %s309, 2
      %s311 = smul.addr %s307, 32
      %s312 = sadd.s32 %s310, %s311
      %s313 = smul.addr %s312, 4
      %s314 = scalar_lea.vmem %s5, %s313
      %p315 = pneg %p204
      %p316 = pneg %p201
      %p317 = scmp.lt.s32.totalorder %s22, 1
      %s318 = scalar_select %p317, %s22, 1
      %p319 = scmp.lt.s32.totalorder %s23, 0
      %s320 = scalar_select %p319, %s23, 0
      %s321 = sadd.s32 %s320, %s318
      %s322 = smul.addr %s321, 2
      %s323 = scalar_lea.vmem %s6, %s322
      %s324 = smul.u32 16, %s23
      %p325 = scmp.lt.s32.totalorder %s22, 1
      %s326 = scalar_select %p325, %s22, 1
      %p327 = scmp.lt.s32.totalorder %s324, 31
      %s328 = scalar_select %p327, %s324, 31
      %s329 = smul.addr %s328, 3
      %s330 = smul.addr %s326, 96
      %s331 = sadd.s32 %s329, %s330
      %s332 = smul.addr %s331, 4
      %s333 = scalar_lea.vmem %s0, %s332
      %s334 = smul.u32 16, %s23
      %s335 = sadd.s32 %s23, 1
      %s336 = smul.u32 %s335, 2
      %s337 = smul.u32 8, %s336
      %p338 = scmp.lt.s32.totalorder %s22, 1
      %s339 = scalar_select %p338, %s22, 1
      %p340 = scmp.lt.s32.totalorder %s337, 31
      %s341 = scalar_select %p340, %s337, 31
      %s342 = smul.addr %s341, 3
      %s343 = smul.addr %s339, 96
      %s344 = sadd.s32 %s342, %s343
      %s345 = smul.addr %s344, 4
      %s346 = scalar_lea.vmem %s1, %s345
      %s347 = sadd.s32 %s23, 1
      %s348 = smul.u32 %s347, 2
      %s349 = smul.u32 8, %s348
      %s350 = smul.u32 16, %s23
      %p351 = scmp.lt.s32.totalorder %s22, 1
      %s352 = scalar_select %p351, %s22, 1
      %p353 = scmp.lt.s32.totalorder %s350, 15
      %s354 = scalar_select %p353, %s350, 15
      %s355 = smul.addr %s354, 2
      %s356 = smul.addr %s352, 32
      %s357 = sadd.s32 %s355, %s356
      %s358 = smul.addr %s357, 4
      %s359 = scalar_lea.vmem %s5, %s358
      %s360 = smul.u32 16, %s23
      %p361 = scmp.lt.s32.totalorder %s22, 1
      %s362 = scalar_select %p361, %s22, 1
      %p363 = scmp.lt.s32.totalorder %s23, 0
      %s364 = scalar_select %p363, %s23, 0
      %s365 = sadd.s32 %s364, %s362
      %s366 = smul.addr %s365, 2
      %s367 = scalar_lea.vmem %s6, %s366
      %v368 = vld [vmem:[%s333] sm:$0xf]
      %v369 = vld [vmem:[%s333 + $0x4] sm:$0xf]
      %v370 = vld [vmem:[%s333 + $0x8] sm:$0xf]
      %v371 = vld [vmem:[%s333 + $0xc] sm:$0xf]
      %v372 = vld [vmem:[%s333 + $0x10] sm:$0xf]
      %v373 = vld [vmem:[%s333 + $0x14] sm:$0xf]
      %v374 = vld [vmem:[%s333 + $0x18] sm:$0xf]
      %v375 = vld [vmem:[%s333 + $0x1c] sm:$0xf]
      %v376 = vld [vmem:[%s333 + $0x20] sm:$0xf]
      %v377 = vld [vmem:[%s333 + $0x24] sm:$0xf]
      %v378 = vld [vmem:[%s333 + $0x28] sm:$0xf]
      %v379 = vld [vmem:[%s333 + $0x2c] sm:$0xf]
      %v380 = vld [vmem:[%s333 + $0x30] sm:$0xf]
      %v381 = vld [vmem:[%s333 + $0x34] sm:$0xf]
      %v382 = vld [vmem:[%s333 + $0x38] sm:$0xf]
      %v383 = vld [vmem:[%s333 + $0x3c] sm:$0xf]
      %v384 = vld [vmem:[%s333 + $0x40] sm:$0xf]
      %v385 = vld [vmem:[%s333 + $0x44] sm:$0xf]
      %v386 = vld [vmem:[%s333 + $0x48] sm:$0xf]
      %v387 = vld [vmem:[%s333 + $0x4c] sm:$0xf]
      %v388 = vld [vmem:[%s333 + $0x50] sm:$0xf]
      %v389 = vld [vmem:[%s333 + $0x54] sm:$0xf]
      %v390 = vld [vmem:[%s333 + $0x58] sm:$0xf]
      %v391 = vld [vmem:[%s333 + $0x5c] sm:$0xf]
      %v392 = vld [vmem:[%s333 + $0x60] sm:$0xf]
      %v393 = vld [vmem:[%s333 + $0x64] sm:$0xf]
      %v394 = vld [vmem:[%s333 + $0x68] sm:$0xf]
      %v395 = vld [vmem:[%s333 + $0x6c] sm:$0xf]
      %v396 = vld [vmem:[%s333 + $0x70] sm:$0xf]
      %v397 = vld [vmem:[%s333 + $0x74] sm:$0xf]
      %v398 = vld [vmem:[%s333 + $0x78] sm:$0xf]
      %v399 = vld [vmem:[%s333 + $0x7c] sm:$0xf]
      %v400 = vld [vmem:[%s333 + $0x80] sm:$0xf]
      %v401 = vld [vmem:[%s333 + $0x84] sm:$0xf]
      %v402 = vld [vmem:[%s333 + $0x88] sm:$0xf]
      %v403 = vld [vmem:[%s333 + $0x8c] sm:$0xf]
      %v404 = vld [vmem:[%s333 + $0x90] sm:$0xf]
      %v405 = vld [vmem:[%s333 + $0x94] sm:$0xf]
      %v406 = vld [vmem:[%s333 + $0x98] sm:$0xf]
      %v407 = vld [vmem:[%s333 + $0x9c] sm:$0xf]
      %v408 = vld [vmem:[%s333 + $0xa0] sm:$0xf]
      %v409 = vld [vmem:[%s333 + $0xa4] sm:$0xf]
      %v410 = vld [vmem:[%s333 + $0xa8] sm:$0xf]
      %v411 = vld [vmem:[%s333 + $0xac] sm:$0xf]
      %v412 = vld [vmem:[%s333 + $0xb0] sm:$0xf]
      %v413 = vld [vmem:[%s333 + $0xb4] sm:$0xf]
      %v414 = vld [vmem:[%s333 + $0xb8] sm:$0xf]
      %v415 = vld [vmem:[%s333 + $0xbc] sm:$0xf]
      %s416 = smul.u32 %s23, 16
      %v417 = vunpack.c.l.bf16 %v368
      %v418 = vunpack.c.l.bf16 %v369
      %v419 = vunpack.c.l.bf16 %v370
      %v420 = vunpack.c.l.bf16 %v371
      %v421 = vunpack.c.l.bf16 %v372
      %v422 = vunpack.c.l.bf16 %v373
      %v423 = vunpack.c.l.bf16 %v374
      %v424 = vunpack.c.l.bf16 %v375
      %v425 = vunpack.c.l.bf16 %v376
      %v426 = vunpack.c.l.bf16 %v377
      %v427 = vunpack.c.l.bf16 %v378
      %v428 = vunpack.c.l.bf16 %v379
      %v429 = vunpack.c.l.bf16 %v380
      %v430 = vunpack.c.l.bf16 %v381
      %v431 = vunpack.c.l.bf16 %v382
      %v432 = vunpack.c.l.bf16 %v383
      %v433 = vunpack.c.l.bf16 %v384
      %v434 = vunpack.c.l.bf16 %v385
      %v435 = vunpack.c.l.bf16 %v386
      %v436 = vunpack.c.l.bf16 %v387
      %v437 = vunpack.c.l.bf16 %v388
      %v438 = vunpack.c.l.bf16 %v389
      %v439 = vunpack.c.l.bf16 %v390
      %v440 = vunpack.c.l.bf16 %v391
      %v441 = vunpack.c.l.bf16 %v392
      %v442 = vunpack.c.l.bf16 %v393
      %v443 = vunpack.c.l.bf16 %v394
      %v444 = vunpack.c.l.bf16 %v395
      %v445 = vunpack.c.l.bf16 %v396
      %v446 = vunpack.c.l.bf16 %v397
      %v447 = vunpack.c.l.bf16 %v398
      %v448 = vunpack.c.l.bf16 %v399
      %v449 = vunpack.c.l.bf16 %v400
      %v450 = vunpack.c.l.bf16 %v401
      %v451 = vunpack.c.l.bf16 %v402
      %v452 = vunpack.c.l.bf16 %v403
      %v453 = vunpack.c.l.bf16 %v404
      %v454 = vunpack.c.l.bf16 %v405
      %v455 = vunpack.c.l.bf16 %v406
      %v456 = vunpack.c.l.bf16 %v407
      %v457 = vunpack.c.l.bf16 %v408
      %v458 = vunpack.c.l.bf16 %v409
      %v459 = vunpack.c.l.bf16 %v410
      %v460 = vunpack.c.l.bf16 %v411
      %v461 = vunpack.c.l.bf16 %v412
      %v462 = vunpack.c.l.bf16 %v413
      %v463 = vunpack.c.l.bf16 %v414
      %v464 = vunpack.c.l.bf16 %v415
      %v465 = vld [vmem:[%s3] sm:$0x1]
      %v467 = vperm.slane %v465, 0
      %v469 = vmul.f32 %v417, %v467
      %v470 = vmul.f32 %v418, %v467
      %v471 = vmul.f32 %v419, %v467
      %v472 = vmul.f32 %v420, %v467
      %v473 = vmul.f32 %v421, %v467
      %v474 = vmul.f32 %v422, %v467
      %v475 = vmul.f32 %v423, %v467
      %v476 = vmul.f32 %v424, %v467
      %v477 = vmul.f32 %v425, %v467
      %v478 = vmul.f32 %v426, %v467
      %v479 = vmul.f32 %v427, %v467
      %v480 = vmul.f32 %v428, %v467
      %v481 = vmul.f32 %v429, %v467
      %v482 = vmul.f32 %v430, %v467
      %v483 = vmul.f32 %v431, %v467
      %v484 = vmul.f32 %v432, %v467
      %v485 = vmul.f32 %v433, %v467
      %v486 = vmul.f32 %v434, %v467
      %v487 = vmul.f32 %v435, %v467
      %v488 = vmul.f32 %v436, %v467
      %v489 = vmul.f32 %v437, %v467
      %v490 = vmul.f32 %v438, %v467
      %v491 = vmul.f32 %v439, %v467
      %v492 = vmul.f32 %v440, %v467
      %v493 = vmul.f32 %v441, %v467
      %v494 = vmul.f32 %v442, %v467
      %v495 = vmul.f32 %v443, %v467
      %v496 = vmul.f32 %v444, %v467
      %v497 = vmul.f32 %v445, %v467
      %v498 = vmul.f32 %v446, %v467
      %v499 = vmul.f32 %v447, %v467
      %v500 = vmul.f32 %v448, %v467
      %v501 = vmul.f32 %v449, %v467
      %v502 = vmul.f32 %v450, %v467
      %v503 = vmul.f32 %v451, %v467
      %v504 = vmul.f32 %v452, %v467
      %v505 = vmul.f32 %v453, %v467
      %v506 = vmul.f32 %v454, %v467
      %v507 = vmul.f32 %v455, %v467
      %v508 = vmul.f32 %v456, %v467
      %v509 = vmul.f32 %v457, %v467
      %v510 = vmul.f32 %v458, %v467
      %v511 = vmul.f32 %v459, %v467
      %v512 = vmul.f32 %v460, %v467
      %v513 = vmul.f32 %v461, %v467
      %v514 = vmul.f32 %v462, %v467
      %v515 = vmul.f32 %v463, %v467
      %v516 = vmul.f32 %v464, %v467
      %v517 = vld [vmem:[%s4] sm:$0x1]
      %v519 = vperm.slane %v517, 0
      %v521 = vadd.f32 %v469, %v519
      %v522 = vadd.f32 %v470, %v519
      %v523 = vadd.f32 %v471, %v519
      %v524 = vadd.f32 %v472, %v519
      %v525 = vadd.f32 %v473, %v519
      %v526 = vadd.f32 %v474, %v519
      %v527 = vadd.f32 %v475, %v519
      %v528 = vadd.f32 %v476, %v519
      %v529 = vadd.f32 %v477, %v519
      %v530 = vadd.f32 %v478, %v519
      %v531 = vadd.f32 %v479, %v519
      %v532 = vadd.f32 %v480, %v519
      %v533 = vadd.f32 %v481, %v519
      %v534 = vadd.f32 %v482, %v519
      %v535 = vadd.f32 %v483, %v519
      %v536 = vadd.f32 %v484, %v519
      %v537 = vadd.f32 %v485, %v519
      %v538 = vadd.f32 %v486, %v519
      %v539 = vadd.f32 %v487, %v519
      %v540 = vadd.f32 %v488, %v519
      %v541 = vadd.f32 %v489, %v519
      %v542 = vadd.f32 %v490, %v519
      %v543 = vadd.f32 %v491, %v519
      %v544 = vadd.f32 %v492, %v519
      %v545 = vadd.f32 %v493, %v519
      %v546 = vadd.f32 %v494, %v519
      %v547 = vadd.f32 %v495, %v519
      %v548 = vadd.f32 %v496, %v519
      %v549 = vadd.f32 %v497, %v519
      %v550 = vadd.f32 %v498, %v519
      %v551 = vadd.f32 %v499, %v519
      %v552 = vadd.f32 %v500, %v519
      %v553 = vadd.f32 %v501, %v519
      %v554 = vadd.f32 %v502, %v519
      %v555 = vadd.f32 %v503, %v519
      %v556 = vadd.f32 %v504, %v519
      %v557 = vadd.f32 %v505, %v519
      %v558 = vadd.f32 %v506, %v519
      %v559 = vadd.f32 %v507, %v519
      %v560 = vadd.f32 %v508, %v519
      %v561 = vadd.f32 %v509, %v519
      %v562 = vadd.f32 %v510, %v519
      %v563 = vadd.f32 %v511, %v519
      %v564 = vadd.f32 %v512, %v519
      %v565 = vadd.f32 %v513, %v519
      %v566 = vadd.f32 %v514, %v519
      %v567 = vadd.f32 %v515, %v519
      %v568 = vadd.f32 %v516, %v519
      %v569 = vmax.f32 %v521, 0.0
      %v570 = vmax.f32 %v522, 0.0
      %v571 = vmax.f32 %v523, 0.0
      %v572 = vmax.f32 %v524, 0.0
      %v573 = vmax.f32 %v525, 0.0
      %v574 = vmax.f32 %v526, 0.0
      %v575 = vmax.f32 %v527, 0.0
      %v576 = vmax.f32 %v528, 0.0
      %v577 = vmax.f32 %v529, 0.0
      %v578 = vmax.f32 %v530, 0.0
      %v579 = vmax.f32 %v531, 0.0
      %v580 = vmax.f32 %v532, 0.0
      %v581 = vmax.f32 %v533, 0.0
      %v582 = vmax.f32 %v534, 0.0
      %v583 = vmax.f32 %v535, 0.0
      %v584 = vmax.f32 %v536, 0.0
      %v585 = vmax.f32 %v537, 0.0
      %v586 = vmax.f32 %v538, 0.0
      %v587 = vmax.f32 %v539, 0.0
      %v588 = vmax.f32 %v540, 0.0
      %v589 = vmax.f32 %v541, 0.0
      %v590 = vmax.f32 %v542, 0.0
      %v591 = vmax.f32 %v543, 0.0
      %v592 = vmax.f32 %v544, 0.0
      %v593 = vmax.f32 %v545, 0.0
      %v594 = vmax.f32 %v546, 0.0
      %v595 = vmax.f32 %v547, 0.0
      %v596 = vmax.f32 %v548, 0.0
      %v597 = vmax.f32 %v549, 0.0
      %v598 = vmax.f32 %v550, 0.0
      %v599 = vmax.f32 %v551, 0.0
      %v600 = vmax.f32 %v552, 0.0
      %v601 = vmax.f32 %v553, 0.0
      %v602 = vmax.f32 %v554, 0.0
      %v603 = vmax.f32 %v555, 0.0
      %v604 = vmax.f32 %v556, 0.0
      %v605 = vmax.f32 %v557, 0.0
      %v606 = vmax.f32 %v558, 0.0
      %v607 = vmax.f32 %v559, 0.0
      %v608 = vmax.f32 %v560, 0.0
      %v609 = vmax.f32 %v561, 0.0
      %v610 = vmax.f32 %v562, 0.0
      %v611 = vmax.f32 %v563, 0.0
      %v612 = vmax.f32 %v564, 0.0
      %v613 = vmax.f32 %v565, 0.0
      %v614 = vmax.f32 %v566, 0.0
      %v615 = vmax.f32 %v567, 0.0
      %v616 = vmax.f32 %v568, 0.0
      %v617 = vstv %s416
      %v618 = vadd.s32 %v617, 1
      %v619 = vadd.s32 %v617, 2
      %v620 = vadd.s32 %v617, 3
      %v621 = vadd.s32 %v617, 4
      %v622 = vadd.s32 %v617, 5
      %v623 = vadd.s32 %v617, 6
      %v624 = vadd.s32 %v617, 7
      %v625 = vadd.s32 %v617, 8
      %v626 = vadd.s32 %v617, 9
      %v627 = vadd.s32 %v617, 10
      %v628 = vadd.s32 %v617, 11
      %v629 = vadd.s32 %v617, 12
      %v630 = vadd.s32 %v617, 13
      %v631 = vadd.s32 %v617, 14
      %v632 = vadd.s32 %v617, 15
      %v633 = vlaneseq
      %v634 = vshrl.u32 %v633, 7
      %v635 = vadd.s32 %v634, 8
      %v636 = vadd.s32 %v634, 16
      %vm637 = vcmp.ge.s32.totalorder %v617, 1
      %vm638 = vcmp.ge.s32.totalorder %v618, 1
      %vm639 = vcmp.ge.s32.totalorder %v619, 1
      %vm640 = vcmp.ge.s32.totalorder %v620, 1
      %vm641 = vcmp.ge.s32.totalorder %v621, 1
      %vm642 = vcmp.ge.s32.totalorder %v622, 1
      %vm643 = vcmp.ge.s32.totalorder %v623, 1
      %vm644 = vcmp.ge.s32.totalorder %v624, 1
      %vm645 = vcmp.ge.s32.totalorder %v625, 1
      %vm646 = vcmp.ge.s32.totalorder %v626, 1
      %vm647 = vcmp.ge.s32.totalorder %v627, 1
      %vm648 = vcmp.ge.s32.totalorder %v628, 1
      %vm649 = vcmp.ge.s32.totalorder %v629, 1
      %vm650 = vcmp.ge.s32.totalorder %v630, 1
      %vm651 = vcmp.ge.s32.totalorder %v631, 1
      %vm652 = vcmp.ge.s32.totalorder %v632, 1
      %vm653 = vcmp.lt.s32.totalorder %v617, 17
      %vm654 = vcmp.lt.s32.totalorder %v618, 17
      %vm655 = vcmp.lt.s32.totalorder %v619, 17
      %vm656 = vcmp.lt.s32.totalorder %v620, 17
      %vm657 = vcmp.lt.s32.totalorder %v621, 17
      %vm658 = vcmp.lt.s32.totalorder %v622, 17
      %vm659 = vcmp.lt.s32.totalorder %v623, 17
      %vm660 = vcmp.lt.s32.totalorder %v624, 17
      %vm661 = vcmp.lt.s32.totalorder %v625, 17
      %vm662 = vcmp.lt.s32.totalorder %v626, 17
      %vm663 = vcmp.lt.s32.totalorder %v627, 17
      %vm664 = vcmp.lt.s32.totalorder %v628, 17
      %vm665 = vcmp.lt.s32.totalorder %v629, 17
      %vm666 = vcmp.lt.s32.totalorder %v630, 17
      %vm667 = vcmp.lt.s32.totalorder %v631, 17
      %vm668 = vcmp.lt.s32.totalorder %v632, 17
      %vm669 = vmand %vm637, %vm653
      %vm670 = vmand %vm638, %vm654
      %vm671 = vmand %vm639, %vm655
      %vm672 = vmand %vm640, %vm656
      %vm673 = vmand %vm641, %vm657
      %vm674 = vmand %vm642, %vm658
      %vm675 = vmand %vm643, %vm659
      %vm676 = vmand %vm644, %vm660
      %vm677 = vmand %vm645, %vm661
      %vm678 = vmand %vm646, %vm662
      %vm679 = vmand %vm647, %vm663
      %vm680 = vmand %vm648, %vm664
      %vm681 = vmand %vm649, %vm665
      %vm682 = vmand %vm650, %vm666
      %vm683 = vmand %vm651, %vm667
      %vm684 = vmand %vm652, %vm668
      %vm685 = vcmp.ge.s32.totalorder %v634, 1
      %vm686 = vcmp.ge.s32.totalorder %v635, 1
      %vm687 = vcmp.ge.s32.totalorder %v636, 1
      %vm688 = vcmp.lt.s32.totalorder %v634, 17
      %vm689 = vcmp.lt.s32.totalorder %v635, 17
      %vm690 = vcmp.lt.s32.totalorder %v636, 17
      %vm691 = vmand %vm685, %vm688
      %vm692 = vmand %vm686, %vm689
      %vm693 = vmand %vm687, %vm690
      %vm694 = vmand %vm669, %vm691
      %vm695 = vmand %vm669, %vm692
      %vm696 = vmand %vm669, %vm693
      %vm697 = vmand %vm670, %vm691
      %vm698 = vmand %vm670, %vm692
      %vm699 = vmand %vm670, %vm693
      %vm700 = vmand %vm671, %vm691
      %vm701 = vmand %vm671, %vm692
      %vm702 = vmand %vm671, %vm693
      %vm703 = vmand %vm672, %vm691
      %vm704 = vmand %vm672, %vm692
      %vm705 = vmand %vm672, %vm693
      %vm706 = vmand %vm673, %vm691
      %vm707 = vmand %vm673, %vm692
      %vm708 = vmand %vm673, %vm693
      %vm709 = vmand %vm674, %vm691
      %vm710 = vmand %vm674, %vm692
      %vm711 = vmand %vm674, %vm693
      %vm712 = vmand %vm675, %vm691
      %vm713 = vmand %vm675, %vm692
      %vm714 = vmand %vm675, %vm693
      %vm715 = vmand %vm676, %vm691
      %vm716 = vmand %vm676, %vm692
      %vm717 = vmand %vm676, %vm693
      %vm718 = vmand %vm677, %vm691
      %vm719 = vmand %vm677, %vm692
      %vm720 = vmand %vm677, %vm693
      %vm721 = vmand %vm678, %vm691
      %vm722 = vmand %vm678, %vm692
      %vm723 = vmand %vm678, %vm693
      %vm724 = vmand %vm679, %vm691
      %vm725 = vmand %vm679, %vm692
      %vm726 = vmand %vm679, %vm693
      %vm727 = vmand %vm680, %vm691
      %vm728 = vmand %vm680, %vm692
      %vm729 = vmand %vm680, %vm693
      %vm730 = vmand %vm681, %vm691
      %vm731 = vmand %vm681, %vm692
      %vm732 = vmand %vm681, %vm693
      %vm733 = vmand %vm682, %vm691
      %vm734 = vmand %vm682, %vm692
      %vm735 = vmand %vm682, %vm693
      %vm736 = vmand %vm683, %vm691
      %vm737 = vmand %vm683, %vm692
      %vm738 = vmand %vm683, %vm693
      %vm739 = vmand %vm684, %vm691
      %vm740 = vmand %vm684, %vm692
      %vm741 = vmand %vm684, %vm693
      %v742 = vsel %vm694, 1, 0
      %v743 = vsel %vm695, 1, 0
      %v744 = vsel %vm696, 1, 0
      %v745 = vsel %vm697, 1, 0
      %v746 = vsel %vm698, 1, 0
      %v747 = vsel %vm699, 1, 0
      %v748 = vsel %vm700, 1, 0
      %v749 = vsel %vm701, 1, 0
      %v750 = vsel %vm702, 1, 0
      %v751 = vsel %vm703, 1, 0
      %v752 = vsel %vm704, 1, 0
      %v753 = vsel %vm705, 1, 0
      %v754 = vsel %vm706, 1, 0
      %v755 = vsel %vm707, 1, 0
      %v756 = vsel %vm708, 1, 0
      %v757 = vsel %vm709, 1, 0
      %v758 = vsel %vm710, 1, 0
      %v759 = vsel %vm711, 1, 0
      %v760 = vsel %vm712, 1, 0
      %v761 = vsel %vm713, 1, 0
      %v762 = vsel %vm714, 1, 0
      %v763 = vsel %vm715, 1, 0
      %v764 = vsel %vm716, 1, 0
      %v765 = vsel %vm717, 1, 0
      %v766 = vsel %vm718, 1, 0
      %v767 = vsel %vm719, 1, 0
      %v768 = vsel %vm720, 1, 0
      %v769 = vsel %vm721, 1, 0
      %v770 = vsel %vm722, 1, 0
      %v771 = vsel %vm723, 1, 0
      %v772 = vsel %vm724, 1, 0
      %v773 = vsel %vm725, 1, 0
      %v774 = vsel %vm726, 1, 0
      %v775 = vsel %vm727, 1, 0
      %v776 = vsel %vm728, 1, 0
      %v777 = vsel %vm729, 1, 0
      %v778 = vsel %vm730, 1, 0
      %v779 = vsel %vm731, 1, 0
      %v780 = vsel %vm732, 1, 0
      %v781 = vsel %vm733, 1, 0
      %v782 = vsel %vm734, 1, 0
      %v783 = vsel %vm735, 1, 0
      %v784 = vsel %vm736, 1, 0
      %v785 = vsel %vm737, 1, 0
      %v786 = vsel %vm738, 1, 0
      %v787 = vsel %vm739, 1, 0
      %v788 = vsel %vm740, 1, 0
      %v789 = vsel %vm741, 1, 0
      %vm790 = vcmp.eq.s32.totalorder %v742, 1
      %vm791 = vcmp.eq.s32.totalorder %v743, 1
      %vm792 = vcmp.eq.s32.totalorder %v744, 1
      %vm793 = vcmp.eq.s32.totalorder %v745, 1
      %vm794 = vcmp.eq.s32.totalorder %v746, 1
      %vm795 = vcmp.eq.s32.totalorder %v747, 1
      %vm796 = vcmp.eq.s32.totalorder %v748, 1
      %vm797 = vcmp.eq.s32.totalorder %v749, 1
      %vm798 = vcmp.eq.s32.totalorder %v750, 1
      %vm799 = vcmp.eq.s32.totalorder %v751, 1
      %vm800 = vcmp.eq.s32.totalorder %v752, 1
      %vm801 = vcmp.eq.s32.totalorder %v753, 1
      %vm802 = vcmp.eq.s32.totalorder %v754, 1
      %vm803 = vcmp.eq.s32.totalorder %v755, 1
      %vm804 = vcmp.eq.s32.totalorder %v756, 1
      %vm805 = vcmp.eq.s32.totalorder %v757, 1
      %vm806 = vcmp.eq.s32.totalorder %v758, 1
      %vm807 = vcmp.eq.s32.totalorder %v759, 1
      %vm808 = vcmp.eq.s32.totalorder %v760, 1
      %vm809 = vcmp.eq.s32.totalorder %v761, 1
      %vm810 = vcmp.eq.s32.totalorder %v762, 1
      %vm811 = vcmp.eq.s32.totalorder %v763, 1
      %vm812 = vcmp.eq.s32.totalorder %v764, 1
      %vm813 = vcmp.eq.s32.totalorder %v765, 1
      %vm814 = vcmp.eq.s32.totalorder %v766, 1
      %vm815 = vcmp.eq.s32.totalorder %v767, 1
      %vm816 = vcmp.eq.s32.totalorder %v768, 1
      %vm817 = vcmp.eq.s32.totalorder %v769, 1
      %vm818 = vcmp.eq.s32.totalorder %v770, 1
      %vm819 = vcmp.eq.s32.totalorder %v771, 1
      %vm820 = vcmp.eq.s32.totalorder %v772, 1
      %vm821 = vcmp.eq.s32.totalorder %v773, 1
      %vm822 = vcmp.eq.s32.totalorder %v774, 1
      %vm823 = vcmp.eq.s32.totalorder %v775, 1
      %vm824 = vcmp.eq.s32.totalorder %v776, 1
      %vm825 = vcmp.eq.s32.totalorder %v777, 1
      %vm826 = vcmp.eq.s32.totalorder %v778, 1
      %vm827 = vcmp.eq.s32.totalorder %v779, 1
      %vm828 = vcmp.eq.s32.totalorder %v780, 1
      %vm829 = vcmp.eq.s32.totalorder %v781, 1
      %vm830 = vcmp.eq.s32.totalorder %v782, 1
      %vm831 = vcmp.eq.s32.totalorder %v783, 1
      %vm832 = vcmp.eq.s32.totalorder %v784, 1
      %vm833 = vcmp.eq.s32.totalorder %v785, 1
      %vm834 = vcmp.eq.s32.totalorder %v786, 1
      %vm835 = vcmp.eq.s32.totalorder %v787, 1
      %vm836 = vcmp.eq.s32.totalorder %v788, 1
      %vm837 = vcmp.eq.s32.totalorder %v789, 1
      %v838 = vsel %vm790, %v569, 0.0
      %v839 = vsel %vm791, %v570, 0.0
      %v840 = vsel %vm792, %v571, 0.0
      %v841 = vsel %vm793, %v572, 0.0
      %v842 = vsel %vm794, %v573, 0.0
      %v843 = vsel %vm795, %v574, 0.0
      %v844 = vsel %vm796, %v575, 0.0
      %v845 = vsel %vm797, %v576, 0.0
      %v846 = vsel %vm798, %v577, 0.0
      %v847 = vsel %vm799, %v578, 0.0
      %v848 = vsel %vm800, %v579, 0.0
      %v849 = vsel %vm801, %v580, 0.0
      %v850 = vsel %vm802, %v581, 0.0
      %v851 = vsel %vm803, %v582, 0.0
      %v852 = vsel %vm804, %v583, 0.0
      %v853 = vsel %vm805, %v584, 0.0
      %v854 = vsel %vm806, %v585, 0.0
      %v855 = vsel %vm807, %v586, 0.0
      %v856 = vsel %vm808, %v587, 0.0
      %v857 = vsel %vm809, %v588, 0.0
      %v858 = vsel %vm810, %v589, 0.0
      %v859 = vsel %vm811, %v590, 0.0
      %v860 = vsel %vm812, %v591, 0.0
      %v861 = vsel %vm813, %v592, 0.0
      %v862 = vsel %vm814, %v593, 0.0
      %v863 = vsel %vm815, %v594, 0.0
      %v864 = vsel %vm816, %v595, 0.0
      %v865 = vsel %vm817, %v596, 0.0
      %v866 = vsel %vm818, %v597, 0.0
      %v867 = vsel %vm819, %v598, 0.0
      %v868 = vsel %vm820, %v599, 0.0
      %v869 = vsel %vm821, %v600, 0.0
      %v870 = vsel %vm822, %v601, 0.0
      %v871 = vsel %vm823, %v602, 0.0
      %v872 = vsel %vm824, %v603, 0.0
      %v873 = vsel %vm825, %v604, 0.0
      %v874 = vsel %vm826, %v605, 0.0
      %v875 = vsel %vm827, %v606, 0.0
      %v876 = vsel %vm828, %v607, 0.0
      %v877 = vsel %vm829, %v608, 0.0
      %v878 = vsel %vm830, %v609, 0.0
      %v879 = vsel %vm831, %v610, 0.0
      %v880 = vsel %vm832, %v611, 0.0
      %v881 = vsel %vm833, %v612, 0.0
      %v882 = vsel %vm834, %v613, 0.0
      %v883 = vsel %vm835, %v614, 0.0
      %v884 = vsel %vm836, %v615, 0.0
      %v885 = vsel %vm837, %v616, 0.0
      %v886 = vpack.c.bf16 %v838, %v838
      %v887 = vpack.c.bf16 %v839, %v839
      %v888 = vpack.c.bf16 %v840, %v840
      %v889 = vpack.c.bf16 %v841, %v841
      %v890 = vpack.c.bf16 %v842, %v842
      %v891 = vpack.c.bf16 %v843, %v843
      %v892 = vpack.c.bf16 %v844, %v844
      %v893 = vpack.c.bf16 %v845, %v845
      %v894 = vpack.c.bf16 %v846, %v846
      %v895 = vpack.c.bf16 %v847, %v847
      %v896 = vpack.c.bf16 %v848, %v848
      %v897 = vpack.c.bf16 %v849, %v849
      %v898 = vpack.c.bf16 %v850, %v850
      %v899 = vpack.c.bf16 %v851, %v851
      %v900 = vpack.c.bf16 %v852, %v852
      %v901 = vpack.c.bf16 %v853, %v853
      %v902 = vpack.c.bf16 %v854, %v854
      %v903 = vpack.c.bf16 %v855, %v855
      %v904 = vpack.c.bf16 %v856, %v856
      %v905 = vpack.c.bf16 %v857, %v857
      %v906 = vpack.c.bf16 %v858, %v858
      %v907 = vpack.c.bf16 %v859, %v859
      %v908 = vpack.c.bf16 %v860, %v860
      %v909 = vpack.c.bf16 %v861, %v861
      %v910 = vpack.c.bf16 %v862, %v862
      %v911 = vpack.c.bf16 %v863, %v863
      %v912 = vpack.c.bf16 %v864, %v864
      %v913 = vpack.c.bf16 %v865, %v865
      %v914 = vpack.c.bf16 %v866, %v866
      %v915 = vpack.c.bf16 %v867, %v867
      %v916 = vpack.c.bf16 %v868, %v868
      %v917 = vpack.c.bf16 %v869, %v869
      %v918 = vpack.c.bf16 %v870, %v870
      %v919 = vpack.c.bf16 %v871, %v871
      %v920 = vpack.c.bf16 %v872, %v872
      %v921 = vpack.c.bf16 %v873, %v873
      %v922 = vpack.c.bf16 %v874, %v874
      %v923 = vpack.c.bf16 %v875, %v875
      %v924 = vpack.c.bf16 %v876, %v876
      %v925 = vpack.c.bf16 %v877, %v877
      %v926 = vpack.c.bf16 %v878, %v878
      %v927 = vpack.c.bf16 %v879, %v879
      %v928 = vpack.c.bf16 %v880, %v880
      %v929 = vpack.c.bf16 %v881, %v881
      %v930 = vpack.c.bf16 %v882, %v882
      %v931 = vpack.c.bf16 %v883, %v883
      %v932 = vpack.c.bf16 %v884, %v884
      %v933 = vpack.c.bf16 %v885, %v885
      %934 = vst [vmem:[#allocation2] sm:$0xf] %v886
      %935 = vst [vmem:[#allocation2 + $0x4] sm:$0xf] %v887
      %936 = vst [vmem:[#allocation2 + $0x8] sm:$0xf] %v888
      %937 = vst [vmem:[#allocation2 + $0xc] sm:$0xf] %v889
      %938 = vst [vmem:[#allocation2 + $0x10] sm:$0xf] %v890
      %939 = vst [vmem:[#allocation2 + $0x14] sm:$0xf] %v891
      %940 = vst [vmem:[#allocation2 + $0x18] sm:$0xf] %v892
      %941 = vst [vmem:[#allocation2 + $0x1c] sm:$0xf] %v893
      %942 = vst [vmem:[#allocation2 + $0x20] sm:$0xf] %v894
      %943 = vst [vmem:[#allocation2 + $0x24] sm:$0xf] %v895
      %944 = vst [vmem:[#allocation2 + $0x28] sm:$0xf] %v896
      %945 = vst [vmem:[#allocation2 + $0x2c] sm:$0xf] %v897
      %946 = vst [vmem:[#allocation2 + $0x30] sm:$0xf] %v898
      %947 = vst [vmem:[#allocation2 + $0x34] sm:$0xf] %v899
      %948 = vst [vmem:[#allocation2 + $0x38] sm:$0xf] %v900
      %949 = vst [vmem:[#allocation2 + $0x3c] sm:$0xf] %v901
      %950 = vst [vmem:[#allocation2 + $0x40] sm:$0xf] %v902
      %951 = vst [vmem:[#allocation2 + $0x44] sm:$0xf] %v903
      %952 = vst [vmem:[#allocation2 + $0x48] sm:$0xf] %v904
      %953 = vst [vmem:[#allocation2 + $0x4c] sm:$0xf] %v905
      %954 = vst [vmem:[#allocation2 + $0x50] sm:$0xf] %v906
      %955 = vst [vmem:[#allocation2 + $0x54] sm:$0xf] %v907
      %956 = vst [vmem:[#allocation2 + $0x58] sm:$0xf] %v908
      %957 = vst [vmem:[#allocation2 + $0x5c] sm:$0xf] %v909
      %958 = vst [vmem:[#allocation2 + $0x60] sm:$0xf] %v910
      %959 = vst [vmem:[#allocation2 + $0x64] sm:$0xf] %v911
      %960 = vst [vmem:[#allocation2 + $0x68] sm:$0xf] %v912
      %961 = vst [vmem:[#allocation2 + $0x6c] sm:$0xf] %v913
      %962 = vst [vmem:[#allocation2 + $0x70] sm:$0xf] %v914
      %963 = vst [vmem:[#allocation2 + $0x74] sm:$0xf] %v915
      %964 = vst [vmem:[#allocation2 + $0x78] sm:$0xf] %v916
      %965 = vst [vmem:[#allocation2 + $0x7c] sm:$0xf] %v917
      %966 = vst [vmem:[#allocation2 + $0x80] sm:$0xf] %v918
      %967 = vst [vmem:[#allocation2 + $0x84] sm:$0xf] %v919
      %968 = vst [vmem:[#allocation2 + $0x88] sm:$0xf] %v920
      %969 = vst [vmem:[#allocation2 + $0x8c] sm:$0xf] %v921
      %970 = vst [vmem:[#allocation2 + $0x90] sm:$0xf] %v922
      %971 = vst [vmem:[#allocation2 + $0x94] sm:$0xf] %v923
      %972 = vst [vmem:[#allocation2 + $0x98] sm:$0xf] %v924
      %973 = vst [vmem:[#allocation2 + $0x9c] sm:$0xf] %v925
      %974 = vst [vmem:[#allocation2 + $0xa0] sm:$0xf] %v926
      %975 = vst [vmem:[#allocation2 + $0xa4] sm:$0xf] %v927
      %976 = vst [vmem:[#allocation2 + $0xa8] sm:$0xf] %v928
      %977 = vst [vmem:[#allocation2 + $0xac] sm:$0xf] %v929
      %978 = vst [vmem:[#allocation2 + $0xb0] sm:$0xf] %v930
      %979 = vst [vmem:[#allocation2 + $0xb4] sm:$0xf] %v931
      %980 = vst [vmem:[#allocation2 + $0xb8] sm:$0xf] %v932
      %981 = vst [vmem:[#allocation2 + $0xbc] sm:$0xf] %v933
      %v982 = vld [vmem:[%s346] sm:$0xf]
      %v983 = vld [vmem:[%s346 + $0x4] sm:$0xf]
      %v984 = vld [vmem:[%s346 + $0x8] sm:$0xf]
      %v985 = vld [vmem:[%s346 + $0xc] sm:$0xf]
      %v986 = vld [vmem:[%s346 + $0x10] sm:$0xf]
      %v987 = vld [vmem:[%s346 + $0x14] sm:$0xf]
      %v988 = vld [vmem:[%s346 + $0x18] sm:$0xf]
      %v989 = vld [vmem:[%s346 + $0x1c] sm:$0xf]
      %v990 = vld [vmem:[%s346 + $0x20] sm:$0xf]
      %v991 = vld [vmem:[%s346 + $0x24] sm:$0xf]
      %v992 = vld [vmem:[%s346 + $0x28] sm:$0xf]
      %v993 = vld [vmem:[%s346 + $0x2c] sm:$0xf]
      %v994 = vld [vmem:[%s346 + $0x30] sm:$0xf]
      %v995 = vld [vmem:[%s346 + $0x34] sm:$0xf]
      %v996 = vld [vmem:[%s346 + $0x38] sm:$0xf]
      %v997 = vld [vmem:[%s346 + $0x3c] sm:$0xf]
      %v998 = vld [vmem:[%s346 + $0x40] sm:$0xf]
      %v999 = vld [vmem:[%s346 + $0x44] sm:$0xf]
      %v1000 = vld [vmem:[%s346 + $0x48] sm:$0xf]
      %v1001 = vld [vmem:[%s346 + $0x4c] sm:$0xf]
      %v1002 = vld [vmem:[%s346 + $0x50] sm:$0xf]
      %v1003 = vld [vmem:[%s346 + $0x54] sm:$0xf]
      %v1004 = vld [vmem:[%s346 + $0x58] sm:$0xf]
      %v1005 = vld [vmem:[%s346 + $0x5c] sm:$0xf]
      %s1006 = sadd.s32 %s23, 1
      %s1007 = smul.u32 %s1006, 16
      %v1008 = vunpack.c.l.bf16 %v982
      %v1009 = vunpack.c.l.bf16 %v983
      %v1010 = vunpack.c.l.bf16 %v984
      %v1011 = vunpack.c.l.bf16 %v985
      %v1012 = vunpack.c.l.bf16 %v986
      %v1013 = vunpack.c.l.bf16 %v987
      %v1014 = vunpack.c.l.bf16 %v988
      %v1015 = vunpack.c.l.bf16 %v989
      %v1016 = vunpack.c.l.bf16 %v990
      %v1017 = vunpack.c.l.bf16 %v991
      %v1018 = vunpack.c.l.bf16 %v992
      %v1019 = vunpack.c.l.bf16 %v993
      %v1020 = vunpack.c.l.bf16 %v994
      %v1021 = vunpack.c.l.bf16 %v995
      %v1022 = vunpack.c.l.bf16 %v996
      %v1023 = vunpack.c.l.bf16 %v997
      %v1024 = vunpack.c.l.bf16 %v998
      %v1025 = vunpack.c.l.bf16 %v999
      %v1026 = vunpack.c.l.bf16 %v1000
      %v1027 = vunpack.c.l.bf16 %v1001
      %v1028 = vunpack.c.l.bf16 %v1002
      %v1029 = vunpack.c.l.bf16 %v1003
      %v1030 = vunpack.c.l.bf16 %v1004
      %v1031 = vunpack.c.l.bf16 %v1005
      %v1032 = vld [vmem:[%s3] sm:$0x1]
      %v1034 = vperm.slane %v1032, 0
      %v1036 = vmul.f32 %v1008, %v1034
      %v1037 = vmul.f32 %v1009, %v1034
      %v1038 = vmul.f32 %v1010, %v1034
      %v1039 = vmul.f32 %v1011, %v1034
      %v1040 = vmul.f32 %v1012, %v1034
      %v1041 = vmul.f32 %v1013, %v1034
      %v1042 = vmul.f32 %v1014, %v1034
      %v1043 = vmul.f32 %v1015, %v1034
      %v1044 = vmul.f32 %v1016, %v1034
      %v1045 = vmul.f32 %v1017, %v1034
      %v1046 = vmul.f32 %v1018, %v1034
      %v1047 = vmul.f32 %v1019, %v1034
      %v1048 = vmul.f32 %v1020, %v1034
      %v1049 = vmul.f32 %v1021, %v1034
      %v1050 = vmul.f32 %v1022, %v1034
      %v1051 = vmul.f32 %v1023, %v1034
      %v1052 = vmul.f32 %v1024, %v1034
      %v1053 = vmul.f32 %v1025, %v1034
      %v1054 = vmul.f32 %v1026, %v1034
      %v1055 = vmul.f32 %v1027, %v1034
      %v1056 = vmul.f32 %v1028, %v1034
      %v1057 = vmul.f32 %v1029, %v1034
      %v1058 = vmul.f32 %v1030, %v1034
      %v1059 = vmul.f32 %v1031, %v1034
      %v1060 = vld [vmem:[%s4] sm:$0x1]
      %v1062 = vperm.slane %v1060, 0
      %v1064 = vadd.f32 %v1036, %v1062
      %v1065 = vadd.f32 %v1037, %v1062
      %v1066 = vadd.f32 %v1038, %v1062
      %v1067 = vadd.f32 %v1039, %v1062
      %v1068 = vadd.f32 %v1040, %v1062
      %v1069 = vadd.f32 %v1041, %v1062
      %v1070 = vadd.f32 %v1042, %v1062
      %v1071 = vadd.f32 %v1043, %v1062
      %v1072 = vadd.f32 %v1044, %v1062
      %v1073 = vadd.f32 %v1045, %v1062
      %v1074 = vadd.f32 %v1046, %v1062
      %v1075 = vadd.f32 %v1047, %v1062
      %v1076 = vadd.f32 %v1048, %v1062
      %v1077 = vadd.f32 %v1049, %v1062
      %v1078 = vadd.f32 %v1050, %v1062
      %v1079 = vadd.f32 %v1051, %v1062
      %v1080 = vadd.f32 %v1052, %v1062
      %v1081 = vadd.f32 %v1053, %v1062
      %v1082 = vadd.f32 %v1054, %v1062
      %v1083 = vadd.f32 %v1055, %v1062
      %v1084 = vadd.f32 %v1056, %v1062
      %v1085 = vadd.f32 %v1057, %v1062
      %v1086 = vadd.f32 %v1058, %v1062
      %v1087 = vadd.f32 %v1059, %v1062
      %v1088 = vmax.f32 %v1064, 0.0
      %v1089 = vmax.f32 %v1065, 0.0
      %v1090 = vmax.f32 %v1066, 0.0
      %v1091 = vmax.f32 %v1067, 0.0
      %v1092 = vmax.f32 %v1068, 0.0
      %v1093 = vmax.f32 %v1069, 0.0
      %v1094 = vmax.f32 %v1070, 0.0
      %v1095 = vmax.f32 %v1071, 0.0
      %v1096 = vmax.f32 %v1072, 0.0
      %v1097 = vmax.f32 %v1073, 0.0
      %v1098 = vmax.f32 %v1074, 0.0
      %v1099 = vmax.f32 %v1075, 0.0
      %v1100 = vmax.f32 %v1076, 0.0
      %v1101 = vmax.f32 %v1077, 0.0
      %v1102 = vmax.f32 %v1078, 0.0
      %v1103 = vmax.f32 %v1079, 0.0
      %v1104 = vmax.f32 %v1080, 0.0
      %v1105 = vmax.f32 %v1081, 0.0
      %v1106 = vmax.f32 %v1082, 0.0
      %v1107 = vmax.f32 %v1083, 0.0
      %v1108 = vmax.f32 %v1084, 0.0
      %v1109 = vmax.f32 %v1085, 0.0
      %v1110 = vmax.f32 %v1086, 0.0
      %v1111 = vmax.f32 %v1087, 0.0
      %v1112 = vstv %s1007
      %v1113 = vadd.s32 %v1112, 1
      %v1114 = vadd.s32 %v1112, 2
      %v1115 = vadd.s32 %v1112, 3
      %v1116 = vadd.s32 %v1112, 4
      %v1117 = vadd.s32 %v1112, 5
      %v1118 = vadd.s32 %v1112, 6
      %v1119 = vadd.s32 %v1112, 7
      %vm1120 = vcmp.ge.s32.totalorder %v1112, 1
      %vm1121 = vcmp.ge.s32.totalorder %v1113, 1
      %vm1122 = vcmp.ge.s32.totalorder %v1114, 1
      %vm1123 = vcmp.ge.s32.totalorder %v1115, 1
      %vm1124 = vcmp.ge.s32.totalorder %v1116, 1
      %vm1125 = vcmp.ge.s32.totalorder %v1117, 1
      %vm1126 = vcmp.ge.s32.totalorder %v1118, 1
      %vm1127 = vcmp.ge.s32.totalorder %v1119, 1
      %vm1128 = vcmp.lt.s32.totalorder %v1112, 17
      %vm1129 = vcmp.lt.s32.totalorder %v1113, 17
      %vm1130 = vcmp.lt.s32.totalorder %v1114, 17
      %vm1131 = vcmp.lt.s32.totalorder %v1115, 17
      %vm1132 = vcmp.lt.s32.totalorder %v1116, 17
      %vm1133 = vcmp.lt.s32.totalorder %v1117, 17
      %vm1134 = vcmp.lt.s32.totalorder %v1118, 17
      %vm1135 = vcmp.lt.s32.totalorder %v1119, 17
      %vm1136 = vmand %vm1120, %vm1128
      %vm1137 = vmand %vm1121, %vm1129
      %vm1138 = vmand %vm1122, %vm1130
      %vm1139 = vmand %vm1123, %vm1131
      %vm1140 = vmand %vm1124, %vm1132
      %vm1141 = vmand %vm1125, %vm1133
      %vm1142 = vmand %vm1126, %vm1134
      %vm1143 = vmand %vm1127, %vm1135
      %vm1144 = vmand %vm1136, %vm691
      %vm1145 = vmand %vm1136, %vm692
      %vm1146 = vmand %vm1136, %vm693
      %vm1147 = vmand %vm1137, %vm691
      %vm1148 = vmand %vm1137, %vm692
      %vm1149 = vmand %vm1137, %vm693
      %vm1150 = vmand %vm1138, %vm691
      %vm1151 = vmand %vm1138, %vm692
      %vm1152 = vmand %vm1138, %vm693
      %vm1153 = vmand %vm1139, %vm691
      %vm1154 = vmand %vm1139, %vm692
      %vm1155 = vmand %vm1139, %vm693
      %vm1156 = vmand %vm1140, %vm691
      %vm1157 = vmand %vm1140, %vm692
      %vm1158 = vmand %vm1140, %vm693
      %vm1159 = vmand %vm1141, %vm691
      %vm1160 = vmand %vm1141, %vm692
      %vm1161 = vmand %vm1141, %vm693
      %vm1162 = vmand %vm1142, %vm691
      %vm1163 = vmand %vm1142, %vm692
      %vm1164 = vmand %vm1142, %vm693
      %vm1165 = vmand %vm1143, %vm691
      %vm1166 = vmand %vm1143, %vm692
      %vm1167 = vmand %vm1143, %vm693
      %v1168 = vsel %vm1144, 1, 0
      %v1169 = vsel %vm1145, 1, 0
      %v1170 = vsel %vm1146, 1, 0
      %v1171 = vsel %vm1147, 1, 0
      %v1172 = vsel %vm1148, 1, 0
      %v1173 = vsel %vm1149, 1, 0
      %v1174 = vsel %vm1150, 1, 0
      %v1175 = vsel %vm1151, 1, 0
      %v1176 = vsel %vm1152, 1, 0
      %v1177 = vsel %vm1153, 1, 0
      %v1178 = vsel %vm1154, 1, 0
      %v1179 = vsel %vm1155, 1, 0
      %v1180 = vsel %vm1156, 1, 0
      %v1181 = vsel %vm1157, 1, 0
      %v1182 = vsel %vm1158, 1, 0
      %v1183 = vsel %vm1159, 1, 0
      %v1184 = vsel %vm1160, 1, 0
      %v1185 = vsel %vm1161, 1, 0
      %v1186 = vsel %vm1162, 1, 0
      %v1187 = vsel %vm1163, 1, 0
      %v1188 = vsel %vm1164, 1, 0
      %v1189 = vsel %vm1165, 1, 0
      %v1190 = vsel %vm1166, 1, 0
      %v1191 = vsel %vm1167, 1, 0
      %vm1192 = vcmp.eq.s32.totalorder %v1168, 1
      %vm1193 = vcmp.eq.s32.totalorder %v1169, 1
      %vm1194 = vcmp.eq.s32.totalorder %v1170, 1
      %vm1195 = vcmp.eq.s32.totalorder %v1171, 1
      %vm1196 = vcmp.eq.s32.totalorder %v1172, 1
      %vm1197 = vcmp.eq.s32.totalorder %v1173, 1
      %vm1198 = vcmp.eq.s32.totalorder %v1174, 1
      %vm1199 = vcmp.eq.s32.totalorder %v1175, 1
      %vm1200 = vcmp.eq.s32.totalorder %v1176, 1
      %vm1201 = vcmp.eq.s32.totalorder %v1177, 1
      %vm1202 = vcmp.eq.s32.totalorder %v1178, 1
      %vm1203 = vcmp.eq.s32.totalorder %v1179, 1
      %vm1204 = vcmp.eq.s32.totalorder %v1180, 1
      %vm1205 = vcmp.eq.s32.totalorder %v1181, 1
      %vm1206 = vcmp.eq.s32.totalorder %v1182, 1
      %vm1207 = vcmp.eq.s32.totalorder %v1183, 1
      %vm1208 = vcmp.eq.s32.totalorder %v1184, 1
      %vm1209 = vcmp.eq.s32.totalorder %v1185, 1
      %vm1210 = vcmp.eq.s32.totalorder %v1186, 1
      %vm1211 = vcmp.eq.s32.totalorder %v1187, 1
      %vm1212 = vcmp.eq.s32.totalorder %v1188, 1
      %vm1213 = vcmp.eq.s32.totalorder %v1189, 1
      %vm1214 = vcmp.eq.s32.totalorder %v1190, 1
      %vm1215 = vcmp.eq.s32.totalorder %v1191, 1
      %v1216 = vsel %vm1192, %v1088, 0.0
      %v1217 = vsel %vm1193, %v1089, 0.0
      %v1218 = vsel %vm1194, %v1090, 0.0
      %v1219 = vsel %vm1195, %v1091, 0.0
      %v1220 = vsel %vm1196, %v1092, 0.0
      %v1221 = vsel %vm1197, %v1093, 0.0
      %v1222 = vsel %vm1198, %v1094, 0.0
      %v1223 = vsel %vm1199, %v1095, 0.0
      %v1224 = vsel %vm1200, %v1096, 0.0
      %v1225 = vsel %vm1201, %v1097, 0.0
      %v1226 = vsel %vm1202, %v1098, 0.0
      %v1227 = vsel %vm1203, %v1099, 0.0
      %v1228 = vsel %vm1204, %v1100, 0.0
      %v1229 = vsel %vm1205, %v1101, 0.0
      %v1230 = vsel %vm1206, %v1102, 0.0
      %v1231 = vsel %vm1207, %v1103, 0.0
      %v1232 = vsel %vm1208, %v1104, 0.0
      %v1233 = vsel %vm1209, %v1105, 0.0
      %v1234 = vsel %vm1210, %v1106, 0.0
      %v1235 = vsel %vm1211, %v1107, 0.0
      %v1236 = vsel %vm1212, %v1108, 0.0
      %v1237 = vsel %vm1213, %v1109, 0.0
      %v1238 = vsel %vm1214, %v1110, 0.0
      %v1239 = vsel %vm1215, %v1111, 0.0
      %v1240 = vpack.c.bf16 %v1216, %v1216
      %v1241 = vpack.c.bf16 %v1217, %v1217
      %v1242 = vpack.c.bf16 %v1218, %v1218
      %v1243 = vpack.c.bf16 %v1219, %v1219
      %v1244 = vpack.c.bf16 %v1220, %v1220
      %v1245 = vpack.c.bf16 %v1221, %v1221
      %v1246 = vpack.c.bf16 %v1222, %v1222
      %v1247 = vpack.c.bf16 %v1223, %v1223
      %v1248 = vpack.c.bf16 %v1224, %v1224
      %v1249 = vpack.c.bf16 %v1225, %v1225
      %v1250 = vpack.c.bf16 %v1226, %v1226
      %v1251 = vpack.c.bf16 %v1227, %v1227
      %v1252 = vpack.c.bf16 %v1228, %v1228
      %v1253 = vpack.c.bf16 %v1229, %v1229
      %v1254 = vpack.c.bf16 %v1230, %v1230
      %v1255 = vpack.c.bf16 %v1231, %v1231
      %v1256 = vpack.c.bf16 %v1232, %v1232
      %v1257 = vpack.c.bf16 %v1233, %v1233
      %v1258 = vpack.c.bf16 %v1234, %v1234
      %v1259 = vpack.c.bf16 %v1235, %v1235
      %v1260 = vpack.c.bf16 %v1236, %v1236
      %v1261 = vpack.c.bf16 %v1237, %v1237
      %v1262 = vpack.c.bf16 %v1238, %v1238
      %v1263 = vpack.c.bf16 %v1239, %v1239
      %s1264 = scalar_lea.vmem [#allocation2], 192
      %1265 = vst [vmem:[%s1264] sm:$0xf] %v1240
      %1266 = vst [vmem:[%s1264 + $0x4] sm:$0xf] %v1241
      %1267 = vst [vmem:[%s1264 + $0x8] sm:$0xf] %v1242
      %1268 = vst [vmem:[%s1264 + $0xc] sm:$0xf] %v1243
      %1269 = vst [vmem:[%s1264 + $0x10] sm:$0xf] %v1244
      %1270 = vst [vmem:[%s1264 + $0x14] sm:$0xf] %v1245
      %1271 = vst [vmem:[%s1264 + $0x18] sm:$0xf] %v1246
      %1272 = vst [vmem:[%s1264 + $0x1c] sm:$0xf] %v1247
      %1273 = vst [vmem:[%s1264 + $0x20] sm:$0xf] %v1248
      %1274 = vst [vmem:[%s1264 + $0x24] sm:$0xf] %v1249
      %1275 = vst [vmem:[%s1264 + $0x28] sm:$0xf] %v1250
      %1276 = vst [vmem:[%s1264 + $0x2c] sm:$0xf] %v1251
      %1277 = vst [vmem:[%s1264 + $0x30] sm:$0xf] %v1252
      %1278 = vst [vmem:[%s1264 + $0x34] sm:$0xf] %v1253
      %1279 = vst [vmem:[%s1264 + $0x38] sm:$0xf] %v1254
      %1280 = vst [vmem:[%s1264 + $0x3c] sm:$0xf] %v1255
      %1281 = vst [vmem:[%s1264 + $0x40] sm:$0xf] %v1256
      %1282 = vst [vmem:[%s1264 + $0x44] sm:$0xf] %v1257
      %1283 = vst [vmem:[%s1264 + $0x48] sm:$0xf] %v1258
      %1284 = vst [vmem:[%s1264 + $0x4c] sm:$0xf] %v1259
      %1285 = vst [vmem:[%s1264 + $0x50] sm:$0xf] %v1260
      %1286 = vst [vmem:[%s1264 + $0x54] sm:$0xf] %v1261
      %1287 = vst [vmem:[%s1264 + $0x58] sm:$0xf] %v1262
      %1288 = vst [vmem:[%s1264 + $0x5c] sm:$0xf] %v1263
      %v1289 = vld [vmem:[#allocation2] sm:$0xf]
      %v1290 = vld [vmem:[#allocation2 + $0x4] sm:$0xf]
      %v1291 = vld [vmem:[#allocation2 + $0x8] sm:$0xf]
      %v1292 = vld [vmem:[#allocation2 + $0xc] sm:$0xf]
      %v1293 = vld [vmem:[#allocation2 + $0x10] sm:$0xf]
      %v1294 = vld [vmem:[#allocation2 + $0x14] sm:$0xf]
      %v1295 = vld [vmem:[#allocation2 + $0x18] sm:$0xf]
      %v1296 = vld [vmem:[#allocation2 + $0x1c] sm:$0xf]
      %v1297 = vld [vmem:[#allocation2 + $0x20] sm:$0xf]
      %v1298 = vld [vmem:[#allocation2 + $0x24] sm:$0xf]
      %v1299 = vld [vmem:[#allocation2 + $0x28] sm:$0xf]
      %v1300 = vld [vmem:[#allocation2 + $0x2c] sm:$0xf]
      %v1301 = vld [vmem:[#allocation2 + $0x30] sm:$0xf]
      %v1302 = vld [vmem:[#allocation2 + $0x34] sm:$0xf]
      %v1303 = vld [vmem:[#allocation2 + $0x38] sm:$0xf]
      %v1304 = vld [vmem:[#allocation2 + $0x3c] sm:$0xf]
      %v1305 = vld [vmem:[#allocation2 + $0x40] sm:$0xf]
      %v1306 = vld [vmem:[#allocation2 + $0x44] sm:$0xf]
      %v1307 = vld [vmem:[#allocation2 + $0x48] sm:$0xf]
      %v1308 = vld [vmem:[#allocation2 + $0x4c] sm:$0xf]
      %v1309 = vld [vmem:[#allocation2 + $0x50] sm:$0xf]
      %v1310 = vld [vmem:[#allocation2 + $0x54] sm:$0xf]
      %v1311 = vld [vmem:[#allocation2 + $0x58] sm:$0xf]
      %v1312 = vld [vmem:[#allocation2 + $0x5c] sm:$0xf]
      %v1313 = vld [vmem:[#allocation2 + $0x60] sm:$0xf]
      %v1314 = vld [vmem:[#allocation2 + $0x64] sm:$0xf]
      %v1315 = vld [vmem:[#allocation2 + $0x68] sm:$0xf]
      %v1316 = vld [vmem:[#allocation2 + $0x6c] sm:$0xf]
      %v1317 = vld [vmem:[#allocation2 + $0x70] sm:$0xf]
      %v1318 = vld [vmem:[#allocation2 + $0x74] sm:$0xf]
      %v1319 = vld [vmem:[#allocation2 + $0x78] sm:$0xf]
      %v1320 = vld [vmem:[#allocation2 + $0x7c] sm:$0xf]
      %v1321 = vld [vmem:[#allocation2 + $0x80] sm:$0xf]
      %v1322 = vld [vmem:[#allocation2 + $0x84] sm:$0xf]
      %v1323 = vld [vmem:[#allocation2 + $0x88] sm:$0xf]
      %v1324 = vld [vmem:[#allocation2 + $0x8c] sm:$0xf]
      %v1325 = vld [vmem:[#allocation2 + $0x90] sm:$0xf]
      %v1326 = vld [vmem:[#allocation2 + $0x94] sm:$0xf]
      %v1327 = vld [vmem:[#allocation2 + $0x98] sm:$0xf]
      %v1328 = vld [vmem:[#allocation2 + $0x9c] sm:$0xf]
      %v1329 = vld [vmem:[#allocation2 + $0xa0] sm:$0xf]
      %v1330 = vld [vmem:[#allocation2 + $0xa4] sm:$0xf]
      %v1331 = vld [vmem:[#allocation2 + $0xa8] sm:$0xf]
      %v1332 = vld [vmem:[#allocation2 + $0xac] sm:$0xf]
      %v1333 = vld [vmem:[#allocation2 + $0xb0] sm:$0xf]
      %v1334 = vld [vmem:[#allocation2 + $0xb4] sm:$0xf]
      %v1335 = vld [vmem:[#allocation2 + $0xb8] sm:$0xf]
      %v1336 = vld [vmem:[#allocation2 + $0xbc] sm:$0xf]
      %v1369 = vunpack.c.l.b16 %v1289
      %v1370 = vunpack.c.l.b16 %v1290
      %v1371 = vunpack.c.l.b16 %v1292
      %v1372 = vunpack.c.l.b16 %v1293
      %v1373 = vunpack.c.l.b16 %v1295
      %v1374 = vunpack.c.l.b16 %v1296
      %v1375 = vunpack.c.l.b16 %v1298
      %v1376 = vunpack.c.l.b16 %v1299
      %v1377 = vunpack.c.l.b16 %v1301
      %v1378 = vunpack.c.l.b16 %v1302
      %v1379 = vunpack.c.l.b16 %v1304
      %v1380 = vunpack.c.l.b16 %v1305
      %v1381 = vunpack.c.l.b16 %v1307
      %v1382 = vunpack.c.l.b16 %v1308
      %v1383 = vunpack.c.l.b16 %v1310
      %v1384 = vunpack.c.l.b16 %v1311
      %v1385 = vunpack.c.l.b16 %v1313
      %v1386 = vunpack.c.l.b16 %v1314
      %v1387 = vunpack.c.l.b16 %v1316
      %v1388 = vunpack.c.l.b16 %v1317
      %v1389 = vunpack.c.l.b16 %v1319
      %v1390 = vunpack.c.l.b16 %v1320
      %v1391 = vunpack.c.l.b16 %v1322
      %v1392 = vunpack.c.l.b16 %v1323
      %v1393 = vunpack.c.l.b16 %v1325
      %v1394 = vunpack.c.l.b16 %v1326
      %v1395 = vunpack.c.l.b16 %v1328
      %v1396 = vunpack.c.l.b16 %v1329
      %v1397 = vunpack.c.l.b16 %v1331
      %v1398 = vunpack.c.l.b16 %v1332
      %v1399 = vunpack.c.l.b16 %v1334
      %v1400 = vunpack.c.l.b16 %v1335
      %v1401 = vpack.c.b16 %v1370, %v1369
      %v1402 = vpack.c.b16 %v1372, %v1371
      %v1403 = vpack.c.b16 %v1374, %v1373
      %v1404 = vpack.c.b16 %v1376, %v1375
      %v1405 = vpack.c.b16 %v1378, %v1377
      %v1406 = vpack.c.b16 %v1380, %v1379
      %v1407 = vpack.c.b16 %v1382, %v1381
      %v1408 = vpack.c.b16 %v1384, %v1383
      %v1409 = vpack.c.b16 %v1386, %v1385
      %v1410 = vpack.c.b16 %v1388, %v1387
      %v1411 = vpack.c.b16 %v1390, %v1389
      %v1412 = vpack.c.b16 %v1392, %v1391
      %v1413 = vpack.c.b16 %v1394, %v1393
      %v1414 = vpack.c.b16 %v1396, %v1395
      %v1415 = vpack.c.b16 %v1398, %v1397
      %v1416 = vpack.c.b16 %v1400, %v1399
      %v1449 = vunpack.c.l.b16 %v1291
      %v1450 = vunpack.c.l.b16 %v1294
      %v1451 = vunpack.c.l.b16 %v1297
      %v1452 = vunpack.c.l.b16 %v1300
      %v1453 = vunpack.c.l.b16 %v1303
      %v1454 = vunpack.c.l.b16 %v1306
      %v1455 = vunpack.c.l.b16 %v1309
      %v1456 = vunpack.c.l.b16 %v1312
      %v1457 = vunpack.c.l.b16 %v1315
      %v1458 = vunpack.c.l.b16 %v1318
      %v1459 = vunpack.c.l.b16 %v1321
      %v1460 = vunpack.c.l.b16 %v1324
      %v1461 = vunpack.c.l.b16 %v1327
      %v1462 = vunpack.c.l.b16 %v1330
      %v1463 = vunpack.c.l.b16 %v1333
      %v1464 = vunpack.c.l.b16 %v1336
      %v1465 = vpack.c.b16 %v1449, %v1449
      %v1466 = vpack.c.b16 %v1450, %v1450
      %v1467 = vpack.c.b16 %v1451, %v1451
      %v1468 = vpack.c.b16 %v1452, %v1452
      %v1469 = vpack.c.b16 %v1453, %v1453
      %v1470 = vpack.c.b16 %v1454, %v1454
      %v1471 = vpack.c.b16 %v1455, %v1455
      %v1472 = vpack.c.b16 %v1456, %v1456
      %v1473 = vpack.c.b16 %v1457, %v1457
      %v1474 = vpack.c.b16 %v1458, %v1458
      %v1475 = vpack.c.b16 %v1459, %v1459
      %v1476 = vpack.c.b16 %v1460, %v1460
      %v1477 = vpack.c.b16 %v1461, %v1461
      %v1478 = vpack.c.b16 %v1462, %v1462
      %v1479 = vpack.c.b16 %v1463, %v1463
      %v1480 = vpack.c.b16 %v1464, %v1464
      %vm1481 = vsmask.f32 7424
      %v1483 = vshrl.u32 %v1401, 16
      %v1485 = vshll.u32 %v1401, 16
      %v1487 = vrot.slane %v1485, 1
      %v1488 = vor.u32 %v1483, %v1487
      %v1490 = vshll.u32 %v1465, 16
      %v1492 = vrot.slane %v1490, 1
      %v1493 = vsel %vm1481, %v1488, %v1492
      %v1495 = vshrl.u32 %v1402, 16
      %v1497 = vshll.u32 %v1402, 16
      %v1499 = vrot.slane %v1497, 1
      %v1500 = vor.u32 %v1495, %v1499
      %v1502 = vshll.u32 %v1466, 16
      %v1504 = vrot.slane %v1502, 1
      %v1505 = vsel %vm1481, %v1500, %v1504
      %v1507 = vshrl.u32 %v1403, 16
      %v1509 = vshll.u32 %v1403, 16
      %v1511 = vrot.slane %v1509, 1
      %v1512 = vor.u32 %v1507, %v1511
      %v1514 = vshll.u32 %v1467, 16
      %v1516 = vrot.slane %v1514, 1
      %v1517 = vsel %vm1481, %v1512, %v1516
      %v1519 = vshrl.u32 %v1404, 16
      %v1521 = vshll.u32 %v1404, 16
      %v1523 = vrot.slane %v1521, 1
      %v1524 = vor.u32 %v1519, %v1523
      %v1526 = vshll.u32 %v1468, 16
      %v1528 = vrot.slane %v1526, 1
      %v1529 = vsel %vm1481, %v1524, %v1528
      %v1531 = vshrl.u32 %v1405, 16
      %v1533 = vshll.u32 %v1405, 16
      %v1535 = vrot.slane %v1533, 1
      %v1536 = vor.u32 %v1531, %v1535
      %v1538 = vshll.u32 %v1469, 16
      %v1540 = vrot.slane %v1538, 1
      %v1541 = vsel %vm1481, %v1536, %v1540
      %v1543 = vshrl.u32 %v1406, 16
      %v1545 = vshll.u32 %v1406, 16
      %v1547 = vrot.slane %v1545, 1
      %v1548 = vor.u32 %v1543, %v1547
      %v1550 = vshll.u32 %v1470, 16
      %v1552 = vrot.slane %v1550, 1
      %v1553 = vsel %vm1481, %v1548, %v1552
      %v1555 = vshrl.u32 %v1407, 16
      %v1557 = vshll.u32 %v1407, 16
      %v1559 = vrot.slane %v1557, 1
      %v1560 = vor.u32 %v1555, %v1559
      %v1562 = vshll.u32 %v1471, 16
      %v1564 = vrot.slane %v1562, 1
      %v1565 = vsel %vm1481, %v1560, %v1564
      %v1567 = vshrl.u32 %v1408, 16
      %v1569 = vshll.u32 %v1408, 16
      %v1571 = vrot.slane %v1569, 1
      %v1572 = vor.u32 %v1567, %v1571
      %v1574 = vshll.u32 %v1472, 16
      %v1576 = vrot.slane %v1574, 1
      %v1577 = vsel %vm1481, %v1572, %v1576
      %v1579 = vshrl.u32 %v1409, 16
      %v1581 = vshll.u32 %v1409, 16
      %v1583 = vrot.slane %v1581, 1
      %v1584 = vor.u32 %v1579, %v1583
      %v1586 = vshll.u32 %v1473, 16
      %v1588 = vrot.slane %v1586, 1
      %v1589 = vsel %vm1481, %v1584, %v1588
      %v1591 = vshrl.u32 %v1410, 16
      %v1593 = vshll.u32 %v1410, 16
      %v1595 = vrot.slane %v1593, 1
      %v1596 = vor.u32 %v1591, %v1595
      %v1598 = vshll.u32 %v1474, 16
      %v1600 = vrot.slane %v1598, 1
      %v1601 = vsel %vm1481, %v1596, %v1600
      %v1603 = vshrl.u32 %v1411, 16
      %v1605 = vshll.u32 %v1411, 16
      %v1607 = vrot.slane %v1605, 1
      %v1608 = vor.u32 %v1603, %v1607
      %v1610 = vshll.u32 %v1475, 16
      %v1612 = vrot.slane %v1610, 1
      %v1613 = vsel %vm1481, %v1608, %v1612
      %v1615 = vshrl.u32 %v1412, 16
      %v1617 = vshll.u32 %v1412, 16
      %v1619 = vrot.slane %v1617, 1
      %v1620 = vor.u32 %v1615, %v1619
      %v1622 = vshll.u32 %v1476, 16
      %v1624 = vrot.slane %v1622, 1
      %v1625 = vsel %vm1481, %v1620, %v1624
      %v1627 = vshrl.u32 %v1413, 16
      %v1629 = vshll.u32 %v1413, 16
      %v1631 = vrot.slane %v1629, 1
      %v1632 = vor.u32 %v1627, %v1631
      %v1634 = vshll.u32 %v1477, 16
      %v1636 = vrot.slane %v1634, 1
      %v1637 = vsel %vm1481, %v1632, %v1636
      %v1639 = vshrl.u32 %v1414, 16
      %v1641 = vshll.u32 %v1414, 16
      %v1643 = vrot.slane %v1641, 1
      %v1644 = vor.u32 %v1639, %v1643
      %v1646 = vshll.u32 %v1478, 16
      %v1648 = vrot.slane %v1646, 1
      %v1649 = vsel %vm1481, %v1644, %v1648
      %v1651 = vshrl.u32 %v1415, 16
      %v1653 = vshll.u32 %v1415, 16
      %v1655 = vrot.slane %v1653, 1
      %v1656 = vor.u32 %v1651, %v1655
      %v1658 = vshll.u32 %v1479, 16
      %v1660 = vrot.slane %v1658, 1
      %v1661 = vsel %vm1481, %v1656, %v1660
      %v1663 = vshrl.u32 %v1416, 16
      %v1665 = vshll.u32 %v1416, 16
      %v1667 = vrot.slane %v1665, 1
      %v1668 = vor.u32 %v1663, %v1667
      %v1670 = vshll.u32 %v1480, 16
      %v1672 = vrot.slane %v1670, 1
      %v1673 = vsel %vm1481, %v1668, %v1672
      %vm1690 = vcmask 1046528
      %v1691 = vrot.slane %v1401, 1
      %v1692 = vrot.slane %v1465, 1
      %v1693 = vsel %vm1690, %v1691, %v1692
      %v1694 = vrot.slane %v1402, 1
      %v1695 = vrot.slane %v1466, 1
      %v1696 = vsel %vm1690, %v1694, %v1695
      %v1697 = vrot.slane %v1403, 1
      %v1698 = vrot.slane %v1467, 1
      %v1699 = vsel %vm1690, %v1697, %v1698
      %v1700 = vrot.slane %v1404, 1
      %v1701 = vrot.slane %v1468, 1
      %v1702 = vsel %vm1690, %v1700, %v1701
      %v1703 = vrot.slane %v1405, 1
      %v1704 = vrot.slane %v1469, 1
      %v1705 = vsel %vm1690, %v1703, %v1704
      %v1706 = vrot.slane %v1406, 1
      %v1707 = vrot.slane %v1470, 1
      %v1708 = vsel %vm1690, %v1706, %v1707
      %v1709 = vrot.slane %v1407, 1
      %v1710 = vrot.slane %v1471, 1
      %v1711 = vsel %vm1690, %v1709, %v1710
      %v1712 = vrot.slane %v1408, 1
      %v1713 = vrot.slane %v1472, 1
      %v1714 = vsel %vm1690, %v1712, %v1713
      %v1715 = vrot.slane %v1409, 1
      %v1716 = vrot.slane %v1473, 1
      %v1717 = vsel %vm1690, %v1715, %v1716
      %v1718 = vrot.slane %v1410, 1
      %v1719 = vrot.slane %v1474, 1
      %v1720 = vsel %vm1690, %v1718, %v1719
      %v1721 = vrot.slane %v1411, 1
      %v1722 = vrot.slane %v1475, 1
      %v1723 = vsel %vm1690, %v1721, %v1722
      %v1724 = vrot.slane %v1412, 1
      %v1725 = vrot.slane %v1476, 1
      %v1726 = vsel %vm1690, %v1724, %v1725
      %v1727 = vrot.slane %v1413, 1
      %v1728 = vrot.slane %v1477, 1
      %v1729 = vsel %vm1690, %v1727, %v1728
      %v1730 = vrot.slane %v1414, 1
      %v1731 = vrot.slane %v1478, 1
      %v1732 = vsel %vm1690, %v1730, %v1731
      %v1733 = vrot.slane %v1415, 1
      %v1734 = vrot.slane %v1479, 1
      %v1735 = vsel %vm1690, %v1733, %v1734
      %v1736 = vrot.slane %v1416, 1
      %v1737 = vrot.slane %v1480, 1
      %v1738 = vsel %vm1690, %v1736, %v1737
      %v1755 = vld [vmem:[%s2] sm:$0xf]
      %v1756 = vld [vmem:[%s2 + $0x4] sm:$0xf]
      %v1757 = vld [vmem:[%s2 + $0x8] sm:$0xf]
      %v1758 = vld [vmem:[%s2 + $0xc] sm:$0xf]
      %v1759 = vld [vmem:[%s2 + $0x10] sm:$0xf]
      %v1760 = vld [vmem:[%s2 + $0x14] sm:$0xf]
      %v1761 = vld [vmem:[%s2 + $0x18] sm:$0xf]
      %v1762 = vld [vmem:[%s2 + $0x1c] sm:$0xf]
      %v1763 = vld [vmem:[%s2 + $0x20] sm:$0xf]
      %v1764 = vld [vmem:[%s2 + $0x24] sm:$0xf]
      %v1765 = vld [vmem:[%s2 + $0x28] sm:$0xf]
      %v1766 = vld [vmem:[%s2 + $0x2c] sm:$0xf]
      %v1767 = vld [vmem:[%s2 + $0x30] sm:$0xf]
      %v1768 = vld [vmem:[%s2 + $0x34] sm:$0xf]
      %v1769 = vld [vmem:[%s2 + $0x38] sm:$0xf]
      %v1770 = vld [vmem:[%s2 + $0x3c] sm:$0xf]
      %v1771 = vld [vmem:[%s2 + $0x40] sm:$0xf]
      %v1772 = vld [vmem:[%s2 + $0x44] sm:$0xf]
      %v1773 = vld [vmem:[%s2 + $0x48] sm:$0xf]
      %v1774 = vld [vmem:[%s2 + $0x4c] sm:$0xf]
      %v1775 = vld [vmem:[%s2 + $0x50] sm:$0xf]
      %v1776 = vld [vmem:[%s2 + $0x54] sm:$0xf]
      %v1777 = vld [vmem:[%s2 + $0x58] sm:$0xf]
      %v1778 = vld [vmem:[%s2 + $0x5c] sm:$0xf]
      %v1779 = vld [vmem:[%s2 + $0x60] sm:$0xf]
      %v1780 = vld [vmem:[%s2 + $0x64] sm:$0xf]
      %v1781 = vld [vmem:[%s2 + $0x68] sm:$0xf]
      %v1782 = vld [vmem:[%s2 + $0x6c] sm:$0xf]
      %v1783 = vld [vmem:[%s2 + $0x70] sm:$0xf]
      %v1784 = vld [vmem:[%s2 + $0x74] sm:$0xf]
      %v1785 = vld [vmem:[%s2 + $0x78] sm:$0xf]
      %v1786 = vld [vmem:[%s2 + $0x7c] sm:$0xf]
      %v1787 = vld [vmem:[%s2 + $0x80] sm:$0xf]
      %v1788 = vld [vmem:[%s2 + $0x84] sm:$0xf]
      %v1789 = vld [vmem:[%s2 + $0x88] sm:$0xf]
      %v1790 = vld [vmem:[%s2 + $0x8c] sm:$0xf]
      %v1791 = vld [vmem:[%s2 + $0x90] sm:$0xf]
      %v1792 = vld [vmem:[%s2 + $0x94] sm:$0xf]
      %v1793 = vld [vmem:[%s2 + $0x98] sm:$0xf]
      %v1794 = vld [vmem:[%s2 + $0x9c] sm:$0xf]
      %v1795 = vld [vmem:[%s2 + $0xa0] sm:$0xf]
      %v1796 = vld [vmem:[%s2 + $0xa4] sm:$0xf]
      %v1797 = vld [vmem:[%s2 + $0xa8] sm:$0xf]
      %v1798 = vld [vmem:[%s2 + $0xac] sm:$0xf]
      %v1799 = vld [vmem:[%s2 + $0xb0] sm:$0xf]
      %v1800 = vld [vmem:[%s2 + $0xb4] sm:$0xf]
      %v1801 = vld [vmem:[%s2 + $0xb8] sm:$0xf]
      %v1802 = vld [vmem:[%s2 + $0xbc] sm:$0xf]
      %s1803 = scalar_lea.vmem [#allocation2], 12
      %v1804 = vld [vmem:[%s1803] sm:$0xf]
      %v1805 = vld [vmem:[%s1803 + $0x4] sm:$0xf]
      %v1806 = vld [vmem:[%s1803 + $0x8] sm:$0xf]
      %v1807 = vld [vmem:[%s1803 + $0xc] sm:$0xf]
      %v1808 = vld [vmem:[%s1803 + $0x10] sm:$0xf]
      %v1809 = vld [vmem:[%s1803 + $0x14] sm:$0xf]
      %v1810 = vld [vmem:[%s1803 + $0x18] sm:$0xf]
      %v1811 = vld [vmem:[%s1803 + $0x1c] sm:$0xf]
      %v1812 = vld [vmem:[%s1803 + $0x20] sm:$0xf]
      %v1813 = vld [vmem:[%s1803 + $0x24] sm:$0xf]
      %v1814 = vld [vmem:[%s1803 + $0x28] sm:$0xf]
      %v1815 = vld [vmem:[%s1803 + $0x2c] sm:$0xf]
      %v1816 = vld [vmem:[%s1803 + $0x30] sm:$0xf]
      %v1817 = vld [vmem:[%s1803 + $0x34] sm:$0xf]
      %v1818 = vld [vmem:[%s1803 + $0x38] sm:$0xf]
      %v1819 = vld [vmem:[%s1803 + $0x3c] sm:$0xf]
      %v1820 = vld [vmem:[%s1803 + $0x40] sm:$0xf]
      %v1821 = vld [vmem:[%s1803 + $0x44] sm:$0xf]
      %v1822 = vld [vmem:[%s1803 + $0x48] sm:$0xf]
      %v1823 = vld [vmem:[%s1803 + $0x4c] sm:$0xf]
      %v1824 = vld [vmem:[%s1803 + $0x50] sm:$0xf]
      %v1825 = vld [vmem:[%s1803 + $0x54] sm:$0xf]
      %v1826 = vld [vmem:[%s1803 + $0x58] sm:$0xf]
      %v1827 = vld [vmem:[%s1803 + $0x5c] sm:$0xf]
      %v1828 = vld [vmem:[%s1803 + $0x60] sm:$0xf]
      %v1829 = vld [vmem:[%s1803 + $0x64] sm:$0xf]
      %v1830 = vld [vmem:[%s1803 + $0x68] sm:$0xf]
      %v1831 = vld [vmem:[%s1803 + $0x6c] sm:$0xf]
      %v1832 = vld [vmem:[%s1803 + $0x70] sm:$0xf]
      %v1833 = vld [vmem:[%s1803 + $0x74] sm:$0xf]
      %v1834 = vld [vmem:[%s1803 + $0x78] sm:$0xf]
      %v1835 = vld [vmem:[%s1803 + $0x7c] sm:$0xf]
      %v1836 = vld [vmem:[%s1803 + $0x80] sm:$0xf]
      %v1837 = vld [vmem:[%s1803 + $0x84] sm:$0xf]
      %v1838 = vld [vmem:[%s1803 + $0x88] sm:$0xf]
      %v1839 = vld [vmem:[%s1803 + $0x8c] sm:$0xf]
      %v1840 = vld [vmem:[%s1803 + $0x90] sm:$0xf]
      %v1841 = vld [vmem:[%s1803 + $0x94] sm:$0xf]
      %v1842 = vld [vmem:[%s1803 + $0x98] sm:$0xf]
      %v1843 = vld [vmem:[%s1803 + $0x9c] sm:$0xf]
      %v1844 = vld [vmem:[%s1803 + $0xa0] sm:$0xf]
      %v1845 = vld [vmem:[%s1803 + $0xa4] sm:$0xf]
      %v1846 = vld [vmem:[%s1803 + $0xa8] sm:$0xf]
      %v1847 = vld [vmem:[%s1803 + $0xac] sm:$0xf]
      %v1848 = vld [vmem:[%s1803 + $0xb0] sm:$0xf]
      %v1849 = vld [vmem:[%s1803 + $0xb4] sm:$0xf]
      %v1850 = vld [vmem:[%s1803 + $0xb8] sm:$0xf]
      %v1851 = vld [vmem:[%s1803 + $0xbc] sm:$0xf]
      %v1884 = vunpack.c.l.b16 %v1804
      %v1885 = vunpack.c.l.b16 %v1805
      %v1886 = vunpack.c.l.b16 %v1807
      %v1887 = vunpack.c.l.b16 %v1808
      %v1888 = vunpack.c.l.b16 %v1810
      %v1889 = vunpack.c.l.b16 %v1811
      %v1890 = vunpack.c.l.b16 %v1813
      %v1891 = vunpack.c.l.b16 %v1814
      %v1892 = vunpack.c.l.b16 %v1816
      %v1893 = vunpack.c.l.b16 %v1817
      %v1894 = vunpack.c.l.b16 %v1819
      %v1895 = vunpack.c.l.b16 %v1820
      %v1896 = vunpack.c.l.b16 %v1822
      %v1897 = vunpack.c.l.b16 %v1823
      %v1898 = vunpack.c.l.b16 %v1825
      %v1899 = vunpack.c.l.b16 %v1826
      %v1900 = vunpack.c.l.b16 %v1828
      %v1901 = vunpack.c.l.b16 %v1829
      %v1902 = vunpack.c.l.b16 %v1831
      %v1903 = vunpack.c.l.b16 %v1832
      %v1904 = vunpack.c.l.b16 %v1834
      %v1905 = vunpack.c.l.b16 %v1835
      %v1906 = vunpack.c.l.b16 %v1837
      %v1907 = vunpack.c.l.b16 %v1838
      %v1908 = vunpack.c.l.b16 %v1840
      %v1909 = vunpack.c.l.b16 %v1841
      %v1910 = vunpack.c.l.b16 %v1843
      %v1911 = vunpack.c.l.b16 %v1844
      %v1912 = vunpack.c.l.b16 %v1846
      %v1913 = vunpack.c.l.b16 %v1847
      %v1914 = vunpack.c.l.b16 %v1849
      %v1915 = vunpack.c.l.b16 %v1850
      %v1916 = vpack.c.b16 %v1885, %v1884
      %v1917 = vpack.c.b16 %v1887, %v1886
      %v1918 = vpack.c.b16 %v1889, %v1888
      %v1919 = vpack.c.b16 %v1891, %v1890
      %v1920 = vpack.c.b16 %v1893, %v1892
      %v1921 = vpack.c.b16 %v1895, %v1894
      %v1922 = vpack.c.b16 %v1897, %v1896
      %v1923 = vpack.c.b16 %v1899, %v1898
      %v1924 = vpack.c.b16 %v1901, %v1900
      %v1925 = vpack.c.b16 %v1903, %v1902
      %v1926 = vpack.c.b16 %v1905, %v1904
      %v1927 = vpack.c.b16 %v1907, %v1906
      %v1928 = vpack.c.b16 %v1909, %v1908
      %v1929 = vpack.c.b16 %v1911, %v1910
      %v1930 = vpack.c.b16 %v1913, %v1912
      %v1931 = vpack.c.b16 %v1915, %v1914
      %v1964 = vunpack.c.l.b16 %v1806
      %v1965 = vunpack.c.l.b16 %v1809
      %v1966 = vunpack.c.l.b16 %v1812
      %v1967 = vunpack.c.l.b16 %v1815
      %v1968 = vunpack.c.l.b16 %v1818
      %v1969 = vunpack.c.l.b16 %v1821
      %v1970 = vunpack.c.l.b16 %v1824
      %v1971 = vunpack.c.l.b16 %v1827
      %v1972 = vunpack.c.l.b16 %v1830
      %v1973 = vunpack.c.l.b16 %v1833
      %v1974 = vunpack.c.l.b16 %v1836
      %v1975 = vunpack.c.l.b16 %v1839
      %v1976 = vunpack.c.l.b16 %v1842
      %v1977 = vunpack.c.l.b16 %v1845
      %v1978 = vunpack.c.l.b16 %v1848
      %v1979 = vunpack.c.l.b16 %v1851
      %v1980 = vpack.c.b16 %v1964, %v1964
      %v1981 = vpack.c.b16 %v1965, %v1965
      %v1982 = vpack.c.b16 %v1966, %v1966
      %v1983 = vpack.c.b16 %v1967, %v1967
      %v1984 = vpack.c.b16 %v1968, %v1968
      %v1985 = vpack.c.b16 %v1969, %v1969
      %v1986 = vpack.c.b16 %v1970, %v1970
      %v1987 = vpack.c.b16 %v1971, %v1971
      %v1988 = vpack.c.b16 %v1972, %v1972
      %v1989 = vpack.c.b16 %v1973, %v1973
      %v1990 = vpack.c.b16 %v1974, %v1974
      %v1991 = vpack.c.b16 %v1975, %v1975
      %v1992 = vpack.c.b16 %v1976, %v1976
      %v1993 = vpack.c.b16 %v1977, %v1977
      %v1994 = vpack.c.b16 %v1978, %v1978
      %v1995 = vpack.c.b16 %v1979, %v1979
      %v1997 = vshrl.u32 %v1916, 16
      %v1999 = vshll.u32 %v1916, 16
      %v2001 = vrot.slane %v1999, 1
      %v2002 = vor.u32 %v1997, %v2001
      %v2004 = vshll.u32 %v1980, 16
      %v2006 = vrot.slane %v2004, 1
      %v2007 = vsel %vm1481, %v2002, %v2006
      %v2009 = vshrl.u32 %v1917, 16
      %v2011 = vshll.u32 %v1917, 16
      %v2013 = vrot.slane %v2011, 1
      %v2014 = vor.u32 %v2009, %v2013
      %v2016 = vshll.u32 %v1981, 16
      %v2018 = vrot.slane %v2016, 1
      %v2019 = vsel %vm1481, %v2014, %v2018
      %v2021 = vshrl.u32 %v1918, 16
      %v2023 = vshll.u32 %v1918, 16
      %v2025 = vrot.slane %v2023, 1
      %v2026 = vor.u32 %v2021, %v2025
      %v2028 = vshll.u32 %v1982, 16
      %v2030 = vrot.slane %v2028, 1
      %v2031 = vsel %vm1481, %v2026, %v2030
      %v2033 = vshrl.u32 %v1919, 16
      %v2035 = vshll.u32 %v1919, 16
      %v2037 = vrot.slane %v2035, 1
      %v2038 = vor.u32 %v2033, %v2037
      %v2040 = vshll.u32 %v1983, 16
      %v2042 = vrot.slane %v2040, 1
      %v2043 = vsel %vm1481, %v2038, %v2042
      %v2045 = vshrl.u32 %v1920, 16
      %v2047 = vshll.u32 %v1920, 16
      %v2049 = vrot.slane %v2047, 1
      %v2050 = vor.u32 %v2045, %v2049
      %v2052 = vshll.u32 %v1984, 16
      %v2054 = vrot.slane %v2052, 1
      %v2055 = vsel %vm1481, %v2050, %v2054
      %v2057 = vshrl.u32 %v1921, 16
      %v2059 = vshll.u32 %v1921, 16
      %v2061 = vrot.slane %v2059, 1
      %v2062 = vor.u32 %v2057, %v2061
      %v2064 = vshll.u32 %v1985, 16
      %v2066 = vrot.slane %v2064, 1
      %v2067 = vsel %vm1481, %v2062, %v2066
      %v2069 = vshrl.u32 %v1922, 16
      %v2071 = vshll.u32 %v1922, 16
      %v2073 = vrot.slane %v2071, 1
      %v2074 = vor.u32 %v2069, %v2073
      %v2076 = vshll.u32 %v1986, 16
      %v2078 = vrot.slane %v2076, 1
      %v2079 = vsel %vm1481, %v2074, %v2078
      %v2081 = vshrl.u32 %v1923, 16
      %v2083 = vshll.u32 %v1923, 16
      %v2085 = vrot.slane %v2083, 1
      %v2086 = vor.u32 %v2081, %v2085
      %v2088 = vshll.u32 %v1987, 16
      %v2090 = vrot.slane %v2088, 1
      %v2091 = vsel %vm1481, %v2086, %v2090
      %v2093 = vshrl.u32 %v1924, 16
      %v2095 = vshll.u32 %v1924, 16
      %v2097 = vrot.slane %v2095, 1
      %v2098 = vor.u32 %v2093, %v2097
      %v2100 = vshll.u32 %v1988, 16
      %v2102 = vrot.slane %v2100, 1
      %v2103 = vsel %vm1481, %v2098, %v2102
      %v2105 = vshrl.u32 %v1925, 16
      %v2107 = vshll.u32 %v1925, 16
      %v2109 = vrot.slane %v2107, 1
      %v2110 = vor.u32 %v2105, %v2109
      %v2112 = vshll.u32 %v1989, 16
      %v2114 = vrot.slane %v2112, 1
      %v2115 = vsel %vm1481, %v2110, %v2114
      %v2117 = vshrl.u32 %v1926, 16
      %v2119 = vshll.u32 %v1926, 16
      %v2121 = vrot.slane %v2119, 1
      %v2122 = vor.u32 %v2117, %v2121
      %v2124 = vshll.u32 %v1990, 16
      %v2126 = vrot.slane %v2124, 1
      %v2127 = vsel %vm1481, %v2122, %v2126
      %v2129 = vshrl.u32 %v1927, 16
      %v2131 = vshll.u32 %v1927, 16
      %v2133 = vrot.slane %v2131, 1
      %v2134 = vor.u32 %v2129, %v2133
      %v2136 = vshll.u32 %v1991, 16
      %v2138 = vrot.slane %v2136, 1
      %v2139 = vsel %vm1481, %v2134, %v2138
      %v2141 = vshrl.u32 %v1928, 16
      %v2143 = vshll.u32 %v1928, 16
      %v2145 = vrot.slane %v2143, 1
      %v2146 = vor.u32 %v2141, %v2145
      %v2148 = vshll.u32 %v1992, 16
      %v2150 = vrot.slane %v2148, 1
      %v2151 = vsel %vm1481, %v2146, %v2150
      %v2153 = vshrl.u32 %v1929, 16
      %v2155 = vshll.u32 %v1929, 16
      %v2157 = vrot.slane %v2155, 1
      %v2158 = vor.u32 %v2153, %v2157
      %v2160 = vshll.u32 %v1993, 16
      %v2162 = vrot.slane %v2160, 1
      %v2163 = vsel %vm1481, %v2158, %v2162
      %v2165 = vshrl.u32 %v1930, 16
      %v2167 = vshll.u32 %v1930, 16
      %v2169 = vrot.slane %v2167, 1
      %v2170 = vor.u32 %v2165, %v2169
      %v2172 = vshll.u32 %v1994, 16
      %v2174 = vrot.slane %v2172, 1
      %v2175 = vsel %vm1481, %v2170, %v2174
      %v2177 = vshrl.u32 %v1931, 16
      %v2179 = vshll.u32 %v1931, 16
      %v2181 = vrot.slane %v2179, 1
      %v2182 = vor.u32 %v2177, %v2181
      %v2184 = vshll.u32 %v1995, 16
      %v2186 = vrot.slane %v2184, 1
      %v2187 = vsel %vm1481, %v2182, %v2186
      %v2204 = vrot.slane %v1916, 1
      %v2205 = vrot.slane %v1980, 1
      %v2206 = vsel %vm1690, %v2204, %v2205
      %v2207 = vrot.slane %v1917, 1
      %v2208 = vrot.slane %v1981, 1
      %v2209 = vsel %vm1690, %v2207, %v2208
      %v2210 = vrot.slane %v1918, 1
      %v2211 = vrot.slane %v1982, 1
      %v2212 = vsel %vm1690, %v2210, %v2211
      %v2213 = vrot.slane %v1919, 1
      %v2214 = vrot.slane %v1983, 1
      %v2215 = vsel %vm1690, %v2213, %v2214
      %v2216 = vrot.slane %v1920, 1
      %v2217 = vrot.slane %v1984, 1
      %v2218 = vsel %vm1690, %v2216, %v2217
      %v2219 = vrot.slane %v1921, 1
      %v2220 = vrot.slane %v1985, 1
      %v2221 = vsel %vm1690, %v2219, %v2220
      %v2222 = vrot.slane %v1922, 1
      %v2223 = vrot.slane %v1986, 1
      %v2224 = vsel %vm1690, %v2222, %v2223
      %v2225 = vrot.slane %v1923, 1
      %v2226 = vrot.slane %v1987, 1
      %v2227 = vsel %vm1690, %v2225, %v2226
      %v2228 = vrot.slane %v1924, 1
      %v2229 = vrot.slane %v1988, 1
      %v2230 = vsel %vm1690, %v2228, %v2229
      %v2231 = vrot.slane %v1925, 1
      %v2232 = vrot.slane %v1989, 1
      %v2233 = vsel %vm1690, %v2231, %v2232
      %v2234 = vrot.slane %v1926, 1
      %v2235 = vrot.slane %v1990, 1
      %v2236 = vsel %vm1690, %v2234, %v2235
      %v2237 = vrot.slane %v1927, 1
      %v2238 = vrot.slane %v1991, 1
      %v2239 = vsel %vm1690, %v2237, %v2238
      %v2240 = vrot.slane %v1928, 1
      %v2241 = vrot.slane %v1992, 1
      %v2242 = vsel %vm1690, %v2240, %v2241
      %v2243 = vrot.slane %v1929, 1
      %v2244 = vrot.slane %v1993, 1
      %v2245 = vsel %vm1690, %v2243, %v2244
      %v2246 = vrot.slane %v1930, 1
      %v2247 = vrot.slane %v1994, 1
      %v2248 = vsel %vm1690, %v2246, %v2247
      %v2249 = vrot.slane %v1931, 1
      %v2250 = vrot.slane %v1995, 1
      %v2251 = vsel %vm1690, %v2249, %v2250
      %s2268 = scalar_lea.vmem %s2, 192
      %v2269 = vld [vmem:[%s2268] sm:$0xf]
      %v2270 = vld [vmem:[%s2268 + $0x4] sm:$0xf]
      %v2271 = vld [vmem:[%s2268 + $0x8] sm:$0xf]
      %v2272 = vld [vmem:[%s2268 + $0xc] sm:$0xf]
      %v2273 = vld [vmem:[%s2268 + $0x10] sm:$0xf]
      %v2274 = vld [vmem:[%s2268 + $0x14] sm:$0xf]
      %v2275 = vld [vmem:[%s2268 + $0x18] sm:$0xf]
      %v2276 = vld [vmem:[%s2268 + $0x1c] sm:$0xf]
      %v2277 = vld [vmem:[%s2268 + $0x20] sm:$0xf]
      %v2278 = vld [vmem:[%s2268 + $0x24] sm:$0xf]
      %v2279 = vld [vmem:[%s2268 + $0x28] sm:$0xf]
      %v2280 = vld [vmem:[%s2268 + $0x2c] sm:$0xf]
      %v2281 = vld [vmem:[%s2268 + $0x30] sm:$0xf]
      %v2282 = vld [vmem:[%s2268 + $0x34] sm:$0xf]
      %v2283 = vld [vmem:[%s2268 + $0x38] sm:$0xf]
      %v2284 = vld [vmem:[%s2268 + $0x3c] sm:$0xf]
      %v2285 = vld [vmem:[%s2268 + $0x40] sm:$0xf]
      %v2286 = vld [vmem:[%s2268 + $0x44] sm:$0xf]
      %v2287 = vld [vmem:[%s2268 + $0x48] sm:$0xf]
      %v2288 = vld [vmem:[%s2268 + $0x4c] sm:$0xf]
      %v2289 = vld [vmem:[%s2268 + $0x50] sm:$0xf]
      %v2290 = vld [vmem:[%s2268 + $0x54] sm:$0xf]
      %v2291 = vld [vmem:[%s2268 + $0x58] sm:$0xf]
      %v2292 = vld [vmem:[%s2268 + $0x5c] sm:$0xf]
      %v2293 = vld [vmem:[%s2268 + $0x60] sm:$0xf]
      %v2294 = vld [vmem:[%s2268 + $0x64] sm:$0xf]
      %v2295 = vld [vmem:[%s2268 + $0x68] sm:$0xf]
      %v2296 = vld [vmem:[%s2268 + $0x6c] sm:$0xf]
      %v2297 = vld [vmem:[%s2268 + $0x70] sm:$0xf]
      %v2298 = vld [vmem:[%s2268 + $0x74] sm:$0xf]
      %v2299 = vld [vmem:[%s2268 + $0x78] sm:$0xf]
      %v2300 = vld [vmem:[%s2268 + $0x7c] sm:$0xf]
      %v2301 = vld [vmem:[%s2268 + $0x80] sm:$0xf]
      %v2302 = vld [vmem:[%s2268 + $0x84] sm:$0xf]
      %v2303 = vld [vmem:[%s2268 + $0x88] sm:$0xf]
      %v2304 = vld [vmem:[%s2268 + $0x8c] sm:$0xf]
      %v2305 = vld [vmem:[%s2268 + $0x90] sm:$0xf]
      %v2306 = vld [vmem:[%s2268 + $0x94] sm:$0xf]
      %v2307 = vld [vmem:[%s2268 + $0x98] sm:$0xf]
      %v2308 = vld [vmem:[%s2268 + $0x9c] sm:$0xf]
      %v2309 = vld [vmem:[%s2268 + $0xa0] sm:$0xf]
      %v2310 = vld [vmem:[%s2268 + $0xa4] sm:$0xf]
      %v2311 = vld [vmem:[%s2268 + $0xa8] sm:$0xf]
      %v2312 = vld [vmem:[%s2268 + $0xac] sm:$0xf]
      %v2313 = vld [vmem:[%s2268 + $0xb0] sm:$0xf]
      %v2314 = vld [vmem:[%s2268 + $0xb4] sm:$0xf]
      %v2315 = vld [vmem:[%s2268 + $0xb8] sm:$0xf]
      %v2316 = vld [vmem:[%s2268 + $0xbc] sm:$0xf]
      %v2365 = vunpack.c.l.b16 %v2269
      %v2366 = vunpack.c.l.b16 %v2270
      %v2367 = vunpack.c.l.b16 %v2271
      %v2368 = vunpack.c.l.b16 %v2272
      %v2369 = vunpack.c.l.b16 %v2273
      %v2370 = vunpack.c.l.b16 %v2274
      %v2371 = vunpack.c.l.b16 %v2275
      %v2372 = vunpack.c.l.b16 %v2276
      %v2373 = vunpack.c.l.b16 %v2277
      %v2374 = vunpack.c.l.b16 %v2278
      %v2375 = vunpack.c.l.b16 %v2279
      %v2376 = vunpack.c.l.b16 %v2280
      %v2377 = vunpack.c.l.b16 %v2281
      %v2378 = vunpack.c.l.b16 %v2282
      %v2379 = vunpack.c.l.b16 %v2283
      %v2380 = vunpack.c.l.b16 %v2284
      %v2381 = vunpack.c.l.b16 %v2285
      %v2382 = vunpack.c.l.b16 %v2286
      %v2383 = vunpack.c.l.b16 %v2287
      %v2384 = vunpack.c.l.b16 %v2288
      %v2385 = vunpack.c.l.b16 %v2289
      %v2386 = vunpack.c.l.b16 %v2290
      %v2387 = vunpack.c.l.b16 %v2291
      %v2388 = vunpack.c.l.b16 %v2292
      %v2389 = vunpack.c.l.b16 %v2293
      %v2390 = vunpack.c.l.b16 %v2294
      %v2391 = vunpack.c.l.b16 %v2295
      %v2392 = vunpack.c.l.b16 %v2296
      %v2393 = vunpack.c.l.b16 %v2297
      %v2394 = vunpack.c.l.b16 %v2298
      %v2395 = vunpack.c.l.b16 %v2299
      %v2396 = vunpack.c.l.b16 %v2300
      %v2397 = vunpack.c.l.b16 %v2301
      %v2398 = vunpack.c.l.b16 %v2302
      %v2399 = vunpack.c.l.b16 %v2303
      %v2400 = vunpack.c.l.b16 %v2304
      %v2401 = vunpack.c.l.b16 %v2305
      %v2402 = vunpack.c.l.b16 %v2306
      %v2403 = vunpack.c.l.b16 %v2307
      %v2404 = vunpack.c.l.b16 %v2308
      %v2405 = vunpack.c.l.b16 %v2309
      %v2406 = vunpack.c.l.b16 %v2310
      %v2407 = vunpack.c.l.b16 %v2311
      %v2408 = vunpack.c.l.b16 %v2312
      %v2409 = vunpack.c.l.b16 %v2313
      %v2410 = vunpack.c.l.b16 %v2314
      %v2411 = vunpack.c.l.b16 %v2315
      %v2412 = vunpack.c.l.b16 %v2316
      %v2413 = vpack.c.b16 %v2366, %v2365
      %v2414 = vpack.c.b16 %v2368, %v2367
      %v2415 = vpack.c.b16 %v2370, %v2369
      %v2416 = vpack.c.b16 %v2372, %v2371
      %v2417 = vpack.c.b16 %v2374, %v2373
      %v2418 = vpack.c.b16 %v2376, %v2375
      %v2419 = vpack.c.b16 %v2378, %v2377
      %v2420 = vpack.c.b16 %v2380, %v2379
      %v2421 = vpack.c.b16 %v2382, %v2381
      %v2422 = vpack.c.b16 %v2384, %v2383
      %v2423 = vpack.c.b16 %v2386, %v2385
      %v2424 = vpack.c.b16 %v2388, %v2387
      %v2425 = vpack.c.b16 %v2390, %v2389
      %v2426 = vpack.c.b16 %v2392, %v2391
      %v2427 = vpack.c.b16 %v2394, %v2393
      %v2428 = vpack.c.b16 %v2396, %v2395
      %v2429 = vpack.c.b16 %v2398, %v2397
      %v2430 = vpack.c.b16 %v2400, %v2399
      %v2431 = vpack.c.b16 %v2402, %v2401
      %v2432 = vpack.c.b16 %v2404, %v2403
      %v2433 = vpack.c.b16 %v2406, %v2405
      %v2434 = vpack.c.b16 %v2408, %v2407
      %v2435 = vpack.c.b16 %v2410, %v2409
      %v2436 = vpack.c.b16 %v2412, %v2411
      %2461 = vmatpush.bf16.msra.mxu0 %v2420
      %2462 = vmatpush.bf16.msra.mxu0 %v2419
      %2463 = vmatpush.bf16.msra.mxu0 %v2418
      %2464 = vmatpush.bf16.msra.mxu0 %v2417
      %2465 = vmatpush.bf16.msra.mxu0 %v2416
      %2466 = vmatpush.bf16.msra.mxu0 %v2415
      %2467 = vmatpush.bf16.msra.mxu0 %v2414
      %2468 = vmatpush.bf16.msra.mxu0 %v2413
      %2469 = vmatmul.bf16.gmra.mxu0 %v1916
      %v2470 = vpop.f32.mrf.mxu0
      %v2471 = vadd.f32 0.0, %v2470
      %v2472 = vpop.f32.mrf.mxu0
      %v2473 = vadd.f32 0.0, %v2472
      %2474 = vmatmul.bf16.gmra.mxu0 %v1917
      %v2475 = vpop.f32.mrf.mxu0
      %v2476 = vadd.f32 0.0, %v2475
      %v2477 = vpop.f32.mrf.mxu0
      %v2478 = vadd.f32 0.0, %v2477
      %2479 = vmatmul.bf16.gmra.mxu0 %v1918
      %v2480 = vpop.f32.mrf.mxu0
      %v2481 = vadd.f32 0.0, %v2480
      %v2482 = vpop.f32.mrf.mxu0
      %v2483 = vadd.f32 0.0, %v2482
      %2484 = vmatmul.bf16.gmra.mxu0 %v1919
      %v2485 = vpop.f32.mrf.mxu0
      %v2486 = vadd.f32 0.0, %v2485
      %v2487 = vpop.f32.mrf.mxu0
      %v2488 = vadd.f32 0.0, %v2487
      %2489 = vmatmul.bf16.gmra.mxu0 %v1920
      %v2490 = vpop.f32.mrf.mxu0
      %v2491 = vadd.f32 0.0, %v2490
      %v2492 = vpop.f32.mrf.mxu0
      %v2493 = vadd.f32 0.0, %v2492
      %2494 = vmatmul.bf16.gmra.mxu0 %v1921
      %v2495 = vpop.f32.mrf.mxu0
      %v2496 = vadd.f32 0.0, %v2495
      %v2497 = vpop.f32.mrf.mxu0
      %v2498 = vadd.f32 0.0, %v2497
      %2499 = vmatmul.bf16.gmra.mxu0 %v1922
      %v2500 = vpop.f32.mrf.mxu0
      %v2501 = vadd.f32 0.0, %v2500
      %v2502 = vpop.f32.mrf.mxu0
      %v2503 = vadd.f32 0.0, %v2502
      %2504 = vmatmul.bf16.gmra.mxu0 %v1923
      %v2505 = vpop.f32.mrf.mxu0
      %v2506 = vadd.f32 0.0, %v2505
      %v2507 = vpop.f32.mrf.mxu0
      %v2508 = vadd.f32 0.0, %v2507
      %2509 = vmatmul.bf16.gmra.mxu0 %v1924
      %v2510 = vpop.f32.mrf.mxu0
      %v2511 = vadd.f32 0.0, %v2510
      %v2512 = vpop.f32.mrf.mxu0
      %v2513 = vadd.f32 0.0, %v2512
      %2514 = vmatmul.bf16.gmra.mxu0 %v1925
      %v2515 = vpop.f32.mrf.mxu0
      %v2516 = vadd.f32 0.0, %v2515
      %v2517 = vpop.f32.mrf.mxu0
      %v2518 = vadd.f32 0.0, %v2517
      %2519 = vmatmul.bf16.gmra.mxu0 %v1926
      %v2520 = vpop.f32.mrf.mxu0
      %v2521 = vadd.f32 0.0, %v2520
      %v2522 = vpop.f32.mrf.mxu0
      %v2523 = vadd.f32 0.0, %v2522
      %2524 = vmatmul.bf16.gmra.mxu0 %v1927
      %v2525 = vpop.f32.mrf.mxu0
      %v2526 = vadd.f32 0.0, %v2525
      %v2527 = vpop.f32.mrf.mxu0
      %v2528 = vadd.f32 0.0, %v2527
      %2529 = vmatmul.bf16.gmra.mxu0 %v1928
      %v2530 = vpop.f32.mrf.mxu0
      %v2531 = vadd.f32 0.0, %v2530
      %v2532 = vpop.f32.mrf.mxu0
      %v2533 = vadd.f32 0.0, %v2532
      %2534 = vmatmul.bf16.gmra.mxu0 %v1929
      %v2535 = vpop.f32.mrf.mxu0
      %v2536 = vadd.f32 0.0, %v2535
      %v2537 = vpop.f32.mrf.mxu0
      %v2538 = vadd.f32 0.0, %v2537
      %2539 = vmatmul.bf16.gmra.mxu0 %v1930
      %v2540 = vpop.f32.mrf.mxu0
      %v2541 = vadd.f32 0.0, %v2540
      %v2542 = vpop.f32.mrf.mxu0
      %v2543 = vadd.f32 0.0, %v2542
      %2544 = vmatmul.bf16.gmra.mxu0 %v1931
      %v2545 = vpop.f32.mrf.mxu0
      %v2546 = vadd.f32 0.0, %v2545
      %v2547 = vpop.f32.mrf.mxu0
      %v2548 = vadd.f32 0.0, %v2547
      %2549 = vdwg.mxu0
      %2550 = vmatpush.bf16.msra.mxu0 %v2428
      %2551 = vmatpush.bf16.msra.mxu0 %v2427
      %2552 = vmatpush.bf16.msra.mxu0 %v2426
      %2553 = vmatpush.bf16.msra.mxu0 %v2425
      %2554 = vmatpush.bf16.msra.mxu0 %v2424
      %2555 = vmatpush.bf16.msra.mxu0 %v2423
      %2556 = vmatpush.bf16.msra.mxu0 %v2422
      %2557 = vmatpush.bf16.msra.mxu0 %v2421
      %2558 = vmatmul.bf16.gmra.mxu0 %v2007
      %v2559 = vpop.f32.mrf.mxu0
      %v2560 = vadd.f32 %v2471, %v2559
      %v2561 = vpop.f32.mrf.mxu0
      %v2562 = vadd.f32 %v2473, %v2561
      %2563 = vmatmul.bf16.gmra.mxu0 %v2019
      %v2564 = vpop.f32.mrf.mxu0
      %v2565 = vadd.f32 %v2476, %v2564
      %v2566 = vpop.f32.mrf.mxu0
      %v2567 = vadd.f32 %v2478, %v2566
      %2568 = vmatmul.bf16.gmra.mxu0 %v2031
      %v2569 = vpop.f32.mrf.mxu0
      %v2570 = vadd.f32 %v2481, %v2569
      %v2571 = vpop.f32.mrf.mxu0
      %v2572 = vadd.f32 %v2483, %v2571
      %2573 = vmatmul.bf16.gmra.mxu0 %v2043
      %v2574 = vpop.f32.mrf.mxu0
      %v2575 = vadd.f32 %v2486, %v2574
      %v2576 = vpop.f32.mrf.mxu0
      %v2577 = vadd.f32 %v2488, %v2576
      %2578 = vmatmul.bf16.gmra.mxu0 %v2055
      %v2579 = vpop.f32.mrf.mxu0
      %v2580 = vadd.f32 %v2491, %v2579
      %v2581 = vpop.f32.mrf.mxu0
      %v2582 = vadd.f32 %v2493, %v2581
      %2583 = vmatmul.bf16.gmra.mxu0 %v2067
      %v2584 = vpop.f32.mrf.mxu0
      %v2585 = vadd.f32 %v2496, %v2584
      %v2586 = vpop.f32.mrf.mxu0
      %v2587 = vadd.f32 %v2498, %v2586
      %2588 = vmatmul.bf16.gmra.mxu0 %v2079
      %v2589 = vpop.f32.mrf.mxu0
      %v2590 = vadd.f32 %v2501, %v2589
      %v2591 = vpop.f32.mrf.mxu0
      %v2592 = vadd.f32 %v2503, %v2591
      %2593 = vmatmul.bf16.gmra.mxu0 %v2091
      %v2594 = vpop.f32.mrf.mxu0
      %v2595 = vadd.f32 %v2506, %v2594
      %v2596 = vpop.f32.mrf.mxu0
      %v2597 = vadd.f32 %v2508, %v2596
      %2598 = vmatmul.bf16.gmra.mxu0 %v2103
      %v2599 = vpop.f32.mrf.mxu0
      %v2600 = vadd.f32 %v2511, %v2599
      %v2601 = vpop.f32.mrf.mxu0
      %v2602 = vadd.f32 %v2513, %v2601
      %2603 = vmatmul.bf16.gmra.mxu0 %v2115
      %v2604 = vpop.f32.mrf.mxu0
      %v2605 = vadd.f32 %v2516, %v2604
      %v2606 = vpop.f32.mrf.mxu0
      %v2607 = vadd.f32 %v2518, %v2606
      %2608 = vmatmul.bf16.gmra.mxu0 %v2127
      %v2609 = vpop.f32.mrf.mxu0
      %v2610 = vadd.f32 %v2521, %v2609
      %v2611 = vpop.f32.mrf.mxu0
      %v2612 = vadd.f32 %v2523, %v2611
      %2613 = vmatmul.bf16.gmra.mxu0 %v2139
      %v2614 = vpop.f32.mrf.mxu0
      %v2615 = vadd.f32 %v2526, %v2614
      %v2616 = vpop.f32.mrf.mxu0
      %v2617 = vadd.f32 %v2528, %v2616
      %2618 = vmatmul.bf16.gmra.mxu0 %v2151
      %v2619 = vpop.f32.mrf.mxu0
      %v2620 = vadd.f32 %v2531, %v2619
      %v2621 = vpop.f32.mrf.mxu0
      %v2622 = vadd.f32 %v2533, %v2621
      %2623 = vmatmul.bf16.gmra.mxu0 %v2163
      %v2624 = vpop.f32.mrf.mxu0
      %v2625 = vadd.f32 %v2536, %v2624
      %v2626 = vpop.f32.mrf.mxu0
      %v2627 = vadd.f32 %v2538, %v2626
      %2628 = vmatmul.bf16.gmra.mxu0 %v2175
      %v2629 = vpop.f32.mrf.mxu0
      %v2630 = vadd.f32 %v2541, %v2629
      %v2631 = vpop.f32.mrf.mxu0
      %v2632 = vadd.f32 %v2543, %v2631
      %2633 = vmatmul.bf16.gmra.mxu0 %v2187
      %v2634 = vpop.f32.mrf.mxu0
      %v2635 = vadd.f32 %v2546, %v2634
      %v2636 = vpop.f32.mrf.mxu0
      %v2637 = vadd.f32 %v2548, %v2636
      %2638 = vdwg.mxu0
      %2639 = vmatpush.bf16.msra.mxu0 %v2436
      %2640 = vmatpush.bf16.msra.mxu0 %v2435
      %2641 = vmatpush.bf16.msra.mxu0 %v2434
      %2642 = vmatpush.bf16.msra.mxu0 %v2433
      %2643 = vmatpush.bf16.msra.mxu0 %v2432
      %2644 = vmatpush.bf16.msra.mxu0 %v2431
      %2645 = vmatpush.bf16.msra.mxu0 %v2430
      %2646 = vmatpush.bf16.msra.mxu0 %v2429
      %2647 = vmatmul.bf16.gmra.mxu0 %v2206
      %v2648 = vpop.f32.mrf.mxu0
      %v2649 = vadd.f32 %v2560, %v2648
      %v2650 = vpop.f32.mrf.mxu0
      %v2651 = vadd.f32 %v2562, %v2650
      %2652 = vmatmul.bf16.gmra.mxu0 %v2209
      %v2653 = vpop.f32.mrf.mxu0
      %v2654 = vadd.f32 %v2565, %v2653
      %v2655 = vpop.f32.mrf.mxu0
      %v2656 = vadd.f32 %v2567, %v2655
      %2657 = vmatmul.bf16.gmra.mxu0 %v2212
      %v2658 = vpop.f32.mrf.mxu0
      %v2659 = vadd.f32 %v2570, %v2658
      %v2660 = vpop.f32.mrf.mxu0
      %v2661 = vadd.f32 %v2572, %v2660
      %2662 = vmatmul.bf16.gmra.mxu0 %v2215
      %v2663 = vpop.f32.mrf.mxu0
      %v2664 = vadd.f32 %v2575, %v2663
      %v2665 = vpop.f32.mrf.mxu0
      %v2666 = vadd.f32 %v2577, %v2665
      %2667 = vmatmul.bf16.gmra.mxu0 %v2218
      %v2668 = vpop.f32.mrf.mxu0
      %v2669 = vadd.f32 %v2580, %v2668
      %v2670 = vpop.f32.mrf.mxu0
      %v2671 = vadd.f32 %v2582, %v2670
      %2672 = vmatmul.bf16.gmra.mxu0 %v2221
      %v2673 = vpop.f32.mrf.mxu0
      %v2674 = vadd.f32 %v2585, %v2673
      %v2675 = vpop.f32.mrf.mxu0
      %v2676 = vadd.f32 %v2587, %v2675
      %2677 = vmatmul.bf16.gmra.mxu0 %v2224
      %v2678 = vpop.f32.mrf.mxu0
      %v2679 = vadd.f32 %v2590, %v2678
      %v2680 = vpop.f32.mrf.mxu0
      %v2681 = vadd.f32 %v2592, %v2680
      %2682 = vmatmul.bf16.gmra.mxu0 %v2227
      %v2683 = vpop.f32.mrf.mxu0
      %v2684 = vadd.f32 %v2595, %v2683
      %v2685 = vpop.f32.mrf.mxu0
      %v2686 = vadd.f32 %v2597, %v2685
      %2687 = vmatmul.bf16.gmra.mxu0 %v2230
      %v2688 = vpop.f32.mrf.mxu0
      %v2689 = vadd.f32 %v2600, %v2688
      %v2690 = vpop.f32.mrf.mxu0
      %v2691 = vadd.f32 %v2602, %v2690
      %2692 = vmatmul.bf16.gmra.mxu0 %v2233
      %v2693 = vpop.f32.mrf.mxu0
      %v2694 = vadd.f32 %v2605, %v2693
      %v2695 = vpop.f32.mrf.mxu0
      %v2696 = vadd.f32 %v2607, %v2695
      %2697 = vmatmul.bf16.gmra.mxu0 %v2236
      %v2698 = vpop.f32.mrf.mxu0
      %v2699 = vadd.f32 %v2610, %v2698
      %v2700 = vpop.f32.mrf.mxu0
      %v2701 = vadd.f32 %v2612, %v2700
      %2702 = vmatmul.bf16.gmra.mxu0 %v2239
      %v2703 = vpop.f32.mrf.mxu0
      %v2704 = vadd.f32 %v2615, %v2703
      %v2705 = vpop.f32.mrf.mxu0
      %v2706 = vadd.f32 %v2617, %v2705
      %2707 = vmatmul.bf16.gmra.mxu0 %v2242
      %v2708 = vpop.f32.mrf.mxu0
      %v2709 = vadd.f32 %v2620, %v2708
      %v2710 = vpop.f32.mrf.mxu0
      %v2711 = vadd.f32 %v2622, %v2710
      %2712 = vmatmul.bf16.gmra.mxu0 %v2245
      %v2713 = vpop.f32.mrf.mxu0
      %v2714 = vadd.f32 %v2625, %v2713
      %v2715 = vpop.f32.mrf.mxu0
      %v2716 = vadd.f32 %v2627, %v2715
      %2717 = vmatmul.bf16.gmra.mxu0 %v2248
      %v2718 = vpop.f32.mrf.mxu0
      %v2719 = vadd.f32 %v2630, %v2718
      %v2720 = vpop.f32.mrf.mxu0
      %v2721 = vadd.f32 %v2632, %v2720
      %2722 = vmatmul.bf16.gmra.mxu0 %v2251
      %v2723 = vpop.f32.mrf.mxu0
      %v2724 = vadd.f32 %v2635, %v2723
      %v2725 = vpop.f32.mrf.mxu0
      %v2726 = vadd.f32 %v2637, %v2725
      %2727 = vdwg.mxu0
      %v2776 = vunpack.c.l.b16 %v1755
      %v2777 = vunpack.c.l.b16 %v1756
      %v2778 = vunpack.c.l.b16 %v1757
      %v2779 = vunpack.c.l.b16 %v1758
      %v2780 = vunpack.c.l.b16 %v1759
      %v2781 = vunpack.c.l.b16 %v1760
      %v2782 = vunpack.c.l.b16 %v1761
      %v2783 = vunpack.c.l.b16 %v1762
      %v2784 = vunpack.c.l.b16 %v1763
      %v2785 = vunpack.c.l.b16 %v1764
      %v2786 = vunpack.c.l.b16 %v1765
      %v2787 = vunpack.c.l.b16 %v1766
      %v2788 = vunpack.c.l.b16 %v1767
      %v2789 = vunpack.c.l.b16 %v1768
      %v2790 = vunpack.c.l.b16 %v1769
      %v2791 = vunpack.c.l.b16 %v1770
      %v2792 = vunpack.c.l.b16 %v1771
      %v2793 = vunpack.c.l.b16 %v1772
      %v2794 = vunpack.c.l.b16 %v1773
      %v2795 = vunpack.c.l.b16 %v1774
      %v2796 = vunpack.c.l.b16 %v1775
      %v2797 = vunpack.c.l.b16 %v1776
      %v2798 = vunpack.c.l.b16 %v1777
      %v2799 = vunpack.c.l.b16 %v1778
      %v2800 = vunpack.c.l.b16 %v1779
      %v2801 = vunpack.c.l.b16 %v1780
      %v2802 = vunpack.c.l.b16 %v1781
      %v2803 = vunpack.c.l.b16 %v1782
      %v2804 = vunpack.c.l.b16 %v1783
      %v2805 = vunpack.c.l.b16 %v1784
      %v2806 = vunpack.c.l.b16 %v1785
      %v2807 = vunpack.c.l.b16 %v1786
      %v2808 = vunpack.c.l.b16 %v1787
      %v2809 = vunpack.c.l.b16 %v1788
      %v2810 = vunpack.c.l.b16 %v1789
      %v2811 = vunpack.c.l.b16 %v1790
      %v2812 = vunpack.c.l.b16 %v1791
      %v2813 = vunpack.c.l.b16 %v1792
      %v2814 = vunpack.c.l.b16 %v1793
      %v2815 = vunpack.c.l.b16 %v1794
      %v2816 = vunpack.c.l.b16 %v1795
      %v2817 = vunpack.c.l.b16 %v1796
      %v2818 = vunpack.c.l.b16 %v1797
      %v2819 = vunpack.c.l.b16 %v1798
      %v2820 = vunpack.c.l.b16 %v1799
      %v2821 = vunpack.c.l.b16 %v1800
      %v2822 = vunpack.c.l.b16 %v1801
      %v2823 = vunpack.c.l.b16 %v1802
      %v2824 = vpack.c.b16 %v2777, %v2776
      %v2825 = vpack.c.b16 %v2779, %v2778
      %v2826 = vpack.c.b16 %v2781, %v2780
      %v2827 = vpack.c.b16 %v2783, %v2782
      %v2828 = vpack.c.b16 %v2785, %v2784
      %v2829 = vpack.c.b16 %v2787, %v2786
      %v2830 = vpack.c.b16 %v2789, %v2788
      %v2831 = vpack.c.b16 %v2791, %v2790
      %v2832 = vpack.c.b16 %v2793, %v2792
      %v2833 = vpack.c.b16 %v2795, %v2794
      %v2834 = vpack.c.b16 %v2797, %v2796
      %v2835 = vpack.c.b16 %v2799, %v2798
      %v2836 = vpack.c.b16 %v2801, %v2800
      %v2837 = vpack.c.b16 %v2803, %v2802
      %v2838 = vpack.c.b16 %v2805, %v2804
      %v2839 = vpack.c.b16 %v2807, %v2806
      %v2840 = vpack.c.b16 %v2809, %v2808
      %v2841 = vpack.c.b16 %v2811, %v2810
      %v2842 = vpack.c.b16 %v2813, %v2812
      %v2843 = vpack.c.b16 %v2815, %v2814
      %v2844 = vpack.c.b16 %v2817, %v2816
      %v2845 = vpack.c.b16 %v2819, %v2818
      %v2846 = vpack.c.b16 %v2821, %v2820
      %v2847 = vpack.c.b16 %v2823, %v2822
      %2872 = vmatpush.bf16.msra.mxu0 %v2831
      %2873 = vmatpush.bf16.msra.mxu0 %v2830
      %2874 = vmatpush.bf16.msra.mxu0 %v2829
      %2875 = vmatpush.bf16.msra.mxu0 %v2828
      %2876 = vmatpush.bf16.msra.mxu0 %v2827
      %2877 = vmatpush.bf16.msra.mxu0 %v2826
      %2878 = vmatpush.bf16.msra.mxu0 %v2825
      %2879 = vmatpush.bf16.msra.mxu0 %v2824
      %2880 = vmatmul.bf16.gmra.mxu0 %v1401
      %v2881 = vpop.f32.mrf.mxu0
      %v2882 = vadd.f32 %v2649, %v2881
      %v2883 = vpop.f32.mrf.mxu0
      %v2884 = vadd.f32 %v2651, %v2883
      %2885 = vmatmul.bf16.gmra.mxu0 %v1402
      %v2886 = vpop.f32.mrf.mxu0
      %v2887 = vadd.f32 %v2654, %v2886
      %v2888 = vpop.f32.mrf.mxu0
      %v2889 = vadd.f32 %v2656, %v2888
      %2890 = vmatmul.bf16.gmra.mxu0 %v1403
      %v2891 = vpop.f32.mrf.mxu0
      %v2892 = vadd.f32 %v2659, %v2891
      %v2893 = vpop.f32.mrf.mxu0
      %v2894 = vadd.f32 %v2661, %v2893
      %2895 = vmatmul.bf16.gmra.mxu0 %v1404
      %v2896 = vpop.f32.mrf.mxu0
      %v2897 = vadd.f32 %v2664, %v2896
      %v2898 = vpop.f32.mrf.mxu0
      %v2899 = vadd.f32 %v2666, %v2898
      %2900 = vmatmul.bf16.gmra.mxu0 %v1405
      %v2901 = vpop.f32.mrf.mxu0
      %v2902 = vadd.f32 %v2669, %v2901
      %v2903 = vpop.f32.mrf.mxu0
      %v2904 = vadd.f32 %v2671, %v2903
      %2905 = vmatmul.bf16.gmra.mxu0 %v1406
      %v2906 = vpop.f32.mrf.mxu0
      %v2907 = vadd.f32 %v2674, %v2906
      %v2908 = vpop.f32.mrf.mxu0
      %v2909 = vadd.f32 %v2676, %v2908
      %2910 = vmatmul.bf16.gmra.mxu0 %v1407
      %v2911 = vpop.f32.mrf.mxu0
      %v2912 = vadd.f32 %v2679, %v2911
      %v2913 = vpop.f32.mrf.mxu0
      %v2914 = vadd.f32 %v2681, %v2913
      %2915 = vmatmul.bf16.gmra.mxu0 %v1408
      %v2916 = vpop.f32.mrf.mxu0
      %v2917 = vadd.f32 %v2684, %v2916
      %v2918 = vpop.f32.mrf.mxu0
      %v2919 = vadd.f32 %v2686, %v2918
      %2920 = vmatmul.bf16.gmra.mxu0 %v1409
      %v2921 = vpop.f32.mrf.mxu0
      %v2922 = vadd.f32 %v2689, %v2921
      %v2923 = vpop.f32.mrf.mxu0
      %v2924 = vadd.f32 %v2691, %v2923
      %2925 = vmatmul.bf16.gmra.mxu0 %v1410
      %v2926 = vpop.f32.mrf.mxu0
      %v2927 = vadd.f32 %v2694, %v2926
      %v2928 = vpop.f32.mrf.mxu0
      %v2929 = vadd.f32 %v2696, %v2928
      %2930 = vmatmul.bf16.gmra.mxu0 %v1411
      %v2931 = vpop.f32.mrf.mxu0
      %v2932 = vadd.f32 %v2699, %v2931
      %v2933 = vpop.f32.mrf.mxu0
      %v2934 = vadd.f32 %v2701, %v2933
      %2935 = vmatmul.bf16.gmra.mxu0 %v1412
      %v2936 = vpop.f32.mrf.mxu0
      %v2937 = vadd.f32 %v2704, %v2936
      %v2938 = vpop.f32.mrf.mxu0
      %v2939 = vadd.f32 %v2706, %v2938
      %2940 = vmatmul.bf16.gmra.mxu0 %v1413
      %v2941 = vpop.f32.mrf.mxu0
      %v2942 = vadd.f32 %v2709, %v2941
      %v2943 = vpop.f32.mrf.mxu0
      %v2944 = vadd.f32 %v2711, %v2943
      %2945 = vmatmul.bf16.gmra.mxu0 %v1414
      %v2946 = vpop.f32.mrf.mxu0
      %v2947 = vadd.f32 %v2714, %v2946
      %v2948 = vpop.f32.mrf.mxu0
      %v2949 = vadd.f32 %v2716, %v2948
      %2950 = vmatmul.bf16.gmra.mxu0 %v1415
      %v2951 = vpop.f32.mrf.mxu0
      %v2952 = vadd.f32 %v2719, %v2951
      %v2953 = vpop.f32.mrf.mxu0
      %v2954 = vadd.f32 %v2721, %v2953
      %2955 = vmatmul.bf16.gmra.mxu0 %v1416
      %v2956 = vpop.f32.mrf.mxu0
      %v2957 = vadd.f32 %v2724, %v2956
      %v2958 = vpop.f32.mrf.mxu0
      %v2959 = vadd.f32 %v2726, %v2958
      %2960 = vdwg.mxu0
      %2961 = vmatpush.bf16.msra.mxu0 %v2839
      %2962 = vmatpush.bf16.msra.mxu0 %v2838
      %2963 = vmatpush.bf16.msra.mxu0 %v2837
      %2964 = vmatpush.bf16.msra.mxu0 %v2836
      %2965 = vmatpush.bf16.msra.mxu0 %v2835
      %2966 = vmatpush.bf16.msra.mxu0 %v2834
      %2967 = vmatpush.bf16.msra.mxu0 %v2833
      %2968 = vmatpush.bf16.msra.mxu0 %v2832
      %2969 = vmatmul.bf16.gmra.mxu0 %v1493
      %v2970 = vpop.f32.mrf.mxu0
      %v2971 = vadd.f32 %v2882, %v2970
      %v2972 = vpop.f32.mrf.mxu0
      %v2973 = vadd.f32 %v2884, %v2972
      %2974 = vmatmul.bf16.gmra.mxu0 %v1505
      %v2975 = vpop.f32.mrf.mxu0
      %v2976 = vadd.f32 %v2887, %v2975
      %v2977 = vpop.f32.mrf.mxu0
      %v2978 = vadd.f32 %v2889, %v2977
      %2979 = vmatmul.bf16.gmra.mxu0 %v1517
      %v2980 = vpop.f32.mrf.mxu0
      %v2981 = vadd.f32 %v2892, %v2980
      %v2982 = vpop.f32.mrf.mxu0
      %v2983 = vadd.f32 %v2894, %v2982
      %2984 = vmatmul.bf16.gmra.mxu0 %v1529
      %v2985 = vpop.f32.mrf.mxu0
      %v2986 = vadd.f32 %v2897, %v2985
      %v2987 = vpop.f32.mrf.mxu0
      %v2988 = vadd.f32 %v2899, %v2987
      %2989 = vmatmul.bf16.gmra.mxu0 %v1541
      %v2990 = vpop.f32.mrf.mxu0
      %v2991 = vadd.f32 %v2902, %v2990
      %v2992 = vpop.f32.mrf.mxu0
      %v2993 = vadd.f32 %v2904, %v2992
      %2994 = vmatmul.bf16.gmra.mxu0 %v1553
      %v2995 = vpop.f32.mrf.mxu0
      %v2996 = vadd.f32 %v2907, %v2995
      %v2997 = vpop.f32.mrf.mxu0
      %v2998 = vadd.f32 %v2909, %v2997
      %2999 = vmatmul.bf16.gmra.mxu0 %v1565
      %v3000 = vpop.f32.mrf.mxu0
      %v3001 = vadd.f32 %v2912, %v3000
      %v3002 = vpop.f32.mrf.mxu0
      %v3003 = vadd.f32 %v2914, %v3002
      %3004 = vmatmul.bf16.gmra.mxu0 %v1577
      %v3005 = vpop.f32.mrf.mxu0
      %v3006 = vadd.f32 %v2917, %v3005
      %v3007 = vpop.f32.mrf.mxu0
      %v3008 = vadd.f32 %v2919, %v3007
      %3009 = vmatmul.bf16.gmra.mxu0 %v1589
      %v3010 = vpop.f32.mrf.mxu0
      %v3011 = vadd.f32 %v2922, %v3010
      %v3012 = vpop.f32.mrf.mxu0
      %v3013 = vadd.f32 %v2924, %v3012
      %3014 = vmatmul.bf16.gmra.mxu0 %v1601
      %v3015 = vpop.f32.mrf.mxu0
      %v3016 = vadd.f32 %v2927, %v3015
      %v3017 = vpop.f32.mrf.mxu0
      %v3018 = vadd.f32 %v2929, %v3017
      %3019 = vmatmul.bf16.gmra.mxu0 %v1613
      %v3020 = vpop.f32.mrf.mxu0
      %v3021 = vadd.f32 %v2932, %v3020
      %v3022 = vpop.f32.mrf.mxu0
      %v3023 = vadd.f32 %v2934, %v3022
      %3024 = vmatmul.bf16.gmra.mxu0 %v1625
      %v3025 = vpop.f32.mrf.mxu0
      %v3026 = vadd.f32 %v2937, %v3025
      %v3027 = vpop.f32.mrf.mxu0
      %v3028 = vadd.f32 %v2939, %v3027
      %3029 = vmatmul.bf16.gmra.mxu0 %v1637
      %v3030 = vpop.f32.mrf.mxu0
      %v3031 = vadd.f32 %v2942, %v3030
      %v3032 = vpop.f32.mrf.mxu0
      %v3033 = vadd.f32 %v2944, %v3032
      %3034 = vmatmul.bf16.gmra.mxu0 %v1649
      %v3035 = vpop.f32.mrf.mxu0
      %v3036 = vadd.f32 %v2947, %v3035
      %v3037 = vpop.f32.mrf.mxu0
      %v3038 = vadd.f32 %v2949, %v3037
      %3039 = vmatmul.bf16.gmra.mxu0 %v1661
      %v3040 = vpop.f32.mrf.mxu0
      %v3041 = vadd.f32 %v2952, %v3040
      %v3042 = vpop.f32.mrf.mxu0
      %v3043 = vadd.f32 %v2954, %v3042
      %3044 = vmatmul.bf16.gmra.mxu0 %v1673
      %v3045 = vpop.f32.mrf.mxu0
      %v3046 = vadd.f32 %v2957, %v3045
      %v3047 = vpop.f32.mrf.mxu0
      %v3048 = vadd.f32 %v2959, %v3047
      %3049 = vdwg.mxu0
      %3050 = vmatpush.bf16.msra.mxu0 %v2847
      %3051 = vmatpush.bf16.msra.mxu0 %v2846
      %3052 = vmatpush.bf16.msra.mxu0 %v2845
      %3053 = vmatpush.bf16.msra.mxu0 %v2844
      %3054 = vmatpush.bf16.msra.mxu0 %v2843
      %3055 = vmatpush.bf16.msra.mxu0 %v2842
      %3056 = vmatpush.bf16.msra.mxu0 %v2841
      %3057 = vmatpush.bf16.msra.mxu0 %v2840
      %3058 = vmatmul.bf16.gmra.mxu0 %v1693
      %v3059 = vpop.f32.mrf.mxu0
      %v3060 = vadd.f32 %v2971, %v3059
      %v3061 = vpop.f32.mrf.mxu0
      %v3062 = vadd.f32 %v2973, %v3061
      %3063 = vmatmul.bf16.gmra.mxu0 %v1696
      %v3064 = vpop.f32.mrf.mxu0
      %v3065 = vadd.f32 %v2976, %v3064
      %v3066 = vpop.f32.mrf.mxu0
      %v3067 = vadd.f32 %v2978, %v3066
      %3068 = vmatmul.bf16.gmra.mxu0 %v1699
      %v3069 = vpop.f32.mrf.mxu0
      %v3070 = vadd.f32 %v2981, %v3069
      %v3071 = vpop.f32.mrf.mxu0
      %v3072 = vadd.f32 %v2983, %v3071
      %3073 = vmatmul.bf16.gmra.mxu0 %v1702
      %v3074 = vpop.f32.mrf.mxu0
      %v3075 = vadd.f32 %v2986, %v3074
      %v3076 = vpop.f32.mrf.mxu0
      %v3077 = vadd.f32 %v2988, %v3076
      %3078 = vmatmul.bf16.gmra.mxu0 %v1705
      %v3079 = vpop.f32.mrf.mxu0
      %v3080 = vadd.f32 %v2991, %v3079
      %v3081 = vpop.f32.mrf.mxu0
      %v3082 = vadd.f32 %v2993, %v3081
      %3083 = vmatmul.bf16.gmra.mxu0 %v1708
      %v3084 = vpop.f32.mrf.mxu0
      %v3085 = vadd.f32 %v2996, %v3084
      %v3086 = vpop.f32.mrf.mxu0
      %v3087 = vadd.f32 %v2998, %v3086
      %3088 = vmatmul.bf16.gmra.mxu0 %v1711
      %v3089 = vpop.f32.mrf.mxu0
      %v3090 = vadd.f32 %v3001, %v3089
      %v3091 = vpop.f32.mrf.mxu0
      %v3092 = vadd.f32 %v3003, %v3091
      %3093 = vmatmul.bf16.gmra.mxu0 %v1714
      %v3094 = vpop.f32.mrf.mxu0
      %v3095 = vadd.f32 %v3006, %v3094
      %v3096 = vpop.f32.mrf.mxu0
      %v3097 = vadd.f32 %v3008, %v3096
      %3098 = vmatmul.bf16.gmra.mxu0 %v1717
      %v3099 = vpop.f32.mrf.mxu0
      %v3100 = vadd.f32 %v3011, %v3099
      %v3101 = vpop.f32.mrf.mxu0
      %v3102 = vadd.f32 %v3013, %v3101
      %3103 = vmatmul.bf16.gmra.mxu0 %v1720
      %v3104 = vpop.f32.mrf.mxu0
      %v3105 = vadd.f32 %v3016, %v3104
      %v3106 = vpop.f32.mrf.mxu0
      %v3107 = vadd.f32 %v3018, %v3106
      %3108 = vmatmul.bf16.gmra.mxu0 %v1723
      %v3109 = vpop.f32.mrf.mxu0
      %v3110 = vadd.f32 %v3021, %v3109
      %v3111 = vpop.f32.mrf.mxu0
      %v3112 = vadd.f32 %v3023, %v3111
      %3113 = vmatmul.bf16.gmra.mxu0 %v1726
      %v3114 = vpop.f32.mrf.mxu0
      %v3115 = vadd.f32 %v3026, %v3114
      %v3116 = vpop.f32.mrf.mxu0
      %v3117 = vadd.f32 %v3028, %v3116
      %3118 = vmatmul.bf16.gmra.mxu0 %v1729
      %v3119 = vpop.f32.mrf.mxu0
      %v3120 = vadd.f32 %v3031, %v3119
      %v3121 = vpop.f32.mrf.mxu0
      %v3122 = vadd.f32 %v3033, %v3121
      %3123 = vmatmul.bf16.gmra.mxu0 %v1732
      %v3124 = vpop.f32.mrf.mxu0
      %v3125 = vadd.f32 %v3036, %v3124
      %v3126 = vpop.f32.mrf.mxu0
      %v3127 = vadd.f32 %v3038, %v3126
      %3128 = vmatmul.bf16.gmra.mxu0 %v1735
      %v3129 = vpop.f32.mrf.mxu0
      %v3130 = vadd.f32 %v3041, %v3129
      %v3131 = vpop.f32.mrf.mxu0
      %v3132 = vadd.f32 %v3043, %v3131
      %3133 = vmatmul.bf16.gmra.mxu0 %v1738
      %v3134 = vpop.f32.mrf.mxu0
      %v3135 = vadd.f32 %v3046, %v3134
      %v3136 = vpop.f32.mrf.mxu0
      %v3137 = vadd.f32 %v3048, %v3136
      %3138 = vdwg.mxu0
      %s3139 = scalar_lea.vmem [#allocation2], 24
      %v3140 = vld [vmem:[%s3139] sm:$0xf]
      %v3141 = vld [vmem:[%s3139 + $0x4] sm:$0xf]
      %v3142 = vld [vmem:[%s3139 + $0x8] sm:$0xf]
      %v3143 = vld [vmem:[%s3139 + $0xc] sm:$0xf]
      %v3144 = vld [vmem:[%s3139 + $0x10] sm:$0xf]
      %v3145 = vld [vmem:[%s3139 + $0x14] sm:$0xf]
      %v3146 = vld [vmem:[%s3139 + $0x18] sm:$0xf]
      %v3147 = vld [vmem:[%s3139 + $0x1c] sm:$0xf]
      %v3148 = vld [vmem:[%s3139 + $0x20] sm:$0xf]
      %v3149 = vld [vmem:[%s3139 + $0x24] sm:$0xf]
      %v3150 = vld [vmem:[%s3139 + $0x28] sm:$0xf]
      %v3151 = vld [vmem:[%s3139 + $0x2c] sm:$0xf]
      %v3152 = vld [vmem:[%s3139 + $0x30] sm:$0xf]
      %v3153 = vld [vmem:[%s3139 + $0x34] sm:$0xf]
      %v3154 = vld [vmem:[%s3139 + $0x38] sm:$0xf]
      %v3155 = vld [vmem:[%s3139 + $0x3c] sm:$0xf]
      %v3156 = vld [vmem:[%s3139 + $0x40] sm:$0xf]
      %v3157 = vld [vmem:[%s3139 + $0x44] sm:$0xf]
      %v3158 = vld [vmem:[%s3139 + $0x48] sm:$0xf]
      %v3159 = vld [vmem:[%s3139 + $0x4c] sm:$0xf]
      %v3160 = vld [vmem:[%s3139 + $0x50] sm:$0xf]
      %v3161 = vld [vmem:[%s3139 + $0x54] sm:$0xf]
      %v3162 = vld [vmem:[%s3139 + $0x58] sm:$0xf]
      %v3163 = vld [vmem:[%s3139 + $0x5c] sm:$0xf]
      %v3164 = vld [vmem:[%s3139 + $0x60] sm:$0xf]
      %v3165 = vld [vmem:[%s3139 + $0x64] sm:$0xf]
      %v3166 = vld [vmem:[%s3139 + $0x68] sm:$0xf]
      %v3167 = vld [vmem:[%s3139 + $0x6c] sm:$0xf]
      %v3168 = vld [vmem:[%s3139 + $0x70] sm:$0xf]
      %v3169 = vld [vmem:[%s3139 + $0x74] sm:$0xf]
      %v3170 = vld [vmem:[%s3139 + $0x78] sm:$0xf]
      %v3171 = vld [vmem:[%s3139 + $0x7c] sm:$0xf]
      %v3172 = vld [vmem:[%s3139 + $0x80] sm:$0xf]
      %v3173 = vld [vmem:[%s3139 + $0x84] sm:$0xf]
      %v3174 = vld [vmem:[%s3139 + $0x88] sm:$0xf]
      %v3175 = vld [vmem:[%s3139 + $0x8c] sm:$0xf]
      %v3176 = vld [vmem:[%s3139 + $0x90] sm:$0xf]
      %v3177 = vld [vmem:[%s3139 + $0x94] sm:$0xf]
      %v3178 = vld [vmem:[%s3139 + $0x98] sm:$0xf]
      %v3179 = vld [vmem:[%s3139 + $0x9c] sm:$0xf]
      %v3180 = vld [vmem:[%s3139 + $0xa0] sm:$0xf]
      %v3181 = vld [vmem:[%s3139 + $0xa4] sm:$0xf]
      %v3182 = vld [vmem:[%s3139 + $0xa8] sm:$0xf]
      %v3183 = vld [vmem:[%s3139 + $0xac] sm:$0xf]
      %v3184 = vld [vmem:[%s3139 + $0xb0] sm:$0xf]
      %v3185 = vld [vmem:[%s3139 + $0xb4] sm:$0xf]
      %v3186 = vld [vmem:[%s3139 + $0xb8] sm:$0xf]
      %v3187 = vld [vmem:[%s3139 + $0xbc] sm:$0xf]
      %v3220 = vunpack.c.l.b16 %v3140
      %v3221 = vunpack.c.l.b16 %v3141
      %v3222 = vunpack.c.l.b16 %v3143
      %v3223 = vunpack.c.l.b16 %v3144
      %v3224 = vunpack.c.l.b16 %v3146
      %v3225 = vunpack.c.l.b16 %v3147
      %v3226 = vunpack.c.l.b16 %v3149
      %v3227 = vunpack.c.l.b16 %v3150
      %v3228 = vunpack.c.l.b16 %v3152
      %v3229 = vunpack.c.l.b16 %v3153
      %v3230 = vunpack.c.l.b16 %v3155
      %v3231 = vunpack.c.l.b16 %v3156
      %v3232 = vunpack.c.l.b16 %v3158
      %v3233 = vunpack.c.l.b16 %v3159
      %v3234 = vunpack.c.l.b16 %v3161
      %v3235 = vunpack.c.l.b16 %v3162
      %v3236 = vunpack.c.l.b16 %v3164
      %v3237 = vunpack.c.l.b16 %v3165
      %v3238 = vunpack.c.l.b16 %v3167
      %v3239 = vunpack.c.l.b16 %v3168
      %v3240 = vunpack.c.l.b16 %v3170
      %v3241 = vunpack.c.l.b16 %v3171
      %v3242 = vunpack.c.l.b16 %v3173
      %v3243 = vunpack.c.l.b16 %v3174
      %v3244 = vunpack.c.l.b16 %v3176
      %v3245 = vunpack.c.l.b16 %v3177
      %v3246 = vunpack.c.l.b16 %v3179
      %v3247 = vunpack.c.l.b16 %v3180
      %v3248 = vunpack.c.l.b16 %v3182
      %v3249 = vunpack.c.l.b16 %v3183
      %v3250 = vunpack.c.l.b16 %v3185
      %v3251 = vunpack.c.l.b16 %v3186
      %v3252 = vpack.c.b16 %v3221, %v3220
      %v3253 = vpack.c.b16 %v3223, %v3222
      %v3254 = vpack.c.b16 %v3225, %v3224
      %v3255 = vpack.c.b16 %v3227, %v3226
      %v3256 = vpack.c.b16 %v3229, %v3228
      %v3257 = vpack.c.b16 %v3231, %v3230
      %v3258 = vpack.c.b16 %v3233, %v3232
      %v3259 = vpack.c.b16 %v3235, %v3234
      %v3260 = vpack.c.b16 %v3237, %v3236
      %v3261 = vpack.c.b16 %v3239, %v3238
      %v3262 = vpack.c.b16 %v3241, %v3240
      %v3263 = vpack.c.b16 %v3243, %v3242
      %v3264 = vpack.c.b16 %v3245, %v3244
      %v3265 = vpack.c.b16 %v3247, %v3246
      %v3266 = vpack.c.b16 %v3249, %v3248
      %v3267 = vpack.c.b16 %v3251, %v3250
      %v3300 = vunpack.c.l.b16 %v3142
      %v3301 = vunpack.c.l.b16 %v3145
      %v3302 = vunpack.c.l.b16 %v3148
      %v3303 = vunpack.c.l.b16 %v3151
      %v3304 = vunpack.c.l.b16 %v3154
      %v3305 = vunpack.c.l.b16 %v3157
      %v3306 = vunpack.c.l.b16 %v3160
      %v3307 = vunpack.c.l.b16 %v3163
      %v3308 = vunpack.c.l.b16 %v3166
      %v3309 = vunpack.c.l.b16 %v3169
      %v3310 = vunpack.c.l.b16 %v3172
      %v3311 = vunpack.c.l.b16 %v3175
      %v3312 = vunpack.c.l.b16 %v3178
      %v3313 = vunpack.c.l.b16 %v3181
      %v3314 = vunpack.c.l.b16 %v3184
      %v3315 = vunpack.c.l.b16 %v3187
      %v3316 = vpack.c.b16 %v3300, %v3300
      %v3317 = vpack.c.b16 %v3301, %v3301
      %v3318 = vpack.c.b16 %v3302, %v3302
      %v3319 = vpack.c.b16 %v3303, %v3303
      %v3320 = vpack.c.b16 %v3304, %v3304
      %v3321 = vpack.c.b16 %v3305, %v3305
      %v3322 = vpack.c.b16 %v3306, %v3306
      %v3323 = vpack.c.b16 %v3307, %v3307
      %v3324 = vpack.c.b16 %v3308, %v3308
      %v3325 = vpack.c.b16 %v3309, %v3309
      %v3326 = vpack.c.b16 %v3310, %v3310
      %v3327 = vpack.c.b16 %v3311, %v3311
      %v3328 = vpack.c.b16 %v3312, %v3312
      %v3329 = vpack.c.b16 %v3313, %v3313
      %v3330 = vpack.c.b16 %v3314, %v3314
      %v3331 = vpack.c.b16 %v3315, %v3315
      %v3333 = vshrl.u32 %v3252, 16
      %v3335 = vshll.u32 %v3252, 16
      %v3337 = vrot.slane %v3335, 1
      %v3338 = vor.u32 %v3333, %v3337
      %v3340 = vshll.u32 %v3316, 16
      %v3342 = vrot.slane %v3340, 1
      %v3343 = vsel %vm1481, %v3338, %v3342
      %v3345 = vshrl.u32 %v3253, 16
      %v3347 = vshll.u32 %v3253, 16
      %v3349 = vrot.slane %v3347, 1
      %v3350 = vor.u32 %v3345, %v3349
      %v3352 = vshll.u32 %v3317, 16
      %v3354 = vrot.slane %v3352, 1
      %v3355 = vsel %vm1481, %v3350, %v3354
      %v3357 = vshrl.u32 %v3254, 16
      %v3359 = vshll.u32 %v3254, 16
      %v3361 = vrot.slane %v3359, 1
      %v3362 = vor.u32 %v3357, %v3361
      %v3364 = vshll.u32 %v3318, 16
      %v3366 = vrot.slane %v3364, 1
      %v3367 = vsel %vm1481, %v3362, %v3366
      %v3369 = vshrl.u32 %v3255, 16
      %v3371 = vshll.u32 %v3255, 16
      %v3373 = vrot.slane %v3371, 1
      %v3374 = vor.u32 %v3369, %v3373
      %v3376 = vshll.u32 %v3319, 16
      %v3378 = vrot.slane %v3376, 1
      %v3379 = vsel %vm1481, %v3374, %v3378
      %v3381 = vshrl.u32 %v3256, 16
      %v3383 = vshll.u32 %v3256, 16
      %v3385 = vrot.slane %v3383, 1
      %v3386 = vor.u32 %v3381, %v3385
      %v3388 = vshll.u32 %v3320, 16
      %v3390 = vrot.slane %v3388, 1
      %v3391 = vsel %vm1481, %v3386, %v3390
      %v3393 = vshrl.u32 %v3257, 16
      %v3395 = vshll.u32 %v3257, 16
      %v3397 = vrot.slane %v3395, 1
      %v3398 = vor.u32 %v3393, %v3397
      %v3400 = vshll.u32 %v3321, 16
      %v3402 = vrot.slane %v3400, 1
      %v3403 = vsel %vm1481, %v3398, %v3402
      %v3405 = vshrl.u32 %v3258, 16
      %v3407 = vshll.u32 %v3258, 16
      %v3409 = vrot.slane %v3407, 1
      %v3410 = vor.u32 %v3405, %v3409
      %v3412 = vshll.u32 %v3322, 16
      %v3414 = vrot.slane %v3412, 1
      %v3415 = vsel %vm1481, %v3410, %v3414
      %v3417 = vshrl.u32 %v3259, 16
      %v3419 = vshll.u32 %v3259, 16
      %v3421 = vrot.slane %v3419, 1
      %v3422 = vor.u32 %v3417, %v3421
      %v3424 = vshll.u32 %v3323, 16
      %v3426 = vrot.slane %v3424, 1
      %v3427 = vsel %vm1481, %v3422, %v3426
      %v3429 = vshrl.u32 %v3260, 16
      %v3431 = vshll.u32 %v3260, 16
      %v3433 = vrot.slane %v3431, 1
      %v3434 = vor.u32 %v3429, %v3433
      %v3436 = vshll.u32 %v3324, 16
      %v3438 = vrot.slane %v3436, 1
      %v3439 = vsel %vm1481, %v3434, %v3438
      %v3441 = vshrl.u32 %v3261, 16
      %v3443 = vshll.u32 %v3261, 16
      %v3445 = vrot.slane %v3443, 1
      %v3446 = vor.u32 %v3441, %v3445
      %v3448 = vshll.u32 %v3325, 16
      %v3450 = vrot.slane %v3448, 1
      %v3451 = vsel %vm1481, %v3446, %v3450
      %v3453 = vshrl.u32 %v3262, 16
      %v3455 = vshll.u32 %v3262, 16
      %v3457 = vrot.slane %v3455, 1
      %v3458 = vor.u32 %v3453, %v3457
      %v3460 = vshll.u32 %v3326, 16
      %v3462 = vrot.slane %v3460, 1
      %v3463 = vsel %vm1481, %v3458, %v3462
      %v3465 = vshrl.u32 %v3263, 16
      %v3467 = vshll.u32 %v3263, 16
      %v3469 = vrot.slane %v3467, 1
      %v3470 = vor.u32 %v3465, %v3469
      %v3472 = vshll.u32 %v3327, 16
      %v3474 = vrot.slane %v3472, 1
      %v3475 = vsel %vm1481, %v3470, %v3474
      %v3477 = vshrl.u32 %v3264, 16
      %v3479 = vshll.u32 %v3264, 16
      %v3481 = vrot.slane %v3479, 1
      %v3482 = vor.u32 %v3477, %v3481
      %v3484 = vshll.u32 %v3328, 16
      %v3486 = vrot.slane %v3484, 1
      %v3487 = vsel %vm1481, %v3482, %v3486
      %v3489 = vshrl.u32 %v3265, 16
      %v3491 = vshll.u32 %v3265, 16
      %v3493 = vrot.slane %v3491, 1
      %v3494 = vor.u32 %v3489, %v3493
      %v3496 = vshll.u32 %v3329, 16
      %v3498 = vrot.slane %v3496, 1
      %v3499 = vsel %vm1481, %v3494, %v3498
      %v3501 = vshrl.u32 %v3266, 16
      %v3503 = vshll.u32 %v3266, 16
      %v3505 = vrot.slane %v3503, 1
      %v3506 = vor.u32 %v3501, %v3505
      %v3508 = vshll.u32 %v3330, 16
      %v3510 = vrot.slane %v3508, 1
      %v3511 = vsel %vm1481, %v3506, %v3510
      %v3513 = vshrl.u32 %v3267, 16
      %v3515 = vshll.u32 %v3267, 16
      %v3517 = vrot.slane %v3515, 1
      %v3518 = vor.u32 %v3513, %v3517
      %v3520 = vshll.u32 %v3331, 16
      %v3522 = vrot.slane %v3520, 1
      %v3523 = vsel %vm1481, %v3518, %v3522
      %v3540 = vrot.slane %v3252, 1
      %v3541 = vrot.slane %v3316, 1
      %v3542 = vsel %vm1690, %v3540, %v3541
      %v3543 = vrot.slane %v3253, 1
      %v3544 = vrot.slane %v3317, 1
      %v3545 = vsel %vm1690, %v3543, %v3544
      %v3546 = vrot.slane %v3254, 1
      %v3547 = vrot.slane %v3318, 1
      %v3548 = vsel %vm1690, %v3546, %v3547
      %v3549 = vrot.slane %v3255, 1
      %v3550 = vrot.slane %v3319, 1
      %v3551 = vsel %vm1690, %v3549, %v3550
      %v3552 = vrot.slane %v3256, 1
      %v3553 = vrot.slane %v3320, 1
      %v3554 = vsel %vm1690, %v3552, %v3553
      %v3555 = vrot.slane %v3257, 1
      %v3556 = vrot.slane %v3321, 1
      %v3557 = vsel %vm1690, %v3555, %v3556
      %v3558 = vrot.slane %v3258, 1
      %v3559 = vrot.slane %v3322, 1
      %v3560 = vsel %vm1690, %v3558, %v3559
      %v3561 = vrot.slane %v3259, 1
      %v3562 = vrot.slane %v3323, 1
      %v3563 = vsel %vm1690, %v3561, %v3562
      %v3564 = vrot.slane %v3260, 1
      %v3565 = vrot.slane %v3324, 1
      %v3566 = vsel %vm1690, %v3564, %v3565
      %v3567 = vrot.slane %v3261, 1
      %v3568 = vrot.slane %v3325, 1
      %v3569 = vsel %vm1690, %v3567, %v3568
      %v3570 = vrot.slane %v3262, 1
      %v3571 = vrot.slane %v3326, 1
      %v3572 = vsel %vm1690, %v3570, %v3571
      %v3573 = vrot.slane %v3263, 1
      %v3574 = vrot.slane %v3327, 1
      %v3575 = vsel %vm1690, %v3573, %v3574
      %v3576 = vrot.slane %v3264, 1
      %v3577 = vrot.slane %v3328, 1
      %v3578 = vsel %vm1690, %v3576, %v3577
      %v3579 = vrot.slane %v3265, 1
      %v3580 = vrot.slane %v3329, 1
      %v3581 = vsel %vm1690, %v3579, %v3580
      %v3582 = vrot.slane %v3266, 1
      %v3583 = vrot.slane %v3330, 1
      %v3584 = vsel %vm1690, %v3582, %v3583
      %v3585 = vrot.slane %v3267, 1
      %v3586 = vrot.slane %v3331, 1
      %v3587 = vsel %vm1690, %v3585, %v3586
      %s3604 = scalar_lea.vmem %s2, 384
      %v3605 = vld [vmem:[%s3604] sm:$0xf]
      %v3606 = vld [vmem:[%s3604 + $0x4] sm:$0xf]
      %v3607 = vld [vmem:[%s3604 + $0x8] sm:$0xf]
      %v3608 = vld [vmem:[%s3604 + $0xc] sm:$0xf]
      %v3609 = vld [vmem:[%s3604 + $0x10] sm:$0xf]
      %v3610 = vld [vmem:[%s3604 + $0x14] sm:$0xf]
      %v3611 = vld [vmem:[%s3604 + $0x18] sm:$0xf]
      %v3612 = vld [vmem:[%s3604 + $0x1c] sm:$0xf]
      %v3613 = vld [vmem:[%s3604 + $0x20] sm:$0xf]
      %v3614 = vld [vmem:[%s3604 + $0x24] sm:$0xf]
      %v3615 = vld [vmem:[%s3604 + $0x28] sm:$0xf]
      %v3616 = vld [vmem:[%s3604 + $0x2c] sm:$0xf]
      %v3617 = vld [vmem:[%s3604 + $0x30] sm:$0xf]
      %v3618 = vld [vmem:[%s3604 + $0x34] sm:$0xf]
      %v3619 = vld [vmem:[%s3604 + $0x38] sm:$0xf]
      %v3620 = vld [vmem:[%s3604 + $0x3c] sm:$0xf]
      %v3621 = vld [vmem:[%s3604 + $0x40] sm:$0xf]
      %v3622 = vld [vmem:[%s3604 + $0x44] sm:$0xf]
      %v3623 = vld [vmem:[%s3604 + $0x48] sm:$0xf]
      %v3624 = vld [vmem:[%s3604 + $0x4c] sm:$0xf]
      %v3625 = vld [vmem:[%s3604 + $0x50] sm:$0xf]
      %v3626 = vld [vmem:[%s3604 + $0x54] sm:$0xf]
      %v3627 = vld [vmem:[%s3604 + $0x58] sm:$0xf]
      %v3628 = vld [vmem:[%s3604 + $0x5c] sm:$0xf]
      %v3629 = vld [vmem:[%s3604 + $0x60] sm:$0xf]
      %v3630 = vld [vmem:[%s3604 + $0x64] sm:$0xf]
      %v3631 = vld [vmem:[%s3604 + $0x68] sm:$0xf]
      %v3632 = vld [vmem:[%s3604 + $0x6c] sm:$0xf]
      %v3633 = vld [vmem:[%s3604 + $0x70] sm:$0xf]
      %v3634 = vld [vmem:[%s3604 + $0x74] sm:$0xf]
      %v3635 = vld [vmem:[%s3604 + $0x78] sm:$0xf]
      %v3636 = vld [vmem:[%s3604 + $0x7c] sm:$0xf]
      %v3637 = vld [vmem:[%s3604 + $0x80] sm:$0xf]
      %v3638 = vld [vmem:[%s3604 + $0x84] sm:$0xf]
      %v3639 = vld [vmem:[%s3604 + $0x88] sm:$0xf]
      %v3640 = vld [vmem:[%s3604 + $0x8c] sm:$0xf]
      %v3641 = vld [vmem:[%s3604 + $0x90] sm:$0xf]
      %v3642 = vld [vmem:[%s3604 + $0x94] sm:$0xf]
      %v3643 = vld [vmem:[%s3604 + $0x98] sm:$0xf]
      %v3644 = vld [vmem:[%s3604 + $0x9c] sm:$0xf]
      %v3645 = vld [vmem:[%s3604 + $0xa0] sm:$0xf]
      %v3646 = vld [vmem:[%s3604 + $0xa4] sm:$0xf]
      %v3647 = vld [vmem:[%s3604 + $0xa8] sm:$0xf]
      %v3648 = vld [vmem:[%s3604 + $0xac] sm:$0xf]
      %v3649 = vld [vmem:[%s3604 + $0xb0] sm:$0xf]
      %v3650 = vld [vmem:[%s3604 + $0xb4] sm:$0xf]
      %v3651 = vld [vmem:[%s3604 + $0xb8] sm:$0xf]
      %v3652 = vld [vmem:[%s3604 + $0xbc] sm:$0xf]
      %v3701 = vunpack.c.l.b16 %v3605
      %v3702 = vunpack.c.l.b16 %v3606
      %v3703 = vunpack.c.l.b16 %v3607
      %v3704 = vunpack.c.l.b16 %v3608
      %v3705 = vunpack.c.l.b16 %v3609
      %v3706 = vunpack.c.l.b16 %v3610
      %v3707 = vunpack.c.l.b16 %v3611
      %v3708 = vunpack.c.l.b16 %v3612
      %v3709 = vunpack.c.l.b16 %v3613
      %v3710 = vunpack.c.l.b16 %v3614
      %v3711 = vunpack.c.l.b16 %v3615
      %v3712 = vunpack.c.l.b16 %v3616
      %v3713 = vunpack.c.l.b16 %v3617
      %v3714 = vunpack.c.l.b16 %v3618
      %v3715 = vunpack.c.l.b16 %v3619
      %v3716 = vunpack.c.l.b16 %v3620
      %v3717 = vunpack.c.l.b16 %v3621
      %v3718 = vunpack.c.l.b16 %v3622
      %v3719 = vunpack.c.l.b16 %v3623
      %v3720 = vunpack.c.l.b16 %v3624
      %v3721 = vunpack.c.l.b16 %v3625
      %v3722 = vunpack.c.l.b16 %v3626
      %v3723 = vunpack.c.l.b16 %v3627
      %v3724 = vunpack.c.l.b16 %v3628
      %v3725 = vunpack.c.l.b16 %v3629
      %v3726 = vunpack.c.l.b16 %v3630
      %v3727 = vunpack.c.l.b16 %v3631
      %v3728 = vunpack.c.l.b16 %v3632
      %v3729 = vunpack.c.l.b16 %v3633
      %v3730 = vunpack.c.l.b16 %v3634
      %v3731 = vunpack.c.l.b16 %v3635
      %v3732 = vunpack.c.l.b16 %v3636
      %v3733 = vunpack.c.l.b16 %v3637
      %v3734 = vunpack.c.l.b16 %v3638
      %v3735 = vunpack.c.l.b16 %v3639
      %v3736 = vunpack.c.l.b16 %v3640
      %v3737 = vunpack.c.l.b16 %v3641
      %v3738 = vunpack.c.l.b16 %v3642
      %v3739 = vunpack.c.l.b16 %v3643
      %v3740 = vunpack.c.l.b16 %v3644
      %v3741 = vunpack.c.l.b16 %v3645
      %v3742 = vunpack.c.l.b16 %v3646
      %v3743 = vunpack.c.l.b16 %v3647
      %v3744 = vunpack.c.l.b16 %v3648
      %v3745 = vunpack.c.l.b16 %v3649
      %v3746 = vunpack.c.l.b16 %v3650
      %v3747 = vunpack.c.l.b16 %v3651
      %v3748 = vunpack.c.l.b16 %v3652
      %v3749 = vpack.c.b16 %v3702, %v3701
      %v3750 = vpack.c.b16 %v3704, %v3703
      %v3751 = vpack.c.b16 %v3706, %v3705
      %v3752 = vpack.c.b16 %v3708, %v3707
      %v3753 = vpack.c.b16 %v3710, %v3709
      %v3754 = vpack.c.b16 %v3712, %v3711
      %v3755 = vpack.c.b16 %v3714, %v3713
      %v3756 = vpack.c.b16 %v3716, %v3715
      %v3757 = vpack.c.b16 %v3718, %v3717
      %v3758 = vpack.c.b16 %v3720, %v3719
      %v3759 = vpack.c.b16 %v3722, %v3721
      %v3760 = vpack.c.b16 %v3724, %v3723
      %v3761 = vpack.c.b16 %v3726, %v3725
      %v3762 = vpack.c.b16 %v3728, %v3727
      %v3763 = vpack.c.b16 %v3730, %v3729
      %v3764 = vpack.c.b16 %v3732, %v3731
      %v3765 = vpack.c.b16 %v3734, %v3733
      %v3766 = vpack.c.b16 %v3736, %v3735
      %v3767 = vpack.c.b16 %v3738, %v3737
      %v3768 = vpack.c.b16 %v3740, %v3739
      %v3769 = vpack.c.b16 %v3742, %v3741
      %v3770 = vpack.c.b16 %v3744, %v3743
      %v3771 = vpack.c.b16 %v3746, %v3745
      %v3772 = vpack.c.b16 %v3748, %v3747
      %3797 = vmatpush.bf16.msra.mxu0 %v3756
      %3798 = vmatpush.bf16.msra.mxu0 %v3755
      %3799 = vmatpush.bf16.msra.mxu0 %v3754
      %3800 = vmatpush.bf16.msra.mxu0 %v3753
      %3801 = vmatpush.bf16.msra.mxu0 %v3752
      %3802 = vmatpush.bf16.msra.mxu0 %v3751
      %3803 = vmatpush.bf16.msra.mxu0 %v3750
      %3804 = vmatpush.bf16.msra.mxu0 %v3749
      %3805 = vmatmul.bf16.gmra.mxu0 %v3252
      %v3806 = vpop.f32.mrf.mxu0
      %v3807 = vadd.f32 0.0, %v3806
      %v3808 = vpop.f32.mrf.mxu0
      %v3809 = vadd.f32 0.0, %v3808
      %3810 = vmatmul.bf16.gmra.mxu0 %v3253
      %v3811 = vpop.f32.mrf.mxu0
      %v3812 = vadd.f32 0.0, %v3811
      %v3813 = vpop.f32.mrf.mxu0
      %v3814 = vadd.f32 0.0, %v3813
      %3815 = vmatmul.bf16.gmra.mxu0 %v3254
      %v3816 = vpop.f32.mrf.mxu0
      %v3817 = vadd.f32 0.0, %v3816
      %v3818 = vpop.f32.mrf.mxu0
      %v3819 = vadd.f32 0.0, %v3818
      %3820 = vmatmul.bf16.gmra.mxu0 %v3255
      %v3821 = vpop.f32.mrf.mxu0
      %v3822 = vadd.f32 0.0, %v3821
      %v3823 = vpop.f32.mrf.mxu0
      %v3824 = vadd.f32 0.0, %v3823
      %3825 = vmatmul.bf16.gmra.mxu0 %v3256
      %v3826 = vpop.f32.mrf.mxu0
      %v3827 = vadd.f32 0.0, %v3826
      %v3828 = vpop.f32.mrf.mxu0
      %v3829 = vadd.f32 0.0, %v3828
      %3830 = vmatmul.bf16.gmra.mxu0 %v3257
      %v3831 = vpop.f32.mrf.mxu0
      %v3832 = vadd.f32 0.0, %v3831
      %v3833 = vpop.f32.mrf.mxu0
      %v3834 = vadd.f32 0.0, %v3833
      %3835 = vmatmul.bf16.gmra.mxu0 %v3258
      %v3836 = vpop.f32.mrf.mxu0
      %v3837 = vadd.f32 0.0, %v3836
      %v3838 = vpop.f32.mrf.mxu0
      %v3839 = vadd.f32 0.0, %v3838
      %3840 = vmatmul.bf16.gmra.mxu0 %v3259
      %v3841 = vpop.f32.mrf.mxu0
      %v3842 = vadd.f32 0.0, %v3841
      %v3843 = vpop.f32.mrf.mxu0
      %v3844 = vadd.f32 0.0, %v3843
      %3845 = vmatmul.bf16.gmra.mxu0 %v3260
      %v3846 = vpop.f32.mrf.mxu0
      %v3847 = vadd.f32 0.0, %v3846
      %v3848 = vpop.f32.mrf.mxu0
      %v3849 = vadd.f32 0.0, %v3848
      %3850 = vmatmul.bf16.gmra.mxu0 %v3261
      %v3851 = vpop.f32.mrf.mxu0
      %v3852 = vadd.f32 0.0, %v3851
      %v3853 = vpop.f32.mrf.mxu0
      %v3854 = vadd.f32 0.0, %v3853
      %3855 = vmatmul.bf16.gmra.mxu0 %v3262
      %v3856 = vpop.f32.mrf.mxu0
      %v3857 = vadd.f32 0.0, %v3856
      %v3858 = vpop.f32.mrf.mxu0
      %v3859 = vadd.f32 0.0, %v3858
      %3860 = vmatmul.bf16.gmra.mxu0 %v3263
      %v3861 = vpop.f32.mrf.mxu0
      %v3862 = vadd.f32 0.0, %v3861
      %v3863 = vpop.f32.mrf.mxu0
      %v3864 = vadd.f32 0.0, %v3863
      %3865 = vmatmul.bf16.gmra.mxu0 %v3264
      %v3866 = vpop.f32.mrf.mxu0
      %v3867 = vadd.f32 0.0, %v3866
      %v3868 = vpop.f32.mrf.mxu0
      %v3869 = vadd.f32 0.0, %v3868
      %3870 = vmatmul.bf16.gmra.mxu0 %v3265
      %v3871 = vpop.f32.mrf.mxu0
      %v3872 = vadd.f32 0.0, %v3871
      %v3873 = vpop.f32.mrf.mxu0
      %v3874 = vadd.f32 0.0, %v3873
      %3875 = vmatmul.bf16.gmra.mxu0 %v3266
      %v3876 = vpop.f32.mrf.mxu0
      %v3877 = vadd.f32 0.0, %v3876
      %v3878 = vpop.f32.mrf.mxu0
      %v3879 = vadd.f32 0.0, %v3878
      %3880 = vmatmul.bf16.gmra.mxu0 %v3267
      %v3881 = vpop.f32.mrf.mxu0
      %v3882 = vadd.f32 0.0, %v3881
      %v3883 = vpop.f32.mrf.mxu0
      %v3884 = vadd.f32 0.0, %v3883
      %3885 = vdwg.mxu0
      %3886 = vmatpush.bf16.msra.mxu0 %v3764
      %3887 = vmatpush.bf16.msra.mxu0 %v3763
      %3888 = vmatpush.bf16.msra.mxu0 %v3762
      %3889 = vmatpush.bf16.msra.mxu0 %v3761
      %3890 = vmatpush.bf16.msra.mxu0 %v3760
      %3891 = vmatpush.bf16.msra.mxu0 %v3759
      %3892 = vmatpush.bf16.msra.mxu0 %v3758
      %3893 = vmatpush.bf16.msra.mxu0 %v3757
      %3894 = vmatmul.bf16.gmra.mxu0 %v3343
      %v3895 = vpop.f32.mrf.mxu0
      %v3896 = vadd.f32 %v3807, %v3895
      %v3897 = vpop.f32.mrf.mxu0
      %v3898 = vadd.f32 %v3809, %v3897
      %3899 = vmatmul.bf16.gmra.mxu0 %v3355
      %v3900 = vpop.f32.mrf.mxu0
      %v3901 = vadd.f32 %v3812, %v3900
      %v3902 = vpop.f32.mrf.mxu0
      %v3903 = vadd.f32 %v3814, %v3902
      %3904 = vmatmul.bf16.gmra.mxu0 %v3367
      %v3905 = vpop.f32.mrf.mxu0
      %v3906 = vadd.f32 %v3817, %v3905
      %v3907 = vpop.f32.mrf.mxu0
      %v3908 = vadd.f32 %v3819, %v3907
      %3909 = vmatmul.bf16.gmra.mxu0 %v3379
      %v3910 = vpop.f32.mrf.mxu0
      %v3911 = vadd.f32 %v3822, %v3910
      %v3912 = vpop.f32.mrf.mxu0
      %v3913 = vadd.f32 %v3824, %v3912
      %3914 = vmatmul.bf16.gmra.mxu0 %v3391
      %v3915 = vpop.f32.mrf.mxu0
      %v3916 = vadd.f32 %v3827, %v3915
      %v3917 = vpop.f32.mrf.mxu0
      %v3918 = vadd.f32 %v3829, %v3917
      %3919 = vmatmul.bf16.gmra.mxu0 %v3403
      %v3920 = vpop.f32.mrf.mxu0
      %v3921 = vadd.f32 %v3832, %v3920
      %v3922 = vpop.f32.mrf.mxu0
      %v3923 = vadd.f32 %v3834, %v3922
      %3924 = vmatmul.bf16.gmra.mxu0 %v3415
      %v3925 = vpop.f32.mrf.mxu0
      %v3926 = vadd.f32 %v3837, %v3925
      %v3927 = vpop.f32.mrf.mxu0
      %v3928 = vadd.f32 %v3839, %v3927
      %3929 = vmatmul.bf16.gmra.mxu0 %v3427
      %v3930 = vpop.f32.mrf.mxu0
      %v3931 = vadd.f32 %v3842, %v3930
      %v3932 = vpop.f32.mrf.mxu0
      %v3933 = vadd.f32 %v3844, %v3932
      %3934 = vmatmul.bf16.gmra.mxu0 %v3439
      %v3935 = vpop.f32.mrf.mxu0
      %v3936 = vadd.f32 %v3847, %v3935
      %v3937 = vpop.f32.mrf.mxu0
      %v3938 = vadd.f32 %v3849, %v3937
      %3939 = vmatmul.bf16.gmra.mxu0 %v3451
      %v3940 = vpop.f32.mrf.mxu0
      %v3941 = vadd.f32 %v3852, %v3940
      %v3942 = vpop.f32.mrf.mxu0
      %v3943 = vadd.f32 %v3854, %v3942
      %3944 = vmatmul.bf16.gmra.mxu0 %v3463
      %v3945 = vpop.f32.mrf.mxu0
      %v3946 = vadd.f32 %v3857, %v3945
      %v3947 = vpop.f32.mrf.mxu0
      %v3948 = vadd.f32 %v3859, %v3947
      %3949 = vmatmul.bf16.gmra.mxu0 %v3475
      %v3950 = vpop.f32.mrf.mxu0
      %v3951 = vadd.f32 %v3862, %v3950
      %v3952 = vpop.f32.mrf.mxu0
      %v3953 = vadd.f32 %v3864, %v3952
      %3954 = vmatmul.bf16.gmra.mxu0 %v3487
      %v3955 = vpop.f32.mrf.mxu0
      %v3956 = vadd.f32 %v3867, %v3955
      %v3957 = vpop.f32.mrf.mxu0
      %v3958 = vadd.f32 %v3869, %v3957
      %3959 = vmatmul.bf16.gmra.mxu0 %v3499
      %v3960 = vpop.f32.mrf.mxu0
      %v3961 = vadd.f32 %v3872, %v3960
      %v3962 = vpop.f32.mrf.mxu0
      %v3963 = vadd.f32 %v3874, %v3962
      %3964 = vmatmul.bf16.gmra.mxu0 %v3511
      %v3965 = vpop.f32.mrf.mxu0
      %v3966 = vadd.f32 %v3877, %v3965
      %v3967 = vpop.f32.mrf.mxu0
      %v3968 = vadd.f32 %v3879, %v3967
      %3969 = vmatmul.bf16.gmra.mxu0 %v3523
      %v3970 = vpop.f32.mrf.mxu0
      %v3971 = vadd.f32 %v3882, %v3970
      %v3972 = vpop.f32.mrf.mxu0
      %v3973 = vadd.f32 %v3884, %v3972
      %3974 = vdwg.mxu0
      %3975 = vmatpush.bf16.msra.mxu0 %v3772
      %3976 = vmatpush.bf16.msra.mxu0 %v3771
      %3977 = vmatpush.bf16.msra.mxu0 %v3770
      %3978 = vmatpush.bf16.msra.mxu0 %v3769
      %3979 = vmatpush.bf16.msra.mxu0 %v3768
      %3980 = vmatpush.bf16.msra.mxu0 %v3767
      %3981 = vmatpush.bf16.msra.mxu0 %v3766
      %3982 = vmatpush.bf16.msra.mxu0 %v3765
      %3983 = vmatmul.bf16.gmra.mxu0 %v3542
      %v3984 = vpop.f32.mrf.mxu0
      %v3985 = vadd.f32 %v3896, %v3984
      %v3986 = vpop.f32.mrf.mxu0
      %v3987 = vadd.f32 %v3898, %v3986
      %3988 = vmatmul.bf16.gmra.mxu0 %v3545
      %v3989 = vpop.f32.mrf.mxu0
      %v3990 = vadd.f32 %v3901, %v3989
      %v3991 = vpop.f32.mrf.mxu0
      %v3992 = vadd.f32 %v3903, %v3991
      %3993 = vmatmul.bf16.gmra.mxu0 %v3548
      %v3994 = vpop.f32.mrf.mxu0
      %v3995 = vadd.f32 %v3906, %v3994
      %v3996 = vpop.f32.mrf.mxu0
      %v3997 = vadd.f32 %v3908, %v3996
      %3998 = vmatmul.bf16.gmra.mxu0 %v3551
      %v3999 = vpop.f32.mrf.mxu0
      %v4000 = vadd.f32 %v3911, %v3999
      %v4001 = vpop.f32.mrf.mxu0
      %v4002 = vadd.f32 %v3913, %v4001
      %4003 = vmatmul.bf16.gmra.mxu0 %v3554
      %v4004 = vpop.f32.mrf.mxu0
      %v4005 = vadd.f32 %v3916, %v4004
      %v4006 = vpop.f32.mrf.mxu0
      %v4007 = vadd.f32 %v3918, %v4006
      %4008 = vmatmul.bf16.gmra.mxu0 %v3557
      %v4009 = vpop.f32.mrf.mxu0
      %v4010 = vadd.f32 %v3921, %v4009
      %v4011 = vpop.f32.mrf.mxu0
      %v4012 = vadd.f32 %v3923, %v4011
      %4013 = vmatmul.bf16.gmra.mxu0 %v3560
      %v4014 = vpop.f32.mrf.mxu0
      %v4015 = vadd.f32 %v3926, %v4014
      %v4016 = vpop.f32.mrf.mxu0
      %v4017 = vadd.f32 %v3928, %v4016
      %4018 = vmatmul.bf16.gmra.mxu0 %v3563
      %v4019 = vpop.f32.mrf.mxu0
      %v4020 = vadd.f32 %v3931, %v4019
      %v4021 = vpop.f32.mrf.mxu0
      %v4022 = vadd.f32 %v3933, %v4021
      %4023 = vmatmul.bf16.gmra.mxu0 %v3566
      %v4024 = vpop.f32.mrf.mxu0
      %v4025 = vadd.f32 %v3936, %v4024
      %v4026 = vpop.f32.mrf.mxu0
      %v4027 = vadd.f32 %v3938, %v4026
      %4028 = vmatmul.bf16.gmra.mxu0 %v3569
      %v4029 = vpop.f32.mrf.mxu0
      %v4030 = vadd.f32 %v3941, %v4029
      %v4031 = vpop.f32.mrf.mxu0
      %v4032 = vadd.f32 %v3943, %v4031
      %4033 = vmatmul.bf16.gmra.mxu0 %v3572
      %v4034 = vpop.f32.mrf.mxu0
      %v4035 = vadd.f32 %v3946, %v4034
      %v4036 = vpop.f32.mrf.mxu0
      %v4037 = vadd.f32 %v3948, %v4036
      %4038 = vmatmul.bf16.gmra.mxu0 %v3575
      %v4039 = vpop.f32.mrf.mxu0
      %v4040 = vadd.f32 %v3951, %v4039
      %v4041 = vpop.f32.mrf.mxu0
      %v4042 = vadd.f32 %v3953, %v4041
      %4043 = vmatmul.bf16.gmra.mxu0 %v3578
      %v4044 = vpop.f32.mrf.mxu0
      %v4045 = vadd.f32 %v3956, %v4044
      %v4046 = vpop.f32.mrf.mxu0
      %v4047 = vadd.f32 %v3958, %v4046
      %4048 = vmatmul.bf16.gmra.mxu0 %v3581
      %v4049 = vpop.f32.mrf.mxu0
      %v4050 = vadd.f32 %v3961, %v4049
      %v4051 = vpop.f32.mrf.mxu0
      %v4052 = vadd.f32 %v3963, %v4051
      %4053 = vmatmul.bf16.gmra.mxu0 %v3584
      %v4054 = vpop.f32.mrf.mxu0
      %v4055 = vadd.f32 %v3966, %v4054
      %v4056 = vpop.f32.mrf.mxu0
      %v4057 = vadd.f32 %v3968, %v4056
      %4058 = vmatmul.bf16.gmra.mxu0 %v3587
      %v4059 = vpop.f32.mrf.mxu0
      %v4060 = vadd.f32 %v3971, %v4059
      %v4061 = vpop.f32.mrf.mxu0
      %v4062 = vadd.f32 %v3973, %v4061
      %4063 = vdwg.mxu0
      %v4064 = vadd.f32 %v3060, %v3985
      %v4065 = vadd.f32 %v3062, %v3987
      %v4066 = vadd.f32 %v3065, %v3990
      %v4067 = vadd.f32 %v3067, %v3992
      %v4068 = vadd.f32 %v3070, %v3995
      %v4069 = vadd.f32 %v3072, %v3997
      %v4070 = vadd.f32 %v3075, %v4000
      %v4071 = vadd.f32 %v3077, %v4002
      %v4072 = vadd.f32 %v3080, %v4005
      %v4073 = vadd.f32 %v3082, %v4007
      %v4074 = vadd.f32 %v3085, %v4010
      %v4075 = vadd.f32 %v3087, %v4012
      %v4076 = vadd.f32 %v3090, %v4015
      %v4077 = vadd.f32 %v3092, %v4017
      %v4078 = vadd.f32 %v3095, %v4020
      %v4079 = vadd.f32 %v3097, %v4022
      %v4080 = vadd.f32 %v3100, %v4025
      %v4081 = vadd.f32 %v3102, %v4027
      %v4082 = vadd.f32 %v3105, %v4030
      %v4083 = vadd.f32 %v3107, %v4032
      %v4084 = vadd.f32 %v3110, %v4035
      %v4085 = vadd.f32 %v3112, %v4037
      %v4086 = vadd.f32 %v3115, %v4040
      %v4087 = vadd.f32 %v3117, %v4042
      %v4088 = vadd.f32 %v3120, %v4045
      %v4089 = vadd.f32 %v3122, %v4047
      %v4090 = vadd.f32 %v3125, %v4050
      %v4091 = vadd.f32 %v3127, %v4052
      %v4092 = vadd.f32 %v3130, %v4055
      %v4093 = vadd.f32 %v3132, %v4057
      %v4094 = vadd.f32 %v3135, %v4060
      %v4095 = vadd.f32 %v3137, %v4062
      %v4096 = vpack.c.bf16 %v4064, %v4064
      %v4097 = vpack.c.bf16 %v4065, %v4065
      %v4098 = vpack.c.bf16 %v4066, %v4066
      %v4099 = vpack.c.bf16 %v4067, %v4067
      %v4100 = vpack.c.bf16 %v4068, %v4068
      %v4101 = vpack.c.bf16 %v4069, %v4069
      %v4102 = vpack.c.bf16 %v4070, %v4070
      %v4103 = vpack.c.bf16 %v4071, %v4071
      %v4104 = vpack.c.bf16 %v4072, %v4072
      %v4105 = vpack.c.bf16 %v4073, %v4073
      %v4106 = vpack.c.bf16 %v4074, %v4074
      %v4107 = vpack.c.bf16 %v4075, %v4075
      %v4108 = vpack.c.bf16 %v4076, %v4076
      %v4109 = vpack.c.bf16 %v4077, %v4077
      %v4110 = vpack.c.bf16 %v4078, %v4078
      %v4111 = vpack.c.bf16 %v4079, %v4079
      %v4112 = vpack.c.bf16 %v4080, %v4080
      %v4113 = vpack.c.bf16 %v4081, %v4081
      %v4114 = vpack.c.bf16 %v4082, %v4082
      %v4115 = vpack.c.bf16 %v4083, %v4083
      %v4116 = vpack.c.bf16 %v4084, %v4084
      %v4117 = vpack.c.bf16 %v4085, %v4085
      %v4118 = vpack.c.bf16 %v4086, %v4086
      %v4119 = vpack.c.bf16 %v4087, %v4087
      %v4120 = vpack.c.bf16 %v4088, %v4088
      %v4121 = vpack.c.bf16 %v4089, %v4089
      %v4122 = vpack.c.bf16 %v4090, %v4090
      %v4123 = vpack.c.bf16 %v4091, %v4091
      %v4124 = vpack.c.bf16 %v4092, %v4092
      %v4125 = vpack.c.bf16 %v4093, %v4093
      %v4126 = vpack.c.bf16 %v4094, %v4094
      %v4127 = vpack.c.bf16 %v4095, %v4095
      %4128 = vst [vmem:[%s359] sm:$0xf] %v4096
      %4129 = vst [vmem:[%s359 + $0x4] sm:$0xf] %v4097
      %4130 = vst [vmem:[%s359 + $0x8] sm:$0xf] %v4098
      %4131 = vst [vmem:[%s359 + $0xc] sm:$0xf] %v4099
      %4132 = vst [vmem:[%s359 + $0x10] sm:$0xf] %v4100
      %4133 = vst [vmem:[%s359 + $0x14] sm:$0xf] %v4101
      %4134 = vst [vmem:[%s359 + $0x18] sm:$0xf] %v4102
      %4135 = vst [vmem:[%s359 + $0x1c] sm:$0xf] %v4103
      %4136 = vst [vmem:[%s359 + $0x20] sm:$0xf] %v4104
      %4137 = vst [vmem:[%s359 + $0x24] sm:$0xf] %v4105
      %4138 = vst [vmem:[%s359 + $0x28] sm:$0xf] %v4106
      %4139 = vst [vmem:[%s359 + $0x2c] sm:$0xf] %v4107
      %4140 = vst [vmem:[%s359 + $0x30] sm:$0xf] %v4108
      %4141 = vst [vmem:[%s359 + $0x34] sm:$0xf] %v4109
      %4142 = vst [vmem:[%s359 + $0x38] sm:$0xf] %v4110
      %4143 = vst [vmem:[%s359 + $0x3c] sm:$0xf] %v4111
      %4144 = vst [vmem:[%s359 + $0x40] sm:$0xf] %v4112
      %4145 = vst [vmem:[%s359 + $0x44] sm:$0xf] %v4113
      %4146 = vst [vmem:[%s359 + $0x48] sm:$0xf] %v4114
      %4147 = vst [vmem:[%s359 + $0x4c] sm:$0xf] %v4115
      %4148 = vst [vmem:[%s359 + $0x50] sm:$0xf] %v4116
      %4149 = vst [vmem:[%s359 + $0x54] sm:$0xf] %v4117
      %4150 = vst [vmem:[%s359 + $0x58] sm:$0xf] %v4118
      %4151 = vst [vmem:[%s359 + $0x5c] sm:$0xf] %v4119
      %4152 = vst [vmem:[%s359 + $0x60] sm:$0xf] %v4120
      %4153 = vst [vmem:[%s359 + $0x64] sm:$0xf] %v4121
      %4154 = vst [vmem:[%s359 + $0x68] sm:$0xf] %v4122
      %4155 = vst [vmem:[%s359 + $0x6c] sm:$0xf] %v4123
      %4156 = vst [vmem:[%s359 + $0x70] sm:$0xf] %v4124
      %4157 = vst [vmem:[%s359 + $0x74] sm:$0xf] %v4125
      %4158 = vst [vmem:[%s359 + $0x78] sm:$0xf] %v4126
      %4159 = vst [vmem:[%s359 + $0x7c] sm:$0xf] %v4127
      %v4160 = vadd.f32 %v4064, %v4065
      %v4161 = vadd.f32 %v4160, %v4066
      %v4162 = vadd.f32 %v4161, %v4067
      %v4163 = vadd.f32 %v4162, %v4068
      %v4164 = vadd.f32 %v4163, %v4069
      %v4165 = vadd.f32 %v4164, %v4070
      %v4166 = vadd.f32 %v4165, %v4071
      %v4167 = vadd.f32 %v4166, %v4072
      %v4168 = vadd.f32 %v4167, %v4073
      %v4169 = vadd.f32 %v4168, %v4074
      %v4170 = vadd.f32 %v4169, %v4075
      %v4171 = vadd.f32 %v4170, %v4076
      %v4172 = vadd.f32 %v4171, %v4077
      %v4173 = vadd.f32 %v4172, %v4078
      %v4174 = vadd.f32 %v4173, %v4079
      %v4175 = vadd.f32 %v4174, %v4080
      %v4176 = vadd.f32 %v4175, %v4081
      %v4177 = vadd.f32 %v4176, %v4082
      %v4178 = vadd.f32 %v4177, %v4083
      %v4179 = vadd.f32 %v4178, %v4084
      %v4180 = vadd.f32 %v4179, %v4085
      %v4181 = vadd.f32 %v4180, %v4086
      %v4182 = vadd.f32 %v4181, %v4087
      %v4183 = vadd.f32 %v4182, %v4088
      %v4184 = vadd.f32 %v4183, %v4089
      %v4185 = vadd.f32 %v4184, %v4090
      %v4186 = vadd.f32 %v4185, %v4091
      %v4187 = vadd.f32 %v4186, %v4092
      %v4188 = vadd.f32 %v4187, %v4093
      %v4189 = vadd.f32 %v4188, %v4094
      %v4190 = vadd.f32 %v4189, %v4095
      %v4191 = vrot.slane %v4190, 4
      %v4192 = vadd.f32 %v4190, %v4191
      %v4193 = vrot.slane %v4192, 2
      %v4194 = vadd.f32 %v4192, %v4193
      %v4195 = vrot.slane %v4194, 1
      %v4196 = vadd.f32 %v4194, %v4195
      %v4197 = vmul.f32 %v4064, %v4064
      %v4198 = vmul.f32 %v4065, %v4065
      %v4199 = vmul.f32 %v4066, %v4066
      %v4200 = vmul.f32 %v4067, %v4067
      %v4201 = vmul.f32 %v4068, %v4068
      %v4202 = vmul.f32 %v4069, %v4069
      %v4203 = vmul.f32 %v4070, %v4070
      %v4204 = vmul.f32 %v4071, %v4071
      %v4205 = vmul.f32 %v4072, %v4072
      %v4206 = vmul.f32 %v4073, %v4073
      %v4207 = vmul.f32 %v4074, %v4074
      %v4208 = vmul.f32 %v4075, %v4075
      %v4209 = vmul.f32 %v4076, %v4076
      %v4210 = vmul.f32 %v4077, %v4077
      %v4211 = vmul.f32 %v4078, %v4078
      %v4212 = vmul.f32 %v4079, %v4079
      %v4213 = vmul.f32 %v4080, %v4080
      %v4214 = vmul.f32 %v4081, %v4081
      %v4215 = vmul.f32 %v4082, %v4082
      %v4216 = vmul.f32 %v4083, %v4083
      %v4217 = vmul.f32 %v4084, %v4084
      %v4218 = vmul.f32 %v4085, %v4085
      %v4219 = vmul.f32 %v4086, %v4086
      %v4220 = vmul.f32 %v4087, %v4087
      %v4221 = vmul.f32 %v4088, %v4088
      %v4222 = vmul.f32 %v4089, %v4089
      %v4223 = vmul.f32 %v4090, %v4090
      %v4224 = vmul.f32 %v4091, %v4091
      %v4225 = vmul.f32 %v4092, %v4092
      %v4226 = vmul.f32 %v4093, %v4093
      %v4227 = vmul.f32 %v4094, %v4094
      %v4228 = vmul.f32 %v4095, %v4095
      %v4229 = vadd.f32 %v4197, %v4198
      %v4230 = vadd.f32 %v4229, %v4199
      %v4231 = vadd.f32 %v4230, %v4200
      %v4232 = vadd.f32 %v4231, %v4201
      %v4233 = vadd.f32 %v4232, %v4202
      %v4234 = vadd.f32 %v4233, %v4203
      %v4235 = vadd.f32 %v4234, %v4204
      %v4236 = vadd.f32 %v4235, %v4205
      %v4237 = vadd.f32 %v4236, %v4206
      %v4238 = vadd.f32 %v4237, %v4207
      %v4239 = vadd.f32 %v4238, %v4208
      %v4240 = vadd.f32 %v4239, %v4209
      %v4241 = vadd.f32 %v4240, %v4210
      %v4242 = vadd.f32 %v4241, %v4211
      %v4243 = vadd.f32 %v4242, %v4212
      %v4244 = vadd.f32 %v4243, %v4213
      %v4245 = vadd.f32 %v4244, %v4214
      %v4246 = vadd.f32 %v4245, %v4215
      %v4247 = vadd.f32 %v4246, %v4216
      %v4248 = vadd.f32 %v4247, %v4217
      %v4249 = vadd.f32 %v4248, %v4218
      %v4250 = vadd.f32 %v4249, %v4219
      %v4251 = vadd.f32 %v4250, %v4220
      %v4252 = vadd.f32 %v4251, %v4221
      %v4253 = vadd.f32 %v4252, %v4222
      %v4254 = vadd.f32 %v4253, %v4223
      %v4255 = vadd.f32 %v4254, %v4224
      %v4256 = vadd.f32 %v4255, %v4225
      %v4257 = vadd.f32 %v4256, %v4226
      %v4258 = vadd.f32 %v4257, %v4227
      %v4259 = vadd.f32 %v4258, %v4228
      %v4260 = vrot.slane %v4259, 4
      %v4261 = vadd.f32 %v4259, %v4260
      %v4262 = vrot.slane %v4261, 2
      %v4263 = vadd.f32 %v4261, %v4262
      %v4264 = vrot.slane %v4263, 1
      %v4265 = vadd.f32 %v4263, %v4264
      %vm4266 = vcmask 1040384
      %v4267 = vsel %vm4266, %v4196, %v4265
      %4268 = vst [vmem:[%s367] sm:$0x3] %v4267
      %s4269 = smul.u32 16, %s23
      %p4270 = scmp.lt.s32.totalorder %s22, 1
      %s4271 = scalar_select %p4270, %s22, 1
      %p4272 = scmp.lt.s32.totalorder %s4269, 15
      %s4273 = scalar_select %p4272, %s4269, 15
      %s4274 = smul.addr %s4273, 2
      %s4275 = smul.addr %s4271, 32
      %s4276 = sadd.s32 %s4274, %s4275
      %s4277 = smul.addr %s4276, 4
      %s4278 = scalar_lea.vmem %s5, %s4277
      %p4279 = scmp.lt.s32.totalorder %s22, 1
      %s4280 = scalar_select %p4279, %s22, 1
      %p4281 = scmp.lt.s32.totalorder %s23, 0
      %s4282 = scalar_select %p4281, %s23, 0
      %s4283 = sadd.s32 %s4282, %s4280
      %s4284 = smul.addr %s4283, 2
      %s4285 = scalar_lea.vmem %s6, %s4284
      // Predicated region
      $region41: #{unet_block_forward.4} parent=39 // pred_check
        %p4286 = pneg %p173
      $region42: #{unet_block_forward.4} parent=39 // pred_check_branch
        %4288 = sbr.rel (%p4286) target = $region44
      $region43: #{unet_block_forward.4} parent=39 // pred_region
        %s4289 = smul.u32 16, %s23
      $region44: #{unet_block_forward.4} parent=39 // pred_fallthru
        _
      // Predicated region
      $region45: #{unet_block_forward.4} parent=39 // pred_check
        %p4290 = pneg %p201
      $region46: #{unet_block_forward.4} parent=39 // pred_check_branch
        %4292 = sbr.rel (%p4290) target = $region48
      $region47: #{unet_block_forward.4} parent=39 // pred_region
        _
      $region48: #{unet_block_forward.4} parent=39 // pred_fallthru
        _
    $region40: #{unet_block_forward.4} parent=5 // pred_fallthru
      _
    %p4293 = scmp.le.s32.totalorder 2, %s13
    // Predicated region
    $region49: #{unet_block_forward.4} parent=5 // pred_check
      %p4294 = pneg %p4293
    $region50: #{unet_block_forward.4} parent=5 // pred_check_branch
      %4296 = sbr.rel (%p4294) target = $region52
    $region51: #{unet_block_forward.4} parent=5 // pred_region
      %s4297 = ssub.s32 %s13, 2
      // Predicated region
      $region53: #{unet_block_forward.4} parent=51 // pred_check
        %p4298 = pneg %p179
      $region54: #{unet_block_forward.4} parent=51 // pred_check_branch
        %4300 = sbr.rel (%p4298) target = $region56
      $region55: #{unet_block_forward.4} parent=51 // pred_region
        %s4301 = smul.u32 16, %s25
        %p4302 = scmp.lt.s32.totalorder %s24, 1
        %s4303 = scalar_select %p4302, %s24, 1
        %p4304 = scmp.lt.s32.totalorder %s4301, 15
        %s4305 = scalar_select %p4304, %s4301, 15
        %s4306 = smul.addr %s4305, 2
        %s4307 = smul.addr %s4303, 32
        %s4308 = sadd.s32 %s4306, %s4307
        %s4309 = smul.addr %s4308, 4
        %s4310 = scalar_lea.vmem %s5, %s4309
      $region56: #{unet_block_forward.4} parent=51 // pred_fallthru
        _
      // Predicated region
      $region57: #{unet_block_forward.4} parent=51 // pred_check
        %p4311 = pneg %p207
      $region58: #{unet_block_forward.4} parent=51 // pred_check_branch
        %4313 = sbr.rel (%p4311) target = $region60
      $region59: #{unet_block_forward.4} parent=51 // pred_region
        %p4314 = scmp.lt.s32.totalorder %s24, 1
        %s4315 = scalar_select %p4314, %s24, 1
        %p4316 = scmp.lt.s32.totalorder %s25, 0
        %s4317 = scalar_select %p4316, %s25, 0
        %s4318 = sadd.s32 %s4317, %s4315
        %s4319 = smul.addr %s4318, 2
        %s4320 = scalar_lea.vmem %s6, %s4319
      $region60: #{unet_block_forward.4} parent=51 // pred_fallthru
        _
    $region52: #{unet_block_forward.4} parent=5 // pred_fallthru
      _
  $region6: #{unet_block_forward.4} parent=0 // loop_footer
    %s17 = sadd.s32 1, %s13
  $region7: #{unet_block_forward.4} parent=0 // loop_footer_branch
    %12 = sbr.rel target = $region3
  $region8: #{unet_block_forward.4} parent=0 // loop_exit
    _

</llo_original>
